<compile_context>
chip_gen: v6e
topology: v6e:2x2x1
jax: 0.10.0
libtpu: 0.0.40
codegen_flags: <defaults>
</compile_context>

<pallas_src>
import jax
import jax.numpy as jnp
from jax.experimental import pallas as pl
from jax.experimental.pallas import tpu as pltpu

BN_EPS = 1e-5
_LANES = 128


# ----------------------------------------------------------------------------
# Kernel
# ----------------------------------------------------------------------------
def _mlp_head_kernel(src_ref, tgt_ref,
                     w1s_ref, w1t_ref, b1_ref,
                     w2_ref, b2_ref,
                     w3_ref, b3_ref,
                     wp_ref, bp_ref,
                     out_ref,
                     sacc, tacc):
    """Fused MLPHead: VPU running max over point tiles, full head on the last tile."""
    n = pl.program_id(1)
    n_chunks = src_ref.shape[-1] // _LANES

    @pl.when(n == 0)
    def _init():
        sacc[...] = jnp.full(sacc.shape, -jnp.inf, dtype=sacc.dtype)
        tacc[...] = jnp.full(tacc.shape, -jnp.inf, dtype=tacc.dtype)

    # Elementwise (VPU-only) running max over 128-lane chunks of the point axis.
    # src / tgt halves accumulate into separate scratches -> no concat, no XLU.
    for c in range(n_chunks):
        lo = c * _LANES
        sacc[...] = jnp.maximum(sacc[...], src_ref[:, :, pl.ds(lo, _LANES)])
        tacc[...] = jnp.maximum(tacc[...], tgt_ref[:, :, pl.ds(lo, _LANES)])

    @pl.when(n == pl.num_programs(1) - 1)
    def _finalize():
        # Single cross-lane reduce per batch tile (XLU cost kept off the hot loop).
        m_src = jnp.max(sacc[...], axis=-1)      # [TB, E]
        m_tgt = jnp.max(tacc[...], axis=-1)      # [TB, E]

        def dot(a, w_ref):
            return jnp.dot(a, w_ref[...], preferred_element_type=jnp.float32)

        # Layer 1: emb @ W1 == m_src @ W1[:E] + m_tgt @ W1[E:]  (W1 pre-split, BN folded).
        h = jnp.maximum(dot(m_src, w1s_ref) + dot(m_tgt, w1t_ref) + b1_ref[...], 0.0)
        h = jnp.maximum(dot(h, w2_ref) + b2_ref[...], 0.0)       # [TB, E/4]
        h = jnp.maximum(dot(h, w3_ref) + b3_ref[...], 0.0)       # [TB, E/8]

        # Fused rot(4) + trans(3) projection into one lane-dense 128-wide slab.
        out_ref[...] = (dot(h, wp_ref) + bp_ref[...]).astype(out_ref.dtype)


# ----------------------------------------------------------------------------
# Wrapper
# ----------------------------------------------------------------------------
def _quat2mat(q):
    # Same component convention as the original DCP quat2mat: (x, y, z, w).
    x, y, z, w = q[:, 0], q[:, 1], q[:, 2], q[:, 3]
    w2, x2, y2, z2 = w * w, x * x, y * y, z * z
    wx, wy, wz = w * x, w * y, w * z
    xy, xz, yz = x * y, x * z, y * z
    B = q.shape[0]
    return jnp.stack([w2 + x2 - y2 - z2, 2 * xy - 2 * wz, 2 * wy + 2 * xz,
                      2 * wz + 2 * xy, w2 - x2 + y2 - z2, 2 * yz - 2 * wx,
                      2 * xz - 2 * wy, 2 * wx + 2 * yz, w2 - x2 - y2 + z2],
                     axis=1).reshape(B, 3, 3)


def _fold_linear_bn(w, b, gamma, beta, mean, var):
    """Fold inference-mode BatchNorm1d into the preceding Linear: y = x @ W' + b'."""
    s = gamma / jnp.sqrt(var + BN_EPS)          # [1, dout]
    return w * s, (b - mean) * s + beta


def mlp_head_forward(src, tgt, params, *, tn=None, tb=None):
    """Pallas equivalent of MLPHead.forward(src_embedding, tgt_embedding)."""
    B, E, N = src.shape
    assert tgt.shape == (B, E, N)
    assert E % 8 == 0 and N % _LANES == 0

    if tb is None:
        # Keep >= 2 batch tiles when possible so the "parallel" axis can be
        # sharded across v7x's two TensorCores (no effect on v5e/v6e).
        tb = B // 2 if (B % 2 == 0 and B >= 2) else B
    if tn is None:
        tn = N if N <= 512 else 512
        while N % tn != 0:
            tn -= _LANES

    # Generation-aware VMEM guard: 2 inputs x 2 buffers x tile + accumulators
    # must stay well under the scoped limit (32 MiB default; v7x: 64 MiB physical).
    def _est_bytes(tb_, tn_):
        return 2 * 2 * tb_ * E * tn_ * 4 + 2 * tb_ * E * _LANES * 4
    while tn > _LANES and _est_bytes(tb, tn) > 24 * 1024 * 1024:
        tn //= 2
    assert N % tn == 0 and tn % _LANES == 0 and B % tb == 0, \
        "example sizes chosen to tile evenly"

    # Fold inference BatchNorm1d into the Linear weights; pre-split layer-1 weight.
    w1, b1 = _fold_linear_bn(params["w1"], params["b1"], params["g1"],
                             params["be1"], params["m1"], params["v1"])
    w2, b2 = _fold_linear_bn(params["w2"], params["b2"], params["g2"],
                             params["be2"], params["m2"], params["v2"])
    w3, b3 = _fold_linear_bn(params["w3"], params["b3"], params["g3"],
                             params["be3"], params["m3"], params["v3"])
    w1s, w1t = w1[:E], w1[E:]

    # Fuse proj_rot (4) + proj_trans (3) into one 128-lane projection (zero-padded).
    dh = E // 8
    wp = jnp.zeros((dh, _LANES), jnp.float32)
    wp = wp.at[:, 0:4].set(params["wr"]).at[:, 4:7].set(params["wt"])
    bp = jnp.zeros((1, _LANES), jnp.float32)
    bp = bp.at[:, 0:4].set(params["br"][0]).at[:, 4:7].set(params["bt"][0])

    def _const_spec(a):                          # grid-invariant -> VMEM-resident
        return pl.BlockSpec(a.shape, lambda b, n: (0,) * a.ndim)

    nb = B // tb
    slab = pl.pallas_call(
        _mlp_head_kernel,
        out_shape=jax.ShapeDtypeStruct((nb, tb, _LANES), jnp.float32),
        grid=(nb, N // tn),
        in_specs=[
            pl.BlockSpec((tb, E, tn), lambda b, n: (b, 0, n)),   # src tile
            pl.BlockSpec((tb, E, tn), lambda b, n: (b, 0, n)),   # tgt tile
            _const_spec(w1s), _const_spec(w1t), _const_spec(b1),
            _const_spec(w2), _const_spec(b2),
            _const_spec(w3), _const_spec(b3),
            _const_spec(wp), _const_spec(bp),
        ],
        # Leading batch-tile dim squeezed; block equals full (tb, 128) slab.
        out_specs=pl.BlockSpec((None, tb, _LANES), lambda b, n: (b, 0, 0)),
        scratch_shapes=[pltpu.VMEM((tb, E, _LANES), jnp.float32),   # src max accumulator
                        pltpu.VMEM((tb, E, _LANES), jnp.float32)],  # tgt max accumulator
        compiler_params=pltpu.CompilerParams(
            dimension_semantics=("parallel", "arbitrary"),
            vmem_limit_bytes=32 * 1024 * 1024),
    )(src, tgt, w1s, w1t, b1, w2, b2, w3, b3, wp, bp)

    # Tiny XLA epilogue on [B, 7]: quaternion normalization + quat2mat.
    slab = slab.reshape(B, _LANES)
    r = slab[:, 0:4]
    t = slab[:, 4:7]
    # torch.norm(p=2, dim=1, keepdim=True): no epsilon (NaN/Inf if rot head ~ 0,
    # matching the PyTorch module's behavior).
    r = r / jnp.sqrt(jnp.sum(r * r, axis=-1, keepdims=True))
    return _quat2mat(r), t, None


# ----------------------------------------------------------------------------
# Deterministic synthetic parameters (weights stored as [in, out])
# ----------------------------------------------------------------------------
def init_params(key, emb_dims):
    E = emb_dims
    dims = [(2 * E, E // 2), (E // 2, E // 4), (E // 4, E // 8)]
    p = {}
    for i, (din, dout) in enumerate(dims, start=1):
        key, kw, kb, kg, kbe, km, kv = jax.random.split(key, 7)
        p[f"w{i}"] = jax.random.normal(kw, (din, dout), jnp.float32) / jnp.sqrt(din)
        p[f"b{i}"] = 0.1 * jax.random.normal(kb, (1, dout), jnp.float32)
        p[f"g{i}"] = 1.0 + 0.1 * jax.random.normal(kg, (1, dout), jnp.float32)   # BN gamma
        p[f"be{i}"] = 0.1 * jax.random.normal(kbe, (1, dout), jnp.float32)       # BN beta
        p[f"m{i}"] = 0.1 * jax.random.normal(km, (1, dout), jnp.float32)         # running mean
        p[f"v{i}"] = 1.0 + 0.1 * jnp.abs(jax.random.normal(kv, (1, dout), jnp.float32))  # running var
    key, kr, kbr, kt, kbt = jax.random.split(key, 5)
    p["wr"] = jax.random.normal(kr, (E // 8, 4), jnp.float32) / jnp.sqrt(E // 8)
    p["br"] = 0.1 * jax.random.normal(kbr, (1, 4), jnp.float32)
    p["wt"] = jax.random.normal(kt, (E // 8, 3), jnp.float32) / jnp.sqrt(E // 8)
    p["bt"] = 0.1 * jax.random.normal(kbt, (1, 3), jnp.float32)
    return p


# ----------------------------------------------------------------------------
# Pure-JAX reference (mirrors the PyTorch module, eval-mode BN, unfolded)
# ----------------------------------------------------------------------------
def mlp_head_reference(src, tgt, p):
    emb = jnp.max(jnp.concatenate([src, tgt], axis=1), axis=-1)
    h = emb
    for i in (1, 2, 3):
        y = h @ p[f"w{i}"] + p[f"b{i}"]
        y = p[f"g{i}"] * (y - p[f"m{i}"]) / jnp.sqrt(p[f"v{i}"] + BN_EPS) + p[f"be{i}"]
        h = jnp.maximum(y, 0.0)
    r = h @ p["wr"] + p["br"]
    r = r / jnp.linalg.norm(r, axis=-1, keepdims=True)
    t = h @ p["wt"] + p["bt"]
    return _quat2mat(r), t, None


if __name__ == "__main__":
    B, E, N = 8, 256, 512   # batch, emb_dims, num points (small but lane/sublane friendly)

    key = jax.random.PRNGKey(0)
    key, ks, kt = jax.random.split(key, 3)
    src = jax.random.normal(ks, (B, E, N), jnp.float32)
    tgt = jax.random.normal(kt, (B, E, N), jnp.float32)
    params = init_params(key, E)

    fwd = jax.jit(lambda s, t: mlp_head_forward(s, t, params))
    rot, trans, extra = fwd(src, tgt)
    jax.block_until_ready((rot, trans))

    assert rot.shape == (B, 3, 3) and trans.shape == (B, 3) and extra is None
    assert rot.dtype == jnp.float32 and trans.dtype == jnp.float32

    rot_ref, trans_ref, _ = mlp_head_reference(src, tgt, params)
    # Tolerance tightened vs the previous version; residual slack only covers
    # differing MXU f32 matmul pass counts between Pallas and XLA's default precision.
    assert jnp.allclose(rot, rot_ref, atol=1e-2, rtol=1e-2), "rotation mismatch vs reference"
    assert jnp.allclose(trans, trans_ref, atol=1e-2, rtol=1e-2), "translation mismatch vs reference"

    print("KERNEL_OK")
</pallas_src>

<mosaic_0001>
module attributes {stable_mosaic.version = 11 : i64} {
  func.func @_mlp_head_kernel(%arg0: i32, %arg1: i32, %arg2: memref<4x256x512xf32, #tpu.memory_space<vmem>>, %arg3: memref<4x256x512xf32, #tpu.memory_space<vmem>>, %arg4: memref<256x128xf32, #tpu.memory_space<vmem>>, %arg5: memref<256x128xf32, #tpu.memory_space<vmem>>, %arg6: memref<1x128xf32, #tpu.memory_space<vmem>>, %arg7: memref<128x64xf32, #tpu.memory_space<vmem>>, %arg8: memref<1x64xf32, #tpu.memory_space<vmem>>, %arg9: memref<64x32xf32, #tpu.memory_space<vmem>>, %arg10: memref<1x32xf32, #tpu.memory_space<vmem>>, %arg11: memref<32x128xf32, #tpu.memory_space<vmem>>, %arg12: memref<1x128xf32, #tpu.memory_space<vmem>>, %arg13: memref<1x4x128xf32, #tpu.memory_space<vmem>>, %arg14: memref<4x256x128xf32, #tpu.memory_space<vmem>>, %arg15: memref<4x256x128xf32, #tpu.memory_space<vmem>>) attributes {dimension_semantics = [#tpu.dimension_semantics<parallel>, #tpu.dimension_semantics<arbitrary>], iteration_bounds = array<i64: 2, 1>, scalar_prefetch = 0 : i64, scratch_operands = 2 : i64, tpu.core_type = #tpu.core_type<tc>, window_params = [{transform_indices = @transform_0, window_bounds = array<i64: 4, 256, 512>}, {transform_indices = @transform_1, window_bounds = array<i64: 4, 256, 512>}, {pipeline_mode = #tpu.pipeline_mode<synchronous>, transform_indices = @transform_2, window_bounds = array<i64: 256, 128>}, {pipeline_mode = #tpu.pipeline_mode<synchronous>, transform_indices = @transform_3, window_bounds = array<i64: 256, 128>}, {pipeline_mode = #tpu.pipeline_mode<synchronous>, transform_indices = @transform_4, window_bounds = array<i64: 1, 128>}, {pipeline_mode = #tpu.pipeline_mode<synchronous>, transform_indices = @transform_5, window_bounds = array<i64: 128, 64>}, {pipeline_mode = #tpu.pipeline_mode<synchronous>, transform_indices = @transform_6, window_bounds = array<i64: 1, 64>}, {pipeline_mode = #tpu.pipeline_mode<synchronous>, transform_indices = @transform_7, window_bounds = array<i64: 64, 32>}, {pipeline_mode = #tpu.pipeline_mode<synchronous>, transform_indices = @transform_8, window_bounds = array<i64: 1, 32>}, {pipeline_mode = #tpu.pipeline_mode<synchronous>, transform_indices = @transform_9, window_bounds = array<i64: 32, 128>}, {pipeline_mode = #tpu.pipeline_mode<synchronous>, transform_indices = @transform_10, window_bounds = array<i64: 1, 128>}, {transform_indices = @transform_11, window_bounds = array<i64: 1, 4, 128>}]} {
    %c0_i32 = arith.constant 0 : i32
    %0 = arith.cmpi eq, %arg1, %c0_i32 : i32
    %1 = arith.extui %0 : i1 to i32
    %c0_i32_0 = arith.constant 0 : i32
    %2 = arith.cmpi ne, %1, %c0_i32_0 : i32
    scf.if %2 {
      %cst = arith.constant 0xFF800000 : f32
      %38 = vector.broadcast %cst : f32 to vector<4x256x128xf32>
      %c0_71 = arith.constant 0 : index
      %c0_72 = arith.constant 0 : index
      %c0_73 = arith.constant 0 : index
      %39 = vector.load %arg14[%c0_71, %c0_72, %c0_73] : memref<4x256x128xf32, #tpu.memory_space<vmem>>, vector<4x256x128xf32>
      tpu.vector_store %arg14[%c0_71, %c0_72, %c0_73], %38 {strides = array<i32>} : memref<4x256x128xf32, #tpu.memory_space<vmem>>, vector<4x256x128xf32>,
      %cst_74 = arith.constant 0xFF800000 : f32
      %40 = vector.broadcast %cst_74 : f32 to vector<4x256x128xf32>
      %c0_75 = arith.constant 0 : index
      %c0_76 = arith.constant 0 : index
      %c0_77 = arith.constant 0 : index
      %41 = vector.load %arg15[%c0_75, %c0_76, %c0_77] : memref<4x256x128xf32, #tpu.memory_space<vmem>>, vector<4x256x128xf32>
      tpu.vector_store %arg15[%c0_75, %c0_76, %c0_77], %40 {strides = array<i32>} : memref<4x256x128xf32, #tpu.memory_space<vmem>>, vector<4x256x128xf32>,
    } else {
    }
    %c0 = arith.constant 0 : index
    %c0_1 = arith.constant 0 : index
    %c0_2 = arith.constant 0 : index
    %3 = vector.load %arg14[%c0, %c0_1, %c0_2] : memref<4x256x128xf32, #tpu.memory_space<vmem>>, vector<4x256x128xf32>
    %c0_3 = arith.constant 0 : index
    %c0_4 = arith.constant 0 : index
    %c0_5 = arith.constant 0 : index
    %4 = vector.load %arg2[%c0_3, %c0_4, %c0_5] : memref<4x256x512xf32, #tpu.memory_space<vmem>>, vector<4x256x128xf32>
    %5 = arith.maximumf %3, %4 : vector<4x256x128xf32>
    %c0_6 = arith.constant 0 : index
    %c0_7 = arith.constant 0 : index
    %c0_8 = arith.constant 0 : index
    %6 = vector.load %arg14[%c0_6, %c0_7, %c0_8] : memref<4x256x128xf32, #tpu.memory_space<vmem>>, vector<4x256x128xf32>
    tpu.vector_store %arg14[%c0_6, %c0_7, %c0_8], %5 {strides = array<i32>} : memref<4x256x128xf32, #tpu.memory_space<vmem>>, vector<4x256x128xf32>,
    %c0_9 = arith.constant 0 : index
    %c0_10 = arith.constant 0 : index
    %c0_11 = arith.constant 0 : index
    %7 = vector.load %arg15[%c0_9, %c0_10, %c0_11] : memref<4x256x128xf32, #tpu.memory_space<vmem>>, vector<4x256x128xf32>
    %c0_12 = arith.constant 0 : index
    %c0_13 = arith.constant 0 : index
    %c0_14 = arith.constant 0 : index
    %8 = vector.load %arg3[%c0_12, %c0_13, %c0_14] : memref<4x256x512xf32, #tpu.memory_space<vmem>>, vector<4x256x128xf32>
    %9 = arith.maximumf %7, %8 : vector<4x256x128xf32>
    %c0_15 = arith.constant 0 : index
    %c0_16 = arith.constant 0 : index
    %c0_17 = arith.constant 0 : index
    %10 = vector.load %arg15[%c0_15, %c0_16, %c0_17] : memref<4x256x128xf32, #tpu.memory_space<vmem>>, vector<4x256x128xf32>
    tpu.vector_store %arg15[%c0_15, %c0_16, %c0_17], %9 {strides = array<i32>} : memref<4x256x128xf32, #tpu.memory_space<vmem>>, vector<4x256x128xf32>,
    %c0_18 = arith.constant 0 : index
    %c0_19 = arith.constant 0 : index
    %c0_20 = arith.constant 0 : index
    %11 = vector.load %arg14[%c0_18, %c0_19, %c0_20] : memref<4x256x128xf32, #tpu.memory_space<vmem>>, vector<4x256x128xf32>
    %c0_21 = arith.constant 0 : index
    %c0_22 = arith.constant 0 : index
    %c128 = arith.constant 128 : index
    %12 = vector.load %arg2[%c0_21, %c0_22, %c128] : memref<4x256x512xf32, #tpu.memory_space<vmem>>, vector<4x256x128xf32>
    %13 = arith.maximumf %11, %12 : vector<4x256x128xf32>
    %c0_23 = arith.constant 0 : index
    %c0_24 = arith.constant 0 : index
    %c0_25 = arith.constant 0 : index
    %14 = vector.load %arg14[%c0_23, %c0_24, %c0_25] : memref<4x256x128xf32, #tpu.memory_space<vmem>>, vector<4x256x128xf32>
    tpu.vector_store %arg14[%c0_23, %c0_24, %c0_25], %13 {strides = array<i32>} : memref<4x256x128xf32, #tpu.memory_space<vmem>>, vector<4x256x128xf32>,
    %c0_26 = arith.constant 0 : index
    %c0_27 = arith.constant 0 : index
    %c0_28 = arith.constant 0 : index
    %15 = vector.load %arg15[%c0_26, %c0_27, %c0_28] : memref<4x256x128xf32, #tpu.memory_space<vmem>>, vector<4x256x128xf32>
    %c0_29 = arith.constant 0 : index
    %c0_30 = arith.constant 0 : index
    %c128_31 = arith.constant 128 : index
    %16 = vector.load %arg3[%c0_29, %c0_30, %c128_31] : memref<4x256x512xf32, #tpu.memory_space<vmem>>, vector<4x256x128xf32>
    %17 = arith.maximumf %15, %16 : vector<4x256x128xf32>
    %c0_32 = arith.constant 0 : index
    %c0_33 = arith.constant 0 : index
    %c0_34 = arith.constant 0 : index
    %18 = vector.load %arg15[%c0_32, %c0_33, %c0_34] : memref<4x256x128xf32, #tpu.memory_space<vmem>>, vector<4x256x128xf32>
    tpu.vector_store %arg15[%c0_32, %c0_33, %c0_34], %17 {strides = array<i32>} : memref<4x256x128xf32, #tpu.memory_space<vmem>>, vector<4x256x128xf32>,
    %c0_35 = arith.constant 0 : index
    %c0_36 = arith.constant 0 : index
    %c0_37 = arith.constant 0 : index
    %19 = vector.load %arg14[%c0_35, %c0_36, %c0_37] : memref<4x256x128xf32, #tpu.memory_space<vmem>>, vector<4x256x128xf32>
    %c0_38 = arith.constant 0 : index
    %c0_39 = arith.constant 0 : index
    %c256 = arith.constant 256 : index
    %20 = vector.load %arg2[%c0_38, %c0_39, %c256] : memref<4x256x512xf32, #tpu.memory_space<vmem>>, vector<4x256x128xf32>
    %21 = arith.maximumf %19, %20 : vector<4x256x128xf32>
    %c0_40 = arith.constant 0 : index
    %c0_41 = arith.constant 0 : index
    %c0_42 = arith.constant 0 : index
    %22 = vector.load %arg14[%c0_40, %c0_41, %c0_42] : memref<4x256x128xf32, #tpu.memory_space<vmem>>, vector<4x256x128xf32>
    tpu.vector_store %arg14[%c0_40, %c0_41, %c0_42], %21 {strides = array<i32>} : memref<4x256x128xf32, #tpu.memory_space<vmem>>, vector<4x256x128xf32>,
    %c0_43 = arith.constant 0 : index
    %c0_44 = arith.constant 0 : index
    %c0_45 = arith.constant 0 : index
    %23 = vector.load %arg15[%c0_43, %c0_44, %c0_45] : memref<4x256x128xf32, #tpu.memory_space<vmem>>, vector<4x256x128xf32>
    %c0_46 = arith.constant 0 : index
    %c0_47 = arith.constant 0 : index
    %c256_48 = arith.constant 256 : index
    %24 = vector.load %arg3[%c0_46, %c0_47, %c256_48] : memref<4x256x512xf32, #tpu.memory_space<vmem>>, vector<4x256x128xf32>
    %25 = arith.maximumf %23, %24 : vector<4x256x128xf32>
    %c0_49 = arith.constant 0 : index
    %c0_50 = arith.constant 0 : index
    %c0_51 = arith.constant 0 : index
    %26 = vector.load %arg15[%c0_49, %c0_50, %c0_51] : memref<4x256x128xf32, #tpu.memory_space<vmem>>, vector<4x256x128xf32>
    tpu.vector_store %arg15[%c0_49, %c0_50, %c0_51], %25 {strides = array<i32>} : memref<4x256x128xf32, #tpu.memory_space<vmem>>, vector<4x256x128xf32>,
    %c0_52 = arith.constant 0 : index
    %c0_53 = arith.constant 0 : index
    %c0_54 = arith.constant 0 : index
    %27 = vector.load %arg14[%c0_52, %c0_53, %c0_54] : memref<4x256x128xf32, #tpu.memory_space<vmem>>, vector<4x256x128xf32>
    %c0_55 = arith.constant 0 : index
    %c0_56 = arith.constant 0 : index
    %c384 = arith.constant 384 : index
    %28 = vector.load %arg2[%c0_55, %c0_56, %c384] : memref<4x256x512xf32, #tpu.memory_space<vmem>>, vector<4x256x128xf32>
    %29 = arith.maximumf %27, %28 : vector<4x256x128xf32>
    %c0_57 = arith.constant 0 : index
    %c0_58 = arith.constant 0 : index
    %c0_59 = arith.constant 0 : index
    %30 = vector.load %arg14[%c0_57, %c0_58, %c0_59] : memref<4x256x128xf32, #tpu.memory_space<vmem>>, vector<4x256x128xf32>
    tpu.vector_store %arg14[%c0_57, %c0_58, %c0_59], %29 {strides = array<i32>} : memref<4x256x128xf32, #tpu.memory_space<vmem>>, vector<4x256x128xf32>,
    %c0_60 = arith.constant 0 : index
    %c0_61 = arith.constant 0 : index
    %c0_62 = arith.constant 0 : index
    %31 = vector.load %arg15[%c0_60, %c0_61, %c0_62] : memref<4x256x128xf32, #tpu.memory_space<vmem>>, vector<4x256x128xf32>
    %c0_63 = arith.constant 0 : index
    %c0_64 = arith.constant 0 : index
    %c384_65 = arith.constant 384 : index
    %32 = vector.load %arg3[%c0_63, %c0_64, %c384_65] : memref<4x256x512xf32, #tpu.memory_space<vmem>>, vector<4x256x128xf32>
    %33 = arith.maximumf %31, %32 : vector<4x256x128xf32>
    %c0_66 = arith.constant 0 : index
    %c0_67 = arith.constant 0 : index
    %c0_68 = arith.constant 0 : index
    %34 = vector.load %arg15[%c0_66, %c0_67, %c0_68] : memref<4x256x128xf32, #tpu.memory_space<vmem>>, vector<4x256x128xf32>
    tpu.vector_store %arg15[%c0_66, %c0_67, %c0_68], %33 {strides = array<i32>} : memref<4x256x128xf32, #tpu.memory_space<vmem>>, vector<4x256x128xf32>,
    %c0_i32_69 = arith.constant 0 : i32
    %35 = arith.cmpi eq, %arg1, %c0_i32_69 : i32
    %36 = arith.extui %35 : i1 to i32
    %c0_i32_70 = arith.constant 0 : i32
    %37 = arith.cmpi ne, %36, %c0_i32_70 : i32
    scf.if %37 {
      %c0_71 = arith.constant 0 : index
      %c0_72 = arith.constant 0 : index
      %c0_73 = arith.constant 0 : index
      %38 = vector.load %arg14[%c0_71, %c0_72, %c0_73] : memref<4x256x128xf32, #tpu.memory_space<vmem>>, vector<4x256x128xf32>
      %cst = arith.constant dense<0xFF800000> : vector<4x256xf32>
      %39 = vector.multi_reduction <maximumf>, %38, %cst [2] : vector<4x256x128xf32> to vector<4x256xf32>
      %c0_74 = arith.constant 0 : index
      %c0_75 = arith.constant 0 : index
      %c0_76 = arith.constant 0 : index
      %40 = vector.load %arg15[%c0_74, %c0_75, %c0_76] : memref<4x256x128xf32, #tpu.memory_space<vmem>>, vector<4x256x128xf32>
      %cst_77 = arith.constant dense<0xFF800000> : vector<4x256xf32>
      %41 = vector.multi_reduction <maximumf>, %40, %cst_77 [2] : vector<4x256x128xf32> to vector<4x256xf32>
      %c0_78 = arith.constant 0 : index
      %c0_79 = arith.constant 0 : index
      %42 = vector.load %arg4[%c0_78, %c0_79] : memref<256x128xf32, #tpu.memory_space<vmem>>, vector<256x128xf32>
      %cst_80 = arith.constant dense<0.000000e+00> : vector<4x128xf32>
      %43 = tpu.matmul %39, %42, %cst_80 {dimension_numbers = #tpu.dot_dimension_numbers<[1], [0], [0], [1], [0, 0, 1, 1], [], []>} : vector<4x256xf32>, vector<256x128xf32>, vector<4x128xf32> -> vector<4x128xf32>
      %c0_81 = arith.constant 0 : index
      %c0_82 = arith.constant 0 : index
      %44 = vector.load %arg5[%c0_81, %c0_82] : memref<256x128xf32, #tpu.memory_space<vmem>>, vector<256x128xf32>
      %cst_83 = arith.constant dense<0.000000e+00> : vector<4x128xf32>
      %45 = tpu.matmul %41, %44, %cst_83 {dimension_numbers = #tpu.dot_dimension_numbers<[1], [0], [0], [1], [0, 0, 1, 1], [], []>} : vector<4x256xf32>, vector<256x128xf32>, vector<4x128xf32> -> vector<4x128xf32>
      %46 = arith.addf %43, %45 : vector<4x128xf32>
      %c0_84 = arith.constant 0 : index
      %c0_85 = arith.constant 0 : index
      %47 = vector.load %arg6[%c0_84, %c0_85] : memref<1x128xf32, #tpu.memory_space<vmem>>, vector<1x128xf32>
      %48 = vector.broadcast %47 : vector<1x128xf32> to vector<4x128xf32>
      %49 = arith.addf %46, %48 : vector<4x128xf32>
      %cst_86 = arith.constant 0.000000e+00 : f32
      %50 = vector.broadcast %cst_86 : f32 to vector<4x128xf32>
      %51 = arith.maximumf %49, %50 : vector<4x128xf32>
      %c0_87 = arith.constant 0 : index
      %c0_88 = arith.constant 0 : index
      %52 = vector.load %arg7[%c0_87, %c0_88] : memref<128x64xf32, #tpu.memory_space<vmem>>, vector<128x64xf32>
      %cst_89 = arith.constant dense<0.000000e+00> : vector<4x64xf32>
      %53 = tpu.matmul %51, %52, %cst_89 {dimension_numbers = #tpu.dot_dimension_numbers<[1], [0], [0], [1], [0, 0, 1, 1], [], []>} : vector<4x128xf32>, vector<128x64xf32>, vector<4x64xf32> -> vector<4x64xf32>
      %c0_90 = arith.constant 0 : index
      %c0_91 = arith.constant 0 : index
      %54 = vector.load %arg8[%c0_90, %c0_91] : memref<1x64xf32, #tpu.memory_space<vmem>>, vector<1x64xf32>
      %55 = vector.broadcast %54 : vector<1x64xf32> to vector<4x64xf32>
      %56 = arith.addf %53, %55 : vector<4x64xf32>
      %cst_92 = arith.constant 0.000000e+00 : f32
      %57 = vector.broadcast %cst_92 : f32 to vector<4x64xf32>
      %58 = arith.maximumf %56, %57 : vector<4x64xf32>
      %c0_93 = arith.constant 0 : index
      %c0_94 = arith.constant 0 : index
      %59 = vector.load %arg9[%c0_93, %c0_94] : memref<64x32xf32, #tpu.memory_space<vmem>>, vector<64x32xf32>
      %cst_95 = arith.constant dense<0.000000e+00> : vector<4x32xf32>
      %60 = tpu.matmul %58, %59, %cst_95 {dimension_numbers = #tpu.dot_dimension_numbers<[1], [0], [0], [1], [0, 0, 1, 1], [], []>} : vector<4x64xf32>, vector<64x32xf32>, vector<4x32xf32> -> vector<4x32xf32>
      %c0_96 = arith.constant 0 : index
      %c0_97 = arith.constant 0 : index
      %61 = vector.load %arg10[%c0_96, %c0_97] : memref<1x32xf32, #tpu.memory_space<vmem>>, vector<1x32xf32>
      %62 = vector.broadcast %61 : vector<1x32xf32> to vector<4x32xf32>
      %63 = arith.addf %60, %62 : vector<4x32xf32>
      %cst_98 = arith.constant 0.000000e+00 : f32
      %64 = vector.broadcast %cst_98 : f32 to vector<4x32xf32>
      %65 = arith.maximumf %63, %64 : vector<4x32xf32>
      %c0_99 = arith.constant 0 : index
      %c0_100 = arith.constant 0 : index
      %66 = vector.load %arg11[%c0_99, %c0_100] : memref<32x128xf32, #tpu.memory_space<vmem>>, vector<32x128xf32>
      %cst_101 = arith.constant dense<0.000000e+00> : vector<4x128xf32>
      %67 = tpu.matmul %65, %66, %cst_101 {dimension_numbers = #tpu.dot_dimension_numbers<[1], [0], [0], [1], [0, 0, 1, 1], [], []>} : vector<4x32xf32>, vector<32x128xf32>, vector<4x128xf32> -> vector<4x128xf32>
      %c0_102 = arith.constant 0 : index
      %c0_103 = arith.constant 0 : index
      %68 = vector.load %arg12[%c0_102, %c0_103] : memref<1x128xf32, #tpu.memory_space<vmem>>, vector<1x128xf32>
      %69 = vector.broadcast %68 : vector<1x128xf32> to vector<4x128xf32>
      %70 = arith.addf %67, %69 : vector<4x128xf32>
      %c0_104 = arith.constant 0 : index
      %c0_105 = arith.constant 0 : index
      %c0_106 = arith.constant 0 : index
      %71 = vector.load %arg13[%c0_104, %c0_105, %c0_106] : memref<1x4x128xf32, #tpu.memory_space<vmem>>, vector<1x4x128xf32>
      %72 = vector.shape_cast %71 : vector<1x4x128xf32> to vector<4x128xf32>
      %73 = vector.shape_cast %70 : vector<4x128xf32> to vector<1x4x128xf32>
      tpu.vector_store %arg13[%c0_104, %c0_105, %c0_106], %73 {strides = array<i32>} : memref<1x4x128xf32, #tpu.memory_space<vmem>>, vector<1x4x128xf32>,
    } else {
    }
    return
  }
  func.func @transform_0(%arg0: i32, %arg1: i32) -> (i32, i32, i32) {
    %c0_i32 = arith.constant 0 : i32
    %c0_i32_0 = arith.constant 0 : i32
    return %arg0, %c0_i32, %arg1 : i32, i32, i32
  }
  func.func @transform_1(%arg0: i32, %arg1: i32) -> (i32, i32, i32) {
    %c0_i32 = arith.constant 0 : i32
    %c0_i32_0 = arith.constant 0 : i32
    return %arg0, %c0_i32, %arg1 : i32, i32, i32
  }
  func.func @transform_2(%arg0: i32, %arg1: i32) -> (i32, i32) {
    %c0_i32 = arith.constant 0 : i32
    %c0_i32_0 = arith.constant 0 : i32
    %c0_i32_1 = arith.constant 0 : i32
    return %c0_i32, %c0_i32_0 : i32, i32
  }
  func.func @transform_3(%arg0: i32, %arg1: i32) -> (i32, i32) {
    %c0_i32 = arith.constant 0 : i32
    %c0_i32_0 = arith.constant 0 : i32
    %c0_i32_1 = arith.constant 0 : i32
    return %c0_i32, %c0_i32_0 : i32, i32
  }
  func.func @transform_4(%arg0: i32, %arg1: i32) -> (i32, i32) {
    %c0_i32 = arith.constant 0 : i32
    %c0_i32_0 = arith.constant 0 : i32
    %c0_i32_1 = arith.constant 0 : i32
    return %c0_i32, %c0_i32_0 : i32, i32
  }
  func.func @transform_5(%arg0: i32, %arg1: i32) -> (i32, i32) {
    %c0_i32 = arith.constant 0 : i32
    %c0_i32_0 = arith.constant 0 : i32
    %c0_i32_1 = arith.constant 0 : i32
    return %c0_i32, %c0_i32_0 : i32, i32
  }
  func.func @transform_6(%arg0: i32, %arg1: i32) -> (i32, i32) {
    %c0_i32 = arith.constant 0 : i32
    %c0_i32_0 = arith.constant 0 : i32
    %c0_i32_1 = arith.constant 0 : i32
    return %c0_i32, %c0_i32_0 : i32, i32
  }
  func.func @transform_7(%arg0: i32, %arg1: i32) -> (i32, i32) {
    %c0_i32 = arith.constant 0 : i32
    %c0_i32_0 = arith.constant 0 : i32
    %c0_i32_1 = arith.constant 0 : i32
    return %c0_i32, %c0_i32_0 : i32, i32
  }
  func.func @transform_8(%arg0: i32, %arg1: i32) -> (i32, i32) {
    %c0_i32 = arith.constant 0 : i32
    %c0_i32_0 = arith.constant 0 : i32
    %c0_i32_1 = arith.constant 0 : i32
    return %c0_i32, %c0_i32_0 : i32, i32
  }
  func.func @transform_9(%arg0: i32, %arg1: i32) -> (i32, i32) {
    %c0_i32 = arith.constant 0 : i32
    %c0_i32_0 = arith.constant 0 : i32
    %c0_i32_1 = arith.constant 0 : i32
    return %c0_i32, %c0_i32_0 : i32, i32
  }
  func.func @transform_10(%arg0: i32, %arg1: i32) -> (i32, i32) {
    %c0_i32 = arith.constant 0 : i32
    %c0_i32_0 = arith.constant 0 : i32
    %c0_i32_1 = arith.constant 0 : i32
    return %c0_i32, %c0_i32_0 : i32, i32
  }
  func.func @transform_11(%arg0: i32, %arg1: i32) -> (i32, i32, i32) {
    %c0_i32 = arith.constant 0 : i32
    %c0_i32_0 = arith.constant 0 : i32
    %c0_i32_1 = arith.constant 0 : i32
    return %arg0, %c0_i32, %c0_i32_0 : i32, i32, i32
  }
}

</mosaic_0001>

<llo_original>
// kernel: _lambda_.1
$region0: #{_lambda_.1}
  #allocation0 [shape = 'u32[]', space=smem, size = 0x4, offset = 0x4, fixed_abs, tag = 'smem constant byte address 0x4 - core index']
  #allocation1 [shape = 'u32[144,128]{1,0:T(1,128)}', space=vmem, size = 0x12000, scoped, tag = 'internal scratch']
  #allocation2 [shape = 'f32[4,256,128]{2,1,0:T(8,128)}', space=vmem, size = 0x80000, scoped, tag = 'scratch operand']
  #allocation3 [shape = 'f32[4,256,128]{2,1,0:T(8,128)}', space=vmem, size = 0x80000, scoped, tag = 'scratch operand']
  %s0 = inlined_call_operand.hbm [shape: f32[8,256,512], index: 0, kind: input, shape index: {}]
  %s1 = inlined_call_operand.hbm [shape: f32[8,256,512], index: 1, kind: input, shape index: {}]
  %s2 = inlined_call_operand.hbm [shape: f32[256,128], index: 2, kind: input, shape index: {}]
  %s3 = inlined_call_operand.hbm [shape: f32[256,128], index: 3, kind: input, shape index: {}]
  %s4 = inlined_call_operand.hbm [shape: f32[1,128], index: 4, kind: input, shape index: {}]
  %s5 = inlined_call_operand.hbm [shape: f32[128,64], index: 5, kind: input, shape index: {}]
  %s6 = inlined_call_operand.hbm [shape: f32[1,64], index: 6, kind: input, shape index: {}]
  %s7 = inlined_call_operand.hbm [shape: f32[64,32], index: 7, kind: input, shape index: {}]
  %s8 = inlined_call_operand.hbm [shape: f32[1,32], index: 8, kind: input, shape index: {}]
  %s9 = inlined_call_operand.vmem [shape: f32[32,128], index: 9, kind: input, shape index: {}]
  %s10 = inlined_call_operand.vmem [shape: f32[1,128], index: 10, kind: input, shape index: {}]
  %s11 = inlined_call_operand.vmem [shape: f32[2,4,128], index: 11, kind: output, shape index: {}]
  %s12 = sld [smem:[#allocation0]]
  $region121: #{_lambda_.1} parent=0
    _
  %s14 = ssub.s32 1, %s12
  %s15 = scalar_select 0, %s14, %s12
  $region1: #{_lambda_.1} parent=0
    #allocation4 [shape = 'u8[4194304]{0}', space=vmem, size = 0x400000, scoped, tag = 'input window, operand 0']
    #allocation5 [shape = 's32[2]{0}', space=sflag, size = 0x8, scoped, tag = 'scoped memory for _lambda_.1']
    #allocation6 [shape = 'u8[4194304]{0}', space=vmem, size = 0x400000, scoped, tag = 'input window, operand 1']
    #allocation7 [shape = 's32[2]{0}', space=sflag, size = 0x8, scoped, tag = 'scoped memory for _lambda_.1']
    #allocation8 [shape = 'u8[131072]{0}', space=vmem, size = 0x20000, scoped, tag = 'input window, operand 2, single buffered']
    #allocation9 [shape = 'u8[131072]{0}', space=vmem, size = 0x20000, scoped, tag = 'input window, operand 3, single buffered']
    #allocation10 [shape = 's32[1]{0}', space=sflag, size = 0x4, scoped, tag = 'scoped memory for _lambda_.1']
    #allocation11 [shape = 'u8[512]{0}', space=vmem, size = 0x400, scoped, tag = 'input window, operand 4, single buffered']
    #allocation12 [shape = 'u8[65536]{0}', space=vmem, size = 0x10000, scoped, tag = 'input window, operand 5, single buffered']
    #allocation13 [shape = 's32[1]{0}', space=sflag, size = 0x4, scoped, tag = 'scoped memory for _lambda_.1']
    #allocation14 [shape = 'u8[512]{0}', space=vmem, size = 0x400, scoped, tag = 'input window, operand 6, single buffered']
    #allocation15 [shape = 'u8[32768]{0}', space=vmem, size = 0x8000, scoped, tag = 'input window, operand 7, single buffered']
    #allocation16 [shape = 's32[1]{0}', space=sflag, size = 0x4, scoped, tag = 'scoped memory for _lambda_.1']
    #allocation17 [shape = 'u8[512]{0}', space=vmem, size = 0x400, scoped, tag = 'input window, operand 8, single buffered']
    %16 = vsyncpa [#allocation5], 0
    %s17 = scalar_lea.sflag [#allocation5], 1
    %18 = vsyncpa %s17, 0
    %19 = vsyncpa [#allocation7], 0
    %s20 = scalar_lea.sflag [#allocation7], 1
    %21 = vsyncpa %s20, 0
    %22 = vsyncpa [#allocation10], 0
    %23 = vsyncpa [#allocation13], 0
    %24 = vsyncpa [#allocation16], 0
    loop: start=0, step=1, limit=4
    $region2: #{_lambda_.1} parent=1 // loop_pre_header
      _
    $region3: #{_lambda_.1} parent=1 // loop_header
      %s26 = sphi 0, %s30
      %p27 = scmp.ge.s32.totalorder %s26, 4
      %s33 = sphi 0, %s45
      %s34 = sphi 0, %s41
      %s35 = sphi 0, %s33
      %s36 = sphi 0, %s34
      %s37 = sphi 0, %s35
      %s38 = sphi 0, %s36
      %s50 = sphi 0, %s52
      %s53 = sphi 0, %s50
      %s54 = sphi 0, %s53
      %s70 = sphi 0, %s54
      %s78 = sphi 0, %s80
      %s81 = sphi 0, %s78
      %s82 = sphi 0, %s81
      %s98 = sphi 0, %s82
      %s102 = sphi 0, %s102
      %s104 = sphi 0, %s102
      %s105 = sphi 0, %s104
      %s119 = sphi 0, %s105
      %s123 = sphi 0, %s123
      %s125 = sphi 0, %s123
      %s126 = sphi 0, %s125
      %s140 = sphi 0, %s126
      %s144 = sphi 0, %s144
      %s146 = sphi 0, %s144
      %s147 = sphi 0, %s146
      %s161 = sphi 0, %s147
      %s165 = sphi 0, %s165
      %s167 = sphi 0, %s165
      %s168 = sphi 0, %s167
      %s182 = sphi 0, %s168
      %s186 = sphi 0, %s186
      %s188 = sphi 0, %s186
      %s189 = sphi 0, %s188
      %s203 = sphi 0, %s189
      %s207 = sphi 0, %s207
      %s209 = sphi 0, %s207
      %s210 = sphi 0, %s209
      %s224 = sphi 0, %s210
      %s228 = sphi 0, %s228
      %s230 = sphi 0, %s228
      %s231 = sphi 0, %s230
      %s245 = sphi 0, %s231
      %s249 = sphi 0, %s249
      %s251 = sphi 0, %s249
      %s252 = sphi 0, %s251
      %s266 = sphi 0, %s252
      %s270 = sphi 0, %s270
      %s272 = sphi 0, %s270
      %s273 = sphi 0, %s272
      %s287 = sphi 0, %s273
      %s293 = sphi 0, %s295
      %s296 = sphi 0, %s293
      %s297 = sphi 0, %s296
      %s313 = sphi 0, %s297
    $region4: #{_lambda_.1} parent=1 // loop_header_branch
      %29 = sbr.rel (%p27) target = $region8
    $region5: #{_lambda_.1} parent=1 // loop_body
      %s31 = ssub.s32 %s26, 1
      %s32 = ssub.s32 %s26, 2
      %s39 = sadd.s32 1, %s34
      %p40 = scmp.ge.s32.totalorder %s39, 1
      %s41 = scalar_select %p40, 0, %s39
      %s42 = sadd.s32 1, %s33
      %s43 = scalar_select %p40, %s42, %s33
      %p44 = scmp.ge.s32.totalorder %s43, 2
      %s45 = scalar_select %p44, 0, %s43
      %s46 = ssub.s32 %s33, %s45
      %s47 = ssub.s32 %s34, %s41
      %s48 = sor.u32 %s46, %s47
      %p49 = scmp.eq.s32.totalorder %s48, 0
      %s51 = sadd.s32 %s50, 1
      %s52 = scalar_select %p49, %s50, %s51
      %p55 = pneg %p49
      %p56 = scmp.eq.s32.totalorder %s26, 1
      %p57 = por %p55, %p56
      %p58 = scmp.ne.s32.totalorder %s50, %s53
      %p59 = scmp.eq.s32.totalorder %s26, 0
      %p60 = por %p58, %p59
      %p61 = scmp.ne.s32.totalorder %s50, %s53
      %p62 = scmp.eq.s32.totalorder %s31, 1
      %p63 = por %p61, %p62
      %p64 = scmp.ne.s32.totalorder %s53, %s54
      %p65 = scmp.eq.s32.totalorder %s31, 0
      %p66 = por %p64, %p65
      %p67 = scmp.ne.s32.totalorder %s53, %s54
      %p68 = scmp.eq.s32.totalorder %s32, 1
      %p69 = por %p67, %p68
      %p71 = scmp.ne.s32.totalorder %s54, %s70
      %p72 = scmp.eq.s32.totalorder %s32, 0
      %p73 = por %p71, %p72
      %s74 = ssub.s32 %s33, %s45
      %s75 = ssub.s32 %s34, %s41
      %s76 = sor.u32 %s74, %s75
      %p77 = scmp.eq.s32.totalorder %s76, 0
      %s79 = sadd.s32 %s78, 1
      %s80 = scalar_select %p77, %s78, %s79
      %p83 = pneg %p77
      %p84 = scmp.eq.s32.totalorder %s26, 1
      %p85 = por %p83, %p84
      %p86 = scmp.ne.s32.totalorder %s78, %s81
      %p87 = scmp.eq.s32.totalorder %s26, 0
      %p88 = por %p86, %p87
      %p89 = scmp.ne.s32.totalorder %s78, %s81
      %p90 = scmp.eq.s32.totalorder %s31, 1
      %p91 = por %p89, %p90
      %p92 = scmp.ne.s32.totalorder %s81, %s82
      %p93 = scmp.eq.s32.totalorder %s31, 0
      %p94 = por %p92, %p93
      %p95 = scmp.ne.s32.totalorder %s81, %s82
      %p96 = scmp.eq.s32.totalorder %s32, 1
      %p97 = por %p95, %p96
      %p99 = scmp.ne.s32.totalorder %s82, %s98
      %p100 = scmp.eq.s32.totalorder %s32, 0
      %p101 = por %p99, %p100
      %s103 = sadd.s32 %s102, 1
      %p106 = scmp.eq.s32.totalorder %s26, 1
      %p107 = scmp.ne.s32.totalorder %s102, %s104
      %p108 = scmp.eq.s32.totalorder %s26, 0
      %p109 = por %p107, %p108
      %p110 = scmp.ne.s32.totalorder %s102, %s104
      %p111 = scmp.eq.s32.totalorder %s31, 1
      %p112 = por %p110, %p111
      %p113 = scmp.ne.s32.totalorder %s104, %s105
      %p114 = scmp.eq.s32.totalorder %s31, 0
      %p115 = por %p113, %p114
      %p116 = scmp.ne.s32.totalorder %s104, %s105
      %p117 = scmp.eq.s32.totalorder %s32, 1
      %p118 = por %p116, %p117
      %p120 = scmp.ne.s32.totalorder %s105, %s119
      %p121 = scmp.eq.s32.totalorder %s32, 0
      %p122 = por %p120, %p121
      %s124 = sadd.s32 %s123, 1
      %p127 = scmp.eq.s32.totalorder %s26, 1
      %p128 = scmp.ne.s32.totalorder %s123, %s125
      %p129 = scmp.eq.s32.totalorder %s26, 0
      %p130 = por %p128, %p129
      %p131 = scmp.ne.s32.totalorder %s123, %s125
      %p132 = scmp.eq.s32.totalorder %s31, 1
      %p133 = por %p131, %p132
      %p134 = scmp.ne.s32.totalorder %s125, %s126
      %p135 = scmp.eq.s32.totalorder %s31, 0
      %p136 = por %p134, %p135
      %p137 = scmp.ne.s32.totalorder %s125, %s126
      %p138 = scmp.eq.s32.totalorder %s32, 1
      %p139 = por %p137, %p138
      %p141 = scmp.ne.s32.totalorder %s126, %s140
      %p142 = scmp.eq.s32.totalorder %s32, 0
      %p143 = por %p141, %p142
      %s145 = sadd.s32 %s144, 1
      %p148 = scmp.eq.s32.totalorder %s26, 1
      %p149 = scmp.ne.s32.totalorder %s144, %s146
      %p150 = scmp.eq.s32.totalorder %s26, 0
      %p151 = por %p149, %p150
      %p152 = scmp.ne.s32.totalorder %s144, %s146
      %p153 = scmp.eq.s32.totalorder %s31, 1
      %p154 = por %p152, %p153
      %p155 = scmp.ne.s32.totalorder %s146, %s147
      %p156 = scmp.eq.s32.totalorder %s31, 0
      %p157 = por %p155, %p156
      %p158 = scmp.ne.s32.totalorder %s146, %s147
      %p159 = scmp.eq.s32.totalorder %s32, 1
      %p160 = por %p158, %p159
      %p162 = scmp.ne.s32.totalorder %s147, %s161
      %p163 = scmp.eq.s32.totalorder %s32, 0
      %p164 = por %p162, %p163
      %s166 = sadd.s32 %s165, 1
      %p169 = scmp.eq.s32.totalorder %s26, 1
      %p170 = scmp.ne.s32.totalorder %s165, %s167
      %p171 = scmp.eq.s32.totalorder %s26, 0
      %p172 = por %p170, %p171
      %p173 = scmp.ne.s32.totalorder %s165, %s167
      %p174 = scmp.eq.s32.totalorder %s31, 1
      %p175 = por %p173, %p174
      %p176 = scmp.ne.s32.totalorder %s167, %s168
      %p177 = scmp.eq.s32.totalorder %s31, 0
      %p178 = por %p176, %p177
      %p179 = scmp.ne.s32.totalorder %s167, %s168
      %p180 = scmp.eq.s32.totalorder %s32, 1
      %p181 = por %p179, %p180
      %p183 = scmp.ne.s32.totalorder %s168, %s182
      %p184 = scmp.eq.s32.totalorder %s32, 0
      %p185 = por %p183, %p184
      %s187 = sadd.s32 %s186, 1
      %p190 = scmp.eq.s32.totalorder %s26, 1
      %p191 = scmp.ne.s32.totalorder %s186, %s188
      %p192 = scmp.eq.s32.totalorder %s26, 0
      %p193 = por %p191, %p192
      %p194 = scmp.ne.s32.totalorder %s186, %s188
      %p195 = scmp.eq.s32.totalorder %s31, 1
      %p196 = por %p194, %p195
      %p197 = scmp.ne.s32.totalorder %s188, %s189
      %p198 = scmp.eq.s32.totalorder %s31, 0
      %p199 = por %p197, %p198
      %p200 = scmp.ne.s32.totalorder %s188, %s189
      %p201 = scmp.eq.s32.totalorder %s32, 1
      %p202 = por %p200, %p201
      %p204 = scmp.ne.s32.totalorder %s189, %s203
      %p205 = scmp.eq.s32.totalorder %s32, 0
      %p206 = por %p204, %p205
      %s208 = sadd.s32 %s207, 1
      %p211 = scmp.eq.s32.totalorder %s26, 1
      %p212 = scmp.ne.s32.totalorder %s207, %s209
      %p213 = scmp.eq.s32.totalorder %s26, 0
      %p214 = por %p212, %p213
      %p215 = scmp.ne.s32.totalorder %s207, %s209
      %p216 = scmp.eq.s32.totalorder %s31, 1
      %p217 = por %p215, %p216
      %p218 = scmp.ne.s32.totalorder %s209, %s210
      %p219 = scmp.eq.s32.totalorder %s31, 0
      %p220 = por %p218, %p219
      %p221 = scmp.ne.s32.totalorder %s209, %s210
      %p222 = scmp.eq.s32.totalorder %s32, 1
      %p223 = por %p221, %p222
      %p225 = scmp.ne.s32.totalorder %s210, %s224
      %p226 = scmp.eq.s32.totalorder %s32, 0
      %p227 = por %p225, %p226
      %s229 = sadd.s32 %s228, 1
      %p232 = scmp.eq.s32.totalorder %s26, 1
      %p233 = scmp.ne.s32.totalorder %s228, %s230
      %p234 = scmp.eq.s32.totalorder %s26, 0
      %p235 = por %p233, %p234
      %p236 = scmp.ne.s32.totalorder %s228, %s230
      %p237 = scmp.eq.s32.totalorder %s31, 1
      %p238 = por %p236, %p237
      %p239 = scmp.ne.s32.totalorder %s230, %s231
      %p240 = scmp.eq.s32.totalorder %s31, 0
      %p241 = por %p239, %p240
      %p242 = scmp.ne.s32.totalorder %s230, %s231
      %p243 = scmp.eq.s32.totalorder %s32, 1
      %p244 = por %p242, %p243
      %p246 = scmp.ne.s32.totalorder %s231, %s245
      %p247 = scmp.eq.s32.totalorder %s32, 0
      %p248 = por %p246, %p247
      %s250 = sadd.s32 %s249, 1
      %p253 = scmp.eq.s32.totalorder %s26, 1
      %p254 = scmp.ne.s32.totalorder %s249, %s251
      %p255 = scmp.eq.s32.totalorder %s26, 0
      %p256 = por %p254, %p255
      %p257 = scmp.ne.s32.totalorder %s249, %s251
      %p258 = scmp.eq.s32.totalorder %s31, 1
      %p259 = por %p257, %p258
      %p260 = scmp.ne.s32.totalorder %s251, %s252
      %p261 = scmp.eq.s32.totalorder %s31, 0
      %p262 = por %p260, %p261
      %p263 = scmp.ne.s32.totalorder %s251, %s252
      %p264 = scmp.eq.s32.totalorder %s32, 1
      %p265 = por %p263, %p264
      %p267 = scmp.ne.s32.totalorder %s252, %s266
      %p268 = scmp.eq.s32.totalorder %s32, 0
      %p269 = por %p267, %p268
      %s271 = sadd.s32 %s270, 1
      %p274 = scmp.eq.s32.totalorder %s26, 1
      %p275 = scmp.ne.s32.totalorder %s270, %s272
      %p276 = scmp.eq.s32.totalorder %s26, 0
      %p277 = por %p275, %p276
      %p278 = scmp.ne.s32.totalorder %s270, %s272
      %p279 = scmp.eq.s32.totalorder %s31, 1
      %p280 = por %p278, %p279
      %p281 = scmp.ne.s32.totalorder %s272, %s273
      %p282 = scmp.eq.s32.totalorder %s31, 0
      %p283 = por %p281, %p282
      %p284 = scmp.ne.s32.totalorder %s272, %s273
      %p285 = scmp.eq.s32.totalorder %s32, 1
      %p286 = por %p284, %p285
      %p288 = scmp.ne.s32.totalorder %s273, %s287
      %p289 = scmp.eq.s32.totalorder %s32, 0
      %p290 = por %p288, %p289
      %s291 = ssub.s32 %s33, %s45
      %p292 = scmp.eq.s32.totalorder %s291, 0
      %s294 = sadd.s32 %s293, 1
      %s295 = scalar_select %p292, %s293, %s294
      %p298 = pneg %p292
      %p299 = scmp.eq.s32.totalorder %s26, 1
      %p300 = por %p298, %p299
      %p301 = scmp.ne.s32.totalorder %s293, %s296
      %p302 = scmp.eq.s32.totalorder %s26, 0
      %p303 = por %p301, %p302
      %p304 = scmp.ne.s32.totalorder %s293, %s296
      %p305 = scmp.eq.s32.totalorder %s31, 1
      %p306 = por %p304, %p305
      %p307 = scmp.ne.s32.totalorder %s296, %s297
      %p308 = scmp.eq.s32.totalorder %s31, 0
      %p309 = por %p307, %p308
      %p310 = scmp.ne.s32.totalorder %s296, %s297
      %p311 = scmp.eq.s32.totalorder %s32, 1
      %p312 = por %p310, %p311
      %p314 = scmp.ne.s32.totalorder %s297, %s313
      %p315 = scmp.eq.s32.totalorder %s32, 0
      %p316 = por %p314, %p315
      %p317 = scmp.le.s32.totalorder 1, %s26
      %p318 = scmp.lt.s32.totalorder %s26, 3
      %p319 = pnand %p317, %p318
      %p320 = pneg %p319
      // Predicated region
      $region9: #{_lambda_.1} parent=5 // pred_check
        _
      $region10: #{_lambda_.1} parent=5 // pred_check_branch
        %322 = sbr.rel (%p319) target = $region12
      $region11: #{_lambda_.1} parent=5 // pred_region
        %s323 = ssub.s32 %s26, 1
        // Predicated region
        $region13: #{_lambda_.1} parent=11 // pred_check
          %p324 = pneg %p115
        $region14: #{_lambda_.1} parent=11 // pred_check_branch
          %326 = sbr.rel (%p324) target = $region16
        $region15: #{_lambda_.1} parent=11 // pred_region
          %s328 = ssub.s32 4096, 4096
          %329 = vsyncadd [#allocation7], %s328
          %s330 = sshll.u32 [#allocation8], 4
          %s331 = int_to_ptr.vmem [resolvable:$true] %s330
          %336 = dma.hbm_to_vmem [thread:$0]  %s2, 4096, %s331, [#allocation7], 128, 128, 8
        $region16: #{_lambda_.1} parent=11 // pred_fallthru
          _
        // Predicated region
        $region17: #{_lambda_.1} parent=11 // pred_check
          %p337 = pneg %p136
        $region18: #{_lambda_.1} parent=11 // pred_check_branch
          %339 = sbr.rel (%p337) target = $region20
        $region19: #{_lambda_.1} parent=11 // pred_region
          %s341 = ssub.s32 4096, 4096
          %342 = vsyncadd [#allocation10], %s341
          %s343 = sshll.u32 [#allocation9], 4
          %s344 = int_to_ptr.vmem [resolvable:$true] %s343
          %349 = dma.hbm_to_vmem [thread:$0]  %s3, 4096, %s344, [#allocation10], 128, 128, 8
        $region20: #{_lambda_.1} parent=11 // pred_fallthru
          _
        // Predicated region
        $region21: #{_lambda_.1} parent=11 // pred_check
          %p350 = pneg %p157
        $region22: #{_lambda_.1} parent=11 // pred_check_branch
          %352 = sbr.rel (%p350) target = $region24
        $region23: #{_lambda_.1} parent=11 // pred_region
          %s354 = ssub.s32 16, 16
          %355 = vsyncadd [#allocation10], %s354
          %s357 = sshll.u32 [#allocation11], 4
          %s358 = int_to_ptr.vmem [resolvable:$true] %s357
          %360 = dma.hbm_to_vmem [thread:$0]  %s4, 16, %s358, [#allocation10]
        $region24: #{_lambda_.1} parent=11 // pred_fallthru
          _
        // Predicated region
        $region25: #{_lambda_.1} parent=11 // pred_check
          %p361 = pneg %p178
        $region26: #{_lambda_.1} parent=11 // pred_check_branch
          %363 = sbr.rel (%p361) target = $region28
        $region27: #{_lambda_.1} parent=11 // pred_region
          %s365 = ssub.s32 2048, 2048
          %366 = vsyncadd [#allocation13], %s365
          %s367 = sshll.u32 [#allocation12], 4
          %s368 = int_to_ptr.vmem [resolvable:$true] %s367
          %373 = dma.hbm_to_vmem [thread:$0]  %s5, 2048, %s368, [#allocation13], 128, 128, 8
        $region28: #{_lambda_.1} parent=11 // pred_fallthru
          _
        // Predicated region
        $region29: #{_lambda_.1} parent=11 // pred_check
          %p374 = pneg %p199
        $region30: #{_lambda_.1} parent=11 // pred_check_branch
          %376 = sbr.rel (%p374) target = $region32
        $region31: #{_lambda_.1} parent=11 // pred_region
          %s378 = ssub.s32 16, 16
          %379 = vsyncadd [#allocation13], %s378
          %s381 = sshll.u32 [#allocation14], 4
          %s382 = int_to_ptr.vmem [resolvable:$true] %s381
          %384 = dma.hbm_to_vmem [thread:$0]  %s6, 16, %s382, [#allocation13]
        $region32: #{_lambda_.1} parent=11 // pred_fallthru
          _
        // Predicated region
        $region33: #{_lambda_.1} parent=11 // pred_check
          %p385 = pneg %p220
        $region34: #{_lambda_.1} parent=11 // pred_check_branch
          %387 = sbr.rel (%p385) target = $region36
        $region35: #{_lambda_.1} parent=11 // pred_region
          %s389 = ssub.s32 1024, 1024
          %390 = vsyncadd [#allocation16], %s389
          %s391 = sshll.u32 [#allocation15], 4
          %s392 = int_to_ptr.vmem [resolvable:$true] %s391
          %397 = dma.hbm_to_vmem [thread:$0]  %s7, 1024, %s392, [#allocation16], 128, 128, 8
        $region36: #{_lambda_.1} parent=11 // pred_fallthru
          _
        // Predicated region
        $region37: #{_lambda_.1} parent=11 // pred_check
          %p398 = pneg %p241
        $region38: #{_lambda_.1} parent=11 // pred_check_branch
          %400 = sbr.rel (%p398) target = $region40
        $region39: #{_lambda_.1} parent=11 // pred_region
          %s402 = ssub.s32 16, 16
          %403 = vsyncadd [#allocation16], %s402
          %s405 = sshll.u32 [#allocation17], 4
          %s406 = int_to_ptr.vmem [resolvable:$true] %s405
          %408 = dma.hbm_to_vmem [thread:$0]  %s8, 16, %s406, [#allocation16]
        $region40: #{_lambda_.1} parent=11 // pred_fallthru
          _
        // Predicated region
        $region41: #{_lambda_.1} parent=11 // pred_check
          %p409 = pneg %p262
        $region42: #{_lambda_.1} parent=11 // pred_check_branch
          %411 = sbr.rel (%p409) target = $region44
        $region43: #{_lambda_.1} parent=11 // pred_region
          _
        $region44: #{_lambda_.1} parent=11 // pred_fallthru
          _
        // Predicated region
        $region45: #{_lambda_.1} parent=11 // pred_check
          %p412 = pneg %p283
        $region46: #{_lambda_.1} parent=11 // pred_check_branch
          %414 = sbr.rel (%p412) target = $region48
        $region47: #{_lambda_.1} parent=11 // pred_region
          _
        $region48: #{_lambda_.1} parent=11 // pred_fallthru
          _
      $region12: #{_lambda_.1} parent=5 // pred_fallthru
        _
      %p415 = scmp.lt.s32.totalorder %s26, 2
      // Predicated region
      $region49: #{_lambda_.1} parent=5 // pred_check
        %p416 = pneg %p415
      $region50: #{_lambda_.1} parent=5 // pred_check_branch
        %418 = sbr.rel (%p416) target = $region52
      $region51: #{_lambda_.1} parent=5 // pred_region
        // Predicated region
        $region53: #{_lambda_.1} parent=51 // pred_check
          %p419 = pneg %p60
        $region54: #{_lambda_.1} parent=51 // pred_check_branch
          %421 = sbr.rel (%p419) target = $region56
        $region55: #{_lambda_.1} parent=51 // pred_region
          %s422 = sand.u32 %s50, 1
          %s423 = scalar_lea.sflag [#allocation5], %s422
          %s424 = sand.u32 %s50, 1
          %s425 = smul.addr %s424, 4096
          %s426 = scalar_lea.vmem [#allocation4], %s425
          %s427 = smul.u32 4, %s33
          %s428 = smul.u32 4, %s34
          %s430 = ssub.s32 65536, 65536
          %431 = vsyncadd %s423, %s430
          %s432 = smul.addr %s427, 128
          %s433 = sadd.s32 %s428, %s432
          %s434 = smul.addr %s433, 128
          %s435 = scalar_lea.hbm %s0, %s434
          %s436 = sshll.u32 %s426, 4
          %s437 = int_to_ptr.vmem [resolvable:$true] %s436
          %442 = dma.hbm_to_vmem [thread:$0]  %s435, 65536, %s437, %s423, 512, 512, 32
        $region56: #{_lambda_.1} parent=51 // pred_fallthru
          _
        // Predicated region
        $region57: #{_lambda_.1} parent=51 // pred_check
          %p443 = pneg %p88
        $region58: #{_lambda_.1} parent=51 // pred_check_branch
          %445 = sbr.rel (%p443) target = $region60
        $region59: #{_lambda_.1} parent=51 // pred_region
          %s446 = sand.u32 %s26, 1
          %s447 = scalar_lea.sflag [#allocation7], %s446
          %s448 = sand.u32 %s78, 1
          %s449 = smul.addr %s448, 4096
          %s450 = scalar_lea.vmem [#allocation6], %s449
          %s451 = smul.u32 4, %s33
          %s452 = smul.u32 4, %s34
          %s454 = ssub.s32 65536, 65536
          %455 = vsyncadd %s447, %s454
          %s456 = smul.addr %s451, 128
          %s457 = sadd.s32 %s452, %s456
          %s458 = smul.addr %s457, 128
          %s459 = scalar_lea.hbm %s1, %s458
          %s460 = sshll.u32 %s450, 4
          %s461 = int_to_ptr.vmem [resolvable:$true] %s460
          %466 = dma.hbm_to_vmem [thread:$0]  %s459, 65536, %s461, %s447, 512, 512, 32
        $region60: #{_lambda_.1} parent=51 // pred_fallthru
          _
      $region52: #{_lambda_.1} parent=5 // pred_fallthru
        _
      %p467 = scmp.le.s32.totalorder 1, %s26
      %p468 = scmp.lt.s32.totalorder %s26, 3
      %p469 = pnand %p467, %p468
      %p470 = pneg %p469
      // Predicated region
      $region61: #{_lambda_.1} parent=5 // pred_check
        _
      $region62: #{_lambda_.1} parent=5 // pred_check_branch
        %472 = sbr.rel (%p469) target = $region64
      $region63: #{_lambda_.1} parent=5 // pred_region
        %s473 = ssub.s32 %s26, 1
        %s474 = sand.u32 %s53, 1
        %s475 = scalar_lea.sflag [#allocation5], %s474
        %s476 = sand.u32 %s53, 1
        %s477 = smul.addr %s476, 4096
        %s478 = scalar_lea.vmem [#allocation4], %s477
        // Predicated region
        $region65: #{_lambda_.1} parent=63 // pred_check
          %p479 = pneg %p66
        $region66: #{_lambda_.1} parent=63 // pred_check_branch
          %481 = sbr.rel (%p479) target = $region68
        $region67: #{_lambda_.1} parent=63 // pred_region
          %482 = dma.done %s475, 65536
        $region68: #{_lambda_.1} parent=63 // pred_fallthru
          _
        %s483 = sand.u32 %s31, 1
        %s484 = scalar_lea.sflag [#allocation7], %s483
        %s485 = sand.u32 %s81, 1
        %s486 = smul.addr %s485, 4096
        %s487 = scalar_lea.vmem [#allocation6], %s486
        // Predicated region
        $region69: #{_lambda_.1} parent=63 // pred_check
          %p488 = pneg %p94
        $region70: #{_lambda_.1} parent=63 // pred_check_branch
          %490 = sbr.rel (%p488) target = $region72
        $region71: #{_lambda_.1} parent=63 // pred_region
          %491 = dma.done %s484, 65536
        $region72: #{_lambda_.1} parent=63 // pred_fallthru
          _
        // Predicated region
        $region73: #{_lambda_.1} parent=63 // pred_check
          %p492 = pneg %p115
        $region74: #{_lambda_.1} parent=63 // pred_check_branch
          %494 = sbr.rel (%p492) target = $region76
        $region75: #{_lambda_.1} parent=63 // pred_region
          %495 = dma.done [#allocation7], 4096
        $region76: #{_lambda_.1} parent=63 // pred_fallthru
          _
        // Predicated region
        $region77: #{_lambda_.1} parent=63 // pred_check
          %p496 = pneg %p136
        $region78: #{_lambda_.1} parent=63 // pred_check_branch
          %498 = sbr.rel (%p496) target = $region80
        $region79: #{_lambda_.1} parent=63 // pred_region
          %499 = dma.done [#allocation10], 4096
        $region80: #{_lambda_.1} parent=63 // pred_fallthru
          _
        // Predicated region
        $region81: #{_lambda_.1} parent=63 // pred_check
          %p500 = pneg %p157
        $region82: #{_lambda_.1} parent=63 // pred_check_branch
          %502 = sbr.rel (%p500) target = $region84
        $region83: #{_lambda_.1} parent=63 // pred_region
          %503 = dma.done [#allocation10], 16
        $region84: #{_lambda_.1} parent=63 // pred_fallthru
          _
        // Predicated region
        $region85: #{_lambda_.1} parent=63 // pred_check
          %p504 = pneg %p178
        $region86: #{_lambda_.1} parent=63 // pred_check_branch
          %506 = sbr.rel (%p504) target = $region88
        $region87: #{_lambda_.1} parent=63 // pred_region
          %507 = dma.done [#allocation13], 2048
        $region88: #{_lambda_.1} parent=63 // pred_fallthru
          _
        // Predicated region
        $region89: #{_lambda_.1} parent=63 // pred_check
          %p508 = pneg %p199
        $region90: #{_lambda_.1} parent=63 // pred_check_branch
          %510 = sbr.rel (%p508) target = $region92
        $region91: #{_lambda_.1} parent=63 // pred_region
          %511 = dma.done [#allocation13], 16
        $region92: #{_lambda_.1} parent=63 // pred_fallthru
          _
        // Predicated region
        $region93: #{_lambda_.1} parent=63 // pred_check
          %p512 = pneg %p220
        $region94: #{_lambda_.1} parent=63 // pred_check_branch
          %514 = sbr.rel (%p512) target = $region96
        $region95: #{_lambda_.1} parent=63 // pred_region
          %515 = dma.done [#allocation16], 1024
        $region96: #{_lambda_.1} parent=63 // pred_fallthru
          _
        // Predicated region
        $region97: #{_lambda_.1} parent=63 // pred_check
          %p516 = pneg %p241
        $region98: #{_lambda_.1} parent=63 // pred_check_branch
          %518 = sbr.rel (%p516) target = $region100
        $region99: #{_lambda_.1} parent=63 // pred_region
          %519 = dma.done [#allocation16], 16
        $region100: #{_lambda_.1} parent=63 // pred_fallthru
          _
        %s520 = sand.u32 %s53, 1
        %s521 = scalar_lea.sflag [#allocation5], %s520
        %s522 = sand.u32 %s53, 1
        %s523 = smul.addr %s522, 4096
        %s524 = scalar_lea.vmem [#allocation4], %s523
        %p525 = pneg %p66
        %p526 = pneg %p63
        %s527 = sand.u32 %s31, 1
        %s528 = scalar_lea.sflag [#allocation7], %s527
        %s529 = sand.u32 %s81, 1
        %s530 = smul.addr %s529, 4096
        %s531 = scalar_lea.vmem [#allocation6], %s530
        %p532 = pneg %p94
        %p533 = pneg %p91
        %p534 = pneg %p115
        %p535 = pneg %p112
        %p536 = pneg %p136
        %p537 = pneg %p133
        %p538 = pneg %p157
        %p539 = pneg %p154
        %p540 = pneg %p178
        %p541 = pneg %p175
        %p542 = pneg %p199
        %p543 = pneg %p196
        %p544 = pneg %p220
        %p545 = pneg %p217
        %p546 = pneg %p241
        %p547 = pneg %p238
        %p548 = pneg %p262
        %p549 = pneg %p259
        %p550 = pneg %p283
        %p551 = pneg %p280
        %p552 = pneg %p309
        %p553 = pneg %p306
        %p554 = scmp.lt.s32.totalorder %s35, 1
        %s555 = scalar_select %p554, %s35, 1
        %s556 = smul.addr %s555, 4
        %s557 = scalar_lea.vmem %s11, %s556
        %s558 = smul.u32 4, %s35
        %s559 = smul.u32 4, %s36
        %s560 = smul.u32 4, %s35
        %s561 = smul.u32 4, %s36
        %p562 = scmp.lt.s32.totalorder %s35, 1
        %s563 = scalar_select %p562, %s35, 1
        %s564 = smul.addr %s563, 4
        %s565 = scalar_lea.vmem %s11, %s564
        %p566 = scmp.eq.s32.totalorder %s36, 0
        // Predicated region
        $region101: #{_lambda_.1} parent=63 // pred_check
          %p567 = pneg %p566
        $region102: #{_lambda_.1} parent=63 // pred_check_branch
          %569 = sbr.rel (%p567) target = $region104
        $region103: #{_lambda_.1} parent=63 // pred_region
          %570 = vst [vmem:[#allocation2] sm:$0xff] -inf
          %571 = vst [vmem:[#allocation2 + $0x8] sm:$0xff] -inf
          %572 = vst [vmem:[#allocation2 + $0x10] sm:$0xff] -inf
          %573 = vst [vmem:[#allocation2 + $0x18] sm:$0xff] -inf
          %574 = vst [vmem:[#allocation2 + $0x20] sm:$0xff] -inf
          %575 = vst [vmem:[#allocation2 + $0x28] sm:$0xff] -inf
          %576 = vst [vmem:[#allocation2 + $0x30] sm:$0xff] -inf
          %577 = vst [vmem:[#allocation2 + $0x38] sm:$0xff] -inf
          %578 = vst [vmem:[#allocation2 + $0x40] sm:$0xff] -inf
          %579 = vst [vmem:[#allocation2 + $0x48] sm:$0xff] -inf
          %580 = vst [vmem:[#allocation2 + $0x50] sm:$0xff] -inf
          %581 = vst [vmem:[#allocation2 + $0x58] sm:$0xff] -inf
          %582 = vst [vmem:[#allocation2 + $0x60] sm:$0xff] -inf
          %583 = vst [vmem:[#allocation2 + $0x68] sm:$0xff] -inf
          %584 = vst [vmem:[#allocation2 + $0x70] sm:$0xff] -inf
          %585 = vst [vmem:[#allocation2 + $0x78] sm:$0xff] -inf
          %586 = vst [vmem:[#allocation2 + $0x80] sm:$0xff] -inf
          %587 = vst [vmem:[#allocation2 + $0x88] sm:$0xff] -inf
          %588 = vst [vmem:[#allocation2 + $0x90] sm:$0xff] -inf
          %589 = vst [vmem:[#allocation2 + $0x98] sm:$0xff] -inf
          %590 = vst [vmem:[#allocation2 + $0xa0] sm:$0xff] -inf
          %591 = vst [vmem:[#allocation2 + $0xa8] sm:$0xff] -inf
          %592 = vst [vmem:[#allocation2 + $0xb0] sm:$0xff] -inf
          %593 = vst [vmem:[#allocation2 + $0xb8] sm:$0xff] -inf
          %594 = vst [vmem:[#allocation2 + $0xc0] sm:$0xff] -inf
          %595 = vst [vmem:[#allocation2 + $0xc8] sm:$0xff] -inf
          %596 = vst [vmem:[#allocation2 + $0xd0] sm:$0xff] -inf
          %597 = vst [vmem:[#allocation2 + $0xd8] sm:$0xff] -inf
          %598 = vst [vmem:[#allocation2 + $0xe0] sm:$0xff] -inf
          %599 = vst [vmem:[#allocation2 + $0xe8] sm:$0xff] -inf
          %600 = vst [vmem:[#allocation2 + $0xf0] sm:$0xff] -inf
          %601 = vst [vmem:[#allocation2 + $0xf8] sm:$0xff] -inf
          %602 = vst [vmem:[#allocation2 + $0x100] sm:$0xff] -inf
          %603 = vst [vmem:[#allocation2 + $0x108] sm:$0xff] -inf
          %604 = vst [vmem:[#allocation2 + $0x110] sm:$0xff] -inf
          %605 = vst [vmem:[#allocation2 + $0x118] sm:$0xff] -inf
          %606 = vst [vmem:[#allocation2 + $0x120] sm:$0xff] -inf
          %607 = vst [vmem:[#allocation2 + $0x128] sm:$0xff] -inf
          %608 = vst [vmem:[#allocation2 + $0x130] sm:$0xff] -inf
          %609 = vst [vmem:[#allocation2 + $0x138] sm:$0xff] -inf
          %610 = vst [vmem:[#allocation2 + $0x140] sm:$0xff] -inf
          %611 = vst [vmem:[#allocation2 + $0x148] sm:$0xff] -inf
          %612 = vst [vmem:[#allocation2 + $0x150] sm:$0xff] -inf
          %613 = vst [vmem:[#allocation2 + $0x158] sm:$0xff] -inf
          %614 = vst [vmem:[#allocation2 + $0x160] sm:$0xff] -inf
          %615 = vst [vmem:[#allocation2 + $0x168] sm:$0xff] -inf
          %616 = vst [vmem:[#allocation2 + $0x170] sm:$0xff] -inf
          %617 = vst [vmem:[#allocation2 + $0x178] sm:$0xff] -inf
          %618 = vst [vmem:[#allocation2 + $0x180] sm:$0xff] -inf
          %619 = vst [vmem:[#allocation2 + $0x188] sm:$0xff] -inf
          %620 = vst [vmem:[#allocation2 + $0x190] sm:$0xff] -inf
          %621 = vst [vmem:[#allocation2 + $0x198] sm:$0xff] -inf
          %622 = vst [vmem:[#allocation2 + $0x1a0] sm:$0xff] -inf
          %623 = vst [vmem:[#allocation2 + $0x1a8] sm:$0xff] -inf
          %624 = vst [vmem:[#allocation2 + $0x1b0] sm:$0xff] -inf
          %625 = vst [vmem:[#allocation2 + $0x1b8] sm:$0xff] -inf
          %626 = vst [vmem:[#allocation2 + $0x1c0] sm:$0xff] -inf
          %627 = vst [vmem:[#allocation2 + $0x1c8] sm:$0xff] -inf
          %628 = vst [vmem:[#allocation2 + $0x1d0] sm:$0xff] -inf
          %629 = vst [vmem:[#allocation2 + $0x1d8] sm:$0xff] -inf
          %630 = vst [vmem:[#allocation2 + $0x1e0] sm:$0xff] -inf
          %631 = vst [vmem:[#allocation2 + $0x1e8] sm:$0xff] -inf
          %632 = vst [vmem:[#allocation2 + $0x1f0] sm:$0xff] -inf
          %633 = vst [vmem:[#allocation2 + $0x1f8] sm:$0xff] -inf
          %634 = vst [vmem:[#allocation2 + $0x200] sm:$0xff] -inf
          %635 = vst [vmem:[#allocation2 + $0x208] sm:$0xff] -inf
          %636 = vst [vmem:[#allocation2 + $0x210] sm:$0xff] -inf
          %637 = vst [vmem:[#allocation2 + $0x218] sm:$0xff] -inf
          %638 = vst [vmem:[#allocation2 + $0x220] sm:$0xff] -inf
          %639 = vst [vmem:[#allocation2 + $0x228] sm:$0xff] -inf
          %640 = vst [vmem:[#allocation2 + $0x230] sm:$0xff] -inf
          %641 = vst [vmem:[#allocation2 + $0x238] sm:$0xff] -inf
          %642 = vst [vmem:[#allocation2 + $0x240] sm:$0xff] -inf
          %643 = vst [vmem:[#allocation2 + $0x248] sm:$0xff] -inf
          %644 = vst [vmem:[#allocation2 + $0x250] sm:$0xff] -inf
          %645 = vst [vmem:[#allocation2 + $0x258] sm:$0xff] -inf
          %646 = vst [vmem:[#allocation2 + $0x260] sm:$0xff] -inf
          %647 = vst [vmem:[#allocation2 + $0x268] sm:$0xff] -inf
          %648 = vst [vmem:[#allocation2 + $0x270] sm:$0xff] -inf
          %649 = vst [vmem:[#allocation2 + $0x278] sm:$0xff] -inf
          %650 = vst [vmem:[#allocation2 + $0x280] sm:$0xff] -inf
          %651 = vst [vmem:[#allocation2 + $0x288] sm:$0xff] -inf
          %652 = vst [vmem:[#allocation2 + $0x290] sm:$0xff] -inf
          %653 = vst [vmem:[#allocation2 + $0x298] sm:$0xff] -inf
          %654 = vst [vmem:[#allocation2 + $0x2a0] sm:$0xff] -inf
          %655 = vst [vmem:[#allocation2 + $0x2a8] sm:$0xff] -inf
          %656 = vst [vmem:[#allocation2 + $0x2b0] sm:$0xff] -inf
          %657 = vst [vmem:[#allocation2 + $0x2b8] sm:$0xff] -inf
          %658 = vst [vmem:[#allocation2 + $0x2c0] sm:$0xff] -inf
          %659 = vst [vmem:[#allocation2 + $0x2c8] sm:$0xff] -inf
          %660 = vst [vmem:[#allocation2 + $0x2d0] sm:$0xff] -inf
          %661 = vst [vmem:[#allocation2 + $0x2d8] sm:$0xff] -inf
          %662 = vst [vmem:[#allocation2 + $0x2e0] sm:$0xff] -inf
          %663 = vst [vmem:[#allocation2 + $0x2e8] sm:$0xff] -inf
          %664 = vst [vmem:[#allocation2 + $0x2f0] sm:$0xff] -inf
          %665 = vst [vmem:[#allocation2 + $0x2f8] sm:$0xff] -inf
          %666 = vst [vmem:[#allocation2 + $0x300] sm:$0xff] -inf
          %667 = vst [vmem:[#allocation2 + $0x308] sm:$0xff] -inf
          %668 = vst [vmem:[#allocation2 + $0x310] sm:$0xff] -inf
          %669 = vst [vmem:[#allocation2 + $0x318] sm:$0xff] -inf
          %670 = vst [vmem:[#allocation2 + $0x320] sm:$0xff] -inf
          %671 = vst [vmem:[#allocation2 + $0x328] sm:$0xff] -inf
          %672 = vst [vmem:[#allocation2 + $0x330] sm:$0xff] -inf
          %673 = vst [vmem:[#allocation2 + $0x338] sm:$0xff] -inf
          %674 = vst [vmem:[#allocation2 + $0x340] sm:$0xff] -inf
          %675 = vst [vmem:[#allocation2 + $0x348] sm:$0xff] -inf
          %676 = vst [vmem:[#allocation2 + $0x350] sm:$0xff] -inf
          %677 = vst [vmem:[#allocation2 + $0x358] sm:$0xff] -inf
          %678 = vst [vmem:[#allocation2 + $0x360] sm:$0xff] -inf
          %679 = vst [vmem:[#allocation2 + $0x368] sm:$0xff] -inf
          %680 = vst [vmem:[#allocation2 + $0x370] sm:$0xff] -inf
          %681 = vst [vmem:[#allocation2 + $0x378] sm:$0xff] -inf
          %682 = vst [vmem:[#allocation2 + $0x380] sm:$0xff] -inf
          %683 = vst [vmem:[#allocation2 + $0x388] sm:$0xff] -inf
          %684 = vst [vmem:[#allocation2 + $0x390] sm:$0xff] -inf
          %685 = vst [vmem:[#allocation2 + $0x398] sm:$0xff] -inf
          %686 = vst [vmem:[#allocation2 + $0x3a0] sm:$0xff] -inf
          %687 = vst [vmem:[#allocation2 + $0x3a8] sm:$0xff] -inf
          %688 = vst [vmem:[#allocation2 + $0x3b0] sm:$0xff] -inf
          %689 = vst [vmem:[#allocation2 + $0x3b8] sm:$0xff] -inf
          %690 = vst [vmem:[#allocation2 + $0x3c0] sm:$0xff] -inf
          %691 = vst [vmem:[#allocation2 + $0x3c8] sm:$0xff] -inf
          %692 = vst [vmem:[#allocation2 + $0x3d0] sm:$0xff] -inf
          %693 = vst [vmem:[#allocation2 + $0x3d8] sm:$0xff] -inf
          %694 = vst [vmem:[#allocation2 + $0x3e0] sm:$0xff] -inf
          %695 = vst [vmem:[#allocation2 + $0x3e8] sm:$0xff] -inf
          %696 = vst [vmem:[#allocation2 + $0x3f0] sm:$0xff] -inf
          %697 = vst [vmem:[#allocation2 + $0x3f8] sm:$0xff] -inf
          %698 = vst [vmem:[#allocation3] sm:$0xff] -inf
          %699 = vst [vmem:[#allocation3 + $0x8] sm:$0xff] -inf
          %700 = vst [vmem:[#allocation3 + $0x10] sm:$0xff] -inf
          %701 = vst [vmem:[#allocation3 + $0x18] sm:$0xff] -inf
          %702 = vst [vmem:[#allocation3 + $0x20] sm:$0xff] -inf
          %703 = vst [vmem:[#allocation3 + $0x28] sm:$0xff] -inf
          %704 = vst [vmem:[#allocation3 + $0x30] sm:$0xff] -inf
          %705 = vst [vmem:[#allocation3 + $0x38] sm:$0xff] -inf
          %706 = vst [vmem:[#allocation3 + $0x40] sm:$0xff] -inf
          %707 = vst [vmem:[#allocation3 + $0x48] sm:$0xff] -inf
          %708 = vst [vmem:[#allocation3 + $0x50] sm:$0xff] -inf
          %709 = vst [vmem:[#allocation3 + $0x58] sm:$0xff] -inf
          %710 = vst [vmem:[#allocation3 + $0x60] sm:$0xff] -inf
          %711 = vst [vmem:[#allocation3 + $0x68] sm:$0xff] -inf
          %712 = vst [vmem:[#allocation3 + $0x70] sm:$0xff] -inf
          %713 = vst [vmem:[#allocation3 + $0x78] sm:$0xff] -inf
          %714 = vst [vmem:[#allocation3 + $0x80] sm:$0xff] -inf
          %715 = vst [vmem:[#allocation3 + $0x88] sm:$0xff] -inf
          %716 = vst [vmem:[#allocation3 + $0x90] sm:$0xff] -inf
          %717 = vst [vmem:[#allocation3 + $0x98] sm:$0xff] -inf
          %718 = vst [vmem:[#allocation3 + $0xa0] sm:$0xff] -inf
          %719 = vst [vmem:[#allocation3 + $0xa8] sm:$0xff] -inf
          %720 = vst [vmem:[#allocation3 + $0xb0] sm:$0xff] -inf
          %721 = vst [vmem:[#allocation3 + $0xb8] sm:$0xff] -inf
          %722 = vst [vmem:[#allocation3 + $0xc0] sm:$0xff] -inf
          %723 = vst [vmem:[#allocation3 + $0xc8] sm:$0xff] -inf
          %724 = vst [vmem:[#allocation3 + $0xd0] sm:$0xff] -inf
          %725 = vst [vmem:[#allocation3 + $0xd8] sm:$0xff] -inf
          %726 = vst [vmem:[#allocation3 + $0xe0] sm:$0xff] -inf
          %727 = vst [vmem:[#allocation3 + $0xe8] sm:$0xff] -inf
          %728 = vst [vmem:[#allocation3 + $0xf0] sm:$0xff] -inf
          %729 = vst [vmem:[#allocation3 + $0xf8] sm:$0xff] -inf
          %730 = vst [vmem:[#allocation3 + $0x100] sm:$0xff] -inf
          %731 = vst [vmem:[#allocation3 + $0x108] sm:$0xff] -inf
          %732 = vst [vmem:[#allocation3 + $0x110] sm:$0xff] -inf
          %733 = vst [vmem:[#allocation3 + $0x118] sm:$0xff] -inf
          %734 = vst [vmem:[#allocation3 + $0x120] sm:$0xff] -inf
          %735 = vst [vmem:[#allocation3 + $0x128] sm:$0xff] -inf
          %736 = vst [vmem:[#allocation3 + $0x130] sm:$0xff] -inf
          %737 = vst [vmem:[#allocation3 + $0x138] sm:$0xff] -inf
          %738 = vst [vmem:[#allocation3 + $0x140] sm:$0xff] -inf
          %739 = vst [vmem:[#allocation3 + $0x148] sm:$0xff] -inf
          %740 = vst [vmem:[#allocation3 + $0x150] sm:$0xff] -inf
          %741 = vst [vmem:[#allocation3 + $0x158] sm:$0xff] -inf
          %742 = vst [vmem:[#allocation3 + $0x160] sm:$0xff] -inf
          %743 = vst [vmem:[#allocation3 + $0x168] sm:$0xff] -inf
          %744 = vst [vmem:[#allocation3 + $0x170] sm:$0xff] -inf
          %745 = vst [vmem:[#allocation3 + $0x178] sm:$0xff] -inf
          %746 = vst [vmem:[#allocation3 + $0x180] sm:$0xff] -inf
          %747 = vst [vmem:[#allocation3 + $0x188] sm:$0xff] -inf
          %748 = vst [vmem:[#allocation3 + $0x190] sm:$0xff] -inf
          %749 = vst [vmem:[#allocation3 + $0x198] sm:$0xff] -inf
          %750 = vst [vmem:[#allocation3 + $0x1a0] sm:$0xff] -inf
          %751 = vst [vmem:[#allocation3 + $0x1a8] sm:$0xff] -inf
          %752 = vst [vmem:[#allocation3 + $0x1b0] sm:$0xff] -inf
          %753 = vst [vmem:[#allocation3 + $0x1b8] sm:$0xff] -inf
          %754 = vst [vmem:[#allocation3 + $0x1c0] sm:$0xff] -inf
          %755 = vst [vmem:[#allocation3 + $0x1c8] sm:$0xff] -inf
          %756 = vst [vmem:[#allocation3 + $0x1d0] sm:$0xff] -inf
          %757 = vst [vmem:[#allocation3 + $0x1d8] sm:$0xff] -inf
          %758 = vst [vmem:[#allocation3 + $0x1e0] sm:$0xff] -inf
          %759 = vst [vmem:[#allocation3 + $0x1e8] sm:$0xff] -inf
          %760 = vst [vmem:[#allocation3 + $0x1f0] sm:$0xff] -inf
          %761 = vst [vmem:[#allocation3 + $0x1f8] sm:$0xff] -inf
          %762 = vst [vmem:[#allocation3 + $0x200] sm:$0xff] -inf
          %763 = vst [vmem:[#allocation3 + $0x208] sm:$0xff] -inf
          %764 = vst [vmem:[#allocation3 + $0x210] sm:$0xff] -inf
          %765 = vst [vmem:[#allocation3 + $0x218] sm:$0xff] -inf
          %766 = vst [vmem:[#allocation3 + $0x220] sm:$0xff] -inf
          %767 = vst [vmem:[#allocation3 + $0x228] sm:$0xff] -inf
          %768 = vst [vmem:[#allocation3 + $0x230] sm:$0xff] -inf
          %769 = vst [vmem:[#allocation3 + $0x238] sm:$0xff] -inf
          %770 = vst [vmem:[#allocation3 + $0x240] sm:$0xff] -inf
          %771 = vst [vmem:[#allocation3 + $0x248] sm:$0xff] -inf
          %772 = vst [vmem:[#allocation3 + $0x250] sm:$0xff] -inf
          %773 = vst [vmem:[#allocation3 + $0x258] sm:$0xff] -inf
          %774 = vst [vmem:[#allocation3 + $0x260] sm:$0xff] -inf
          %775 = vst [vmem:[#allocation3 + $0x268] sm:$0xff] -inf
          %776 = vst [vmem:[#allocation3 + $0x270] sm:$0xff] -inf
          %777 = vst [vmem:[#allocation3 + $0x278] sm:$0xff] -inf
          %778 = vst [vmem:[#allocation3 + $0x280] sm:$0xff] -inf
          %779 = vst [vmem:[#allocation3 + $0x288] sm:$0xff] -inf
          %780 = vst [vmem:[#allocation3 + $0x290] sm:$0xff] -inf
          %781 = vst [vmem:[#allocation3 + $0x298] sm:$0xff] -inf
          %782 = vst [vmem:[#allocation3 + $0x2a0] sm:$0xff] -inf
          %783 = vst [vmem:[#allocation3 + $0x2a8] sm:$0xff] -inf
          %784 = vst [vmem:[#allocation3 + $0x2b0] sm:$0xff] -inf
          %785 = vst [vmem:[#allocation3 + $0x2b8] sm:$0xff] -inf
          %786 = vst [vmem:[#allocation3 + $0x2c0] sm:$0xff] -inf
          %787 = vst [vmem:[#allocation3 + $0x2c8] sm:$0xff] -inf
          %788 = vst [vmem:[#allocation3 + $0x2d0] sm:$0xff] -inf
          %789 = vst [vmem:[#allocation3 + $0x2d8] sm:$0xff] -inf
          %790 = vst [vmem:[#allocation3 + $0x2e0] sm:$0xff] -inf
          %791 = vst [vmem:[#allocation3 + $0x2e8] sm:$0xff] -inf
          %792 = vst [vmem:[#allocation3 + $0x2f0] sm:$0xff] -inf
          %793 = vst [vmem:[#allocation3 + $0x2f8] sm:$0xff] -inf
          %794 = vst [vmem:[#allocation3 + $0x300] sm:$0xff] -inf
          %795 = vst [vmem:[#allocation3 + $0x308] sm:$0xff] -inf
          %796 = vst [vmem:[#allocation3 + $0x310] sm:$0xff] -inf
          %797 = vst [vmem:[#allocation3 + $0x318] sm:$0xff] -inf
          %798 = vst [vmem:[#allocation3 + $0x320] sm:$0xff] -inf
          %799 = vst [vmem:[#allocation3 + $0x328] sm:$0xff] -inf
          %800 = vst [vmem:[#allocation3 + $0x330] sm:$0xff] -inf
          %801 = vst [vmem:[#allocation3 + $0x338] sm:$0xff] -inf
          %802 = vst [vmem:[#allocation3 + $0x340] sm:$0xff] -inf
          %803 = vst [vmem:[#allocation3 + $0x348] sm:$0xff] -inf
          %804 = vst [vmem:[#allocation3 + $0x350] sm:$0xff] -inf
          %805 = vst [vmem:[#allocation3 + $0x358] sm:$0xff] -inf
          %806 = vst [vmem:[#allocation3 + $0x360] sm:$0xff] -inf
          %807 = vst [vmem:[#allocation3 + $0x368] sm:$0xff] -inf
          %808 = vst [vmem:[#allocation3 + $0x370] sm:$0xff] -inf
          %809 = vst [vmem:[#allocation3 + $0x378] sm:$0xff] -inf
          %810 = vst [vmem:[#allocation3 + $0x380] sm:$0xff] -inf
          %811 = vst [vmem:[#allocation3 + $0x388] sm:$0xff] -inf
          %812 = vst [vmem:[#allocation3 + $0x390] sm:$0xff] -inf
          %813 = vst [vmem:[#allocation3 + $0x398] sm:$0xff] -inf
          %814 = vst [vmem:[#allocation3 + $0x3a0] sm:$0xff] -inf
          %815 = vst [vmem:[#allocation3 + $0x3a8] sm:$0xff] -inf
          %816 = vst [vmem:[#allocation3 + $0x3b0] sm:$0xff] -inf
          %817 = vst [vmem:[#allocation3 + $0x3b8] sm:$0xff] -inf
          %818 = vst [vmem:[#allocation3 + $0x3c0] sm:$0xff] -inf
          %819 = vst [vmem:[#allocation3 + $0x3c8] sm:$0xff] -inf
          %820 = vst [vmem:[#allocation3 + $0x3d0] sm:$0xff] -inf
          %821 = vst [vmem:[#allocation3 + $0x3d8] sm:$0xff] -inf
          %822 = vst [vmem:[#allocation3 + $0x3e0] sm:$0xff] -inf
          %823 = vst [vmem:[#allocation3 + $0x3e8] sm:$0xff] -inf
          %824 = vst [vmem:[#allocation3 + $0x3f0] sm:$0xff] -inf
          %825 = vst [vmem:[#allocation3 + $0x3f8] sm:$0xff] -inf
        $region104: #{_lambda_.1} parent=63 // pred_fallthru
          _
        %v826 = vld [vmem:[#allocation2] sm:$0xff]
        %v827 = vld [vmem:[#allocation2 + $0x8] sm:$0xff]
        %v828 = vld [vmem:[#allocation2 + $0x10] sm:$0xff]
        %v829 = vld [vmem:[#allocation2 + $0x18] sm:$0xff]
        %v830 = vld [vmem:[#allocation2 + $0x20] sm:$0xff]
        %v831 = vld [vmem:[#allocation2 + $0x28] sm:$0xff]
        %v832 = vld [vmem:[#allocation2 + $0x30] sm:$0xff]
        %v833 = vld [vmem:[#allocation2 + $0x38] sm:$0xff]
        %v834 = vld [vmem:[#allocation2 + $0x40] sm:$0xff]
        %v835 = vld [vmem:[#allocation2 + $0x48] sm:$0xff]
        %v836 = vld [vmem:[#allocation2 + $0x50] sm:$0xff]
        %v837 = vld [vmem:[#allocation2 + $0x58] sm:$0xff]
        %v838 = vld [vmem:[#allocation2 + $0x60] sm:$0xff]
        %v839 = vld [vmem:[#allocation2 + $0x68] sm:$0xff]
        %v840 = vld [vmem:[#allocation2 + $0x70] sm:$0xff]
        %v841 = vld [vmem:[#allocation2 + $0x78] sm:$0xff]
        %v842 = vld [vmem:[#allocation2 + $0x80] sm:$0xff]
        %v843 = vld [vmem:[#allocation2 + $0x88] sm:$0xff]
        %v844 = vld [vmem:[#allocation2 + $0x90] sm:$0xff]
        %v845 = vld [vmem:[#allocation2 + $0x98] sm:$0xff]
        %v846 = vld [vmem:[#allocation2 + $0xa0] sm:$0xff]
        %v847 = vld [vmem:[#allocation2 + $0xa8] sm:$0xff]
        %v848 = vld [vmem:[#allocation2 + $0xb0] sm:$0xff]
        %v849 = vld [vmem:[#allocation2 + $0xb8] sm:$0xff]
        %v850 = vld [vmem:[#allocation2 + $0xc0] sm:$0xff]
        %v851 = vld [vmem:[#allocation2 + $0xc8] sm:$0xff]
        %v852 = vld [vmem:[#allocation2 + $0xd0] sm:$0xff]
        %v853 = vld [vmem:[#allocation2 + $0xd8] sm:$0xff]
        %v854 = vld [vmem:[#allocation2 + $0xe0] sm:$0xff]
        %v855 = vld [vmem:[#allocation2 + $0xe8] sm:$0xff]
        %v856 = vld [vmem:[#allocation2 + $0xf0] sm:$0xff]
        %v857 = vld [vmem:[#allocation2 + $0xf8] sm:$0xff]
        %v858 = vld [vmem:[#allocation2 + $0x100] sm:$0xff]
        %v859 = vld [vmem:[#allocation2 + $0x108] sm:$0xff]
        %v860 = vld [vmem:[#allocation2 + $0x110] sm:$0xff]
        %v861 = vld [vmem:[#allocation2 + $0x118] sm:$0xff]
        %v862 = vld [vmem:[#allocation2 + $0x120] sm:$0xff]
        %v863 = vld [vmem:[#allocation2 + $0x128] sm:$0xff]
        %v864 = vld [vmem:[#allocation2 + $0x130] sm:$0xff]
        %v865 = vld [vmem:[#allocation2 + $0x138] sm:$0xff]
        %v866 = vld [vmem:[#allocation2 + $0x140] sm:$0xff]
        %v867 = vld [vmem:[#allocation2 + $0x148] sm:$0xff]
        %v868 = vld [vmem:[#allocation2 + $0x150] sm:$0xff]
        %v869 = vld [vmem:[#allocation2 + $0x158] sm:$0xff]
        %v870 = vld [vmem:[#allocation2 + $0x160] sm:$0xff]
        %v871 = vld [vmem:[#allocation2 + $0x168] sm:$0xff]
        %v872 = vld [vmem:[#allocation2 + $0x170] sm:$0xff]
        %v873 = vld [vmem:[#allocation2 + $0x178] sm:$0xff]
        %v874 = vld [vmem:[#allocation2 + $0x180] sm:$0xff]
        %v875 = vld [vmem:[#allocation2 + $0x188] sm:$0xff]
        %v876 = vld [vmem:[#allocation2 + $0x190] sm:$0xff]
        %v877 = vld [vmem:[#allocation2 + $0x198] sm:$0xff]
        %v878 = vld [vmem:[#allocation2 + $0x1a0] sm:$0xff]
        %v879 = vld [vmem:[#allocation2 + $0x1a8] sm:$0xff]
        %v880 = vld [vmem:[#allocation2 + $0x1b0] sm:$0xff]
        %v881 = vld [vmem:[#allocation2 + $0x1b8] sm:$0xff]
        %v882 = vld [vmem:[#allocation2 + $0x1c0] sm:$0xff]
        %v883 = vld [vmem:[#allocation2 + $0x1c8] sm:$0xff]
        %v884 = vld [vmem:[#allocation2 + $0x1d0] sm:$0xff]
        %v885 = vld [vmem:[#allocation2 + $0x1d8] sm:$0xff]
        %v886 = vld [vmem:[#allocation2 + $0x1e0] sm:$0xff]
        %v887 = vld [vmem:[#allocation2 + $0x1e8] sm:$0xff]
        %v888 = vld [vmem:[#allocation2 + $0x1f0] sm:$0xff]
        %v889 = vld [vmem:[#allocation2 + $0x1f8] sm:$0xff]
        %v890 = vld [vmem:[#allocation2 + $0x200] sm:$0xff]
        %v891 = vld [vmem:[#allocation2 + $0x208] sm:$0xff]
        %v892 = vld [vmem:[#allocation2 + $0x210] sm:$0xff]
        %v893 = vld [vmem:[#allocation2 + $0x218] sm:$0xff]
        %v894 = vld [vmem:[#allocation2 + $0x220] sm:$0xff]
        %v895 = vld [vmem:[#allocation2 + $0x228] sm:$0xff]
        %v896 = vld [vmem:[#allocation2 + $0x230] sm:$0xff]
        %v897 = vld [vmem:[#allocation2 + $0x238] sm:$0xff]
        %v898 = vld [vmem:[#allocation2 + $0x240] sm:$0xff]
        %v899 = vld [vmem:[#allocation2 + $0x248] sm:$0xff]
        %v900 = vld [vmem:[#allocation2 + $0x250] sm:$0xff]
        %v901 = vld [vmem:[#allocation2 + $0x258] sm:$0xff]
        %v902 = vld [vmem:[#allocation2 + $0x260] sm:$0xff]
        %v903 = vld [vmem:[#allocation2 + $0x268] sm:$0xff]
        %v904 = vld [vmem:[#allocation2 + $0x270] sm:$0xff]
        %v905 = vld [vmem:[#allocation2 + $0x278] sm:$0xff]
        %v906 = vld [vmem:[#allocation2 + $0x280] sm:$0xff]
        %v907 = vld [vmem:[#allocation2 + $0x288] sm:$0xff]
        %v908 = vld [vmem:[#allocation2 + $0x290] sm:$0xff]
        %v909 = vld [vmem:[#allocation2 + $0x298] sm:$0xff]
        %v910 = vld [vmem:[#allocation2 + $0x2a0] sm:$0xff]
        %v911 = vld [vmem:[#allocation2 + $0x2a8] sm:$0xff]
        %v912 = vld [vmem:[#allocation2 + $0x2b0] sm:$0xff]
        %v913 = vld [vmem:[#allocation2 + $0x2b8] sm:$0xff]
        %v914 = vld [vmem:[#allocation2 + $0x2c0] sm:$0xff]
        %v915 = vld [vmem:[#allocation2 + $0x2c8] sm:$0xff]
        %v916 = vld [vmem:[#allocation2 + $0x2d0] sm:$0xff]
        %v917 = vld [vmem:[#allocation2 + $0x2d8] sm:$0xff]
        %v918 = vld [vmem:[#allocation2 + $0x2e0] sm:$0xff]
        %v919 = vld [vmem:[#allocation2 + $0x2e8] sm:$0xff]
        %v920 = vld [vmem:[#allocation2 + $0x2f0] sm:$0xff]
        %v921 = vld [vmem:[#allocation2 + $0x2f8] sm:$0xff]
        %v922 = vld [vmem:[#allocation2 + $0x300] sm:$0xff]
        %v923 = vld [vmem:[#allocation2 + $0x308] sm:$0xff]
        %v924 = vld [vmem:[#allocation2 + $0x310] sm:$0xff]
        %v925 = vld [vmem:[#allocation2 + $0x318] sm:$0xff]
        %v926 = vld [vmem:[#allocation2 + $0x320] sm:$0xff]
        %v927 = vld [vmem:[#allocation2 + $0x328] sm:$0xff]
        %v928 = vld [vmem:[#allocation2 + $0x330] sm:$0xff]
        %v929 = vld [vmem:[#allocation2 + $0x338] sm:$0xff]
        %v930 = vld [vmem:[#allocation2 + $0x340] sm:$0xff]
        %v931 = vld [vmem:[#allocation2 + $0x348] sm:$0xff]
        %v932 = vld [vmem:[#allocation2 + $0x350] sm:$0xff]
        %v933 = vld [vmem:[#allocation2 + $0x358] sm:$0xff]
        %v934 = vld [vmem:[#allocation2 + $0x360] sm:$0xff]
        %v935 = vld [vmem:[#allocation2 + $0x368] sm:$0xff]
        %v936 = vld [vmem:[#allocation2 + $0x370] sm:$0xff]
        %v937 = vld [vmem:[#allocation2 + $0x378] sm:$0xff]
        %v938 = vld [vmem:[#allocation2 + $0x380] sm:$0xff]
        %v939 = vld [vmem:[#allocation2 + $0x388] sm:$0xff]
        %v940 = vld [vmem:[#allocation2 + $0x390] sm:$0xff]
        %v941 = vld [vmem:[#allocation2 + $0x398] sm:$0xff]
        %v942 = vld [vmem:[#allocation2 + $0x3a0] sm:$0xff]
        %v943 = vld [vmem:[#allocation2 + $0x3a8] sm:$0xff]
        %v944 = vld [vmem:[#allocation2 + $0x3b0] sm:$0xff]
        %v945 = vld [vmem:[#allocation2 + $0x3b8] sm:$0xff]
        %v946 = vld [vmem:[#allocation2 + $0x3c0] sm:$0xff]
        %v947 = vld [vmem:[#allocation2 + $0x3c8] sm:$0xff]
        %v948 = vld [vmem:[#allocation2 + $0x3d0] sm:$0xff]
        %v949 = vld [vmem:[#allocation2 + $0x3d8] sm:$0xff]
        %v950 = vld [vmem:[#allocation2 + $0x3e0] sm:$0xff]
        %v951 = vld [vmem:[#allocation2 + $0x3e8] sm:$0xff]
        %v952 = vld [vmem:[#allocation2 + $0x3f0] sm:$0xff]
        %v953 = vld [vmem:[#allocation2 + $0x3f8] sm:$0xff]
        %v954 = vld [vmem:[%s478] sm:$0xff]
        %v955 = vld [vmem:[%s478 + $0x20] sm:$0xff]
        %v956 = vld [vmem:[%s478 + $0x40] sm:$0xff]
        %v957 = vld [vmem:[%s478 + $0x60] sm:$0xff]
        %v958 = vld [vmem:[%s478 + $0x80] sm:$0xff]
        %v959 = vld [vmem:[%s478 + $0xa0] sm:$0xff]
        %v960 = vld [vmem:[%s478 + $0xc0] sm:$0xff]
        %v961 = vld [vmem:[%s478 + $0xe0] sm:$0xff]
        %v962 = vld [vmem:[%s478 + $0x100] sm:$0xff]
        %v963 = vld [vmem:[%s478 + $0x120] sm:$0xff]
        %v964 = vld [vmem:[%s478 + $0x140] sm:$0xff]
        %v965 = vld [vmem:[%s478 + $0x160] sm:$0xff]
        %v966 = vld [vmem:[%s478 + $0x180] sm:$0xff]
        %v967 = vld [vmem:[%s478 + $0x1a0] sm:$0xff]
        %v968 = vld [vmem:[%s478 + $0x1c0] sm:$0xff]
        %v969 = vld [vmem:[%s478 + $0x1e0] sm:$0xff]
        %v970 = vld [vmem:[%s478 + $0x200] sm:$0xff]
        %v971 = vld [vmem:[%s478 + $0x220] sm:$0xff]
        %v972 = vld [vmem:[%s478 + $0x240] sm:$0xff]
        %v973 = vld [vmem:[%s478 + $0x260] sm:$0xff]
        %v974 = vld [vmem:[%s478 + $0x280] sm:$0xff]
        %v975 = vld [vmem:[%s478 + $0x2a0] sm:$0xff]
        %v976 = vld [vmem:[%s478 + $0x2c0] sm:$0xff]
        %v977 = vld [vmem:[%s478 + $0x2e0] sm:$0xff]
        %v978 = vld [vmem:[%s478 + $0x300] sm:$0xff]
        %v979 = vld [vmem:[%s478 + $0x320] sm:$0xff]
        %v980 = vld [vmem:[%s478 + $0x340] sm:$0xff]
        %v981 = vld [vmem:[%s478 + $0x360] sm:$0xff]
        %v982 = vld [vmem:[%s478 + $0x380] sm:$0xff]
        %v983 = vld [vmem:[%s478 + $0x3a0] sm:$0xff]
        %v984 = vld [vmem:[%s478 + $0x3c0] sm:$0xff]
        %v985 = vld [vmem:[%s478 + $0x3e0] sm:$0xff]
        %v986 = vld [vmem:[%s478 + $0x400] sm:$0xff]
        %v987 = vld [vmem:[%s478 + $0x420] sm:$0xff]
        %v988 = vld [vmem:[%s478 + $0x440] sm:$0xff]
        %v989 = vld [vmem:[%s478 + $0x460] sm:$0xff]
        %v990 = vld [vmem:[%s478 + $0x480] sm:$0xff]
        %v991 = vld [vmem:[%s478 + $0x4a0] sm:$0xff]
        %v992 = vld [vmem:[%s478 + $0x4c0] sm:$0xff]
        %v993 = vld [vmem:[%s478 + $0x4e0] sm:$0xff]
        %v994 = vld [vmem:[%s478 + $0x500] sm:$0xff]
        %v995 = vld [vmem:[%s478 + $0x520] sm:$0xff]
        %v996 = vld [vmem:[%s478 + $0x540] sm:$0xff]
        %v997 = vld [vmem:[%s478 + $0x560] sm:$0xff]
        %v998 = vld [vmem:[%s478 + $0x580] sm:$0xff]
        %v999 = vld [vmem:[%s478 + $0x5a0] sm:$0xff]
        %v1000 = vld [vmem:[%s478 + $0x5c0] sm:$0xff]
        %v1001 = vld [vmem:[%s478 + $0x5e0] sm:$0xff]
        %v1002 = vld [vmem:[%s478 + $0x600] sm:$0xff]
        %v1003 = vld [vmem:[%s478 + $0x620] sm:$0xff]
        %v1004 = vld [vmem:[%s478 + $0x640] sm:$0xff]
        %v1005 = vld [vmem:[%s478 + $0x660] sm:$0xff]
        %v1006 = vld [vmem:[%s478 + $0x680] sm:$0xff]
        %v1007 = vld [vmem:[%s478 + $0x6a0] sm:$0xff]
        %v1008 = vld [vmem:[%s478 + $0x6c0] sm:$0xff]
        %v1009 = vld [vmem:[%s478 + $0x6e0] sm:$0xff]
        %v1010 = vld [vmem:[%s478 + $0x700] sm:$0xff]
        %v1011 = vld [vmem:[%s478 + $0x720] sm:$0xff]
        %v1012 = vld [vmem:[%s478 + $0x740] sm:$0xff]
        %v1013 = vld [vmem:[%s478 + $0x760] sm:$0xff]
        %v1014 = vld [vmem:[%s478 + $0x780] sm:$0xff]
        %v1015 = vld [vmem:[%s478 + $0x7a0] sm:$0xff]
        %v1016 = vld [vmem:[%s478 + $0x7c0] sm:$0xff]
        %v1017 = vld [vmem:[%s478 + $0x7e0] sm:$0xff]
        %v1018 = vld [vmem:[%s478 + $0x800] sm:$0xff]
        %v1019 = vld [vmem:[%s478 + $0x820] sm:$0xff]
        %v1020 = vld [vmem:[%s478 + $0x840] sm:$0xff]
        %v1021 = vld [vmem:[%s478 + $0x860] sm:$0xff]
        %v1022 = vld [vmem:[%s478 + $0x880] sm:$0xff]
        %v1023 = vld [vmem:[%s478 + $0x8a0] sm:$0xff]
        %v1024 = vld [vmem:[%s478 + $0x8c0] sm:$0xff]
        %v1025 = vld [vmem:[%s478 + $0x8e0] sm:$0xff]
        %v1026 = vld [vmem:[%s478 + $0x900] sm:$0xff]
        %v1027 = vld [vmem:[%s478 + $0x920] sm:$0xff]
        %v1028 = vld [vmem:[%s478 + $0x940] sm:$0xff]
        %v1029 = vld [vmem:[%s478 + $0x960] sm:$0xff]
        %v1030 = vld [vmem:[%s478 + $0x980] sm:$0xff]
        %v1031 = vld [vmem:[%s478 + $0x9a0] sm:$0xff]
        %v1032 = vld [vmem:[%s478 + $0x9c0] sm:$0xff]
        %v1033 = vld [vmem:[%s478 + $0x9e0] sm:$0xff]
        %v1034 = vld [vmem:[%s478 + $0xa00] sm:$0xff]
        %v1035 = vld [vmem:[%s478 + $0xa20] sm:$0xff]
        %v1036 = vld [vmem:[%s478 + $0xa40] sm:$0xff]
        %v1037 = vld [vmem:[%s478 + $0xa60] sm:$0xff]
        %v1038 = vld [vmem:[%s478 + $0xa80] sm:$0xff]
        %v1039 = vld [vmem:[%s478 + $0xaa0] sm:$0xff]
        %v1040 = vld [vmem:[%s478 + $0xac0] sm:$0xff]
        %v1041 = vld [vmem:[%s478 + $0xae0] sm:$0xff]
        %v1042 = vld [vmem:[%s478 + $0xb00] sm:$0xff]
        %v1043 = vld [vmem:[%s478 + $0xb20] sm:$0xff]
        %v1044 = vld [vmem:[%s478 + $0xb40] sm:$0xff]
        %v1045 = vld [vmem:[%s478 + $0xb60] sm:$0xff]
        %v1046 = vld [vmem:[%s478 + $0xb80] sm:$0xff]
        %v1047 = vld [vmem:[%s478 + $0xba0] sm:$0xff]
        %v1048 = vld [vmem:[%s478 + $0xbc0] sm:$0xff]
        %v1049 = vld [vmem:[%s478 + $0xbe0] sm:$0xff]
        %v1050 = vld [vmem:[%s478 + $0xc00] sm:$0xff]
        %v1051 = vld [vmem:[%s478 + $0xc20] sm:$0xff]
        %v1052 = vld [vmem:[%s478 + $0xc40] sm:$0xff]
        %v1053 = vld [vmem:[%s478 + $0xc60] sm:$0xff]
        %v1054 = vld [vmem:[%s478 + $0xc80] sm:$0xff]
        %v1055 = vld [vmem:[%s478 + $0xca0] sm:$0xff]
        %v1056 = vld [vmem:[%s478 + $0xcc0] sm:$0xff]
        %v1057 = vld [vmem:[%s478 + $0xce0] sm:$0xff]
        %v1058 = vld [vmem:[%s478 + $0xd00] sm:$0xff]
        %v1059 = vld [vmem:[%s478 + $0xd20] sm:$0xff]
        %v1060 = vld [vmem:[%s478 + $0xd40] sm:$0xff]
        %v1061 = vld [vmem:[%s478 + $0xd60] sm:$0xff]
        %v1062 = vld [vmem:[%s478 + $0xd80] sm:$0xff]
        %v1063 = vld [vmem:[%s478 + $0xda0] sm:$0xff]
        %v1064 = vld [vmem:[%s478 + $0xdc0] sm:$0xff]
        %v1065 = vld [vmem:[%s478 + $0xde0] sm:$0xff]
        %v1066 = vld [vmem:[%s478 + $0xe00] sm:$0xff]
        %v1067 = vld [vmem:[%s478 + $0xe20] sm:$0xff]
        %v1068 = vld [vmem:[%s478 + $0xe40] sm:$0xff]
        %v1069 = vld [vmem:[%s478 + $0xe60] sm:$0xff]
        %v1070 = vld [vmem:[%s478 + $0xe80] sm:$0xff]
        %v1071 = vld [vmem:[%s478 + $0xea0] sm:$0xff]
        %v1072 = vld [vmem:[%s478 + $0xec0] sm:$0xff]
        %v1073 = vld [vmem:[%s478 + $0xee0] sm:$0xff]
        %v1074 = vld [vmem:[%s478 + $0xf00] sm:$0xff]
        %v1075 = vld [vmem:[%s478 + $0xf20] sm:$0xff]
        %v1076 = vld [vmem:[%s478 + $0xf40] sm:$0xff]
        %v1077 = vld [vmem:[%s478 + $0xf60] sm:$0xff]
        %v1078 = vld [vmem:[%s478 + $0xf80] sm:$0xff]
        %v1079 = vld [vmem:[%s478 + $0xfa0] sm:$0xff]
        %v1080 = vld [vmem:[%s478 + $0xfc0] sm:$0xff]
        %v1081 = vld [vmem:[%s478 + $0xfe0] sm:$0xff]
        %v1082 = vmax.f32 %v826, %v954
        %v1083 = vmax.f32 %v827, %v955
        %v1084 = vmax.f32 %v828, %v956
        %v1085 = vmax.f32 %v829, %v957
        %v1086 = vmax.f32 %v830, %v958
        %v1087 = vmax.f32 %v831, %v959
        %v1088 = vmax.f32 %v832, %v960
        %v1089 = vmax.f32 %v833, %v961
        %v1090 = vmax.f32 %v834, %v962
        %v1091 = vmax.f32 %v835, %v963
        %v1092 = vmax.f32 %v836, %v964
        %v1093 = vmax.f32 %v837, %v965
        %v1094 = vmax.f32 %v838, %v966
        %v1095 = vmax.f32 %v839, %v967
        %v1096 = vmax.f32 %v840, %v968
        %v1097 = vmax.f32 %v841, %v969
        %v1098 = vmax.f32 %v842, %v970
        %v1099 = vmax.f32 %v843, %v971
        %v1100 = vmax.f32 %v844, %v972
        %v1101 = vmax.f32 %v845, %v973
        %v1102 = vmax.f32 %v846, %v974
        %v1103 = vmax.f32 %v847, %v975
        %v1104 = vmax.f32 %v848, %v976
        %v1105 = vmax.f32 %v849, %v977
        %v1106 = vmax.f32 %v850, %v978
        %v1107 = vmax.f32 %v851, %v979
        %v1108 = vmax.f32 %v852, %v980
        %v1109 = vmax.f32 %v853, %v981
        %v1110 = vmax.f32 %v854, %v982
        %v1111 = vmax.f32 %v855, %v983
        %v1112 = vmax.f32 %v856, %v984
        %v1113 = vmax.f32 %v857, %v985
        %v1114 = vmax.f32 %v858, %v986
        %v1115 = vmax.f32 %v859, %v987
        %v1116 = vmax.f32 %v860, %v988
        %v1117 = vmax.f32 %v861, %v989
        %v1118 = vmax.f32 %v862, %v990
        %v1119 = vmax.f32 %v863, %v991
        %v1120 = vmax.f32 %v864, %v992
        %v1121 = vmax.f32 %v865, %v993
        %v1122 = vmax.f32 %v866, %v994
        %v1123 = vmax.f32 %v867, %v995
        %v1124 = vmax.f32 %v868, %v996
        %v1125 = vmax.f32 %v869, %v997
        %v1126 = vmax.f32 %v870, %v998
        %v1127 = vmax.f32 %v871, %v999
        %v1128 = vmax.f32 %v872, %v1000
        %v1129 = vmax.f32 %v873, %v1001
        %v1130 = vmax.f32 %v874, %v1002
        %v1131 = vmax.f32 %v875, %v1003
        %v1132 = vmax.f32 %v876, %v1004
        %v1133 = vmax.f32 %v877, %v1005
        %v1134 = vmax.f32 %v878, %v1006
        %v1135 = vmax.f32 %v879, %v1007
        %v1136 = vmax.f32 %v880, %v1008
        %v1137 = vmax.f32 %v881, %v1009
        %v1138 = vmax.f32 %v882, %v1010
        %v1139 = vmax.f32 %v883, %v1011
        %v1140 = vmax.f32 %v884, %v1012
        %v1141 = vmax.f32 %v885, %v1013
        %v1142 = vmax.f32 %v886, %v1014
        %v1143 = vmax.f32 %v887, %v1015
        %v1144 = vmax.f32 %v888, %v1016
        %v1145 = vmax.f32 %v889, %v1017
        %v1146 = vmax.f32 %v890, %v1018
        %v1147 = vmax.f32 %v891, %v1019
        %v1148 = vmax.f32 %v892, %v1020
        %v1149 = vmax.f32 %v893, %v1021
        %v1150 = vmax.f32 %v894, %v1022
        %v1151 = vmax.f32 %v895, %v1023
        %v1152 = vmax.f32 %v896, %v1024
        %v1153 = vmax.f32 %v897, %v1025
        %v1154 = vmax.f32 %v898, %v1026
        %v1155 = vmax.f32 %v899, %v1027
        %v1156 = vmax.f32 %v900, %v1028
        %v1157 = vmax.f32 %v901, %v1029
        %v1158 = vmax.f32 %v902, %v1030
        %v1159 = vmax.f32 %v903, %v1031
        %v1160 = vmax.f32 %v904, %v1032
        %v1161 = vmax.f32 %v905, %v1033
        %v1162 = vmax.f32 %v906, %v1034
        %v1163 = vmax.f32 %v907, %v1035
        %v1164 = vmax.f32 %v908, %v1036
        %v1165 = vmax.f32 %v909, %v1037
        %v1166 = vmax.f32 %v910, %v1038
        %v1167 = vmax.f32 %v911, %v1039
        %v1168 = vmax.f32 %v912, %v1040
        %v1169 = vmax.f32 %v913, %v1041
        %v1170 = vmax.f32 %v914, %v1042
        %v1171 = vmax.f32 %v915, %v1043
        %v1172 = vmax.f32 %v916, %v1044
        %v1173 = vmax.f32 %v917, %v1045
        %v1174 = vmax.f32 %v918, %v1046
        %v1175 = vmax.f32 %v919, %v1047
        %v1176 = vmax.f32 %v920, %v1048
        %v1177 = vmax.f32 %v921, %v1049
        %v1178 = vmax.f32 %v922, %v1050
        %v1179 = vmax.f32 %v923, %v1051
        %v1180 = vmax.f32 %v924, %v1052
        %v1181 = vmax.f32 %v925, %v1053
        %v1182 = vmax.f32 %v926, %v1054
        %v1183 = vmax.f32 %v927, %v1055
        %v1184 = vmax.f32 %v928, %v1056
        %v1185 = vmax.f32 %v929, %v1057
        %v1186 = vmax.f32 %v930, %v1058
        %v1187 = vmax.f32 %v931, %v1059
        %v1188 = vmax.f32 %v932, %v1060
        %v1189 = vmax.f32 %v933, %v1061
        %v1190 = vmax.f32 %v934, %v1062
        %v1191 = vmax.f32 %v935, %v1063
        %v1192 = vmax.f32 %v936, %v1064
        %v1193 = vmax.f32 %v937, %v1065
        %v1194 = vmax.f32 %v938, %v1066
        %v1195 = vmax.f32 %v939, %v1067
        %v1196 = vmax.f32 %v940, %v1068
        %v1197 = vmax.f32 %v941, %v1069
        %v1198 = vmax.f32 %v942, %v1070
        %v1199 = vmax.f32 %v943, %v1071
        %v1200 = vmax.f32 %v944, %v1072
        %v1201 = vmax.f32 %v945, %v1073
        %v1202 = vmax.f32 %v946, %v1074
        %v1203 = vmax.f32 %v947, %v1075
        %v1204 = vmax.f32 %v948, %v1076
        %v1205 = vmax.f32 %v949, %v1077
        %v1206 = vmax.f32 %v950, %v1078
        %v1207 = vmax.f32 %v951, %v1079
        %v1208 = vmax.f32 %v952, %v1080
        %v1209 = vmax.f32 %v953, %v1081
        %1210 = vst [vmem:[#allocation2] sm:$0xff] %v1082
        %1211 = vst [vmem:[#allocation2 + $0x8] sm:$0xff] %v1083
        %1212 = vst [vmem:[#allocation2 + $0x10] sm:$0xff] %v1084
        %1213 = vst [vmem:[#allocation2 + $0x18] sm:$0xff] %v1085
        %1214 = vst [vmem:[#allocation2 + $0x20] sm:$0xff] %v1086
        %1215 = vst [vmem:[#allocation2 + $0x28] sm:$0xff] %v1087
        %1216 = vst [vmem:[#allocation2 + $0x30] sm:$0xff] %v1088
        %1217 = vst [vmem:[#allocation2 + $0x38] sm:$0xff] %v1089
        %1218 = vst [vmem:[#allocation2 + $0x40] sm:$0xff] %v1090
        %1219 = vst [vmem:[#allocation2 + $0x48] sm:$0xff] %v1091
        %1220 = vst [vmem:[#allocation2 + $0x50] sm:$0xff] %v1092
        %1221 = vst [vmem:[#allocation2 + $0x58] sm:$0xff] %v1093
        %1222 = vst [vmem:[#allocation2 + $0x60] sm:$0xff] %v1094
        %1223 = vst [vmem:[#allocation2 + $0x68] sm:$0xff] %v1095
        %1224 = vst [vmem:[#allocation2 + $0x70] sm:$0xff] %v1096
        %1225 = vst [vmem:[#allocation2 + $0x78] sm:$0xff] %v1097
        %1226 = vst [vmem:[#allocation2 + $0x80] sm:$0xff] %v1098
        %1227 = vst [vmem:[#allocation2 + $0x88] sm:$0xff] %v1099
        %1228 = vst [vmem:[#allocation2 + $0x90] sm:$0xff] %v1100
        %1229 = vst [vmem:[#allocation2 + $0x98] sm:$0xff] %v1101
        %1230 = vst [vmem:[#allocation2 + $0xa0] sm:$0xff] %v1102
        %1231 = vst [vmem:[#allocation2 + $0xa8] sm:$0xff] %v1103
        %1232 = vst [vmem:[#allocation2 + $0xb0] sm:$0xff] %v1104
        %1233 = vst [vmem:[#allocation2 + $0xb8] sm:$0xff] %v1105
        %1234 = vst [vmem:[#allocation2 + $0xc0] sm:$0xff] %v1106
        %1235 = vst [vmem:[#allocation2 + $0xc8] sm:$0xff] %v1107
        %1236 = vst [vmem:[#allocation2 + $0xd0] sm:$0xff] %v1108
        %1237 = vst [vmem:[#allocation2 + $0xd8] sm:$0xff] %v1109
        %1238 = vst [vmem:[#allocation2 + $0xe0] sm:$0xff] %v1110
        %1239 = vst [vmem:[#allocation2 + $0xe8] sm:$0xff] %v1111
        %1240 = vst [vmem:[#allocation2 + $0xf0] sm:$0xff] %v1112
        %1241 = vst [vmem:[#allocation2 + $0xf8] sm:$0xff] %v1113
        %1242 = vst [vmem:[#allocation2 + $0x100] sm:$0xff] %v1114
        %1243 = vst [vmem:[#allocation2 + $0x108] sm:$0xff] %v1115
        %1244 = vst [vmem:[#allocation2 + $0x110] sm:$0xff] %v1116
        %1245 = vst [vmem:[#allocation2 + $0x118] sm:$0xff] %v1117
        %1246 = vst [vmem:[#allocation2 + $0x120] sm:$0xff] %v1118
        %1247 = vst [vmem:[#allocation2 + $0x128] sm:$0xff] %v1119
        %1248 = vst [vmem:[#allocation2 + $0x130] sm:$0xff] %v1120
        %1249 = vst [vmem:[#allocation2 + $0x138] sm:$0xff] %v1121
        %1250 = vst [vmem:[#allocation2 + $0x140] sm:$0xff] %v1122
        %1251 = vst [vmem:[#allocation2 + $0x148] sm:$0xff] %v1123
        %1252 = vst [vmem:[#allocation2 + $0x150] sm:$0xff] %v1124
        %1253 = vst [vmem:[#allocation2 + $0x158] sm:$0xff] %v1125
        %1254 = vst [vmem:[#allocation2 + $0x160] sm:$0xff] %v1126
        %1255 = vst [vmem:[#allocation2 + $0x168] sm:$0xff] %v1127
        %1256 = vst [vmem:[#allocation2 + $0x170] sm:$0xff] %v1128
        %1257 = vst [vmem:[#allocation2 + $0x178] sm:$0xff] %v1129
        %1258 = vst [vmem:[#allocation2 + $0x180] sm:$0xff] %v1130
        %1259 = vst [vmem:[#allocation2 + $0x188] sm:$0xff] %v1131
        %1260 = vst [vmem:[#allocation2 + $0x190] sm:$0xff] %v1132
        %1261 = vst [vmem:[#allocation2 + $0x198] sm:$0xff] %v1133
        %1262 = vst [vmem:[#allocation2 + $0x1a0] sm:$0xff] %v1134
        %1263 = vst [vmem:[#allocation2 + $0x1a8] sm:$0xff] %v1135
        %1264 = vst [vmem:[#allocation2 + $0x1b0] sm:$0xff] %v1136
        %1265 = vst [vmem:[#allocation2 + $0x1b8] sm:$0xff] %v1137
        %1266 = vst [vmem:[#allocation2 + $0x1c0] sm:$0xff] %v1138
        %1267 = vst [vmem:[#allocation2 + $0x1c8] sm:$0xff] %v1139
        %1268 = vst [vmem:[#allocation2 + $0x1d0] sm:$0xff] %v1140
        %1269 = vst [vmem:[#allocation2 + $0x1d8] sm:$0xff] %v1141
        %1270 = vst [vmem:[#allocation2 + $0x1e0] sm:$0xff] %v1142
        %1271 = vst [vmem:[#allocation2 + $0x1e8] sm:$0xff] %v1143
        %1272 = vst [vmem:[#allocation2 + $0x1f0] sm:$0xff] %v1144
        %1273 = vst [vmem:[#allocation2 + $0x1f8] sm:$0xff] %v1145
        %1274 = vst [vmem:[#allocation2 + $0x200] sm:$0xff] %v1146
        %1275 = vst [vmem:[#allocation2 + $0x208] sm:$0xff] %v1147
        %1276 = vst [vmem:[#allocation2 + $0x210] sm:$0xff] %v1148
        %1277 = vst [vmem:[#allocation2 + $0x218] sm:$0xff] %v1149
        %1278 = vst [vmem:[#allocation2 + $0x220] sm:$0xff] %v1150
        %1279 = vst [vmem:[#allocation2 + $0x228] sm:$0xff] %v1151
        %1280 = vst [vmem:[#allocation2 + $0x230] sm:$0xff] %v1152
        %1281 = vst [vmem:[#allocation2 + $0x238] sm:$0xff] %v1153
        %1282 = vst [vmem:[#allocation2 + $0x240] sm:$0xff] %v1154
        %1283 = vst [vmem:[#allocation2 + $0x248] sm:$0xff] %v1155
        %1284 = vst [vmem:[#allocation2 + $0x250] sm:$0xff] %v1156
        %1285 = vst [vmem:[#allocation2 + $0x258] sm:$0xff] %v1157
        %1286 = vst [vmem:[#allocation2 + $0x260] sm:$0xff] %v1158
        %1287 = vst [vmem:[#allocation2 + $0x268] sm:$0xff] %v1159
        %1288 = vst [vmem:[#allocation2 + $0x270] sm:$0xff] %v1160
        %1289 = vst [vmem:[#allocation2 + $0x278] sm:$0xff] %v1161
        %1290 = vst [vmem:[#allocation2 + $0x280] sm:$0xff] %v1162
        %1291 = vst [vmem:[#allocation2 + $0x288] sm:$0xff] %v1163
        %1292 = vst [vmem:[#allocation2 + $0x290] sm:$0xff] %v1164
        %1293 = vst [vmem:[#allocation2 + $0x298] sm:$0xff] %v1165
        %1294 = vst [vmem:[#allocation2 + $0x2a0] sm:$0xff] %v1166
        %1295 = vst [vmem:[#allocation2 + $0x2a8] sm:$0xff] %v1167
        %1296 = vst [vmem:[#allocation2 + $0x2b0] sm:$0xff] %v1168
        %1297 = vst [vmem:[#allocation2 + $0x2b8] sm:$0xff] %v1169
        %1298 = vst [vmem:[#allocation2 + $0x2c0] sm:$0xff] %v1170
        %1299 = vst [vmem:[#allocation2 + $0x2c8] sm:$0xff] %v1171
        %1300 = vst [vmem:[#allocation2 + $0x2d0] sm:$0xff] %v1172
        %1301 = vst [vmem:[#allocation2 + $0x2d8] sm:$0xff] %v1173
        %1302 = vst [vmem:[#allocation2 + $0x2e0] sm:$0xff] %v1174
        %1303 = vst [vmem:[#allocation2 + $0x2e8] sm:$0xff] %v1175
        %1304 = vst [vmem:[#allocation2 + $0x2f0] sm:$0xff] %v1176
        %1305 = vst [vmem:[#allocation2 + $0x2f8] sm:$0xff] %v1177
        %1306 = vst [vmem:[#allocation2 + $0x300] sm:$0xff] %v1178
        %1307 = vst [vmem:[#allocation2 + $0x308] sm:$0xff] %v1179
        %1308 = vst [vmem:[#allocation2 + $0x310] sm:$0xff] %v1180
        %1309 = vst [vmem:[#allocation2 + $0x318] sm:$0xff] %v1181
        %1310 = vst [vmem:[#allocation2 + $0x320] sm:$0xff] %v1182
        %1311 = vst [vmem:[#allocation2 + $0x328] sm:$0xff] %v1183
        %1312 = vst [vmem:[#allocation2 + $0x330] sm:$0xff] %v1184
        %1313 = vst [vmem:[#allocation2 + $0x338] sm:$0xff] %v1185
        %1314 = vst [vmem:[#allocation2 + $0x340] sm:$0xff] %v1186
        %1315 = vst [vmem:[#allocation2 + $0x348] sm:$0xff] %v1187
        %1316 = vst [vmem:[#allocation2 + $0x350] sm:$0xff] %v1188
        %1317 = vst [vmem:[#allocation2 + $0x358] sm:$0xff] %v1189
        %1318 = vst [vmem:[#allocation2 + $0x360] sm:$0xff] %v1190
        %1319 = vst [vmem:[#allocation2 + $0x368] sm:$0xff] %v1191
        %1320 = vst [vmem:[#allocation2 + $0x370] sm:$0xff] %v1192
        %1321 = vst [vmem:[#allocation2 + $0x378] sm:$0xff] %v1193
        %1322 = vst [vmem:[#allocation2 + $0x380] sm:$0xff] %v1194
        %1323 = vst [vmem:[#allocation2 + $0x388] sm:$0xff] %v1195
        %1324 = vst [vmem:[#allocation2 + $0x390] sm:$0xff] %v1196
        %1325 = vst [vmem:[#allocation2 + $0x398] sm:$0xff] %v1197
        %1326 = vst [vmem:[#allocation2 + $0x3a0] sm:$0xff] %v1198
        %1327 = vst [vmem:[#allocation2 + $0x3a8] sm:$0xff] %v1199
        %1328 = vst [vmem:[#allocation2 + $0x3b0] sm:$0xff] %v1200
        %1329 = vst [vmem:[#allocation2 + $0x3b8] sm:$0xff] %v1201
        %1330 = vst [vmem:[#allocation2 + $0x3c0] sm:$0xff] %v1202
        %1331 = vst [vmem:[#allocation2 + $0x3c8] sm:$0xff] %v1203
        %1332 = vst [vmem:[#allocation2 + $0x3d0] sm:$0xff] %v1204
        %1333 = vst [vmem:[#allocation2 + $0x3d8] sm:$0xff] %v1205
        %1334 = vst [vmem:[#allocation2 + $0x3e0] sm:$0xff] %v1206
        %1335 = vst [vmem:[#allocation2 + $0x3e8] sm:$0xff] %v1207
        %1336 = vst [vmem:[#allocation2 + $0x3f0] sm:$0xff] %v1208
        %1337 = vst [vmem:[#allocation2 + $0x3f8] sm:$0xff] %v1209
        %v1338 = vld [vmem:[#allocation3] sm:$0xff]
        %v1339 = vld [vmem:[#allocation3 + $0x8] sm:$0xff]
        %v1340 = vld [vmem:[#allocation3 + $0x10] sm:$0xff]
        %v1341 = vld [vmem:[#allocation3 + $0x18] sm:$0xff]
        %v1342 = vld [vmem:[#allocation3 + $0x20] sm:$0xff]
        %v1343 = vld [vmem:[#allocation3 + $0x28] sm:$0xff]
        %v1344 = vld [vmem:[#allocation3 + $0x30] sm:$0xff]
        %v1345 = vld [vmem:[#allocation3 + $0x38] sm:$0xff]
        %v1346 = vld [vmem:[#allocation3 + $0x40] sm:$0xff]
        %v1347 = vld [vmem:[#allocation3 + $0x48] sm:$0xff]
        %v1348 = vld [vmem:[#allocation3 + $0x50] sm:$0xff]
        %v1349 = vld [vmem:[#allocation3 + $0x58] sm:$0xff]
        %v1350 = vld [vmem:[#allocation3 + $0x60] sm:$0xff]
        %v1351 = vld [vmem:[#allocation3 + $0x68] sm:$0xff]
        %v1352 = vld [vmem:[#allocation3 + $0x70] sm:$0xff]
        %v1353 = vld [vmem:[#allocation3 + $0x78] sm:$0xff]
        %v1354 = vld [vmem:[#allocation3 + $0x80] sm:$0xff]
        %v1355 = vld [vmem:[#allocation3 + $0x88] sm:$0xff]
        %v1356 = vld [vmem:[#allocation3 + $0x90] sm:$0xff]
        %v1357 = vld [vmem:[#allocation3 + $0x98] sm:$0xff]
        %v1358 = vld [vmem:[#allocation3 + $0xa0] sm:$0xff]
        %v1359 = vld [vmem:[#allocation3 + $0xa8] sm:$0xff]
        %v1360 = vld [vmem:[#allocation3 + $0xb0] sm:$0xff]
        %v1361 = vld [vmem:[#allocation3 + $0xb8] sm:$0xff]
        %v1362 = vld [vmem:[#allocation3 + $0xc0] sm:$0xff]
        %v1363 = vld [vmem:[#allocation3 + $0xc8] sm:$0xff]
        %v1364 = vld [vmem:[#allocation3 + $0xd0] sm:$0xff]
        %v1365 = vld [vmem:[#allocation3 + $0xd8] sm:$0xff]
        %v1366 = vld [vmem:[#allocation3 + $0xe0] sm:$0xff]
        %v1367 = vld [vmem:[#allocation3 + $0xe8] sm:$0xff]
        %v1368 = vld [vmem:[#allocation3 + $0xf0] sm:$0xff]
        %v1369 = vld [vmem:[#allocation3 + $0xf8] sm:$0xff]
        %v1370 = vld [vmem:[#allocation3 + $0x100] sm:$0xff]
        %v1371 = vld [vmem:[#allocation3 + $0x108] sm:$0xff]
        %v1372 = vld [vmem:[#allocation3 + $0x110] sm:$0xff]
        %v1373 = vld [vmem:[#allocation3 + $0x118] sm:$0xff]
        %v1374 = vld [vmem:[#allocation3 + $0x120] sm:$0xff]
        %v1375 = vld [vmem:[#allocation3 + $0x128] sm:$0xff]
        %v1376 = vld [vmem:[#allocation3 + $0x130] sm:$0xff]
        %v1377 = vld [vmem:[#allocation3 + $0x138] sm:$0xff]
        %v1378 = vld [vmem:[#allocation3 + $0x140] sm:$0xff]
        %v1379 = vld [vmem:[#allocation3 + $0x148] sm:$0xff]
        %v1380 = vld [vmem:[#allocation3 + $0x150] sm:$0xff]
        %v1381 = vld [vmem:[#allocation3 + $0x158] sm:$0xff]
        %v1382 = vld [vmem:[#allocation3 + $0x160] sm:$0xff]
        %v1383 = vld [vmem:[#allocation3 + $0x168] sm:$0xff]
        %v1384 = vld [vmem:[#allocation3 + $0x170] sm:$0xff]
        %v1385 = vld [vmem:[#allocation3 + $0x178] sm:$0xff]
        %v1386 = vld [vmem:[#allocation3 + $0x180] sm:$0xff]
        %v1387 = vld [vmem:[#allocation3 + $0x188] sm:$0xff]
        %v1388 = vld [vmem:[#allocation3 + $0x190] sm:$0xff]
        %v1389 = vld [vmem:[#allocation3 + $0x198] sm:$0xff]
        %v1390 = vld [vmem:[#allocation3 + $0x1a0] sm:$0xff]
        %v1391 = vld [vmem:[#allocation3 + $0x1a8] sm:$0xff]
        %v1392 = vld [vmem:[#allocation3 + $0x1b0] sm:$0xff]
        %v1393 = vld [vmem:[#allocation3 + $0x1b8] sm:$0xff]
        %v1394 = vld [vmem:[#allocation3 + $0x1c0] sm:$0xff]
        %v1395 = vld [vmem:[#allocation3 + $0x1c8] sm:$0xff]
        %v1396 = vld [vmem:[#allocation3 + $0x1d0] sm:$0xff]
        %v1397 = vld [vmem:[#allocation3 + $0x1d8] sm:$0xff]
        %v1398 = vld [vmem:[#allocation3 + $0x1e0] sm:$0xff]
        %v1399 = vld [vmem:[#allocation3 + $0x1e8] sm:$0xff]
        %v1400 = vld [vmem:[#allocation3 + $0x1f0] sm:$0xff]
        %v1401 = vld [vmem:[#allocation3 + $0x1f8] sm:$0xff]
        %v1402 = vld [vmem:[#allocation3 + $0x200] sm:$0xff]
        %v1403 = vld [vmem:[#allocation3 + $0x208] sm:$0xff]
        %v1404 = vld [vmem:[#allocation3 + $0x210] sm:$0xff]
        %v1405 = vld [vmem:[#allocation3 + $0x218] sm:$0xff]
        %v1406 = vld [vmem:[#allocation3 + $0x220] sm:$0xff]
        %v1407 = vld [vmem:[#allocation3 + $0x228] sm:$0xff]
        %v1408 = vld [vmem:[#allocation3 + $0x230] sm:$0xff]
        %v1409 = vld [vmem:[#allocation3 + $0x238] sm:$0xff]
        %v1410 = vld [vmem:[#allocation3 + $0x240] sm:$0xff]
        %v1411 = vld [vmem:[#allocation3 + $0x248] sm:$0xff]
        %v1412 = vld [vmem:[#allocation3 + $0x250] sm:$0xff]
        %v1413 = vld [vmem:[#allocation3 + $0x258] sm:$0xff]
        %v1414 = vld [vmem:[#allocation3 + $0x260] sm:$0xff]
        %v1415 = vld [vmem:[#allocation3 + $0x268] sm:$0xff]
        %v1416 = vld [vmem:[#allocation3 + $0x270] sm:$0xff]
        %v1417 = vld [vmem:[#allocation3 + $0x278] sm:$0xff]
        %v1418 = vld [vmem:[#allocation3 + $0x280] sm:$0xff]
        %v1419 = vld [vmem:[#allocation3 + $0x288] sm:$0xff]
        %v1420 = vld [vmem:[#allocation3 + $0x290] sm:$0xff]
        %v1421 = vld [vmem:[#allocation3 + $0x298] sm:$0xff]
        %v1422 = vld [vmem:[#allocation3 + $0x2a0] sm:$0xff]
        %v1423 = vld [vmem:[#allocation3 + $0x2a8] sm:$0xff]
        %v1424 = vld [vmem:[#allocation3 + $0x2b0] sm:$0xff]
        %v1425 = vld [vmem:[#allocation3 + $0x2b8] sm:$0xff]
        %v1426 = vld [vmem:[#allocation3 + $0x2c0] sm:$0xff]
        %v1427 = vld [vmem:[#allocation3 + $0x2c8] sm:$0xff]
        %v1428 = vld [vmem:[#allocation3 + $0x2d0] sm:$0xff]
        %v1429 = vld [vmem:[#allocation3 + $0x2d8] sm:$0xff]
        %v1430 = vld [vmem:[#allocation3 + $0x2e0] sm:$0xff]
        %v1431 = vld [vmem:[#allocation3 + $0x2e8] sm:$0xff]
        %v1432 = vld [vmem:[#allocation3 + $0x2f0] sm:$0xff]
        %v1433 = vld [vmem:[#allocation3 + $0x2f8] sm:$0xff]
        %v1434 = vld [vmem:[#allocation3 + $0x300] sm:$0xff]
        %v1435 = vld [vmem:[#allocation3 + $0x308] sm:$0xff]
        %v1436 = vld [vmem:[#allocation3 + $0x310] sm:$0xff]
        %v1437 = vld [vmem:[#allocation3 + $0x318] sm:$0xff]
        %v1438 = vld [vmem:[#allocation3 + $0x320] sm:$0xff]
        %v1439 = vld [vmem:[#allocation3 + $0x328] sm:$0xff]
        %v1440 = vld [vmem:[#allocation3 + $0x330] sm:$0xff]
        %v1441 = vld [vmem:[#allocation3 + $0x338] sm:$0xff]
        %v1442 = vld [vmem:[#allocation3 + $0x340] sm:$0xff]
        %v1443 = vld [vmem:[#allocation3 + $0x348] sm:$0xff]
        %v1444 = vld [vmem:[#allocation3 + $0x350] sm:$0xff]
        %v1445 = vld [vmem:[#allocation3 + $0x358] sm:$0xff]
        %v1446 = vld [vmem:[#allocation3 + $0x360] sm:$0xff]
        %v1447 = vld [vmem:[#allocation3 + $0x368] sm:$0xff]
        %v1448 = vld [vmem:[#allocation3 + $0x370] sm:$0xff]
        %v1449 = vld [vmem:[#allocation3 + $0x378] sm:$0xff]
        %v1450 = vld [vmem:[#allocation3 + $0x380] sm:$0xff]
        %v1451 = vld [vmem:[#allocation3 + $0x388] sm:$0xff]
        %v1452 = vld [vmem:[#allocation3 + $0x390] sm:$0xff]
        %v1453 = vld [vmem:[#allocation3 + $0x398] sm:$0xff]
        %v1454 = vld [vmem:[#allocation3 + $0x3a0] sm:$0xff]
        %v1455 = vld [vmem:[#allocation3 + $0x3a8] sm:$0xff]
        %v1456 = vld [vmem:[#allocation3 + $0x3b0] sm:$0xff]
        %v1457 = vld [vmem:[#allocation3 + $0x3b8] sm:$0xff]
        %v1458 = vld [vmem:[#allocation3 + $0x3c0] sm:$0xff]
        %v1459 = vld [vmem:[#allocation3 + $0x3c8] sm:$0xff]
        %v1460 = vld [vmem:[#allocation3 + $0x3d0] sm:$0xff]
        %v1461 = vld [vmem:[#allocation3 + $0x3d8] sm:$0xff]
        %v1462 = vld [vmem:[#allocation3 + $0x3e0] sm:$0xff]
        %v1463 = vld [vmem:[#allocation3 + $0x3e8] sm:$0xff]
        %v1464 = vld [vmem:[#allocation3 + $0x3f0] sm:$0xff]
        %v1465 = vld [vmem:[#allocation3 + $0x3f8] sm:$0xff]
        %v1466 = vld [vmem:[%s487] sm:$0xff]
        %v1467 = vld [vmem:[%s487 + $0x20] sm:$0xff]
        %v1468 = vld [vmem:[%s487 + $0x40] sm:$0xff]
        %v1469 = vld [vmem:[%s487 + $0x60] sm:$0xff]
        %v1470 = vld [vmem:[%s487 + $0x80] sm:$0xff]
        %v1471 = vld [vmem:[%s487 + $0xa0] sm:$0xff]
        %v1472 = vld [vmem:[%s487 + $0xc0] sm:$0xff]
        %v1473 = vld [vmem:[%s487 + $0xe0] sm:$0xff]
        %v1474 = vld [vmem:[%s487 + $0x100] sm:$0xff]
        %v1475 = vld [vmem:[%s487 + $0x120] sm:$0xff]
        %v1476 = vld [vmem:[%s487 + $0x140] sm:$0xff]
        %v1477 = vld [vmem:[%s487 + $0x160] sm:$0xff]
        %v1478 = vld [vmem:[%s487 + $0x180] sm:$0xff]
        %v1479 = vld [vmem:[%s487 + $0x1a0] sm:$0xff]
        %v1480 = vld [vmem:[%s487 + $0x1c0] sm:$0xff]
        %v1481 = vld [vmem:[%s487 + $0x1e0] sm:$0xff]
        %v1482 = vld [vmem:[%s487 + $0x200] sm:$0xff]
        %v1483 = vld [vmem:[%s487 + $0x220] sm:$0xff]
        %v1484 = vld [vmem:[%s487 + $0x240] sm:$0xff]
        %v1485 = vld [vmem:[%s487 + $0x260] sm:$0xff]
        %v1486 = vld [vmem:[%s487 + $0x280] sm:$0xff]
        %v1487 = vld [vmem:[%s487 + $0x2a0] sm:$0xff]
        %v1488 = vld [vmem:[%s487 + $0x2c0] sm:$0xff]
        %v1489 = vld [vmem:[%s487 + $0x2e0] sm:$0xff]
        %v1490 = vld [vmem:[%s487 + $0x300] sm:$0xff]
        %v1491 = vld [vmem:[%s487 + $0x320] sm:$0xff]
        %v1492 = vld [vmem:[%s487 + $0x340] sm:$0xff]
        %v1493 = vld [vmem:[%s487 + $0x360] sm:$0xff]
        %v1494 = vld [vmem:[%s487 + $0x380] sm:$0xff]
        %v1495 = vld [vmem:[%s487 + $0x3a0] sm:$0xff]
        %v1496 = vld [vmem:[%s487 + $0x3c0] sm:$0xff]
        %v1497 = vld [vmem:[%s487 + $0x3e0] sm:$0xff]
        %v1498 = vld [vmem:[%s487 + $0x400] sm:$0xff]
        %v1499 = vld [vmem:[%s487 + $0x420] sm:$0xff]
        %v1500 = vld [vmem:[%s487 + $0x440] sm:$0xff]
        %v1501 = vld [vmem:[%s487 + $0x460] sm:$0xff]
        %v1502 = vld [vmem:[%s487 + $0x480] sm:$0xff]
        %v1503 = vld [vmem:[%s487 + $0x4a0] sm:$0xff]
        %v1504 = vld [vmem:[%s487 + $0x4c0] sm:$0xff]
        %v1505 = vld [vmem:[%s487 + $0x4e0] sm:$0xff]
        %v1506 = vld [vmem:[%s487 + $0x500] sm:$0xff]
        %v1507 = vld [vmem:[%s487 + $0x520] sm:$0xff]
        %v1508 = vld [vmem:[%s487 + $0x540] sm:$0xff]
        %v1509 = vld [vmem:[%s487 + $0x560] sm:$0xff]
        %v1510 = vld [vmem:[%s487 + $0x580] sm:$0xff]
        %v1511 = vld [vmem:[%s487 + $0x5a0] sm:$0xff]
        %v1512 = vld [vmem:[%s487 + $0x5c0] sm:$0xff]
        %v1513 = vld [vmem:[%s487 + $0x5e0] sm:$0xff]
        %v1514 = vld [vmem:[%s487 + $0x600] sm:$0xff]
        %v1515 = vld [vmem:[%s487 + $0x620] sm:$0xff]
        %v1516 = vld [vmem:[%s487 + $0x640] sm:$0xff]
        %v1517 = vld [vmem:[%s487 + $0x660] sm:$0xff]
        %v1518 = vld [vmem:[%s487 + $0x680] sm:$0xff]
        %v1519 = vld [vmem:[%s487 + $0x6a0] sm:$0xff]
        %v1520 = vld [vmem:[%s487 + $0x6c0] sm:$0xff]
        %v1521 = vld [vmem:[%s487 + $0x6e0] sm:$0xff]
        %v1522 = vld [vmem:[%s487 + $0x700] sm:$0xff]
        %v1523 = vld [vmem:[%s487 + $0x720] sm:$0xff]
        %v1524 = vld [vmem:[%s487 + $0x740] sm:$0xff]
        %v1525 = vld [vmem:[%s487 + $0x760] sm:$0xff]
        %v1526 = vld [vmem:[%s487 + $0x780] sm:$0xff]
        %v1527 = vld [vmem:[%s487 + $0x7a0] sm:$0xff]
        %v1528 = vld [vmem:[%s487 + $0x7c0] sm:$0xff]
        %v1529 = vld [vmem:[%s487 + $0x7e0] sm:$0xff]
        %v1530 = vld [vmem:[%s487 + $0x800] sm:$0xff]
        %v1531 = vld [vmem:[%s487 + $0x820] sm:$0xff]
        %v1532 = vld [vmem:[%s487 + $0x840] sm:$0xff]
        %v1533 = vld [vmem:[%s487 + $0x860] sm:$0xff]
        %v1534 = vld [vmem:[%s487 + $0x880] sm:$0xff]
        %v1535 = vld [vmem:[%s487 + $0x8a0] sm:$0xff]
        %v1536 = vld [vmem:[%s487 + $0x8c0] sm:$0xff]
        %v1537 = vld [vmem:[%s487 + $0x8e0] sm:$0xff]
        %v1538 = vld [vmem:[%s487 + $0x900] sm:$0xff]
        %v1539 = vld [vmem:[%s487 + $0x920] sm:$0xff]
        %v1540 = vld [vmem:[%s487 + $0x940] sm:$0xff]
        %v1541 = vld [vmem:[%s487 + $0x960] sm:$0xff]
        %v1542 = vld [vmem:[%s487 + $0x980] sm:$0xff]
        %v1543 = vld [vmem:[%s487 + $0x9a0] sm:$0xff]
        %v1544 = vld [vmem:[%s487 + $0x9c0] sm:$0xff]
        %v1545 = vld [vmem:[%s487 + $0x9e0] sm:$0xff]
        %v1546 = vld [vmem:[%s487 + $0xa00] sm:$0xff]
        %v1547 = vld [vmem:[%s487 + $0xa20] sm:$0xff]
        %v1548 = vld [vmem:[%s487 + $0xa40] sm:$0xff]
        %v1549 = vld [vmem:[%s487 + $0xa60] sm:$0xff]
        %v1550 = vld [vmem:[%s487 + $0xa80] sm:$0xff]
        %v1551 = vld [vmem:[%s487 + $0xaa0] sm:$0xff]
        %v1552 = vld [vmem:[%s487 + $0xac0] sm:$0xff]
        %v1553 = vld [vmem:[%s487 + $0xae0] sm:$0xff]
        %v1554 = vld [vmem:[%s487 + $0xb00] sm:$0xff]
        %v1555 = vld [vmem:[%s487 + $0xb20] sm:$0xff]
        %v1556 = vld [vmem:[%s487 + $0xb40] sm:$0xff]
        %v1557 = vld [vmem:[%s487 + $0xb60] sm:$0xff]
        %v1558 = vld [vmem:[%s487 + $0xb80] sm:$0xff]
        %v1559 = vld [vmem:[%s487 + $0xba0] sm:$0xff]
        %v1560 = vld [vmem:[%s487 + $0xbc0] sm:$0xff]
        %v1561 = vld [vmem:[%s487 + $0xbe0] sm:$0xff]
        %v1562 = vld [vmem:[%s487 + $0xc00] sm:$0xff]
        %v1563 = vld [vmem:[%s487 + $0xc20] sm:$0xff]
        %v1564 = vld [vmem:[%s487 + $0xc40] sm:$0xff]
        %v1565 = vld [vmem:[%s487 + $0xc60] sm:$0xff]
        %v1566 = vld [vmem:[%s487 + $0xc80] sm:$0xff]
        %v1567 = vld [vmem:[%s487 + $0xca0] sm:$0xff]
        %v1568 = vld [vmem:[%s487 + $0xcc0] sm:$0xff]
        %v1569 = vld [vmem:[%s487 + $0xce0] sm:$0xff]
        %v1570 = vld [vmem:[%s487 + $0xd00] sm:$0xff]
        %v1571 = vld [vmem:[%s487 + $0xd20] sm:$0xff]
        %v1572 = vld [vmem:[%s487 + $0xd40] sm:$0xff]
        %v1573 = vld [vmem:[%s487 + $0xd60] sm:$0xff]
        %v1574 = vld [vmem:[%s487 + $0xd80] sm:$0xff]
        %v1575 = vld [vmem:[%s487 + $0xda0] sm:$0xff]
        %v1576 = vld [vmem:[%s487 + $0xdc0] sm:$0xff]
        %v1577 = vld [vmem:[%s487 + $0xde0] sm:$0xff]
        %v1578 = vld [vmem:[%s487 + $0xe00] sm:$0xff]
        %v1579 = vld [vmem:[%s487 + $0xe20] sm:$0xff]
        %v1580 = vld [vmem:[%s487 + $0xe40] sm:$0xff]
        %v1581 = vld [vmem:[%s487 + $0xe60] sm:$0xff]
        %v1582 = vld [vmem:[%s487 + $0xe80] sm:$0xff]
        %v1583 = vld [vmem:[%s487 + $0xea0] sm:$0xff]
        %v1584 = vld [vmem:[%s487 + $0xec0] sm:$0xff]
        %v1585 = vld [vmem:[%s487 + $0xee0] sm:$0xff]
        %v1586 = vld [vmem:[%s487 + $0xf00] sm:$0xff]
        %v1587 = vld [vmem:[%s487 + $0xf20] sm:$0xff]
        %v1588 = vld [vmem:[%s487 + $0xf40] sm:$0xff]
        %v1589 = vld [vmem:[%s487 + $0xf60] sm:$0xff]
        %v1590 = vld [vmem:[%s487 + $0xf80] sm:$0xff]
        %v1591 = vld [vmem:[%s487 + $0xfa0] sm:$0xff]
        %v1592 = vld [vmem:[%s487 + $0xfc0] sm:$0xff]
        %v1593 = vld [vmem:[%s487 + $0xfe0] sm:$0xff]
        %v1594 = vmax.f32 %v1338, %v1466
        %v1595 = vmax.f32 %v1339, %v1467
        %v1596 = vmax.f32 %v1340, %v1468
        %v1597 = vmax.f32 %v1341, %v1469
        %v1598 = vmax.f32 %v1342, %v1470
        %v1599 = vmax.f32 %v1343, %v1471
        %v1600 = vmax.f32 %v1344, %v1472
        %v1601 = vmax.f32 %v1345, %v1473
        %v1602 = vmax.f32 %v1346, %v1474
        %v1603 = vmax.f32 %v1347, %v1475
        %v1604 = vmax.f32 %v1348, %v1476
        %v1605 = vmax.f32 %v1349, %v1477
        %v1606 = vmax.f32 %v1350, %v1478
        %v1607 = vmax.f32 %v1351, %v1479
        %v1608 = vmax.f32 %v1352, %v1480
        %v1609 = vmax.f32 %v1353, %v1481
        %v1610 = vmax.f32 %v1354, %v1482
        %v1611 = vmax.f32 %v1355, %v1483
        %v1612 = vmax.f32 %v1356, %v1484
        %v1613 = vmax.f32 %v1357, %v1485
        %v1614 = vmax.f32 %v1358, %v1486
        %v1615 = vmax.f32 %v1359, %v1487
        %v1616 = vmax.f32 %v1360, %v1488
        %v1617 = vmax.f32 %v1361, %v1489
        %v1618 = vmax.f32 %v1362, %v1490
        %v1619 = vmax.f32 %v1363, %v1491
        %v1620 = vmax.f32 %v1364, %v1492
        %v1621 = vmax.f32 %v1365, %v1493
        %v1622 = vmax.f32 %v1366, %v1494
        %v1623 = vmax.f32 %v1367, %v1495
        %v1624 = vmax.f32 %v1368, %v1496
        %v1625 = vmax.f32 %v1369, %v1497
        %v1626 = vmax.f32 %v1370, %v1498
        %v1627 = vmax.f32 %v1371, %v1499
        %v1628 = vmax.f32 %v1372, %v1500
        %v1629 = vmax.f32 %v1373, %v1501
        %v1630 = vmax.f32 %v1374, %v1502
        %v1631 = vmax.f32 %v1375, %v1503
        %v1632 = vmax.f32 %v1376, %v1504
        %v1633 = vmax.f32 %v1377, %v1505
        %v1634 = vmax.f32 %v1378, %v1506
        %v1635 = vmax.f32 %v1379, %v1507
        %v1636 = vmax.f32 %v1380, %v1508
        %v1637 = vmax.f32 %v1381, %v1509
        %v1638 = vmax.f32 %v1382, %v1510
        %v1639 = vmax.f32 %v1383, %v1511
        %v1640 = vmax.f32 %v1384, %v1512
        %v1641 = vmax.f32 %v1385, %v1513
        %v1642 = vmax.f32 %v1386, %v1514
        %v1643 = vmax.f32 %v1387, %v1515
        %v1644 = vmax.f32 %v1388, %v1516
        %v1645 = vmax.f32 %v1389, %v1517
        %v1646 = vmax.f32 %v1390, %v1518
        %v1647 = vmax.f32 %v1391, %v1519
        %v1648 = vmax.f32 %v1392, %v1520
        %v1649 = vmax.f32 %v1393, %v1521
        %v1650 = vmax.f32 %v1394, %v1522
        %v1651 = vmax.f32 %v1395, %v1523
        %v1652 = vmax.f32 %v1396, %v1524
        %v1653 = vmax.f32 %v1397, %v1525
        %v1654 = vmax.f32 %v1398, %v1526
        %v1655 = vmax.f32 %v1399, %v1527
        %v1656 = vmax.f32 %v1400, %v1528
        %v1657 = vmax.f32 %v1401, %v1529
        %v1658 = vmax.f32 %v1402, %v1530
        %v1659 = vmax.f32 %v1403, %v1531
        %v1660 = vmax.f32 %v1404, %v1532
        %v1661 = vmax.f32 %v1405, %v1533
        %v1662 = vmax.f32 %v1406, %v1534
        %v1663 = vmax.f32 %v1407, %v1535
        %v1664 = vmax.f32 %v1408, %v1536
        %v1665 = vmax.f32 %v1409, %v1537
        %v1666 = vmax.f32 %v1410, %v1538
        %v1667 = vmax.f32 %v1411, %v1539
        %v1668 = vmax.f32 %v1412, %v1540
        %v1669 = vmax.f32 %v1413, %v1541
        %v1670 = vmax.f32 %v1414, %v1542
        %v1671 = vmax.f32 %v1415, %v1543
        %v1672 = vmax.f32 %v1416, %v1544
        %v1673 = vmax.f32 %v1417, %v1545
        %v1674 = vmax.f32 %v1418, %v1546
        %v1675 = vmax.f32 %v1419, %v1547
        %v1676 = vmax.f32 %v1420, %v1548
        %v1677 = vmax.f32 %v1421, %v1549
        %v1678 = vmax.f32 %v1422, %v1550
        %v1679 = vmax.f32 %v1423, %v1551
        %v1680 = vmax.f32 %v1424, %v1552
        %v1681 = vmax.f32 %v1425, %v1553
        %v1682 = vmax.f32 %v1426, %v1554
        %v1683 = vmax.f32 %v1427, %v1555
        %v1684 = vmax.f32 %v1428, %v1556
        %v1685 = vmax.f32 %v1429, %v1557
        %v1686 = vmax.f32 %v1430, %v1558
        %v1687 = vmax.f32 %v1431, %v1559
        %v1688 = vmax.f32 %v1432, %v1560
        %v1689 = vmax.f32 %v1433, %v1561
        %v1690 = vmax.f32 %v1434, %v1562
        %v1691 = vmax.f32 %v1435, %v1563
        %v1692 = vmax.f32 %v1436, %v1564
        %v1693 = vmax.f32 %v1437, %v1565
        %v1694 = vmax.f32 %v1438, %v1566
        %v1695 = vmax.f32 %v1439, %v1567
        %v1696 = vmax.f32 %v1440, %v1568
        %v1697 = vmax.f32 %v1441, %v1569
        %v1698 = vmax.f32 %v1442, %v1570
        %v1699 = vmax.f32 %v1443, %v1571
        %v1700 = vmax.f32 %v1444, %v1572
        %v1701 = vmax.f32 %v1445, %v1573
        %v1702 = vmax.f32 %v1446, %v1574
        %v1703 = vmax.f32 %v1447, %v1575
        %v1704 = vmax.f32 %v1448, %v1576
        %v1705 = vmax.f32 %v1449, %v1577
        %v1706 = vmax.f32 %v1450, %v1578
        %v1707 = vmax.f32 %v1451, %v1579
        %v1708 = vmax.f32 %v1452, %v1580
        %v1709 = vmax.f32 %v1453, %v1581
        %v1710 = vmax.f32 %v1454, %v1582
        %v1711 = vmax.f32 %v1455, %v1583
        %v1712 = vmax.f32 %v1456, %v1584
        %v1713 = vmax.f32 %v1457, %v1585
        %v1714 = vmax.f32 %v1458, %v1586
        %v1715 = vmax.f32 %v1459, %v1587
        %v1716 = vmax.f32 %v1460, %v1588
        %v1717 = vmax.f32 %v1461, %v1589
        %v1718 = vmax.f32 %v1462, %v1590
        %v1719 = vmax.f32 %v1463, %v1591
        %v1720 = vmax.f32 %v1464, %v1592
        %v1721 = vmax.f32 %v1465, %v1593
        %1722 = vst [vmem:[#allocation3] sm:$0xff] %v1594
        %1723 = vst [vmem:[#allocation3 + $0x8] sm:$0xff] %v1595
        %1724 = vst [vmem:[#allocation3 + $0x10] sm:$0xff] %v1596
        %1725 = vst [vmem:[#allocation3 + $0x18] sm:$0xff] %v1597
        %1726 = vst [vmem:[#allocation3 + $0x20] sm:$0xff] %v1598
        %1727 = vst [vmem:[#allocation3 + $0x28] sm:$0xff] %v1599
        %1728 = vst [vmem:[#allocation3 + $0x30] sm:$0xff] %v1600
        %1729 = vst [vmem:[#allocation3 + $0x38] sm:$0xff] %v1601
        %1730 = vst [vmem:[#allocation3 + $0x40] sm:$0xff] %v1602
        %1731 = vst [vmem:[#allocation3 + $0x48] sm:$0xff] %v1603
        %1732 = vst [vmem:[#allocation3 + $0x50] sm:$0xff] %v1604
        %1733 = vst [vmem:[#allocation3 + $0x58] sm:$0xff] %v1605
        %1734 = vst [vmem:[#allocation3 + $0x60] sm:$0xff] %v1606
        %1735 = vst [vmem:[#allocation3 + $0x68] sm:$0xff] %v1607
        %1736 = vst [vmem:[#allocation3 + $0x70] sm:$0xff] %v1608
        %1737 = vst [vmem:[#allocation3 + $0x78] sm:$0xff] %v1609
        %1738 = vst [vmem:[#allocation3 + $0x80] sm:$0xff] %v1610
        %1739 = vst [vmem:[#allocation3 + $0x88] sm:$0xff] %v1611
        %1740 = vst [vmem:[#allocation3 + $0x90] sm:$0xff] %v1612
        %1741 = vst [vmem:[#allocation3 + $0x98] sm:$0xff] %v1613
        %1742 = vst [vmem:[#allocation3 + $0xa0] sm:$0xff] %v1614
        %1743 = vst [vmem:[#allocation3 + $0xa8] sm:$0xff] %v1615
        %1744 = vst [vmem:[#allocation3 + $0xb0] sm:$0xff] %v1616
        %1745 = vst [vmem:[#allocation3 + $0xb8] sm:$0xff] %v1617
        %1746 = vst [vmem:[#allocation3 + $0xc0] sm:$0xff] %v1618
        %1747 = vst [vmem:[#allocation3 + $0xc8] sm:$0xff] %v1619
        %1748 = vst [vmem:[#allocation3 + $0xd0] sm:$0xff] %v1620
        %1749 = vst [vmem:[#allocation3 + $0xd8] sm:$0xff] %v1621
        %1750 = vst [vmem:[#allocation3 + $0xe0] sm:$0xff] %v1622
        %1751 = vst [vmem:[#allocation3 + $0xe8] sm:$0xff] %v1623
        %1752 = vst [vmem:[#allocation3 + $0xf0] sm:$0xff] %v1624
        %1753 = vst [vmem:[#allocation3 + $0xf8] sm:$0xff] %v1625
        %1754 = vst [vmem:[#allocation3 + $0x100] sm:$0xff] %v1626
        %1755 = vst [vmem:[#allocation3 + $0x108] sm:$0xff] %v1627
        %1756 = vst [vmem:[#allocation3 + $0x110] sm:$0xff] %v1628
        %1757 = vst [vmem:[#allocation3 + $0x118] sm:$0xff] %v1629
        %1758 = vst [vmem:[#allocation3 + $0x120] sm:$0xff] %v1630
        %1759 = vst [vmem:[#allocation3 + $0x128] sm:$0xff] %v1631
        %1760 = vst [vmem:[#allocation3 + $0x130] sm:$0xff] %v1632
        %1761 = vst [vmem:[#allocation3 + $0x138] sm:$0xff] %v1633
        %1762 = vst [vmem:[#allocation3 + $0x140] sm:$0xff] %v1634
        %1763 = vst [vmem:[#allocation3 + $0x148] sm:$0xff] %v1635
        %1764 = vst [vmem:[#allocation3 + $0x150] sm:$0xff] %v1636
        %1765 = vst [vmem:[#allocation3 + $0x158] sm:$0xff] %v1637
        %1766 = vst [vmem:[#allocation3 + $0x160] sm:$0xff] %v1638
        %1767 = vst [vmem:[#allocation3 + $0x168] sm:$0xff] %v1639
        %1768 = vst [vmem:[#allocation3 + $0x170] sm:$0xff] %v1640
        %1769 = vst [vmem:[#allocation3 + $0x178] sm:$0xff] %v1641
        %1770 = vst [vmem:[#allocation3 + $0x180] sm:$0xff] %v1642
        %1771 = vst [vmem:[#allocation3 + $0x188] sm:$0xff] %v1643
        %1772 = vst [vmem:[#allocation3 + $0x190] sm:$0xff] %v1644
        %1773 = vst [vmem:[#allocation3 + $0x198] sm:$0xff] %v1645
        %1774 = vst [vmem:[#allocation3 + $0x1a0] sm:$0xff] %v1646
        %1775 = vst [vmem:[#allocation3 + $0x1a8] sm:$0xff] %v1647
        %1776 = vst [vmem:[#allocation3 + $0x1b0] sm:$0xff] %v1648
        %1777 = vst [vmem:[#allocation3 + $0x1b8] sm:$0xff] %v1649
        %1778 = vst [vmem:[#allocation3 + $0x1c0] sm:$0xff] %v1650
        %1779 = vst [vmem:[#allocation3 + $0x1c8] sm:$0xff] %v1651
        %1780 = vst [vmem:[#allocation3 + $0x1d0] sm:$0xff] %v1652
        %1781 = vst [vmem:[#allocation3 + $0x1d8] sm:$0xff] %v1653
        %1782 = vst [vmem:[#allocation3 + $0x1e0] sm:$0xff] %v1654
        %1783 = vst [vmem:[#allocation3 + $0x1e8] sm:$0xff] %v1655
        %1784 = vst [vmem:[#allocation3 + $0x1f0] sm:$0xff] %v1656
        %1785 = vst [vmem:[#allocation3 + $0x1f8] sm:$0xff] %v1657
        %1786 = vst [vmem:[#allocation3 + $0x200] sm:$0xff] %v1658
        %1787 = vst [vmem:[#allocation3 + $0x208] sm:$0xff] %v1659
        %1788 = vst [vmem:[#allocation3 + $0x210] sm:$0xff] %v1660
        %1789 = vst [vmem:[#allocation3 + $0x218] sm:$0xff] %v1661
        %1790 = vst [vmem:[#allocation3 + $0x220] sm:$0xff] %v1662
        %1791 = vst [vmem:[#allocation3 + $0x228] sm:$0xff] %v1663
        %1792 = vst [vmem:[#allocation3 + $0x230] sm:$0xff] %v1664
        %1793 = vst [vmem:[#allocation3 + $0x238] sm:$0xff] %v1665
        %1794 = vst [vmem:[#allocation3 + $0x240] sm:$0xff] %v1666
        %1795 = vst [vmem:[#allocation3 + $0x248] sm:$0xff] %v1667
        %1796 = vst [vmem:[#allocation3 + $0x250] sm:$0xff] %v1668
        %1797 = vst [vmem:[#allocation3 + $0x258] sm:$0xff] %v1669
        %1798 = vst [vmem:[#allocation3 + $0x260] sm:$0xff] %v1670
        %1799 = vst [vmem:[#allocation3 + $0x268] sm:$0xff] %v1671
        %1800 = vst [vmem:[#allocation3 + $0x270] sm:$0xff] %v1672
        %1801 = vst [vmem:[#allocation3 + $0x278] sm:$0xff] %v1673
        %1802 = vst [vmem:[#allocation3 + $0x280] sm:$0xff] %v1674
        %1803 = vst [vmem:[#allocation3 + $0x288] sm:$0xff] %v1675
        %1804 = vst [vmem:[#allocation3 + $0x290] sm:$0xff] %v1676
        %1805 = vst [vmem:[#allocation3 + $0x298] sm:$0xff] %v1677
        %1806 = vst [vmem:[#allocation3 + $0x2a0] sm:$0xff] %v1678
        %1807 = vst [vmem:[#allocation3 + $0x2a8] sm:$0xff] %v1679
        %1808 = vst [vmem:[#allocation3 + $0x2b0] sm:$0xff] %v1680
        %1809 = vst [vmem:[#allocation3 + $0x2b8] sm:$0xff] %v1681
        %1810 = vst [vmem:[#allocation3 + $0x2c0] sm:$0xff] %v1682
        %1811 = vst [vmem:[#allocation3 + $0x2c8] sm:$0xff] %v1683
        %1812 = vst [vmem:[#allocation3 + $0x2d0] sm:$0xff] %v1684
        %1813 = vst [vmem:[#allocation3 + $0x2d8] sm:$0xff] %v1685
        %1814 = vst [vmem:[#allocation3 + $0x2e0] sm:$0xff] %v1686
        %1815 = vst [vmem:[#allocation3 + $0x2e8] sm:$0xff] %v1687
        %1816 = vst [vmem:[#allocation3 + $0x2f0] sm:$0xff] %v1688
        %1817 = vst [vmem:[#allocation3 + $0x2f8] sm:$0xff] %v1689
        %1818 = vst [vmem:[#allocation3 + $0x300] sm:$0xff] %v1690
        %1819 = vst [vmem:[#allocation3 + $0x308] sm:$0xff] %v1691
        %1820 = vst [vmem:[#allocation3 + $0x310] sm:$0xff] %v1692
        %1821 = vst [vmem:[#allocation3 + $0x318] sm:$0xff] %v1693
        %1822 = vst [vmem:[#allocation3 + $0x320] sm:$0xff] %v1694
        %1823 = vst [vmem:[#allocation3 + $0x328] sm:$0xff] %v1695
        %1824 = vst [vmem:[#allocation3 + $0x330] sm:$0xff] %v1696
        %1825 = vst [vmem:[#allocation3 + $0x338] sm:$0xff] %v1697
        %1826 = vst [vmem:[#allocation3 + $0x340] sm:$0xff] %v1698
        %1827 = vst [vmem:[#allocation3 + $0x348] sm:$0xff] %v1699
        %1828 = vst [vmem:[#allocation3 + $0x350] sm:$0xff] %v1700
        %1829 = vst [vmem:[#allocation3 + $0x358] sm:$0xff] %v1701
        %1830 = vst [vmem:[#allocation3 + $0x360] sm:$0xff] %v1702
        %1831 = vst [vmem:[#allocation3 + $0x368] sm:$0xff] %v1703
        %1832 = vst [vmem:[#allocation3 + $0x370] sm:$0xff] %v1704
        %1833 = vst [vmem:[#allocation3 + $0x378] sm:$0xff] %v1705
        %1834 = vst [vmem:[#allocation3 + $0x380] sm:$0xff] %v1706
        %1835 = vst [vmem:[#allocation3 + $0x388] sm:$0xff] %v1707
        %1836 = vst [vmem:[#allocation3 + $0x390] sm:$0xff] %v1708
        %1837 = vst [vmem:[#allocation3 + $0x398] sm:$0xff] %v1709
        %1838 = vst [vmem:[#allocation3 + $0x3a0] sm:$0xff] %v1710
        %1839 = vst [vmem:[#allocation3 + $0x3a8] sm:$0xff] %v1711
        %1840 = vst [vmem:[#allocation3 + $0x3b0] sm:$0xff] %v1712
        %1841 = vst [vmem:[#allocation3 + $0x3b8] sm:$0xff] %v1713
        %1842 = vst [vmem:[#allocation3 + $0x3c0] sm:$0xff] %v1714
        %1843 = vst [vmem:[#allocation3 + $0x3c8] sm:$0xff] %v1715
        %1844 = vst [vmem:[#allocation3 + $0x3d0] sm:$0xff] %v1716
        %1845 = vst [vmem:[#allocation3 + $0x3d8] sm:$0xff] %v1717
        %1846 = vst [vmem:[#allocation3 + $0x3e0] sm:$0xff] %v1718
        %1847 = vst [vmem:[#allocation3 + $0x3e8] sm:$0xff] %v1719
        %1848 = vst [vmem:[#allocation3 + $0x3f0] sm:$0xff] %v1720
        %1849 = vst [vmem:[#allocation3 + $0x3f8] sm:$0xff] %v1721
        %v1850 = vld [vmem:[#allocation2] sm:$0xff]
        %v1851 = vld [vmem:[#allocation2 + $0x8] sm:$0xff]
        %v1852 = vld [vmem:[#allocation2 + $0x10] sm:$0xff]
        %v1853 = vld [vmem:[#allocation2 + $0x18] sm:$0xff]
        %v1854 = vld [vmem:[#allocation2 + $0x20] sm:$0xff]
        %v1855 = vld [vmem:[#allocation2 + $0x28] sm:$0xff]
        %v1856 = vld [vmem:[#allocation2 + $0x30] sm:$0xff]
        %v1857 = vld [vmem:[#allocation2 + $0x38] sm:$0xff]
        %v1858 = vld [vmem:[#allocation2 + $0x40] sm:$0xff]
        %v1859 = vld [vmem:[#allocation2 + $0x48] sm:$0xff]
        %v1860 = vld [vmem:[#allocation2 + $0x50] sm:$0xff]
        %v1861 = vld [vmem:[#allocation2 + $0x58] sm:$0xff]
        %v1862 = vld [vmem:[#allocation2 + $0x60] sm:$0xff]
        %v1863 = vld [vmem:[#allocation2 + $0x68] sm:$0xff]
        %v1864 = vld [vmem:[#allocation2 + $0x70] sm:$0xff]
        %v1865 = vld [vmem:[#allocation2 + $0x78] sm:$0xff]
        %v1866 = vld [vmem:[#allocation2 + $0x80] sm:$0xff]
        %v1867 = vld [vmem:[#allocation2 + $0x88] sm:$0xff]
        %v1868 = vld [vmem:[#allocation2 + $0x90] sm:$0xff]
        %v1869 = vld [vmem:[#allocation2 + $0x98] sm:$0xff]
        %v1870 = vld [vmem:[#allocation2 + $0xa0] sm:$0xff]
        %v1871 = vld [vmem:[#allocation2 + $0xa8] sm:$0xff]
        %v1872 = vld [vmem:[#allocation2 + $0xb0] sm:$0xff]
        %v1873 = vld [vmem:[#allocation2 + $0xb8] sm:$0xff]
        %v1874 = vld [vmem:[#allocation2 + $0xc0] sm:$0xff]
        %v1875 = vld [vmem:[#allocation2 + $0xc8] sm:$0xff]
        %v1876 = vld [vmem:[#allocation2 + $0xd0] sm:$0xff]
        %v1877 = vld [vmem:[#allocation2 + $0xd8] sm:$0xff]
        %v1878 = vld [vmem:[#allocation2 + $0xe0] sm:$0xff]
        %v1879 = vld [vmem:[#allocation2 + $0xe8] sm:$0xff]
        %v1880 = vld [vmem:[#allocation2 + $0xf0] sm:$0xff]
        %v1881 = vld [vmem:[#allocation2 + $0xf8] sm:$0xff]
        %v1882 = vld [vmem:[#allocation2 + $0x100] sm:$0xff]
        %v1883 = vld [vmem:[#allocation2 + $0x108] sm:$0xff]
        %v1884 = vld [vmem:[#allocation2 + $0x110] sm:$0xff]
        %v1885 = vld [vmem:[#allocation2 + $0x118] sm:$0xff]
        %v1886 = vld [vmem:[#allocation2 + $0x120] sm:$0xff]
        %v1887 = vld [vmem:[#allocation2 + $0x128] sm:$0xff]
        %v1888 = vld [vmem:[#allocation2 + $0x130] sm:$0xff]
        %v1889 = vld [vmem:[#allocation2 + $0x138] sm:$0xff]
        %v1890 = vld [vmem:[#allocation2 + $0x140] sm:$0xff]
        %v1891 = vld [vmem:[#allocation2 + $0x148] sm:$0xff]
        %v1892 = vld [vmem:[#allocation2 + $0x150] sm:$0xff]
        %v1893 = vld [vmem:[#allocation2 + $0x158] sm:$0xff]
        %v1894 = vld [vmem:[#allocation2 + $0x160] sm:$0xff]
        %v1895 = vld [vmem:[#allocation2 + $0x168] sm:$0xff]
        %v1896 = vld [vmem:[#allocation2 + $0x170] sm:$0xff]
        %v1897 = vld [vmem:[#allocation2 + $0x178] sm:$0xff]
        %v1898 = vld [vmem:[#allocation2 + $0x180] sm:$0xff]
        %v1899 = vld [vmem:[#allocation2 + $0x188] sm:$0xff]
        %v1900 = vld [vmem:[#allocation2 + $0x190] sm:$0xff]
        %v1901 = vld [vmem:[#allocation2 + $0x198] sm:$0xff]
        %v1902 = vld [vmem:[#allocation2 + $0x1a0] sm:$0xff]
        %v1903 = vld [vmem:[#allocation2 + $0x1a8] sm:$0xff]
        %v1904 = vld [vmem:[#allocation2 + $0x1b0] sm:$0xff]
        %v1905 = vld [vmem:[#allocation2 + $0x1b8] sm:$0xff]
        %v1906 = vld [vmem:[#allocation2 + $0x1c0] sm:$0xff]
        %v1907 = vld [vmem:[#allocation2 + $0x1c8] sm:$0xff]
        %v1908 = vld [vmem:[#allocation2 + $0x1d0] sm:$0xff]
        %v1909 = vld [vmem:[#allocation2 + $0x1d8] sm:$0xff]
        %v1910 = vld [vmem:[#allocation2 + $0x1e0] sm:$0xff]
        %v1911 = vld [vmem:[#allocation2 + $0x1e8] sm:$0xff]
        %v1912 = vld [vmem:[#allocation2 + $0x1f0] sm:$0xff]
        %v1913 = vld [vmem:[#allocation2 + $0x1f8] sm:$0xff]
        %v1914 = vld [vmem:[#allocation2 + $0x200] sm:$0xff]
        %v1915 = vld [vmem:[#allocation2 + $0x208] sm:$0xff]
        %v1916 = vld [vmem:[#allocation2 + $0x210] sm:$0xff]
        %v1917 = vld [vmem:[#allocation2 + $0x218] sm:$0xff]
        %v1918 = vld [vmem:[#allocation2 + $0x220] sm:$0xff]
        %v1919 = vld [vmem:[#allocation2 + $0x228] sm:$0xff]
        %v1920 = vld [vmem:[#allocation2 + $0x230] sm:$0xff]
        %v1921 = vld [vmem:[#allocation2 + $0x238] sm:$0xff]
        %v1922 = vld [vmem:[#allocation2 + $0x240] sm:$0xff]
        %v1923 = vld [vmem:[#allocation2 + $0x248] sm:$0xff]
        %v1924 = vld [vmem:[#allocation2 + $0x250] sm:$0xff]
        %v1925 = vld [vmem:[#allocation2 + $0x258] sm:$0xff]
        %v1926 = vld [vmem:[#allocation2 + $0x260] sm:$0xff]
        %v1927 = vld [vmem:[#allocation2 + $0x268] sm:$0xff]
        %v1928 = vld [vmem:[#allocation2 + $0x270] sm:$0xff]
        %v1929 = vld [vmem:[#allocation2 + $0x278] sm:$0xff]
        %v1930 = vld [vmem:[#allocation2 + $0x280] sm:$0xff]
        %v1931 = vld [vmem:[#allocation2 + $0x288] sm:$0xff]
        %v1932 = vld [vmem:[#allocation2 + $0x290] sm:$0xff]
        %v1933 = vld [vmem:[#allocation2 + $0x298] sm:$0xff]
        %v1934 = vld [vmem:[#allocation2 + $0x2a0] sm:$0xff]
        %v1935 = vld [vmem:[#allocation2 + $0x2a8] sm:$0xff]
        %v1936 = vld [vmem:[#allocation2 + $0x2b0] sm:$0xff]
        %v1937 = vld [vmem:[#allocation2 + $0x2b8] sm:$0xff]
        %v1938 = vld [vmem:[#allocation2 + $0x2c0] sm:$0xff]
        %v1939 = vld [vmem:[#allocation2 + $0x2c8] sm:$0xff]
        %v1940 = vld [vmem:[#allocation2 + $0x2d0] sm:$0xff]
        %v1941 = vld [vmem:[#allocation2 + $0x2d8] sm:$0xff]
        %v1942 = vld [vmem:[#allocation2 + $0x2e0] sm:$0xff]
        %v1943 = vld [vmem:[#allocation2 + $0x2e8] sm:$0xff]
        %v1944 = vld [vmem:[#allocation2 + $0x2f0] sm:$0xff]
        %v1945 = vld [vmem:[#allocation2 + $0x2f8] sm:$0xff]
        %v1946 = vld [vmem:[#allocation2 + $0x300] sm:$0xff]
        %v1947 = vld [vmem:[#allocation2 + $0x308] sm:$0xff]
        %v1948 = vld [vmem:[#allocation2 + $0x310] sm:$0xff]
        %v1949 = vld [vmem:[#allocation2 + $0x318] sm:$0xff]
        %v1950 = vld [vmem:[#allocation2 + $0x320] sm:$0xff]
        %v1951 = vld [vmem:[#allocation2 + $0x328] sm:$0xff]
        %v1952 = vld [vmem:[#allocation2 + $0x330] sm:$0xff]
        %v1953 = vld [vmem:[#allocation2 + $0x338] sm:$0xff]
        %v1954 = vld [vmem:[#allocation2 + $0x340] sm:$0xff]
        %v1955 = vld [vmem:[#allocation2 + $0x348] sm:$0xff]
        %v1956 = vld [vmem:[#allocation2 + $0x350] sm:$0xff]
        %v1957 = vld [vmem:[#allocation2 + $0x358] sm:$0xff]
        %v1958 = vld [vmem:[#allocation2 + $0x360] sm:$0xff]
        %v1959 = vld [vmem:[#allocation2 + $0x368] sm:$0xff]
        %v1960 = vld [vmem:[#allocation2 + $0x370] sm:$0xff]
        %v1961 = vld [vmem:[#allocation2 + $0x378] sm:$0xff]
        %v1962 = vld [vmem:[#allocation2 + $0x380] sm:$0xff]
        %v1963 = vld [vmem:[#allocation2 + $0x388] sm:$0xff]
        %v1964 = vld [vmem:[#allocation2 + $0x390] sm:$0xff]
        %v1965 = vld [vmem:[#allocation2 + $0x398] sm:$0xff]
        %v1966 = vld [vmem:[#allocation2 + $0x3a0] sm:$0xff]
        %v1967 = vld [vmem:[#allocation2 + $0x3a8] sm:$0xff]
        %v1968 = vld [vmem:[#allocation2 + $0x3b0] sm:$0xff]
        %v1969 = vld [vmem:[#allocation2 + $0x3b8] sm:$0xff]
        %v1970 = vld [vmem:[#allocation2 + $0x3c0] sm:$0xff]
        %v1971 = vld [vmem:[#allocation2 + $0x3c8] sm:$0xff]
        %v1972 = vld [vmem:[#allocation2 + $0x3d0] sm:$0xff]
        %v1973 = vld [vmem:[#allocation2 + $0x3d8] sm:$0xff]
        %v1974 = vld [vmem:[#allocation2 + $0x3e0] sm:$0xff]
        %v1975 = vld [vmem:[#allocation2 + $0x3e8] sm:$0xff]
        %v1976 = vld [vmem:[#allocation2 + $0x3f0] sm:$0xff]
        %v1977 = vld [vmem:[#allocation2 + $0x3f8] sm:$0xff]
        %v1978 = vld [vmem:[%s478 + $0x8] sm:$0xff]
        %v1979 = vld [vmem:[%s478 + $0x28] sm:$0xff]
        %v1980 = vld [vmem:[%s478 + $0x48] sm:$0xff]
        %v1981 = vld [vmem:[%s478 + $0x68] sm:$0xff]
        %v1982 = vld [vmem:[%s478 + $0x88] sm:$0xff]
        %v1983 = vld [vmem:[%s478 + $0xa8] sm:$0xff]
        %v1984 = vld [vmem:[%s478 + $0xc8] sm:$0xff]
        %v1985 = vld [vmem:[%s478 + $0xe8] sm:$0xff]
        %v1986 = vld [vmem:[%s478 + $0x108] sm:$0xff]
        %v1987 = vld [vmem:[%s478 + $0x128] sm:$0xff]
        %v1988 = vld [vmem:[%s478 + $0x148] sm:$0xff]
        %v1989 = vld [vmem:[%s478 + $0x168] sm:$0xff]
        %v1990 = vld [vmem:[%s478 + $0x188] sm:$0xff]
        %v1991 = vld [vmem:[%s478 + $0x1a8] sm:$0xff]
        %v1992 = vld [vmem:[%s478 + $0x1c8] sm:$0xff]
        %v1993 = vld [vmem:[%s478 + $0x1e8] sm:$0xff]
        %v1994 = vld [vmem:[%s478 + $0x208] sm:$0xff]
        %v1995 = vld [vmem:[%s478 + $0x228] sm:$0xff]
        %v1996 = vld [vmem:[%s478 + $0x248] sm:$0xff]
        %v1997 = vld [vmem:[%s478 + $0x268] sm:$0xff]
        %v1998 = vld [vmem:[%s478 + $0x288] sm:$0xff]
        %v1999 = vld [vmem:[%s478 + $0x2a8] sm:$0xff]
        %v2000 = vld [vmem:[%s478 + $0x2c8] sm:$0xff]
        %v2001 = vld [vmem:[%s478 + $0x2e8] sm:$0xff]
        %v2002 = vld [vmem:[%s478 + $0x308] sm:$0xff]
        %v2003 = vld [vmem:[%s478 + $0x328] sm:$0xff]
        %v2004 = vld [vmem:[%s478 + $0x348] sm:$0xff]
        %v2005 = vld [vmem:[%s478 + $0x368] sm:$0xff]
        %v2006 = vld [vmem:[%s478 + $0x388] sm:$0xff]
        %v2007 = vld [vmem:[%s478 + $0x3a8] sm:$0xff]
        %v2008 = vld [vmem:[%s478 + $0x3c8] sm:$0xff]
        %v2009 = vld [vmem:[%s478 + $0x3e8] sm:$0xff]
        %v2010 = vld [vmem:[%s478 + $0x408] sm:$0xff]
        %v2011 = vld [vmem:[%s478 + $0x428] sm:$0xff]
        %v2012 = vld [vmem:[%s478 + $0x448] sm:$0xff]
        %v2013 = vld [vmem:[%s478 + $0x468] sm:$0xff]
        %v2014 = vld [vmem:[%s478 + $0x488] sm:$0xff]
        %v2015 = vld [vmem:[%s478 + $0x4a8] sm:$0xff]
        %v2016 = vld [vmem:[%s478 + $0x4c8] sm:$0xff]
        %v2017 = vld [vmem:[%s478 + $0x4e8] sm:$0xff]
        %v2018 = vld [vmem:[%s478 + $0x508] sm:$0xff]
        %v2019 = vld [vmem:[%s478 + $0x528] sm:$0xff]
        %v2020 = vld [vmem:[%s478 + $0x548] sm:$0xff]
        %v2021 = vld [vmem:[%s478 + $0x568] sm:$0xff]
        %v2022 = vld [vmem:[%s478 + $0x588] sm:$0xff]
        %v2023 = vld [vmem:[%s478 + $0x5a8] sm:$0xff]
        %v2024 = vld [vmem:[%s478 + $0x5c8] sm:$0xff]
        %v2025 = vld [vmem:[%s478 + $0x5e8] sm:$0xff]
        %v2026 = vld [vmem:[%s478 + $0x608] sm:$0xff]
        %v2027 = vld [vmem:[%s478 + $0x628] sm:$0xff]
        %v2028 = vld [vmem:[%s478 + $0x648] sm:$0xff]
        %v2029 = vld [vmem:[%s478 + $0x668] sm:$0xff]
        %v2030 = vld [vmem:[%s478 + $0x688] sm:$0xff]
        %v2031 = vld [vmem:[%s478 + $0x6a8] sm:$0xff]
        %v2032 = vld [vmem:[%s478 + $0x6c8] sm:$0xff]
        %v2033 = vld [vmem:[%s478 + $0x6e8] sm:$0xff]
        %v2034 = vld [vmem:[%s478 + $0x708] sm:$0xff]
        %v2035 = vld [vmem:[%s478 + $0x728] sm:$0xff]
        %v2036 = vld [vmem:[%s478 + $0x748] sm:$0xff]
        %v2037 = vld [vmem:[%s478 + $0x768] sm:$0xff]
        %v2038 = vld [vmem:[%s478 + $0x788] sm:$0xff]
        %v2039 = vld [vmem:[%s478 + $0x7a8] sm:$0xff]
        %v2040 = vld [vmem:[%s478 + $0x7c8] sm:$0xff]
        %v2041 = vld [vmem:[%s478 + $0x7e8] sm:$0xff]
        %v2042 = vld [vmem:[%s478 + $0x808] sm:$0xff]
        %v2043 = vld [vmem:[%s478 + $0x828] sm:$0xff]
        %v2044 = vld [vmem:[%s478 + $0x848] sm:$0xff]
        %v2045 = vld [vmem:[%s478 + $0x868] sm:$0xff]
        %v2046 = vld [vmem:[%s478 + $0x888] sm:$0xff]
        %v2047 = vld [vmem:[%s478 + $0x8a8] sm:$0xff]
        %v2048 = vld [vmem:[%s478 + $0x8c8] sm:$0xff]
        %v2049 = vld [vmem:[%s478 + $0x8e8] sm:$0xff]
        %v2050 = vld [vmem:[%s478 + $0x908] sm:$0xff]
        %v2051 = vld [vmem:[%s478 + $0x928] sm:$0xff]
        %v2052 = vld [vmem:[%s478 + $0x948] sm:$0xff]
        %v2053 = vld [vmem:[%s478 + $0x968] sm:$0xff]
        %v2054 = vld [vmem:[%s478 + $0x988] sm:$0xff]
        %v2055 = vld [vmem:[%s478 + $0x9a8] sm:$0xff]
        %v2056 = vld [vmem:[%s478 + $0x9c8] sm:$0xff]
        %v2057 = vld [vmem:[%s478 + $0x9e8] sm:$0xff]
        %v2058 = vld [vmem:[%s478 + $0xa08] sm:$0xff]
        %v2059 = vld [vmem:[%s478 + $0xa28] sm:$0xff]
        %v2060 = vld [vmem:[%s478 + $0xa48] sm:$0xff]
        %v2061 = vld [vmem:[%s478 + $0xa68] sm:$0xff]
        %v2062 = vld [vmem:[%s478 + $0xa88] sm:$0xff]
        %v2063 = vld [vmem:[%s478 + $0xaa8] sm:$0xff]
        %v2064 = vld [vmem:[%s478 + $0xac8] sm:$0xff]
        %v2065 = vld [vmem:[%s478 + $0xae8] sm:$0xff]
        %v2066 = vld [vmem:[%s478 + $0xb08] sm:$0xff]
        %v2067 = vld [vmem:[%s478 + $0xb28] sm:$0xff]
        %v2068 = vld [vmem:[%s478 + $0xb48] sm:$0xff]
        %v2069 = vld [vmem:[%s478 + $0xb68] sm:$0xff]
        %v2070 = vld [vmem:[%s478 + $0xb88] sm:$0xff]
        %v2071 = vld [vmem:[%s478 + $0xba8] sm:$0xff]
        %v2072 = vld [vmem:[%s478 + $0xbc8] sm:$0xff]
        %v2073 = vld [vmem:[%s478 + $0xbe8] sm:$0xff]
        %v2074 = vld [vmem:[%s478 + $0xc08] sm:$0xff]
        %v2075 = vld [vmem:[%s478 + $0xc28] sm:$0xff]
        %v2076 = vld [vmem:[%s478 + $0xc48] sm:$0xff]
        %v2077 = vld [vmem:[%s478 + $0xc68] sm:$0xff]
        %v2078 = vld [vmem:[%s478 + $0xc88] sm:$0xff]
        %v2079 = vld [vmem:[%s478 + $0xca8] sm:$0xff]
        %v2080 = vld [vmem:[%s478 + $0xcc8] sm:$0xff]
        %v2081 = vld [vmem:[%s478 + $0xce8] sm:$0xff]
        %v2082 = vld [vmem:[%s478 + $0xd08] sm:$0xff]
        %v2083 = vld [vmem:[%s478 + $0xd28] sm:$0xff]
        %v2084 = vld [vmem:[%s478 + $0xd48] sm:$0xff]
        %v2085 = vld [vmem:[%s478 + $0xd68] sm:$0xff]
        %v2086 = vld [vmem:[%s478 + $0xd88] sm:$0xff]
        %v2087 = vld [vmem:[%s478 + $0xda8] sm:$0xff]
        %v2088 = vld [vmem:[%s478 + $0xdc8] sm:$0xff]
        %v2089 = vld [vmem:[%s478 + $0xde8] sm:$0xff]
        %v2090 = vld [vmem:[%s478 + $0xe08] sm:$0xff]
        %v2091 = vld [vmem:[%s478 + $0xe28] sm:$0xff]
        %v2092 = vld [vmem:[%s478 + $0xe48] sm:$0xff]
        %v2093 = vld [vmem:[%s478 + $0xe68] sm:$0xff]
        %v2094 = vld [vmem:[%s478 + $0xe88] sm:$0xff]
        %v2095 = vld [vmem:[%s478 + $0xea8] sm:$0xff]
        %v2096 = vld [vmem:[%s478 + $0xec8] sm:$0xff]
        %v2097 = vld [vmem:[%s478 + $0xee8] sm:$0xff]
        %v2098 = vld [vmem:[%s478 + $0xf08] sm:$0xff]
        %v2099 = vld [vmem:[%s478 + $0xf28] sm:$0xff]
        %v2100 = vld [vmem:[%s478 + $0xf48] sm:$0xff]
        %v2101 = vld [vmem:[%s478 + $0xf68] sm:$0xff]
        %v2102 = vld [vmem:[%s478 + $0xf88] sm:$0xff]
        %v2103 = vld [vmem:[%s478 + $0xfa8] sm:$0xff]
        %v2104 = vld [vmem:[%s478 + $0xfc8] sm:$0xff]
        %v2105 = vld [vmem:[%s478 + $0xfe8] sm:$0xff]
        %v2106 = vmax.f32 %v1850, %v1978
        %v2107 = vmax.f32 %v1851, %v1979
        %v2108 = vmax.f32 %v1852, %v1980
        %v2109 = vmax.f32 %v1853, %v1981
        %v2110 = vmax.f32 %v1854, %v1982
        %v2111 = vmax.f32 %v1855, %v1983
        %v2112 = vmax.f32 %v1856, %v1984
        %v2113 = vmax.f32 %v1857, %v1985
        %v2114 = vmax.f32 %v1858, %v1986
        %v2115 = vmax.f32 %v1859, %v1987
        %v2116 = vmax.f32 %v1860, %v1988
        %v2117 = vmax.f32 %v1861, %v1989
        %v2118 = vmax.f32 %v1862, %v1990
        %v2119 = vmax.f32 %v1863, %v1991
        %v2120 = vmax.f32 %v1864, %v1992
        %v2121 = vmax.f32 %v1865, %v1993
        %v2122 = vmax.f32 %v1866, %v1994
        %v2123 = vmax.f32 %v1867, %v1995
        %v2124 = vmax.f32 %v1868, %v1996
        %v2125 = vmax.f32 %v1869, %v1997
        %v2126 = vmax.f32 %v1870, %v1998
        %v2127 = vmax.f32 %v1871, %v1999
        %v2128 = vmax.f32 %v1872, %v2000
        %v2129 = vmax.f32 %v1873, %v2001
        %v2130 = vmax.f32 %v1874, %v2002
        %v2131 = vmax.f32 %v1875, %v2003
        %v2132 = vmax.f32 %v1876, %v2004
        %v2133 = vmax.f32 %v1877, %v2005
        %v2134 = vmax.f32 %v1878, %v2006
        %v2135 = vmax.f32 %v1879, %v2007
        %v2136 = vmax.f32 %v1880, %v2008
        %v2137 = vmax.f32 %v1881, %v2009
        %v2138 = vmax.f32 %v1882, %v2010
        %v2139 = vmax.f32 %v1883, %v2011
        %v2140 = vmax.f32 %v1884, %v2012
        %v2141 = vmax.f32 %v1885, %v2013
        %v2142 = vmax.f32 %v1886, %v2014
        %v2143 = vmax.f32 %v1887, %v2015
        %v2144 = vmax.f32 %v1888, %v2016
        %v2145 = vmax.f32 %v1889, %v2017
        %v2146 = vmax.f32 %v1890, %v2018
        %v2147 = vmax.f32 %v1891, %v2019
        %v2148 = vmax.f32 %v1892, %v2020
        %v2149 = vmax.f32 %v1893, %v2021
        %v2150 = vmax.f32 %v1894, %v2022
        %v2151 = vmax.f32 %v1895, %v2023
        %v2152 = vmax.f32 %v1896, %v2024
        %v2153 = vmax.f32 %v1897, %v2025
        %v2154 = vmax.f32 %v1898, %v2026
        %v2155 = vmax.f32 %v1899, %v2027
        %v2156 = vmax.f32 %v1900, %v2028
        %v2157 = vmax.f32 %v1901, %v2029
        %v2158 = vmax.f32 %v1902, %v2030
        %v2159 = vmax.f32 %v1903, %v2031
        %v2160 = vmax.f32 %v1904, %v2032
        %v2161 = vmax.f32 %v1905, %v2033
        %v2162 = vmax.f32 %v1906, %v2034
        %v2163 = vmax.f32 %v1907, %v2035
        %v2164 = vmax.f32 %v1908, %v2036
        %v2165 = vmax.f32 %v1909, %v2037
        %v2166 = vmax.f32 %v1910, %v2038
        %v2167 = vmax.f32 %v1911, %v2039
        %v2168 = vmax.f32 %v1912, %v2040
        %v2169 = vmax.f32 %v1913, %v2041
        %v2170 = vmax.f32 %v1914, %v2042
        %v2171 = vmax.f32 %v1915, %v2043
        %v2172 = vmax.f32 %v1916, %v2044
        %v2173 = vmax.f32 %v1917, %v2045
        %v2174 = vmax.f32 %v1918, %v2046
        %v2175 = vmax.f32 %v1919, %v2047
        %v2176 = vmax.f32 %v1920, %v2048
        %v2177 = vmax.f32 %v1921, %v2049
        %v2178 = vmax.f32 %v1922, %v2050
        %v2179 = vmax.f32 %v1923, %v2051
        %v2180 = vmax.f32 %v1924, %v2052
        %v2181 = vmax.f32 %v1925, %v2053
        %v2182 = vmax.f32 %v1926, %v2054
        %v2183 = vmax.f32 %v1927, %v2055
        %v2184 = vmax.f32 %v1928, %v2056
        %v2185 = vmax.f32 %v1929, %v2057
        %v2186 = vmax.f32 %v1930, %v2058
        %v2187 = vmax.f32 %v1931, %v2059
        %v2188 = vmax.f32 %v1932, %v2060
        %v2189 = vmax.f32 %v1933, %v2061
        %v2190 = vmax.f32 %v1934, %v2062
        %v2191 = vmax.f32 %v1935, %v2063
        %v2192 = vmax.f32 %v1936, %v2064
        %v2193 = vmax.f32 %v1937, %v2065
        %v2194 = vmax.f32 %v1938, %v2066
        %v2195 = vmax.f32 %v1939, %v2067
        %v2196 = vmax.f32 %v1940, %v2068
        %v2197 = vmax.f32 %v1941, %v2069
        %v2198 = vmax.f32 %v1942, %v2070
        %v2199 = vmax.f32 %v1943, %v2071
        %v2200 = vmax.f32 %v1944, %v2072
        %v2201 = vmax.f32 %v1945, %v2073
        %v2202 = vmax.f32 %v1946, %v2074
        %v2203 = vmax.f32 %v1947, %v2075
        %v2204 = vmax.f32 %v1948, %v2076
        %v2205 = vmax.f32 %v1949, %v2077
        %v2206 = vmax.f32 %v1950, %v2078
        %v2207 = vmax.f32 %v1951, %v2079
        %v2208 = vmax.f32 %v1952, %v2080
        %v2209 = vmax.f32 %v1953, %v2081
        %v2210 = vmax.f32 %v1954, %v2082
        %v2211 = vmax.f32 %v1955, %v2083
        %v2212 = vmax.f32 %v1956, %v2084
        %v2213 = vmax.f32 %v1957, %v2085
        %v2214 = vmax.f32 %v1958, %v2086
        %v2215 = vmax.f32 %v1959, %v2087
        %v2216 = vmax.f32 %v1960, %v2088
        %v2217 = vmax.f32 %v1961, %v2089
        %v2218 = vmax.f32 %v1962, %v2090
        %v2219 = vmax.f32 %v1963, %v2091
        %v2220 = vmax.f32 %v1964, %v2092
        %v2221 = vmax.f32 %v1965, %v2093
        %v2222 = vmax.f32 %v1966, %v2094
        %v2223 = vmax.f32 %v1967, %v2095
        %v2224 = vmax.f32 %v1968, %v2096
        %v2225 = vmax.f32 %v1969, %v2097
        %v2226 = vmax.f32 %v1970, %v2098
        %v2227 = vmax.f32 %v1971, %v2099
        %v2228 = vmax.f32 %v1972, %v2100
        %v2229 = vmax.f32 %v1973, %v2101
        %v2230 = vmax.f32 %v1974, %v2102
        %v2231 = vmax.f32 %v1975, %v2103
        %v2232 = vmax.f32 %v1976, %v2104
        %v2233 = vmax.f32 %v1977, %v2105
        %2234 = vst [vmem:[#allocation2] sm:$0xff] %v2106
        %2235 = vst [vmem:[#allocation2 + $0x8] sm:$0xff] %v2107
        %2236 = vst [vmem:[#allocation2 + $0x10] sm:$0xff] %v2108
        %2237 = vst [vmem:[#allocation2 + $0x18] sm:$0xff] %v2109
        %2238 = vst [vmem:[#allocation2 + $0x20] sm:$0xff] %v2110
        %2239 = vst [vmem:[#allocation2 + $0x28] sm:$0xff] %v2111
        %2240 = vst [vmem:[#allocation2 + $0x30] sm:$0xff] %v2112
        %2241 = vst [vmem:[#allocation2 + $0x38] sm:$0xff] %v2113
        %2242 = vst [vmem:[#allocation2 + $0x40] sm:$0xff] %v2114
        %2243 = vst [vmem:[#allocation2 + $0x48] sm:$0xff] %v2115
        %2244 = vst [vmem:[#allocation2 + $0x50] sm:$0xff] %v2116
        %2245 = vst [vmem:[#allocation2 + $0x58] sm:$0xff] %v2117
        %2246 = vst [vmem:[#allocation2 + $0x60] sm:$0xff] %v2118
        %2247 = vst [vmem:[#allocation2 + $0x68] sm:$0xff] %v2119
        %2248 = vst [vmem:[#allocation2 + $0x70] sm:$0xff] %v2120
        %2249 = vst [vmem:[#allocation2 + $0x78] sm:$0xff] %v2121
        %2250 = vst [vmem:[#allocation2 + $0x80] sm:$0xff] %v2122
        %2251 = vst [vmem:[#allocation2 + $0x88] sm:$0xff] %v2123
        %2252 = vst [vmem:[#allocation2 + $0x90] sm:$0xff] %v2124
        %2253 = vst [vmem:[#allocation2 + $0x98] sm:$0xff] %v2125
        %2254 = vst [vmem:[#allocation2 + $0xa0] sm:$0xff] %v2126
        %2255 = vst [vmem:[#allocation2 + $0xa8] sm:$0xff] %v2127
        %2256 = vst [vmem:[#allocation2 + $0xb0] sm:$0xff] %v2128
        %2257 = vst [vmem:[#allocation2 + $0xb8] sm:$0xff] %v2129
        %2258 = vst [vmem:[#allocation2 + $0xc0] sm:$0xff] %v2130
        %2259 = vst [vmem:[#allocation2 + $0xc8] sm:$0xff] %v2131
        %2260 = vst [vmem:[#allocation2 + $0xd0] sm:$0xff] %v2132
        %2261 = vst [vmem:[#allocation2 + $0xd8] sm:$0xff] %v2133
        %2262 = vst [vmem:[#allocation2 + $0xe0] sm:$0xff] %v2134
        %2263 = vst [vmem:[#allocation2 + $0xe8] sm:$0xff] %v2135
        %2264 = vst [vmem:[#allocation2 + $0xf0] sm:$0xff] %v2136
        %2265 = vst [vmem:[#allocation2 + $0xf8] sm:$0xff] %v2137
        %2266 = vst [vmem:[#allocation2 + $0x100] sm:$0xff] %v2138
        %2267 = vst [vmem:[#allocation2 + $0x108] sm:$0xff] %v2139
        %2268 = vst [vmem:[#allocation2 + $0x110] sm:$0xff] %v2140
        %2269 = vst [vmem:[#allocation2 + $0x118] sm:$0xff] %v2141
        %2270 = vst [vmem:[#allocation2 + $0x120] sm:$0xff] %v2142
        %2271 = vst [vmem:[#allocation2 + $0x128] sm:$0xff] %v2143
        %2272 = vst [vmem:[#allocation2 + $0x130] sm:$0xff] %v2144
        %2273 = vst [vmem:[#allocation2 + $0x138] sm:$0xff] %v2145
        %2274 = vst [vmem:[#allocation2 + $0x140] sm:$0xff] %v2146
        %2275 = vst [vmem:[#allocation2 + $0x148] sm:$0xff] %v2147
        %2276 = vst [vmem:[#allocation2 + $0x150] sm:$0xff] %v2148
        %2277 = vst [vmem:[#allocation2 + $0x158] sm:$0xff] %v2149
        %2278 = vst [vmem:[#allocation2 + $0x160] sm:$0xff] %v2150
        %2279 = vst [vmem:[#allocation2 + $0x168] sm:$0xff] %v2151
        %2280 = vst [vmem:[#allocation2 + $0x170] sm:$0xff] %v2152
        %2281 = vst [vmem:[#allocation2 + $0x178] sm:$0xff] %v2153
        %2282 = vst [vmem:[#allocation2 + $0x180] sm:$0xff] %v2154
        %2283 = vst [vmem:[#allocation2 + $0x188] sm:$0xff] %v2155
        %2284 = vst [vmem:[#allocation2 + $0x190] sm:$0xff] %v2156
        %2285 = vst [vmem:[#allocation2 + $0x198] sm:$0xff] %v2157
        %2286 = vst [vmem:[#allocation2 + $0x1a0] sm:$0xff] %v2158
        %2287 = vst [vmem:[#allocation2 + $0x1a8] sm:$0xff] %v2159
        %2288 = vst [vmem:[#allocation2 + $0x1b0] sm:$0xff] %v2160
        %2289 = vst [vmem:[#allocation2 + $0x1b8] sm:$0xff] %v2161
        %2290 = vst [vmem:[#allocation2 + $0x1c0] sm:$0xff] %v2162
        %2291 = vst [vmem:[#allocation2 + $0x1c8] sm:$0xff] %v2163
        %2292 = vst [vmem:[#allocation2 + $0x1d0] sm:$0xff] %v2164
        %2293 = vst [vmem:[#allocation2 + $0x1d8] sm:$0xff] %v2165
        %2294 = vst [vmem:[#allocation2 + $0x1e0] sm:$0xff] %v2166
        %2295 = vst [vmem:[#allocation2 + $0x1e8] sm:$0xff] %v2167
        %2296 = vst [vmem:[#allocation2 + $0x1f0] sm:$0xff] %v2168
        %2297 = vst [vmem:[#allocation2 + $0x1f8] sm:$0xff] %v2169
        %2298 = vst [vmem:[#allocation2 + $0x200] sm:$0xff] %v2170
        %2299 = vst [vmem:[#allocation2 + $0x208] sm:$0xff] %v2171
        %2300 = vst [vmem:[#allocation2 + $0x210] sm:$0xff] %v2172
        %2301 = vst [vmem:[#allocation2 + $0x218] sm:$0xff] %v2173
        %2302 = vst [vmem:[#allocation2 + $0x220] sm:$0xff] %v2174
        %2303 = vst [vmem:[#allocation2 + $0x228] sm:$0xff] %v2175
        %2304 = vst [vmem:[#allocation2 + $0x230] sm:$0xff] %v2176
        %2305 = vst [vmem:[#allocation2 + $0x238] sm:$0xff] %v2177
        %2306 = vst [vmem:[#allocation2 + $0x240] sm:$0xff] %v2178
        %2307 = vst [vmem:[#allocation2 + $0x248] sm:$0xff] %v2179
        %2308 = vst [vmem:[#allocation2 + $0x250] sm:$0xff] %v2180
        %2309 = vst [vmem:[#allocation2 + $0x258] sm:$0xff] %v2181
        %2310 = vst [vmem:[#allocation2 + $0x260] sm:$0xff] %v2182
        %2311 = vst [vmem:[#allocation2 + $0x268] sm:$0xff] %v2183
        %2312 = vst [vmem:[#allocation2 + $0x270] sm:$0xff] %v2184
        %2313 = vst [vmem:[#allocation2 + $0x278] sm:$0xff] %v2185
        %2314 = vst [vmem:[#allocation2 + $0x280] sm:$0xff] %v2186
        %2315 = vst [vmem:[#allocation2 + $0x288] sm:$0xff] %v2187
        %2316 = vst [vmem:[#allocation2 + $0x290] sm:$0xff] %v2188
        %2317 = vst [vmem:[#allocation2 + $0x298] sm:$0xff] %v2189
        %2318 = vst [vmem:[#allocation2 + $0x2a0] sm:$0xff] %v2190
        %2319 = vst [vmem:[#allocation2 + $0x2a8] sm:$0xff] %v2191
        %2320 = vst [vmem:[#allocation2 + $0x2b0] sm:$0xff] %v2192
        %2321 = vst [vmem:[#allocation2 + $0x2b8] sm:$0xff] %v2193
        %2322 = vst [vmem:[#allocation2 + $0x2c0] sm:$0xff] %v2194
        %2323 = vst [vmem:[#allocation2 + $0x2c8] sm:$0xff] %v2195
        %2324 = vst [vmem:[#allocation2 + $0x2d0] sm:$0xff] %v2196
        %2325 = vst [vmem:[#allocation2 + $0x2d8] sm:$0xff] %v2197
        %2326 = vst [vmem:[#allocation2 + $0x2e0] sm:$0xff] %v2198
        %2327 = vst [vmem:[#allocation2 + $0x2e8] sm:$0xff] %v2199
        %2328 = vst [vmem:[#allocation2 + $0x2f0] sm:$0xff] %v2200
        %2329 = vst [vmem:[#allocation2 + $0x2f8] sm:$0xff] %v2201
        %2330 = vst [vmem:[#allocation2 + $0x300] sm:$0xff] %v2202
        %2331 = vst [vmem:[#allocation2 + $0x308] sm:$0xff] %v2203
        %2332 = vst [vmem:[#allocation2 + $0x310] sm:$0xff] %v2204
        %2333 = vst [vmem:[#allocation2 + $0x318] sm:$0xff] %v2205
        %2334 = vst [vmem:[#allocation2 + $0x320] sm:$0xff] %v2206
        %2335 = vst [vmem:[#allocation2 + $0x328] sm:$0xff] %v2207
        %2336 = vst [vmem:[#allocation2 + $0x330] sm:$0xff] %v2208
        %2337 = vst [vmem:[#allocation2 + $0x338] sm:$0xff] %v2209
        %2338 = vst [vmem:[#allocation2 + $0x340] sm:$0xff] %v2210
        %2339 = vst [vmem:[#allocation2 + $0x348] sm:$0xff] %v2211
        %2340 = vst [vmem:[#allocation2 + $0x350] sm:$0xff] %v2212
        %2341 = vst [vmem:[#allocation2 + $0x358] sm:$0xff] %v2213
        %2342 = vst [vmem:[#allocation2 + $0x360] sm:$0xff] %v2214
        %2343 = vst [vmem:[#allocation2 + $0x368] sm:$0xff] %v2215
        %2344 = vst [vmem:[#allocation2 + $0x370] sm:$0xff] %v2216
        %2345 = vst [vmem:[#allocation2 + $0x378] sm:$0xff] %v2217
        %2346 = vst [vmem:[#allocation2 + $0x380] sm:$0xff] %v2218
        %2347 = vst [vmem:[#allocation2 + $0x388] sm:$0xff] %v2219
        %2348 = vst [vmem:[#allocation2 + $0x390] sm:$0xff] %v2220
        %2349 = vst [vmem:[#allocation2 + $0x398] sm:$0xff] %v2221
        %2350 = vst [vmem:[#allocation2 + $0x3a0] sm:$0xff] %v2222
        %2351 = vst [vmem:[#allocation2 + $0x3a8] sm:$0xff] %v2223
        %2352 = vst [vmem:[#allocation2 + $0x3b0] sm:$0xff] %v2224
        %2353 = vst [vmem:[#allocation2 + $0x3b8] sm:$0xff] %v2225
        %2354 = vst [vmem:[#allocation2 + $0x3c0] sm:$0xff] %v2226
        %2355 = vst [vmem:[#allocation2 + $0x3c8] sm:$0xff] %v2227
        %2356 = vst [vmem:[#allocation2 + $0x3d0] sm:$0xff] %v2228
        %2357 = vst [vmem:[#allocation2 + $0x3d8] sm:$0xff] %v2229
        %2358 = vst [vmem:[#allocation2 + $0x3e0] sm:$0xff] %v2230
        %2359 = vst [vmem:[#allocation2 + $0x3e8] sm:$0xff] %v2231
        %2360 = vst [vmem:[#allocation2 + $0x3f0] sm:$0xff] %v2232
        %2361 = vst [vmem:[#allocation2 + $0x3f8] sm:$0xff] %v2233
        %v2362 = vld [vmem:[#allocation3] sm:$0xff]
        %v2363 = vld [vmem:[#allocation3 + $0x8] sm:$0xff]
        %v2364 = vld [vmem:[#allocation3 + $0x10] sm:$0xff]
        %v2365 = vld [vmem:[#allocation3 + $0x18] sm:$0xff]
        %v2366 = vld [vmem:[#allocation3 + $0x20] sm:$0xff]
        %v2367 = vld [vmem:[#allocation3 + $0x28] sm:$0xff]
        %v2368 = vld [vmem:[#allocation3 + $0x30] sm:$0xff]
        %v2369 = vld [vmem:[#allocation3 + $0x38] sm:$0xff]
        %v2370 = vld [vmem:[#allocation3 + $0x40] sm:$0xff]
        %v2371 = vld [vmem:[#allocation3 + $0x48] sm:$0xff]
        %v2372 = vld [vmem:[#allocation3 + $0x50] sm:$0xff]
        %v2373 = vld [vmem:[#allocation3 + $0x58] sm:$0xff]
        %v2374 = vld [vmem:[#allocation3 + $0x60] sm:$0xff]
        %v2375 = vld [vmem:[#allocation3 + $0x68] sm:$0xff]
        %v2376 = vld [vmem:[#allocation3 + $0x70] sm:$0xff]
        %v2377 = vld [vmem:[#allocation3 + $0x78] sm:$0xff]
        %v2378 = vld [vmem:[#allocation3 + $0x80] sm:$0xff]
        %v2379 = vld [vmem:[#allocation3 + $0x88] sm:$0xff]
        %v2380 = vld [vmem:[#allocation3 + $0x90] sm:$0xff]
        %v2381 = vld [vmem:[#allocation3 + $0x98] sm:$0xff]
        %v2382 = vld [vmem:[#allocation3 + $0xa0] sm:$0xff]
        %v2383 = vld [vmem:[#allocation3 + $0xa8] sm:$0xff]
        %v2384 = vld [vmem:[#allocation3 + $0xb0] sm:$0xff]
        %v2385 = vld [vmem:[#allocation3 + $0xb8] sm:$0xff]
        %v2386 = vld [vmem:[#allocation3 + $0xc0] sm:$0xff]
        %v2387 = vld [vmem:[#allocation3 + $0xc8] sm:$0xff]
        %v2388 = vld [vmem:[#allocation3 + $0xd0] sm:$0xff]
        %v2389 = vld [vmem:[#allocation3 + $0xd8] sm:$0xff]
        %v2390 = vld [vmem:[#allocation3 + $0xe0] sm:$0xff]
        %v2391 = vld [vmem:[#allocation3 + $0xe8] sm:$0xff]
        %v2392 = vld [vmem:[#allocation3 + $0xf0] sm:$0xff]
        %v2393 = vld [vmem:[#allocation3 + $0xf8] sm:$0xff]
        %v2394 = vld [vmem:[#allocation3 + $0x100] sm:$0xff]
        %v2395 = vld [vmem:[#allocation3 + $0x108] sm:$0xff]
        %v2396 = vld [vmem:[#allocation3 + $0x110] sm:$0xff]
        %v2397 = vld [vmem:[#allocation3 + $0x118] sm:$0xff]
        %v2398 = vld [vmem:[#allocation3 + $0x120] sm:$0xff]
        %v2399 = vld [vmem:[#allocation3 + $0x128] sm:$0xff]
        %v2400 = vld [vmem:[#allocation3 + $0x130] sm:$0xff]
        %v2401 = vld [vmem:[#allocation3 + $0x138] sm:$0xff]
        %v2402 = vld [vmem:[#allocation3 + $0x140] sm:$0xff]
        %v2403 = vld [vmem:[#allocation3 + $0x148] sm:$0xff]
        %v2404 = vld [vmem:[#allocation3 + $0x150] sm:$0xff]
        %v2405 = vld [vmem:[#allocation3 + $0x158] sm:$0xff]
        %v2406 = vld [vmem:[#allocation3 + $0x160] sm:$0xff]
        %v2407 = vld [vmem:[#allocation3 + $0x168] sm:$0xff]
        %v2408 = vld [vmem:[#allocation3 + $0x170] sm:$0xff]
        %v2409 = vld [vmem:[#allocation3 + $0x178] sm:$0xff]
        %v2410 = vld [vmem:[#allocation3 + $0x180] sm:$0xff]
        %v2411 = vld [vmem:[#allocation3 + $0x188] sm:$0xff]
        %v2412 = vld [vmem:[#allocation3 + $0x190] sm:$0xff]
        %v2413 = vld [vmem:[#allocation3 + $0x198] sm:$0xff]
        %v2414 = vld [vmem:[#allocation3 + $0x1a0] sm:$0xff]
        %v2415 = vld [vmem:[#allocation3 + $0x1a8] sm:$0xff]
        %v2416 = vld [vmem:[#allocation3 + $0x1b0] sm:$0xff]
        %v2417 = vld [vmem:[#allocation3 + $0x1b8] sm:$0xff]
        %v2418 = vld [vmem:[#allocation3 + $0x1c0] sm:$0xff]
        %v2419 = vld [vmem:[#allocation3 + $0x1c8] sm:$0xff]
        %v2420 = vld [vmem:[#allocation3 + $0x1d0] sm:$0xff]
        %v2421 = vld [vmem:[#allocation3 + $0x1d8] sm:$0xff]
        %v2422 = vld [vmem:[#allocation3 + $0x1e0] sm:$0xff]
        %v2423 = vld [vmem:[#allocation3 + $0x1e8] sm:$0xff]
        %v2424 = vld [vmem:[#allocation3 + $0x1f0] sm:$0xff]
        %v2425 = vld [vmem:[#allocation3 + $0x1f8] sm:$0xff]
        %v2426 = vld [vmem:[#allocation3 + $0x200] sm:$0xff]
        %v2427 = vld [vmem:[#allocation3 + $0x208] sm:$0xff]
        %v2428 = vld [vmem:[#allocation3 + $0x210] sm:$0xff]
        %v2429 = vld [vmem:[#allocation3 + $0x218] sm:$0xff]
        %v2430 = vld [vmem:[#allocation3 + $0x220] sm:$0xff]
        %v2431 = vld [vmem:[#allocation3 + $0x228] sm:$0xff]
        %v2432 = vld [vmem:[#allocation3 + $0x230] sm:$0xff]
        %v2433 = vld [vmem:[#allocation3 + $0x238] sm:$0xff]
        %v2434 = vld [vmem:[#allocation3 + $0x240] sm:$0xff]
        %v2435 = vld [vmem:[#allocation3 + $0x248] sm:$0xff]
        %v2436 = vld [vmem:[#allocation3 + $0x250] sm:$0xff]
        %v2437 = vld [vmem:[#allocation3 + $0x258] sm:$0xff]
        %v2438 = vld [vmem:[#allocation3 + $0x260] sm:$0xff]
        %v2439 = vld [vmem:[#allocation3 + $0x268] sm:$0xff]
        %v2440 = vld [vmem:[#allocation3 + $0x270] sm:$0xff]
        %v2441 = vld [vmem:[#allocation3 + $0x278] sm:$0xff]
        %v2442 = vld [vmem:[#allocation3 + $0x280] sm:$0xff]
        %v2443 = vld [vmem:[#allocation3 + $0x288] sm:$0xff]
        %v2444 = vld [vmem:[#allocation3 + $0x290] sm:$0xff]
        %v2445 = vld [vmem:[#allocation3 + $0x298] sm:$0xff]
        %v2446 = vld [vmem:[#allocation3 + $0x2a0] sm:$0xff]
        %v2447 = vld [vmem:[#allocation3 + $0x2a8] sm:$0xff]
        %v2448 = vld [vmem:[#allocation3 + $0x2b0] sm:$0xff]
        %v2449 = vld [vmem:[#allocation3 + $0x2b8] sm:$0xff]
        %v2450 = vld [vmem:[#allocation3 + $0x2c0] sm:$0xff]
        %v2451 = vld [vmem:[#allocation3 + $0x2c8] sm:$0xff]
        %v2452 = vld [vmem:[#allocation3 + $0x2d0] sm:$0xff]
        %v2453 = vld [vmem:[#allocation3 + $0x2d8] sm:$0xff]
        %v2454 = vld [vmem:[#allocation3 + $0x2e0] sm:$0xff]
        %v2455 = vld [vmem:[#allocation3 + $0x2e8] sm:$0xff]
        %v2456 = vld [vmem:[#allocation3 + $0x2f0] sm:$0xff]
        %v2457 = vld [vmem:[#allocation3 + $0x2f8] sm:$0xff]
        %v2458 = vld [vmem:[#allocation3 + $0x300] sm:$0xff]
        %v2459 = vld [vmem:[#allocation3 + $0x308] sm:$0xff]
        %v2460 = vld [vmem:[#allocation3 + $0x310] sm:$0xff]
        %v2461 = vld [vmem:[#allocation3 + $0x318] sm:$0xff]
        %v2462 = vld [vmem:[#allocation3 + $0x320] sm:$0xff]
        %v2463 = vld [vmem:[#allocation3 + $0x328] sm:$0xff]
        %v2464 = vld [vmem:[#allocation3 + $0x330] sm:$0xff]
        %v2465 = vld [vmem:[#allocation3 + $0x338] sm:$0xff]
        %v2466 = vld [vmem:[#allocation3 + $0x340] sm:$0xff]
        %v2467 = vld [vmem:[#allocation3 + $0x348] sm:$0xff]
        %v2468 = vld [vmem:[#allocation3 + $0x350] sm:$0xff]
        %v2469 = vld [vmem:[#allocation3 + $0x358] sm:$0xff]
        %v2470 = vld [vmem:[#allocation3 + $0x360] sm:$0xff]
        %v2471 = vld [vmem:[#allocation3 + $0x368] sm:$0xff]
        %v2472 = vld [vmem:[#allocation3 + $0x370] sm:$0xff]
        %v2473 = vld [vmem:[#allocation3 + $0x378] sm:$0xff]
        %v2474 = vld [vmem:[#allocation3 + $0x380] sm:$0xff]
        %v2475 = vld [vmem:[#allocation3 + $0x388] sm:$0xff]
        %v2476 = vld [vmem:[#allocation3 + $0x390] sm:$0xff]
        %v2477 = vld [vmem:[#allocation3 + $0x398] sm:$0xff]
        %v2478 = vld [vmem:[#allocation3 + $0x3a0] sm:$0xff]
        %v2479 = vld [vmem:[#allocation3 + $0x3a8] sm:$0xff]
        %v2480 = vld [vmem:[#allocation3 + $0x3b0] sm:$0xff]
        %v2481 = vld [vmem:[#allocation3 + $0x3b8] sm:$0xff]
        %v2482 = vld [vmem:[#allocation3 + $0x3c0] sm:$0xff]
        %v2483 = vld [vmem:[#allocation3 + $0x3c8] sm:$0xff]
        %v2484 = vld [vmem:[#allocation3 + $0x3d0] sm:$0xff]
        %v2485 = vld [vmem:[#allocation3 + $0x3d8] sm:$0xff]
        %v2486 = vld [vmem:[#allocation3 + $0x3e0] sm:$0xff]
        %v2487 = vld [vmem:[#allocation3 + $0x3e8] sm:$0xff]
        %v2488 = vld [vmem:[#allocation3 + $0x3f0] sm:$0xff]
        %v2489 = vld [vmem:[#allocation3 + $0x3f8] sm:$0xff]
        %v2490 = vld [vmem:[%s487 + $0x8] sm:$0xff]
        %v2491 = vld [vmem:[%s487 + $0x28] sm:$0xff]
        %v2492 = vld [vmem:[%s487 + $0x48] sm:$0xff]
        %v2493 = vld [vmem:[%s487 + $0x68] sm:$0xff]
        %v2494 = vld [vmem:[%s487 + $0x88] sm:$0xff]
        %v2495 = vld [vmem:[%s487 + $0xa8] sm:$0xff]
        %v2496 = vld [vmem:[%s487 + $0xc8] sm:$0xff]
        %v2497 = vld [vmem:[%s487 + $0xe8] sm:$0xff]
        %v2498 = vld [vmem:[%s487 + $0x108] sm:$0xff]
        %v2499 = vld [vmem:[%s487 + $0x128] sm:$0xff]
        %v2500 = vld [vmem:[%s487 + $0x148] sm:$0xff]
        %v2501 = vld [vmem:[%s487 + $0x168] sm:$0xff]
        %v2502 = vld [vmem:[%s487 + $0x188] sm:$0xff]
        %v2503 = vld [vmem:[%s487 + $0x1a8] sm:$0xff]
        %v2504 = vld [vmem:[%s487 + $0x1c8] sm:$0xff]
        %v2505 = vld [vmem:[%s487 + $0x1e8] sm:$0xff]
        %v2506 = vld [vmem:[%s487 + $0x208] sm:$0xff]
        %v2507 = vld [vmem:[%s487 + $0x228] sm:$0xff]
        %v2508 = vld [vmem:[%s487 + $0x248] sm:$0xff]
        %v2509 = vld [vmem:[%s487 + $0x268] sm:$0xff]
        %v2510 = vld [vmem:[%s487 + $0x288] sm:$0xff]
        %v2511 = vld [vmem:[%s487 + $0x2a8] sm:$0xff]
        %v2512 = vld [vmem:[%s487 + $0x2c8] sm:$0xff]
        %v2513 = vld [vmem:[%s487 + $0x2e8] sm:$0xff]
        %v2514 = vld [vmem:[%s487 + $0x308] sm:$0xff]
        %v2515 = vld [vmem:[%s487 + $0x328] sm:$0xff]
        %v2516 = vld [vmem:[%s487 + $0x348] sm:$0xff]
        %v2517 = vld [vmem:[%s487 + $0x368] sm:$0xff]
        %v2518 = vld [vmem:[%s487 + $0x388] sm:$0xff]
        %v2519 = vld [vmem:[%s487 + $0x3a8] sm:$0xff]
        %v2520 = vld [vmem:[%s487 + $0x3c8] sm:$0xff]
        %v2521 = vld [vmem:[%s487 + $0x3e8] sm:$0xff]
        %v2522 = vld [vmem:[%s487 + $0x408] sm:$0xff]
        %v2523 = vld [vmem:[%s487 + $0x428] sm:$0xff]
        %v2524 = vld [vmem:[%s487 + $0x448] sm:$0xff]
        %v2525 = vld [vmem:[%s487 + $0x468] sm:$0xff]
        %v2526 = vld [vmem:[%s487 + $0x488] sm:$0xff]
        %v2527 = vld [vmem:[%s487 + $0x4a8] sm:$0xff]
        %v2528 = vld [vmem:[%s487 + $0x4c8] sm:$0xff]
        %v2529 = vld [vmem:[%s487 + $0x4e8] sm:$0xff]
        %v2530 = vld [vmem:[%s487 + $0x508] sm:$0xff]
        %v2531 = vld [vmem:[%s487 + $0x528] sm:$0xff]
        %v2532 = vld [vmem:[%s487 + $0x548] sm:$0xff]
        %v2533 = vld [vmem:[%s487 + $0x568] sm:$0xff]
        %v2534 = vld [vmem:[%s487 + $0x588] sm:$0xff]
        %v2535 = vld [vmem:[%s487 + $0x5a8] sm:$0xff]
        %v2536 = vld [vmem:[%s487 + $0x5c8] sm:$0xff]
        %v2537 = vld [vmem:[%s487 + $0x5e8] sm:$0xff]
        %v2538 = vld [vmem:[%s487 + $0x608] sm:$0xff]
        %v2539 = vld [vmem:[%s487 + $0x628] sm:$0xff]
        %v2540 = vld [vmem:[%s487 + $0x648] sm:$0xff]
        %v2541 = vld [vmem:[%s487 + $0x668] sm:$0xff]
        %v2542 = vld [vmem:[%s487 + $0x688] sm:$0xff]
        %v2543 = vld [vmem:[%s487 + $0x6a8] sm:$0xff]
        %v2544 = vld [vmem:[%s487 + $0x6c8] sm:$0xff]
        %v2545 = vld [vmem:[%s487 + $0x6e8] sm:$0xff]
        %v2546 = vld [vmem:[%s487 + $0x708] sm:$0xff]
        %v2547 = vld [vmem:[%s487 + $0x728] sm:$0xff]
        %v2548 = vld [vmem:[%s487 + $0x748] sm:$0xff]
        %v2549 = vld [vmem:[%s487 + $0x768] sm:$0xff]
        %v2550 = vld [vmem:[%s487 + $0x788] sm:$0xff]
        %v2551 = vld [vmem:[%s487 + $0x7a8] sm:$0xff]
        %v2552 = vld [vmem:[%s487 + $0x7c8] sm:$0xff]
        %v2553 = vld [vmem:[%s487 + $0x7e8] sm:$0xff]
        %v2554 = vld [vmem:[%s487 + $0x808] sm:$0xff]
        %v2555 = vld [vmem:[%s487 + $0x828] sm:$0xff]
        %v2556 = vld [vmem:[%s487 + $0x848] sm:$0xff]
        %v2557 = vld [vmem:[%s487 + $0x868] sm:$0xff]
        %v2558 = vld [vmem:[%s487 + $0x888] sm:$0xff]
        %v2559 = vld [vmem:[%s487 + $0x8a8] sm:$0xff]
        %v2560 = vld [vmem:[%s487 + $0x8c8] sm:$0xff]
        %v2561 = vld [vmem:[%s487 + $0x8e8] sm:$0xff]
        %v2562 = vld [vmem:[%s487 + $0x908] sm:$0xff]
        %v2563 = vld [vmem:[%s487 + $0x928] sm:$0xff]
        %v2564 = vld [vmem:[%s487 + $0x948] sm:$0xff]
        %v2565 = vld [vmem:[%s487 + $0x968] sm:$0xff]
        %v2566 = vld [vmem:[%s487 + $0x988] sm:$0xff]
        %v2567 = vld [vmem:[%s487 + $0x9a8] sm:$0xff]
        %v2568 = vld [vmem:[%s487 + $0x9c8] sm:$0xff]
        %v2569 = vld [vmem:[%s487 + $0x9e8] sm:$0xff]
        %v2570 = vld [vmem:[%s487 + $0xa08] sm:$0xff]
        %v2571 = vld [vmem:[%s487 + $0xa28] sm:$0xff]
        %v2572 = vld [vmem:[%s487 + $0xa48] sm:$0xff]
        %v2573 = vld [vmem:[%s487 + $0xa68] sm:$0xff]
        %v2574 = vld [vmem:[%s487 + $0xa88] sm:$0xff]
        %v2575 = vld [vmem:[%s487 + $0xaa8] sm:$0xff]
        %v2576 = vld [vmem:[%s487 + $0xac8] sm:$0xff]
        %v2577 = vld [vmem:[%s487 + $0xae8] sm:$0xff]
        %v2578 = vld [vmem:[%s487 + $0xb08] sm:$0xff]
        %v2579 = vld [vmem:[%s487 + $0xb28] sm:$0xff]
        %v2580 = vld [vmem:[%s487 + $0xb48] sm:$0xff]
        %v2581 = vld [vmem:[%s487 + $0xb68] sm:$0xff]
        %v2582 = vld [vmem:[%s487 + $0xb88] sm:$0xff]
        %v2583 = vld [vmem:[%s487 + $0xba8] sm:$0xff]
        %v2584 = vld [vmem:[%s487 + $0xbc8] sm:$0xff]
        %v2585 = vld [vmem:[%s487 + $0xbe8] sm:$0xff]
        %v2586 = vld [vmem:[%s487 + $0xc08] sm:$0xff]
        %v2587 = vld [vmem:[%s487 + $0xc28] sm:$0xff]
        %v2588 = vld [vmem:[%s487 + $0xc48] sm:$0xff]
        %v2589 = vld [vmem:[%s487 + $0xc68] sm:$0xff]
        %v2590 = vld [vmem:[%s487 + $0xc88] sm:$0xff]
        %v2591 = vld [vmem:[%s487 + $0xca8] sm:$0xff]
        %v2592 = vld [vmem:[%s487 + $0xcc8] sm:$0xff]
        %v2593 = vld [vmem:[%s487 + $0xce8] sm:$0xff]
        %v2594 = vld [vmem:[%s487 + $0xd08] sm:$0xff]
        %v2595 = vld [vmem:[%s487 + $0xd28] sm:$0xff]
        %v2596 = vld [vmem:[%s487 + $0xd48] sm:$0xff]
        %v2597 = vld [vmem:[%s487 + $0xd68] sm:$0xff]
        %v2598 = vld [vmem:[%s487 + $0xd88] sm:$0xff]
        %v2599 = vld [vmem:[%s487 + $0xda8] sm:$0xff]
        %v2600 = vld [vmem:[%s487 + $0xdc8] sm:$0xff]
        %v2601 = vld [vmem:[%s487 + $0xde8] sm:$0xff]
        %v2602 = vld [vmem:[%s487 + $0xe08] sm:$0xff]
        %v2603 = vld [vmem:[%s487 + $0xe28] sm:$0xff]
        %v2604 = vld [vmem:[%s487 + $0xe48] sm:$0xff]
        %v2605 = vld [vmem:[%s487 + $0xe68] sm:$0xff]
        %v2606 = vld [vmem:[%s487 + $0xe88] sm:$0xff]
        %v2607 = vld [vmem:[%s487 + $0xea8] sm:$0xff]
        %v2608 = vld [vmem:[%s487 + $0xec8] sm:$0xff]
        %v2609 = vld [vmem:[%s487 + $0xee8] sm:$0xff]
        %v2610 = vld [vmem:[%s487 + $0xf08] sm:$0xff]
        %v2611 = vld [vmem:[%s487 + $0xf28] sm:$0xff]
        %v2612 = vld [vmem:[%s487 + $0xf48] sm:$0xff]
        %v2613 = vld [vmem:[%s487 + $0xf68] sm:$0xff]
        %v2614 = vld [vmem:[%s487 + $0xf88] sm:$0xff]
        %v2615 = vld [vmem:[%s487 + $0xfa8] sm:$0xff]
        %v2616 = vld [vmem:[%s487 + $0xfc8] sm:$0xff]
        %v2617 = vld [vmem:[%s487 + $0xfe8] sm:$0xff]
        %v2618 = vmax.f32 %v2362, %v2490
        %v2619 = vmax.f32 %v2363, %v2491
        %v2620 = vmax.f32 %v2364, %v2492
        %v2621 = vmax.f32 %v2365, %v2493
        %v2622 = vmax.f32 %v2366, %v2494
        %v2623 = vmax.f32 %v2367, %v2495
        %v2624 = vmax.f32 %v2368, %v2496
        %v2625 = vmax.f32 %v2369, %v2497
        %v2626 = vmax.f32 %v2370, %v2498
        %v2627 = vmax.f32 %v2371, %v2499
        %v2628 = vmax.f32 %v2372, %v2500
        %v2629 = vmax.f32 %v2373, %v2501
        %v2630 = vmax.f32 %v2374, %v2502
        %v2631 = vmax.f32 %v2375, %v2503
        %v2632 = vmax.f32 %v2376, %v2504
        %v2633 = vmax.f32 %v2377, %v2505
        %v2634 = vmax.f32 %v2378, %v2506
        %v2635 = vmax.f32 %v2379, %v2507
        %v2636 = vmax.f32 %v2380, %v2508
        %v2637 = vmax.f32 %v2381, %v2509
        %v2638 = vmax.f32 %v2382, %v2510
        %v2639 = vmax.f32 %v2383, %v2511
        %v2640 = vmax.f32 %v2384, %v2512
        %v2641 = vmax.f32 %v2385, %v2513
        %v2642 = vmax.f32 %v2386, %v2514
        %v2643 = vmax.f32 %v2387, %v2515
        %v2644 = vmax.f32 %v2388, %v2516
        %v2645 = vmax.f32 %v2389, %v2517
        %v2646 = vmax.f32 %v2390, %v2518
        %v2647 = vmax.f32 %v2391, %v2519
        %v2648 = vmax.f32 %v2392, %v2520
        %v2649 = vmax.f32 %v2393, %v2521
        %v2650 = vmax.f32 %v2394, %v2522
        %v2651 = vmax.f32 %v2395, %v2523
        %v2652 = vmax.f32 %v2396, %v2524
        %v2653 = vmax.f32 %v2397, %v2525
        %v2654 = vmax.f32 %v2398, %v2526
        %v2655 = vmax.f32 %v2399, %v2527
        %v2656 = vmax.f32 %v2400, %v2528
        %v2657 = vmax.f32 %v2401, %v2529
        %v2658 = vmax.f32 %v2402, %v2530
        %v2659 = vmax.f32 %v2403, %v2531
        %v2660 = vmax.f32 %v2404, %v2532
        %v2661 = vmax.f32 %v2405, %v2533
        %v2662 = vmax.f32 %v2406, %v2534
        %v2663 = vmax.f32 %v2407, %v2535
        %v2664 = vmax.f32 %v2408, %v2536
        %v2665 = vmax.f32 %v2409, %v2537
        %v2666 = vmax.f32 %v2410, %v2538
        %v2667 = vmax.f32 %v2411, %v2539
        %v2668 = vmax.f32 %v2412, %v2540
        %v2669 = vmax.f32 %v2413, %v2541
        %v2670 = vmax.f32 %v2414, %v2542
        %v2671 = vmax.f32 %v2415, %v2543
        %v2672 = vmax.f32 %v2416, %v2544
        %v2673 = vmax.f32 %v2417, %v2545
        %v2674 = vmax.f32 %v2418, %v2546
        %v2675 = vmax.f32 %v2419, %v2547
        %v2676 = vmax.f32 %v2420, %v2548
        %v2677 = vmax.f32 %v2421, %v2549
        %v2678 = vmax.f32 %v2422, %v2550
        %v2679 = vmax.f32 %v2423, %v2551
        %v2680 = vmax.f32 %v2424, %v2552
        %v2681 = vmax.f32 %v2425, %v2553
        %v2682 = vmax.f32 %v2426, %v2554
        %v2683 = vmax.f32 %v2427, %v2555
        %v2684 = vmax.f32 %v2428, %v2556
        %v2685 = vmax.f32 %v2429, %v2557
        %v2686 = vmax.f32 %v2430, %v2558
        %v2687 = vmax.f32 %v2431, %v2559
        %v2688 = vmax.f32 %v2432, %v2560
        %v2689 = vmax.f32 %v2433, %v2561
        %v2690 = vmax.f32 %v2434, %v2562
        %v2691 = vmax.f32 %v2435, %v2563
        %v2692 = vmax.f32 %v2436, %v2564
        %v2693 = vmax.f32 %v2437, %v2565
        %v2694 = vmax.f32 %v2438, %v2566
        %v2695 = vmax.f32 %v2439, %v2567
        %v2696 = vmax.f32 %v2440, %v2568
        %v2697 = vmax.f32 %v2441, %v2569
        %v2698 = vmax.f32 %v2442, %v2570
        %v2699 = vmax.f32 %v2443, %v2571
        %v2700 = vmax.f32 %v2444, %v2572
        %v2701 = vmax.f32 %v2445, %v2573
        %v2702 = vmax.f32 %v2446, %v2574
        %v2703 = vmax.f32 %v2447, %v2575
        %v2704 = vmax.f32 %v2448, %v2576
        %v2705 = vmax.f32 %v2449, %v2577
        %v2706 = vmax.f32 %v2450, %v2578
        %v2707 = vmax.f32 %v2451, %v2579
        %v2708 = vmax.f32 %v2452, %v2580
        %v2709 = vmax.f32 %v2453, %v2581
        %v2710 = vmax.f32 %v2454, %v2582
        %v2711 = vmax.f32 %v2455, %v2583
        %v2712 = vmax.f32 %v2456, %v2584
        %v2713 = vmax.f32 %v2457, %v2585
        %v2714 = vmax.f32 %v2458, %v2586
        %v2715 = vmax.f32 %v2459, %v2587
        %v2716 = vmax.f32 %v2460, %v2588
        %v2717 = vmax.f32 %v2461, %v2589
        %v2718 = vmax.f32 %v2462, %v2590
        %v2719 = vmax.f32 %v2463, %v2591
        %v2720 = vmax.f32 %v2464, %v2592
        %v2721 = vmax.f32 %v2465, %v2593
        %v2722 = vmax.f32 %v2466, %v2594
        %v2723 = vmax.f32 %v2467, %v2595
        %v2724 = vmax.f32 %v2468, %v2596
        %v2725 = vmax.f32 %v2469, %v2597
        %v2726 = vmax.f32 %v2470, %v2598
        %v2727 = vmax.f32 %v2471, %v2599
        %v2728 = vmax.f32 %v2472, %v2600
        %v2729 = vmax.f32 %v2473, %v2601
        %v2730 = vmax.f32 %v2474, %v2602
        %v2731 = vmax.f32 %v2475, %v2603
        %v2732 = vmax.f32 %v2476, %v2604
        %v2733 = vmax.f32 %v2477, %v2605
        %v2734 = vmax.f32 %v2478, %v2606
        %v2735 = vmax.f32 %v2479, %v2607
        %v2736 = vmax.f32 %v2480, %v2608
        %v2737 = vmax.f32 %v2481, %v2609
        %v2738 = vmax.f32 %v2482, %v2610
        %v2739 = vmax.f32 %v2483, %v2611
        %v2740 = vmax.f32 %v2484, %v2612
        %v2741 = vmax.f32 %v2485, %v2613
        %v2742 = vmax.f32 %v2486, %v2614
        %v2743 = vmax.f32 %v2487, %v2615
        %v2744 = vmax.f32 %v2488, %v2616
        %v2745 = vmax.f32 %v2489, %v2617
        %2746 = vst [vmem:[#allocation3] sm:$0xff] %v2618
        %2747 = vst [vmem:[#allocation3 + $0x8] sm:$0xff] %v2619
        %2748 = vst [vmem:[#allocation3 + $0x10] sm:$0xff] %v2620
        %2749 = vst [vmem:[#allocation3 + $0x18] sm:$0xff] %v2621
        %2750 = vst [vmem:[#allocation3 + $0x20] sm:$0xff] %v2622
        %2751 = vst [vmem:[#allocation3 + $0x28] sm:$0xff] %v2623
        %2752 = vst [vmem:[#allocation3 + $0x30] sm:$0xff] %v2624
        %2753 = vst [vmem:[#allocation3 + $0x38] sm:$0xff] %v2625
        %2754 = vst [vmem:[#allocation3 + $0x40] sm:$0xff] %v2626
        %2755 = vst [vmem:[#allocation3 + $0x48] sm:$0xff] %v2627
        %2756 = vst [vmem:[#allocation3 + $0x50] sm:$0xff] %v2628
        %2757 = vst [vmem:[#allocation3 + $0x58] sm:$0xff] %v2629
        %2758 = vst [vmem:[#allocation3 + $0x60] sm:$0xff] %v2630
        %2759 = vst [vmem:[#allocation3 + $0x68] sm:$0xff] %v2631
        %2760 = vst [vmem:[#allocation3 + $0x70] sm:$0xff] %v2632
        %2761 = vst [vmem:[#allocation3 + $0x78] sm:$0xff] %v2633
        %2762 = vst [vmem:[#allocation3 + $0x80] sm:$0xff] %v2634
        %2763 = vst [vmem:[#allocation3 + $0x88] sm:$0xff] %v2635
        %2764 = vst [vmem:[#allocation3 + $0x90] sm:$0xff] %v2636
        %2765 = vst [vmem:[#allocation3 + $0x98] sm:$0xff] %v2637
        %2766 = vst [vmem:[#allocation3 + $0xa0] sm:$0xff] %v2638
        %2767 = vst [vmem:[#allocation3 + $0xa8] sm:$0xff] %v2639
        %2768 = vst [vmem:[#allocation3 + $0xb0] sm:$0xff] %v2640
        %2769 = vst [vmem:[#allocation3 + $0xb8] sm:$0xff] %v2641
        %2770 = vst [vmem:[#allocation3 + $0xc0] sm:$0xff] %v2642
        %2771 = vst [vmem:[#allocation3 + $0xc8] sm:$0xff] %v2643
        %2772 = vst [vmem:[#allocation3 + $0xd0] sm:$0xff] %v2644
        %2773 = vst [vmem:[#allocation3 + $0xd8] sm:$0xff] %v2645
        %2774 = vst [vmem:[#allocation3 + $0xe0] sm:$0xff] %v2646
        %2775 = vst [vmem:[#allocation3 + $0xe8] sm:$0xff] %v2647
        %2776 = vst [vmem:[#allocation3 + $0xf0] sm:$0xff] %v2648
        %2777 = vst [vmem:[#allocation3 + $0xf8] sm:$0xff] %v2649
        %2778 = vst [vmem:[#allocation3 + $0x100] sm:$0xff] %v2650
        %2779 = vst [vmem:[#allocation3 + $0x108] sm:$0xff] %v2651
        %2780 = vst [vmem:[#allocation3 + $0x110] sm:$0xff] %v2652
        %2781 = vst [vmem:[#allocation3 + $0x118] sm:$0xff] %v2653
        %2782 = vst [vmem:[#allocation3 + $0x120] sm:$0xff] %v2654
        %2783 = vst [vmem:[#allocation3 + $0x128] sm:$0xff] %v2655
        %2784 = vst [vmem:[#allocation3 + $0x130] sm:$0xff] %v2656
        %2785 = vst [vmem:[#allocation3 + $0x138] sm:$0xff] %v2657
        %2786 = vst [vmem:[#allocation3 + $0x140] sm:$0xff] %v2658
        %2787 = vst [vmem:[#allocation3 + $0x148] sm:$0xff] %v2659
        %2788 = vst [vmem:[#allocation3 + $0x150] sm:$0xff] %v2660
        %2789 = vst [vmem:[#allocation3 + $0x158] sm:$0xff] %v2661
        %2790 = vst [vmem:[#allocation3 + $0x160] sm:$0xff] %v2662
        %2791 = vst [vmem:[#allocation3 + $0x168] sm:$0xff] %v2663
        %2792 = vst [vmem:[#allocation3 + $0x170] sm:$0xff] %v2664
        %2793 = vst [vmem:[#allocation3 + $0x178] sm:$0xff] %v2665
        %2794 = vst [vmem:[#allocation3 + $0x180] sm:$0xff] %v2666
        %2795 = vst [vmem:[#allocation3 + $0x188] sm:$0xff] %v2667
        %2796 = vst [vmem:[#allocation3 + $0x190] sm:$0xff] %v2668
        %2797 = vst [vmem:[#allocation3 + $0x198] sm:$0xff] %v2669
        %2798 = vst [vmem:[#allocation3 + $0x1a0] sm:$0xff] %v2670
        %2799 = vst [vmem:[#allocation3 + $0x1a8] sm:$0xff] %v2671
        %2800 = vst [vmem:[#allocation3 + $0x1b0] sm:$0xff] %v2672
        %2801 = vst [vmem:[#allocation3 + $0x1b8] sm:$0xff] %v2673
        %2802 = vst [vmem:[#allocation3 + $0x1c0] sm:$0xff] %v2674
        %2803 = vst [vmem:[#allocation3 + $0x1c8] sm:$0xff] %v2675
        %2804 = vst [vmem:[#allocation3 + $0x1d0] sm:$0xff] %v2676
        %2805 = vst [vmem:[#allocation3 + $0x1d8] sm:$0xff] %v2677
        %2806 = vst [vmem:[#allocation3 + $0x1e0] sm:$0xff] %v2678
        %2807 = vst [vmem:[#allocation3 + $0x1e8] sm:$0xff] %v2679
        %2808 = vst [vmem:[#allocation3 + $0x1f0] sm:$0xff] %v2680
        %2809 = vst [vmem:[#allocation3 + $0x1f8] sm:$0xff] %v2681
        %2810 = vst [vmem:[#allocation3 + $0x200] sm:$0xff] %v2682
        %2811 = vst [vmem:[#allocation3 + $0x208] sm:$0xff] %v2683
        %2812 = vst [vmem:[#allocation3 + $0x210] sm:$0xff] %v2684
        %2813 = vst [vmem:[#allocation3 + $0x218] sm:$0xff] %v2685
        %2814 = vst [vmem:[#allocation3 + $0x220] sm:$0xff] %v2686
        %2815 = vst [vmem:[#allocation3 + $0x228] sm:$0xff] %v2687
        %2816 = vst [vmem:[#allocation3 + $0x230] sm:$0xff] %v2688
        %2817 = vst [vmem:[#allocation3 + $0x238] sm:$0xff] %v2689
        %2818 = vst [vmem:[#allocation3 + $0x240] sm:$0xff] %v2690
        %2819 = vst [vmem:[#allocation3 + $0x248] sm:$0xff] %v2691
        %2820 = vst [vmem:[#allocation3 + $0x250] sm:$0xff] %v2692
        %2821 = vst [vmem:[#allocation3 + $0x258] sm:$0xff] %v2693
        %2822 = vst [vmem:[#allocation3 + $0x260] sm:$0xff] %v2694
        %2823 = vst [vmem:[#allocation3 + $0x268] sm:$0xff] %v2695
        %2824 = vst [vmem:[#allocation3 + $0x270] sm:$0xff] %v2696
        %2825 = vst [vmem:[#allocation3 + $0x278] sm:$0xff] %v2697
        %2826 = vst [vmem:[#allocation3 + $0x280] sm:$0xff] %v2698
        %2827 = vst [vmem:[#allocation3 + $0x288] sm:$0xff] %v2699
        %2828 = vst [vmem:[#allocation3 + $0x290] sm:$0xff] %v2700
        %2829 = vst [vmem:[#allocation3 + $0x298] sm:$0xff] %v2701
        %2830 = vst [vmem:[#allocation3 + $0x2a0] sm:$0xff] %v2702
        %2831 = vst [vmem:[#allocation3 + $0x2a8] sm:$0xff] %v2703
        %2832 = vst [vmem:[#allocation3 + $0x2b0] sm:$0xff] %v2704
        %2833 = vst [vmem:[#allocation3 + $0x2b8] sm:$0xff] %v2705
        %2834 = vst [vmem:[#allocation3 + $0x2c0] sm:$0xff] %v2706
        %2835 = vst [vmem:[#allocation3 + $0x2c8] sm:$0xff] %v2707
        %2836 = vst [vmem:[#allocation3 + $0x2d0] sm:$0xff] %v2708
        %2837 = vst [vmem:[#allocation3 + $0x2d8] sm:$0xff] %v2709
        %2838 = vst [vmem:[#allocation3 + $0x2e0] sm:$0xff] %v2710
        %2839 = vst [vmem:[#allocation3 + $0x2e8] sm:$0xff] %v2711
        %2840 = vst [vmem:[#allocation3 + $0x2f0] sm:$0xff] %v2712
        %2841 = vst [vmem:[#allocation3 + $0x2f8] sm:$0xff] %v2713
        %2842 = vst [vmem:[#allocation3 + $0x300] sm:$0xff] %v2714
        %2843 = vst [vmem:[#allocation3 + $0x308] sm:$0xff] %v2715
        %2844 = vst [vmem:[#allocation3 + $0x310] sm:$0xff] %v2716
        %2845 = vst [vmem:[#allocation3 + $0x318] sm:$0xff] %v2717
        %2846 = vst [vmem:[#allocation3 + $0x320] sm:$0xff] %v2718
        %2847 = vst [vmem:[#allocation3 + $0x328] sm:$0xff] %v2719
        %2848 = vst [vmem:[#allocation3 + $0x330] sm:$0xff] %v2720
        %2849 = vst [vmem:[#allocation3 + $0x338] sm:$0xff] %v2721
        %2850 = vst [vmem:[#allocation3 + $0x340] sm:$0xff] %v2722
        %2851 = vst [vmem:[#allocation3 + $0x348] sm:$0xff] %v2723
        %2852 = vst [vmem:[#allocation3 + $0x350] sm:$0xff] %v2724
        %2853 = vst [vmem:[#allocation3 + $0x358] sm:$0xff] %v2725
        %2854 = vst [vmem:[#allocation3 + $0x360] sm:$0xff] %v2726
        %2855 = vst [vmem:[#allocation3 + $0x368] sm:$0xff] %v2727
        %2856 = vst [vmem:[#allocation3 + $0x370] sm:$0xff] %v2728
        %2857 = vst [vmem:[#allocation3 + $0x378] sm:$0xff] %v2729
        %2858 = vst [vmem:[#allocation3 + $0x380] sm:$0xff] %v2730
        %2859 = vst [vmem:[#allocation3 + $0x388] sm:$0xff] %v2731
        %2860 = vst [vmem:[#allocation3 + $0x390] sm:$0xff] %v2732
        %2861 = vst [vmem:[#allocation3 + $0x398] sm:$0xff] %v2733
        %2862 = vst [vmem:[#allocation3 + $0x3a0] sm:$0xff] %v2734
        %2863 = vst [vmem:[#allocation3 + $0x3a8] sm:$0xff] %v2735
        %2864 = vst [vmem:[#allocation3 + $0x3b0] sm:$0xff] %v2736
        %2865 = vst [vmem:[#allocation3 + $0x3b8] sm:$0xff] %v2737
        %2866 = vst [vmem:[#allocation3 + $0x3c0] sm:$0xff] %v2738
        %2867 = vst [vmem:[#allocation3 + $0x3c8] sm:$0xff] %v2739
        %2868 = vst [vmem:[#allocation3 + $0x3d0] sm:$0xff] %v2740
        %2869 = vst [vmem:[#allocation3 + $0x3d8] sm:$0xff] %v2741
        %2870 = vst [vmem:[#allocation3 + $0x3e0] sm:$0xff] %v2742
        %2871 = vst [vmem:[#allocation3 + $0x3e8] sm:$0xff] %v2743
        %2872 = vst [vmem:[#allocation3 + $0x3f0] sm:$0xff] %v2744
        %2873 = vst [vmem:[#allocation3 + $0x3f8] sm:$0xff] %v2745
        %v2874 = vld [vmem:[#allocation2] sm:$0xff]
        %v2875 = vld [vmem:[#allocation2 + $0x8] sm:$0xff]
        %v2876 = vld [vmem:[#allocation2 + $0x10] sm:$0xff]
        %v2877 = vld [vmem:[#allocation2 + $0x18] sm:$0xff]
        %v2878 = vld [vmem:[#allocation2 + $0x20] sm:$0xff]
        %v2879 = vld [vmem:[#allocation2 + $0x28] sm:$0xff]
        %v2880 = vld [vmem:[#allocation2 + $0x30] sm:$0xff]
        %v2881 = vld [vmem:[#allocation2 + $0x38] sm:$0xff]
        %v2882 = vld [vmem:[#allocation2 + $0x40] sm:$0xff]
        %v2883 = vld [vmem:[#allocation2 + $0x48] sm:$0xff]
        %v2884 = vld [vmem:[#allocation2 + $0x50] sm:$0xff]
        %v2885 = vld [vmem:[#allocation2 + $0x58] sm:$0xff]
        %v2886 = vld [vmem:[#allocation2 + $0x60] sm:$0xff]
        %v2887 = vld [vmem:[#allocation2 + $0x68] sm:$0xff]
        %v2888 = vld [vmem:[#allocation2 + $0x70] sm:$0xff]
        %v2889 = vld [vmem:[#allocation2 + $0x78] sm:$0xff]
        %v2890 = vld [vmem:[#allocation2 + $0x80] sm:$0xff]
        %v2891 = vld [vmem:[#allocation2 + $0x88] sm:$0xff]
        %v2892 = vld [vmem:[#allocation2 + $0x90] sm:$0xff]
        %v2893 = vld [vmem:[#allocation2 + $0x98] sm:$0xff]
        %v2894 = vld [vmem:[#allocation2 + $0xa0] sm:$0xff]
        %v2895 = vld [vmem:[#allocation2 + $0xa8] sm:$0xff]
        %v2896 = vld [vmem:[#allocation2 + $0xb0] sm:$0xff]
        %v2897 = vld [vmem:[#allocation2 + $0xb8] sm:$0xff]
        %v2898 = vld [vmem:[#allocation2 + $0xc0] sm:$0xff]
        %v2899 = vld [vmem:[#allocation2 + $0xc8] sm:$0xff]
        %v2900 = vld [vmem:[#allocation2 + $0xd0] sm:$0xff]
        %v2901 = vld [vmem:[#allocation2 + $0xd8] sm:$0xff]
        %v2902 = vld [vmem:[#allocation2 + $0xe0] sm:$0xff]
        %v2903 = vld [vmem:[#allocation2 + $0xe8] sm:$0xff]
        %v2904 = vld [vmem:[#allocation2 + $0xf0] sm:$0xff]
        %v2905 = vld [vmem:[#allocation2 + $0xf8] sm:$0xff]
        %v2906 = vld [vmem:[#allocation2 + $0x100] sm:$0xff]
        %v2907 = vld [vmem:[#allocation2 + $0x108] sm:$0xff]
        %v2908 = vld [vmem:[#allocation2 + $0x110] sm:$0xff]
        %v2909 = vld [vmem:[#allocation2 + $0x118] sm:$0xff]
        %v2910 = vld [vmem:[#allocation2 + $0x120] sm:$0xff]
        %v2911 = vld [vmem:[#allocation2 + $0x128] sm:$0xff]
        %v2912 = vld [vmem:[#allocation2 + $0x130] sm:$0xff]
        %v2913 = vld [vmem:[#allocation2 + $0x138] sm:$0xff]
        %v2914 = vld [vmem:[#allocation2 + $0x140] sm:$0xff]
        %v2915 = vld [vmem:[#allocation2 + $0x148] sm:$0xff]
        %v2916 = vld [vmem:[#allocation2 + $0x150] sm:$0xff]
        %v2917 = vld [vmem:[#allocation2 + $0x158] sm:$0xff]
        %v2918 = vld [vmem:[#allocation2 + $0x160] sm:$0xff]
        %v2919 = vld [vmem:[#allocation2 + $0x168] sm:$0xff]
        %v2920 = vld [vmem:[#allocation2 + $0x170] sm:$0xff]
        %v2921 = vld [vmem:[#allocation2 + $0x178] sm:$0xff]
        %v2922 = vld [vmem:[#allocation2 + $0x180] sm:$0xff]
        %v2923 = vld [vmem:[#allocation2 + $0x188] sm:$0xff]
        %v2924 = vld [vmem:[#allocation2 + $0x190] sm:$0xff]
        %v2925 = vld [vmem:[#allocation2 + $0x198] sm:$0xff]
        %v2926 = vld [vmem:[#allocation2 + $0x1a0] sm:$0xff]
        %v2927 = vld [vmem:[#allocation2 + $0x1a8] sm:$0xff]
        %v2928 = vld [vmem:[#allocation2 + $0x1b0] sm:$0xff]
        %v2929 = vld [vmem:[#allocation2 + $0x1b8] sm:$0xff]
        %v2930 = vld [vmem:[#allocation2 + $0x1c0] sm:$0xff]
        %v2931 = vld [vmem:[#allocation2 + $0x1c8] sm:$0xff]
        %v2932 = vld [vmem:[#allocation2 + $0x1d0] sm:$0xff]
        %v2933 = vld [vmem:[#allocation2 + $0x1d8] sm:$0xff]
        %v2934 = vld [vmem:[#allocation2 + $0x1e0] sm:$0xff]
        %v2935 = vld [vmem:[#allocation2 + $0x1e8] sm:$0xff]
        %v2936 = vld [vmem:[#allocation2 + $0x1f0] sm:$0xff]
        %v2937 = vld [vmem:[#allocation2 + $0x1f8] sm:$0xff]
        %v2938 = vld [vmem:[#allocation2 + $0x200] sm:$0xff]
        %v2939 = vld [vmem:[#allocation2 + $0x208] sm:$0xff]
        %v2940 = vld [vmem:[#allocation2 + $0x210] sm:$0xff]
        %v2941 = vld [vmem:[#allocation2 + $0x218] sm:$0xff]
        %v2942 = vld [vmem:[#allocation2 + $0x220] sm:$0xff]
        %v2943 = vld [vmem:[#allocation2 + $0x228] sm:$0xff]
        %v2944 = vld [vmem:[#allocation2 + $0x230] sm:$0xff]
        %v2945 = vld [vmem:[#allocation2 + $0x238] sm:$0xff]
        %v2946 = vld [vmem:[#allocation2 + $0x240] sm:$0xff]
        %v2947 = vld [vmem:[#allocation2 + $0x248] sm:$0xff]
        %v2948 = vld [vmem:[#allocation2 + $0x250] sm:$0xff]
        %v2949 = vld [vmem:[#allocation2 + $0x258] sm:$0xff]
        %v2950 = vld [vmem:[#allocation2 + $0x260] sm:$0xff]
        %v2951 = vld [vmem:[#allocation2 + $0x268] sm:$0xff]
        %v2952 = vld [vmem:[#allocation2 + $0x270] sm:$0xff]
        %v2953 = vld [vmem:[#allocation2 + $0x278] sm:$0xff]
        %v2954 = vld [vmem:[#allocation2 + $0x280] sm:$0xff]
        %v2955 = vld [vmem:[#allocation2 + $0x288] sm:$0xff]
        %v2956 = vld [vmem:[#allocation2 + $0x290] sm:$0xff]
        %v2957 = vld [vmem:[#allocation2 + $0x298] sm:$0xff]
        %v2958 = vld [vmem:[#allocation2 + $0x2a0] sm:$0xff]
        %v2959 = vld [vmem:[#allocation2 + $0x2a8] sm:$0xff]
        %v2960 = vld [vmem:[#allocation2 + $0x2b0] sm:$0xff]
        %v2961 = vld [vmem:[#allocation2 + $0x2b8] sm:$0xff]
        %v2962 = vld [vmem:[#allocation2 + $0x2c0] sm:$0xff]
        %v2963 = vld [vmem:[#allocation2 + $0x2c8] sm:$0xff]
        %v2964 = vld [vmem:[#allocation2 + $0x2d0] sm:$0xff]
        %v2965 = vld [vmem:[#allocation2 + $0x2d8] sm:$0xff]
        %v2966 = vld [vmem:[#allocation2 + $0x2e0] sm:$0xff]
        %v2967 = vld [vmem:[#allocation2 + $0x2e8] sm:$0xff]
        %v2968 = vld [vmem:[#allocation2 + $0x2f0] sm:$0xff]
        %v2969 = vld [vmem:[#allocation2 + $0x2f8] sm:$0xff]
        %v2970 = vld [vmem:[#allocation2 + $0x300] sm:$0xff]
        %v2971 = vld [vmem:[#allocation2 + $0x308] sm:$0xff]
        %v2972 = vld [vmem:[#allocation2 + $0x310] sm:$0xff]
        %v2973 = vld [vmem:[#allocation2 + $0x318] sm:$0xff]
        %v2974 = vld [vmem:[#allocation2 + $0x320] sm:$0xff]
        %v2975 = vld [vmem:[#allocation2 + $0x328] sm:$0xff]
        %v2976 = vld [vmem:[#allocation2 + $0x330] sm:$0xff]
        %v2977 = vld [vmem:[#allocation2 + $0x338] sm:$0xff]
        %v2978 = vld [vmem:[#allocation2 + $0x340] sm:$0xff]
        %v2979 = vld [vmem:[#allocation2 + $0x348] sm:$0xff]
        %v2980 = vld [vmem:[#allocation2 + $0x350] sm:$0xff]
        %v2981 = vld [vmem:[#allocation2 + $0x358] sm:$0xff]
        %v2982 = vld [vmem:[#allocation2 + $0x360] sm:$0xff]
        %v2983 = vld [vmem:[#allocation2 + $0x368] sm:$0xff]
        %v2984 = vld [vmem:[#allocation2 + $0x370] sm:$0xff]
        %v2985 = vld [vmem:[#allocation2 + $0x378] sm:$0xff]
        %v2986 = vld [vmem:[#allocation2 + $0x380] sm:$0xff]
        %v2987 = vld [vmem:[#allocation2 + $0x388] sm:$0xff]
        %v2988 = vld [vmem:[#allocation2 + $0x390] sm:$0xff]
        %v2989 = vld [vmem:[#allocation2 + $0x398] sm:$0xff]
        %v2990 = vld [vmem:[#allocation2 + $0x3a0] sm:$0xff]
        %v2991 = vld [vmem:[#allocation2 + $0x3a8] sm:$0xff]
        %v2992 = vld [vmem:[#allocation2 + $0x3b0] sm:$0xff]
        %v2993 = vld [vmem:[#allocation2 + $0x3b8] sm:$0xff]
        %v2994 = vld [vmem:[#allocation2 + $0x3c0] sm:$0xff]
        %v2995 = vld [vmem:[#allocation2 + $0x3c8] sm:$0xff]
        %v2996 = vld [vmem:[#allocation2 + $0x3d0] sm:$0xff]
        %v2997 = vld [vmem:[#allocation2 + $0x3d8] sm:$0xff]
        %v2998 = vld [vmem:[#allocation2 + $0x3e0] sm:$0xff]
        %v2999 = vld [vmem:[#allocation2 + $0x3e8] sm:$0xff]
        %v3000 = vld [vmem:[#allocation2 + $0x3f0] sm:$0xff]
        %v3001 = vld [vmem:[#allocation2 + $0x3f8] sm:$0xff]
        %v3002 = vld [vmem:[%s478 + $0x10] sm:$0xff]
        %v3003 = vld [vmem:[%s478 + $0x30] sm:$0xff]
        %v3004 = vld [vmem:[%s478 + $0x50] sm:$0xff]
        %v3005 = vld [vmem:[%s478 + $0x70] sm:$0xff]
        %v3006 = vld [vmem:[%s478 + $0x90] sm:$0xff]
        %v3007 = vld [vmem:[%s478 + $0xb0] sm:$0xff]
        %v3008 = vld [vmem:[%s478 + $0xd0] sm:$0xff]
        %v3009 = vld [vmem:[%s478 + $0xf0] sm:$0xff]
        %v3010 = vld [vmem:[%s478 + $0x110] sm:$0xff]
        %v3011 = vld [vmem:[%s478 + $0x130] sm:$0xff]
        %v3012 = vld [vmem:[%s478 + $0x150] sm:$0xff]
        %v3013 = vld [vmem:[%s478 + $0x170] sm:$0xff]
        %v3014 = vld [vmem:[%s478 + $0x190] sm:$0xff]
        %v3015 = vld [vmem:[%s478 + $0x1b0] sm:$0xff]
        %v3016 = vld [vmem:[%s478 + $0x1d0] sm:$0xff]
        %v3017 = vld [vmem:[%s478 + $0x1f0] sm:$0xff]
        %v3018 = vld [vmem:[%s478 + $0x210] sm:$0xff]
        %v3019 = vld [vmem:[%s478 + $0x230] sm:$0xff]
        %v3020 = vld [vmem:[%s478 + $0x250] sm:$0xff]
        %v3021 = vld [vmem:[%s478 + $0x270] sm:$0xff]
        %v3022 = vld [vmem:[%s478 + $0x290] sm:$0xff]
        %v3023 = vld [vmem:[%s478 + $0x2b0] sm:$0xff]
        %v3024 = vld [vmem:[%s478 + $0x2d0] sm:$0xff]
        %v3025 = vld [vmem:[%s478 + $0x2f0] sm:$0xff]
        %v3026 = vld [vmem:[%s478 + $0x310] sm:$0xff]
        %v3027 = vld [vmem:[%s478 + $0x330] sm:$0xff]
        %v3028 = vld [vmem:[%s478 + $0x350] sm:$0xff]
        %v3029 = vld [vmem:[%s478 + $0x370] sm:$0xff]
        %v3030 = vld [vmem:[%s478 + $0x390] sm:$0xff]
        %v3031 = vld [vmem:[%s478 + $0x3b0] sm:$0xff]
        %v3032 = vld [vmem:[%s478 + $0x3d0] sm:$0xff]
        %v3033 = vld [vmem:[%s478 + $0x3f0] sm:$0xff]
        %v3034 = vld [vmem:[%s478 + $0x410] sm:$0xff]
        %v3035 = vld [vmem:[%s478 + $0x430] sm:$0xff]
        %v3036 = vld [vmem:[%s478 + $0x450] sm:$0xff]
        %v3037 = vld [vmem:[%s478 + $0x470] sm:$0xff]
        %v3038 = vld [vmem:[%s478 + $0x490] sm:$0xff]
        %v3039 = vld [vmem:[%s478 + $0x4b0] sm:$0xff]
        %v3040 = vld [vmem:[%s478 + $0x4d0] sm:$0xff]
        %v3041 = vld [vmem:[%s478 + $0x4f0] sm:$0xff]
        %v3042 = vld [vmem:[%s478 + $0x510] sm:$0xff]
        %v3043 = vld [vmem:[%s478 + $0x530] sm:$0xff]
        %v3044 = vld [vmem:[%s478 + $0x550] sm:$0xff]
        %v3045 = vld [vmem:[%s478 + $0x570] sm:$0xff]
        %v3046 = vld [vmem:[%s478 + $0x590] sm:$0xff]
        %v3047 = vld [vmem:[%s478 + $0x5b0] sm:$0xff]
        %v3048 = vld [vmem:[%s478 + $0x5d0] sm:$0xff]
        %v3049 = vld [vmem:[%s478 + $0x5f0] sm:$0xff]
        %v3050 = vld [vmem:[%s478 + $0x610] sm:$0xff]
        %v3051 = vld [vmem:[%s478 + $0x630] sm:$0xff]
        %v3052 = vld [vmem:[%s478 + $0x650] sm:$0xff]
        %v3053 = vld [vmem:[%s478 + $0x670] sm:$0xff]
        %v3054 = vld [vmem:[%s478 + $0x690] sm:$0xff]
        %v3055 = vld [vmem:[%s478 + $0x6b0] sm:$0xff]
        %v3056 = vld [vmem:[%s478 + $0x6d0] sm:$0xff]
        %v3057 = vld [vmem:[%s478 + $0x6f0] sm:$0xff]
        %v3058 = vld [vmem:[%s478 + $0x710] sm:$0xff]
        %v3059 = vld [vmem:[%s478 + $0x730] sm:$0xff]
        %v3060 = vld [vmem:[%s478 + $0x750] sm:$0xff]
        %v3061 = vld [vmem:[%s478 + $0x770] sm:$0xff]
        %v3062 = vld [vmem:[%s478 + $0x790] sm:$0xff]
        %v3063 = vld [vmem:[%s478 + $0x7b0] sm:$0xff]
        %v3064 = vld [vmem:[%s478 + $0x7d0] sm:$0xff]
        %v3065 = vld [vmem:[%s478 + $0x7f0] sm:$0xff]
        %v3066 = vld [vmem:[%s478 + $0x810] sm:$0xff]
        %v3067 = vld [vmem:[%s478 + $0x830] sm:$0xff]
        %v3068 = vld [vmem:[%s478 + $0x850] sm:$0xff]
        %v3069 = vld [vmem:[%s478 + $0x870] sm:$0xff]
        %v3070 = vld [vmem:[%s478 + $0x890] sm:$0xff]
        %v3071 = vld [vmem:[%s478 + $0x8b0] sm:$0xff]
        %v3072 = vld [vmem:[%s478 + $0x8d0] sm:$0xff]
        %v3073 = vld [vmem:[%s478 + $0x8f0] sm:$0xff]
        %v3074 = vld [vmem:[%s478 + $0x910] sm:$0xff]
        %v3075 = vld [vmem:[%s478 + $0x930] sm:$0xff]
        %v3076 = vld [vmem:[%s478 + $0x950] sm:$0xff]
        %v3077 = vld [vmem:[%s478 + $0x970] sm:$0xff]
        %v3078 = vld [vmem:[%s478 + $0x990] sm:$0xff]
        %v3079 = vld [vmem:[%s478 + $0x9b0] sm:$0xff]
        %v3080 = vld [vmem:[%s478 + $0x9d0] sm:$0xff]
        %v3081 = vld [vmem:[%s478 + $0x9f0] sm:$0xff]
        %v3082 = vld [vmem:[%s478 + $0xa10] sm:$0xff]
        %v3083 = vld [vmem:[%s478 + $0xa30] sm:$0xff]
        %v3084 = vld [vmem:[%s478 + $0xa50] sm:$0xff]
        %v3085 = vld [vmem:[%s478 + $0xa70] sm:$0xff]
        %v3086 = vld [vmem:[%s478 + $0xa90] sm:$0xff]
        %v3087 = vld [vmem:[%s478 + $0xab0] sm:$0xff]
        %v3088 = vld [vmem:[%s478 + $0xad0] sm:$0xff]
        %v3089 = vld [vmem:[%s478 + $0xaf0] sm:$0xff]
        %v3090 = vld [vmem:[%s478 + $0xb10] sm:$0xff]
        %v3091 = vld [vmem:[%s478 + $0xb30] sm:$0xff]
        %v3092 = vld [vmem:[%s478 + $0xb50] sm:$0xff]
        %v3093 = vld [vmem:[%s478 + $0xb70] sm:$0xff]
        %v3094 = vld [vmem:[%s478 + $0xb90] sm:$0xff]
        %v3095 = vld [vmem:[%s478 + $0xbb0] sm:$0xff]
        %v3096 = vld [vmem:[%s478 + $0xbd0] sm:$0xff]
        %v3097 = vld [vmem:[%s478 + $0xbf0] sm:$0xff]
        %v3098 = vld [vmem:[%s478 + $0xc10] sm:$0xff]
        %v3099 = vld [vmem:[%s478 + $0xc30] sm:$0xff]
        %v3100 = vld [vmem:[%s478 + $0xc50] sm:$0xff]
        %v3101 = vld [vmem:[%s478 + $0xc70] sm:$0xff]
        %v3102 = vld [vmem:[%s478 + $0xc90] sm:$0xff]
        %v3103 = vld [vmem:[%s478 + $0xcb0] sm:$0xff]
        %v3104 = vld [vmem:[%s478 + $0xcd0] sm:$0xff]
        %v3105 = vld [vmem:[%s478 + $0xcf0] sm:$0xff]
        %v3106 = vld [vmem:[%s478 + $0xd10] sm:$0xff]
        %v3107 = vld [vmem:[%s478 + $0xd30] sm:$0xff]
        %v3108 = vld [vmem:[%s478 + $0xd50] sm:$0xff]
        %v3109 = vld [vmem:[%s478 + $0xd70] sm:$0xff]
        %v3110 = vld [vmem:[%s478 + $0xd90] sm:$0xff]
        %v3111 = vld [vmem:[%s478 + $0xdb0] sm:$0xff]
        %v3112 = vld [vmem:[%s478 + $0xdd0] sm:$0xff]
        %v3113 = vld [vmem:[%s478 + $0xdf0] sm:$0xff]
        %v3114 = vld [vmem:[%s478 + $0xe10] sm:$0xff]
        %v3115 = vld [vmem:[%s478 + $0xe30] sm:$0xff]
        %v3116 = vld [vmem:[%s478 + $0xe50] sm:$0xff]
        %v3117 = vld [vmem:[%s478 + $0xe70] sm:$0xff]
        %v3118 = vld [vmem:[%s478 + $0xe90] sm:$0xff]
        %v3119 = vld [vmem:[%s478 + $0xeb0] sm:$0xff]
        %v3120 = vld [vmem:[%s478 + $0xed0] sm:$0xff]
        %v3121 = vld [vmem:[%s478 + $0xef0] sm:$0xff]
        %v3122 = vld [vmem:[%s478 + $0xf10] sm:$0xff]
        %v3123 = vld [vmem:[%s478 + $0xf30] sm:$0xff]
        %v3124 = vld [vmem:[%s478 + $0xf50] sm:$0xff]
        %v3125 = vld [vmem:[%s478 + $0xf70] sm:$0xff]
        %v3126 = vld [vmem:[%s478 + $0xf90] sm:$0xff]
        %v3127 = vld [vmem:[%s478 + $0xfb0] sm:$0xff]
        %v3128 = vld [vmem:[%s478 + $0xfd0] sm:$0xff]
        %v3129 = vld [vmem:[%s478 + $0xff0] sm:$0xff]
        %v3130 = vmax.f32 %v2874, %v3002
        %v3131 = vmax.f32 %v2875, %v3003
        %v3132 = vmax.f32 %v2876, %v3004
        %v3133 = vmax.f32 %v2877, %v3005
        %v3134 = vmax.f32 %v2878, %v3006
        %v3135 = vmax.f32 %v2879, %v3007
        %v3136 = vmax.f32 %v2880, %v3008
        %v3137 = vmax.f32 %v2881, %v3009
        %v3138 = vmax.f32 %v2882, %v3010
        %v3139 = vmax.f32 %v2883, %v3011
        %v3140 = vmax.f32 %v2884, %v3012
        %v3141 = vmax.f32 %v2885, %v3013
        %v3142 = vmax.f32 %v2886, %v3014
        %v3143 = vmax.f32 %v2887, %v3015
        %v3144 = vmax.f32 %v2888, %v3016
        %v3145 = vmax.f32 %v2889, %v3017
        %v3146 = vmax.f32 %v2890, %v3018
        %v3147 = vmax.f32 %v2891, %v3019
        %v3148 = vmax.f32 %v2892, %v3020
        %v3149 = vmax.f32 %v2893, %v3021
        %v3150 = vmax.f32 %v2894, %v3022
        %v3151 = vmax.f32 %v2895, %v3023
        %v3152 = vmax.f32 %v2896, %v3024
        %v3153 = vmax.f32 %v2897, %v3025
        %v3154 = vmax.f32 %v2898, %v3026
        %v3155 = vmax.f32 %v2899, %v3027
        %v3156 = vmax.f32 %v2900, %v3028
        %v3157 = vmax.f32 %v2901, %v3029
        %v3158 = vmax.f32 %v2902, %v3030
        %v3159 = vmax.f32 %v2903, %v3031
        %v3160 = vmax.f32 %v2904, %v3032
        %v3161 = vmax.f32 %v2905, %v3033
        %v3162 = vmax.f32 %v2906, %v3034
        %v3163 = vmax.f32 %v2907, %v3035
        %v3164 = vmax.f32 %v2908, %v3036
        %v3165 = vmax.f32 %v2909, %v3037
        %v3166 = vmax.f32 %v2910, %v3038
        %v3167 = vmax.f32 %v2911, %v3039
        %v3168 = vmax.f32 %v2912, %v3040
        %v3169 = vmax.f32 %v2913, %v3041
        %v3170 = vmax.f32 %v2914, %v3042
        %v3171 = vmax.f32 %v2915, %v3043
        %v3172 = vmax.f32 %v2916, %v3044
        %v3173 = vmax.f32 %v2917, %v3045
        %v3174 = vmax.f32 %v2918, %v3046
        %v3175 = vmax.f32 %v2919, %v3047
        %v3176 = vmax.f32 %v2920, %v3048
        %v3177 = vmax.f32 %v2921, %v3049
        %v3178 = vmax.f32 %v2922, %v3050
        %v3179 = vmax.f32 %v2923, %v3051
        %v3180 = vmax.f32 %v2924, %v3052
        %v3181 = vmax.f32 %v2925, %v3053
        %v3182 = vmax.f32 %v2926, %v3054
        %v3183 = vmax.f32 %v2927, %v3055
        %v3184 = vmax.f32 %v2928, %v3056
        %v3185 = vmax.f32 %v2929, %v3057
        %v3186 = vmax.f32 %v2930, %v3058
        %v3187 = vmax.f32 %v2931, %v3059
        %v3188 = vmax.f32 %v2932, %v3060
        %v3189 = vmax.f32 %v2933, %v3061
        %v3190 = vmax.f32 %v2934, %v3062
        %v3191 = vmax.f32 %v2935, %v3063
        %v3192 = vmax.f32 %v2936, %v3064
        %v3193 = vmax.f32 %v2937, %v3065
        %v3194 = vmax.f32 %v2938, %v3066
        %v3195 = vmax.f32 %v2939, %v3067
        %v3196 = vmax.f32 %v2940, %v3068
        %v3197 = vmax.f32 %v2941, %v3069
        %v3198 = vmax.f32 %v2942, %v3070
        %v3199 = vmax.f32 %v2943, %v3071
        %v3200 = vmax.f32 %v2944, %v3072
        %v3201 = vmax.f32 %v2945, %v3073
        %v3202 = vmax.f32 %v2946, %v3074
        %v3203 = vmax.f32 %v2947, %v3075
        %v3204 = vmax.f32 %v2948, %v3076
        %v3205 = vmax.f32 %v2949, %v3077
        %v3206 = vmax.f32 %v2950, %v3078
        %v3207 = vmax.f32 %v2951, %v3079
        %v3208 = vmax.f32 %v2952, %v3080
        %v3209 = vmax.f32 %v2953, %v3081
        %v3210 = vmax.f32 %v2954, %v3082
        %v3211 = vmax.f32 %v2955, %v3083
        %v3212 = vmax.f32 %v2956, %v3084
        %v3213 = vmax.f32 %v2957, %v3085
        %v3214 = vmax.f32 %v2958, %v3086
        %v3215 = vmax.f32 %v2959, %v3087
        %v3216 = vmax.f32 %v2960, %v3088
        %v3217 = vmax.f32 %v2961, %v3089
        %v3218 = vmax.f32 %v2962, %v3090
        %v3219 = vmax.f32 %v2963, %v3091
        %v3220 = vmax.f32 %v2964, %v3092
        %v3221 = vmax.f32 %v2965, %v3093
        %v3222 = vmax.f32 %v2966, %v3094
        %v3223 = vmax.f32 %v2967, %v3095
        %v3224 = vmax.f32 %v2968, %v3096
        %v3225 = vmax.f32 %v2969, %v3097
        %v3226 = vmax.f32 %v2970, %v3098
        %v3227 = vmax.f32 %v2971, %v3099
        %v3228 = vmax.f32 %v2972, %v3100
        %v3229 = vmax.f32 %v2973, %v3101
        %v3230 = vmax.f32 %v2974, %v3102
        %v3231 = vmax.f32 %v2975, %v3103
        %v3232 = vmax.f32 %v2976, %v3104
        %v3233 = vmax.f32 %v2977, %v3105
        %v3234 = vmax.f32 %v2978, %v3106
        %v3235 = vmax.f32 %v2979, %v3107
        %v3236 = vmax.f32 %v2980, %v3108
        %v3237 = vmax.f32 %v2981, %v3109
        %v3238 = vmax.f32 %v2982, %v3110
        %v3239 = vmax.f32 %v2983, %v3111
        %v3240 = vmax.f32 %v2984, %v3112
        %v3241 = vmax.f32 %v2985, %v3113
        %v3242 = vmax.f32 %v2986, %v3114
        %v3243 = vmax.f32 %v2987, %v3115
        %v3244 = vmax.f32 %v2988, %v3116
        %v3245 = vmax.f32 %v2989, %v3117
        %v3246 = vmax.f32 %v2990, %v3118
        %v3247 = vmax.f32 %v2991, %v3119
        %v3248 = vmax.f32 %v2992, %v3120
        %v3249 = vmax.f32 %v2993, %v3121
        %v3250 = vmax.f32 %v2994, %v3122
        %v3251 = vmax.f32 %v2995, %v3123
        %v3252 = vmax.f32 %v2996, %v3124
        %v3253 = vmax.f32 %v2997, %v3125
        %v3254 = vmax.f32 %v2998, %v3126
        %v3255 = vmax.f32 %v2999, %v3127
        %v3256 = vmax.f32 %v3000, %v3128
        %v3257 = vmax.f32 %v3001, %v3129
        %3258 = vst [vmem:[#allocation2] sm:$0xff] %v3130
        %3259 = vst [vmem:[#allocation2 + $0x8] sm:$0xff] %v3131
        %3260 = vst [vmem:[#allocation2 + $0x10] sm:$0xff] %v3132
        %3261 = vst [vmem:[#allocation2 + $0x18] sm:$0xff] %v3133
        %3262 = vst [vmem:[#allocation2 + $0x20] sm:$0xff] %v3134
        %3263 = vst [vmem:[#allocation2 + $0x28] sm:$0xff] %v3135
        %3264 = vst [vmem:[#allocation2 + $0x30] sm:$0xff] %v3136
        %3265 = vst [vmem:[#allocation2 + $0x38] sm:$0xff] %v3137
        %3266 = vst [vmem:[#allocation2 + $0x40] sm:$0xff] %v3138
        %3267 = vst [vmem:[#allocation2 + $0x48] sm:$0xff] %v3139
        %3268 = vst [vmem:[#allocation2 + $0x50] sm:$0xff] %v3140
        %3269 = vst [vmem:[#allocation2 + $0x58] sm:$0xff] %v3141
        %3270 = vst [vmem:[#allocation2 + $0x60] sm:$0xff] %v3142
        %3271 = vst [vmem:[#allocation2 + $0x68] sm:$0xff] %v3143
        %3272 = vst [vmem:[#allocation2 + $0x70] sm:$0xff] %v3144
        %3273 = vst [vmem:[#allocation2 + $0x78] sm:$0xff] %v3145
        %3274 = vst [vmem:[#allocation2 + $0x80] sm:$0xff] %v3146
        %3275 = vst [vmem:[#allocation2 + $0x88] sm:$0xff] %v3147
        %3276 = vst [vmem:[#allocation2 + $0x90] sm:$0xff] %v3148
        %3277 = vst [vmem:[#allocation2 + $0x98] sm:$0xff] %v3149
        %3278 = vst [vmem:[#allocation2 + $0xa0] sm:$0xff] %v3150
        %3279 = vst [vmem:[#allocation2 + $0xa8] sm:$0xff] %v3151
        %3280 = vst [vmem:[#allocation2 + $0xb0] sm:$0xff] %v3152
        %3281 = vst [vmem:[#allocation2 + $0xb8] sm:$0xff] %v3153
        %3282 = vst [vmem:[#allocation2 + $0xc0] sm:$0xff] %v3154
        %3283 = vst [vmem:[#allocation2 + $0xc8] sm:$0xff] %v3155
        %3284 = vst [vmem:[#allocation2 + $0xd0] sm:$0xff] %v3156
        %3285 = vst [vmem:[#allocation2 + $0xd8] sm:$0xff] %v3157
        %3286 = vst [vmem:[#allocation2 + $0xe0] sm:$0xff] %v3158
        %3287 = vst [vmem:[#allocation2 + $0xe8] sm:$0xff] %v3159
        %3288 = vst [vmem:[#allocation2 + $0xf0] sm:$0xff] %v3160
        %3289 = vst [vmem:[#allocation2 + $0xf8] sm:$0xff] %v3161
        %3290 = vst [vmem:[#allocation2 + $0x100] sm:$0xff] %v3162
        %3291 = vst [vmem:[#allocation2 + $0x108] sm:$0xff] %v3163
        %3292 = vst [vmem:[#allocation2 + $0x110] sm:$0xff] %v3164
        %3293 = vst [vmem:[#allocation2 + $0x118] sm:$0xff] %v3165
        %3294 = vst [vmem:[#allocation2 + $0x120] sm:$0xff] %v3166
        %3295 = vst [vmem:[#allocation2 + $0x128] sm:$0xff] %v3167
        %3296 = vst [vmem:[#allocation2 + $0x130] sm:$0xff] %v3168
        %3297 = vst [vmem:[#allocation2 + $0x138] sm:$0xff] %v3169
        %3298 = vst [vmem:[#allocation2 + $0x140] sm:$0xff] %v3170
        %3299 = vst [vmem:[#allocation2 + $0x148] sm:$0xff] %v3171
        %3300 = vst [vmem:[#allocation2 + $0x150] sm:$0xff] %v3172
        %3301 = vst [vmem:[#allocation2 + $0x158] sm:$0xff] %v3173
        %3302 = vst [vmem:[#allocation2 + $0x160] sm:$0xff] %v3174
        %3303 = vst [vmem:[#allocation2 + $0x168] sm:$0xff] %v3175
        %3304 = vst [vmem:[#allocation2 + $0x170] sm:$0xff] %v3176
        %3305 = vst [vmem:[#allocation2 + $0x178] sm:$0xff] %v3177
        %3306 = vst [vmem:[#allocation2 + $0x180] sm:$0xff] %v3178
        %3307 = vst [vmem:[#allocation2 + $0x188] sm:$0xff] %v3179
        %3308 = vst [vmem:[#allocation2 + $0x190] sm:$0xff] %v3180
        %3309 = vst [vmem:[#allocation2 + $0x198] sm:$0xff] %v3181
        %3310 = vst [vmem:[#allocation2 + $0x1a0] sm:$0xff] %v3182
        %3311 = vst [vmem:[#allocation2 + $0x1a8] sm:$0xff] %v3183
        %3312 = vst [vmem:[#allocation2 + $0x1b0] sm:$0xff] %v3184
        %3313 = vst [vmem:[#allocation2 + $0x1b8] sm:$0xff] %v3185
        %3314 = vst [vmem:[#allocation2 + $0x1c0] sm:$0xff] %v3186
        %3315 = vst [vmem:[#allocation2 + $0x1c8] sm:$0xff] %v3187
        %3316 = vst [vmem:[#allocation2 + $0x1d0] sm:$0xff] %v3188
        %3317 = vst [vmem:[#allocation2 + $0x1d8] sm:$0xff] %v3189
        %3318 = vst [vmem:[#allocation2 + $0x1e0] sm:$0xff] %v3190
        %3319 = vst [vmem:[#allocation2 + $0x1e8] sm:$0xff] %v3191
        %3320 = vst [vmem:[#allocation2 + $0x1f0] sm:$0xff] %v3192
        %3321 = vst [vmem:[#allocation2 + $0x1f8] sm:$0xff] %v3193
        %3322 = vst [vmem:[#allocation2 + $0x200] sm:$0xff] %v3194
        %3323 = vst [vmem:[#allocation2 + $0x208] sm:$0xff] %v3195
        %3324 = vst [vmem:[#allocation2 + $0x210] sm:$0xff] %v3196
        %3325 = vst [vmem:[#allocation2 + $0x218] sm:$0xff] %v3197
        %3326 = vst [vmem:[#allocation2 + $0x220] sm:$0xff] %v3198
        %3327 = vst [vmem:[#allocation2 + $0x228] sm:$0xff] %v3199
        %3328 = vst [vmem:[#allocation2 + $0x230] sm:$0xff] %v3200
        %3329 = vst [vmem:[#allocation2 + $0x238] sm:$0xff] %v3201
        %3330 = vst [vmem:[#allocation2 + $0x240] sm:$0xff] %v3202
        %3331 = vst [vmem:[#allocation2 + $0x248] sm:$0xff] %v3203
        %3332 = vst [vmem:[#allocation2 + $0x250] sm:$0xff] %v3204
        %3333 = vst [vmem:[#allocation2 + $0x258] sm:$0xff] %v3205
        %3334 = vst [vmem:[#allocation2 + $0x260] sm:$0xff] %v3206
        %3335 = vst [vmem:[#allocation2 + $0x268] sm:$0xff] %v3207
        %3336 = vst [vmem:[#allocation2 + $0x270] sm:$0xff] %v3208
        %3337 = vst [vmem:[#allocation2 + $0x278] sm:$0xff] %v3209
        %3338 = vst [vmem:[#allocation2 + $0x280] sm:$0xff] %v3210
        %3339 = vst [vmem:[#allocation2 + $0x288] sm:$0xff] %v3211
        %3340 = vst [vmem:[#allocation2 + $0x290] sm:$0xff] %v3212
        %3341 = vst [vmem:[#allocation2 + $0x298] sm:$0xff] %v3213
        %3342 = vst [vmem:[#allocation2 + $0x2a0] sm:$0xff] %v3214
        %3343 = vst [vmem:[#allocation2 + $0x2a8] sm:$0xff] %v3215
        %3344 = vst [vmem:[#allocation2 + $0x2b0] sm:$0xff] %v3216
        %3345 = vst [vmem:[#allocation2 + $0x2b8] sm:$0xff] %v3217
        %3346 = vst [vmem:[#allocation2 + $0x2c0] sm:$0xff] %v3218
        %3347 = vst [vmem:[#allocation2 + $0x2c8] sm:$0xff] %v3219
        %3348 = vst [vmem:[#allocation2 + $0x2d0] sm:$0xff] %v3220
        %3349 = vst [vmem:[#allocation2 + $0x2d8] sm:$0xff] %v3221
        %3350 = vst [vmem:[#allocation2 + $0x2e0] sm:$0xff] %v3222
        %3351 = vst [vmem:[#allocation2 + $0x2e8] sm:$0xff] %v3223
        %3352 = vst [vmem:[#allocation2 + $0x2f0] sm:$0xff] %v3224
        %3353 = vst [vmem:[#allocation2 + $0x2f8] sm:$0xff] %v3225
        %3354 = vst [vmem:[#allocation2 + $0x300] sm:$0xff] %v3226
        %3355 = vst [vmem:[#allocation2 + $0x308] sm:$0xff] %v3227
        %3356 = vst [vmem:[#allocation2 + $0x310] sm:$0xff] %v3228
        %3357 = vst [vmem:[#allocation2 + $0x318] sm:$0xff] %v3229
        %3358 = vst [vmem:[#allocation2 + $0x320] sm:$0xff] %v3230
        %3359 = vst [vmem:[#allocation2 + $0x328] sm:$0xff] %v3231
        %3360 = vst [vmem:[#allocation2 + $0x330] sm:$0xff] %v3232
        %3361 = vst [vmem:[#allocation2 + $0x338] sm:$0xff] %v3233
        %3362 = vst [vmem:[#allocation2 + $0x340] sm:$0xff] %v3234
        %3363 = vst [vmem:[#allocation2 + $0x348] sm:$0xff] %v3235
        %3364 = vst [vmem:[#allocation2 + $0x350] sm:$0xff] %v3236
        %3365 = vst [vmem:[#allocation2 + $0x358] sm:$0xff] %v3237
        %3366 = vst [vmem:[#allocation2 + $0x360] sm:$0xff] %v3238
        %3367 = vst [vmem:[#allocation2 + $0x368] sm:$0xff] %v3239
        %3368 = vst [vmem:[#allocation2 + $0x370] sm:$0xff] %v3240
        %3369 = vst [vmem:[#allocation2 + $0x378] sm:$0xff] %v3241
        %3370 = vst [vmem:[#allocation2 + $0x380] sm:$0xff] %v3242
        %3371 = vst [vmem:[#allocation2 + $0x388] sm:$0xff] %v3243
        %3372 = vst [vmem:[#allocation2 + $0x390] sm:$0xff] %v3244
        %3373 = vst [vmem:[#allocation2 + $0x398] sm:$0xff] %v3245
        %3374 = vst [vmem:[#allocation2 + $0x3a0] sm:$0xff] %v3246
        %3375 = vst [vmem:[#allocation2 + $0x3a8] sm:$0xff] %v3247
        %3376 = vst [vmem:[#allocation2 + $0x3b0] sm:$0xff] %v3248
        %3377 = vst [vmem:[#allocation2 + $0x3b8] sm:$0xff] %v3249
        %3378 = vst [vmem:[#allocation2 + $0x3c0] sm:$0xff] %v3250
        %3379 = vst [vmem:[#allocation2 + $0x3c8] sm:$0xff] %v3251
        %3380 = vst [vmem:[#allocation2 + $0x3d0] sm:$0xff] %v3252
        %3381 = vst [vmem:[#allocation2 + $0x3d8] sm:$0xff] %v3253
        %3382 = vst [vmem:[#allocation2 + $0x3e0] sm:$0xff] %v3254
        %3383 = vst [vmem:[#allocation2 + $0x3e8] sm:$0xff] %v3255
        %3384 = vst [vmem:[#allocation2 + $0x3f0] sm:$0xff] %v3256
        %3385 = vst [vmem:[#allocation2 + $0x3f8] sm:$0xff] %v3257
        %v3386 = vld [vmem:[#allocation3] sm:$0xff]
        %v3387 = vld [vmem:[#allocation3 + $0x8] sm:$0xff]
        %v3388 = vld [vmem:[#allocation3 + $0x10] sm:$0xff]
        %v3389 = vld [vmem:[#allocation3 + $0x18] sm:$0xff]
        %v3390 = vld [vmem:[#allocation3 + $0x20] sm:$0xff]
        %v3391 = vld [vmem:[#allocation3 + $0x28] sm:$0xff]
        %v3392 = vld [vmem:[#allocation3 + $0x30] sm:$0xff]
        %v3393 = vld [vmem:[#allocation3 + $0x38] sm:$0xff]
        %v3394 = vld [vmem:[#allocation3 + $0x40] sm:$0xff]
        %v3395 = vld [vmem:[#allocation3 + $0x48] sm:$0xff]
        %v3396 = vld [vmem:[#allocation3 + $0x50] sm:$0xff]
        %v3397 = vld [vmem:[#allocation3 + $0x58] sm:$0xff]
        %v3398 = vld [vmem:[#allocation3 + $0x60] sm:$0xff]
        %v3399 = vld [vmem:[#allocation3 + $0x68] sm:$0xff]
        %v3400 = vld [vmem:[#allocation3 + $0x70] sm:$0xff]
        %v3401 = vld [vmem:[#allocation3 + $0x78] sm:$0xff]
        %v3402 = vld [vmem:[#allocation3 + $0x80] sm:$0xff]
        %v3403 = vld [vmem:[#allocation3 + $0x88] sm:$0xff]
        %v3404 = vld [vmem:[#allocation3 + $0x90] sm:$0xff]
        %v3405 = vld [vmem:[#allocation3 + $0x98] sm:$0xff]
        %v3406 = vld [vmem:[#allocation3 + $0xa0] sm:$0xff]
        %v3407 = vld [vmem:[#allocation3 + $0xa8] sm:$0xff]
        %v3408 = vld [vmem:[#allocation3 + $0xb0] sm:$0xff]
        %v3409 = vld [vmem:[#allocation3 + $0xb8] sm:$0xff]
        %v3410 = vld [vmem:[#allocation3 + $0xc0] sm:$0xff]
        %v3411 = vld [vmem:[#allocation3 + $0xc8] sm:$0xff]
        %v3412 = vld [vmem:[#allocation3 + $0xd0] sm:$0xff]
        %v3413 = vld [vmem:[#allocation3 + $0xd8] sm:$0xff]
        %v3414 = vld [vmem:[#allocation3 + $0xe0] sm:$0xff]
        %v3415 = vld [vmem:[#allocation3 + $0xe8] sm:$0xff]
        %v3416 = vld [vmem:[#allocation3 + $0xf0] sm:$0xff]
        %v3417 = vld [vmem:[#allocation3 + $0xf8] sm:$0xff]
        %v3418 = vld [vmem:[#allocation3 + $0x100] sm:$0xff]
        %v3419 = vld [vmem:[#allocation3 + $0x108] sm:$0xff]
        %v3420 = vld [vmem:[#allocation3 + $0x110] sm:$0xff]
        %v3421 = vld [vmem:[#allocation3 + $0x118] sm:$0xff]
        %v3422 = vld [vmem:[#allocation3 + $0x120] sm:$0xff]
        %v3423 = vld [vmem:[#allocation3 + $0x128] sm:$0xff]
        %v3424 = vld [vmem:[#allocation3 + $0x130] sm:$0xff]
        %v3425 = vld [vmem:[#allocation3 + $0x138] sm:$0xff]
        %v3426 = vld [vmem:[#allocation3 + $0x140] sm:$0xff]
        %v3427 = vld [vmem:[#allocation3 + $0x148] sm:$0xff]
        %v3428 = vld [vmem:[#allocation3 + $0x150] sm:$0xff]
        %v3429 = vld [vmem:[#allocation3 + $0x158] sm:$0xff]
        %v3430 = vld [vmem:[#allocation3 + $0x160] sm:$0xff]
        %v3431 = vld [vmem:[#allocation3 + $0x168] sm:$0xff]
        %v3432 = vld [vmem:[#allocation3 + $0x170] sm:$0xff]
        %v3433 = vld [vmem:[#allocation3 + $0x178] sm:$0xff]
        %v3434 = vld [vmem:[#allocation3 + $0x180] sm:$0xff]
        %v3435 = vld [vmem:[#allocation3 + $0x188] sm:$0xff]
        %v3436 = vld [vmem:[#allocation3 + $0x190] sm:$0xff]
        %v3437 = vld [vmem:[#allocation3 + $0x198] sm:$0xff]
        %v3438 = vld [vmem:[#allocation3 + $0x1a0] sm:$0xff]
        %v3439 = vld [vmem:[#allocation3 + $0x1a8] sm:$0xff]
        %v3440 = vld [vmem:[#allocation3 + $0x1b0] sm:$0xff]
        %v3441 = vld [vmem:[#allocation3 + $0x1b8] sm:$0xff]
        %v3442 = vld [vmem:[#allocation3 + $0x1c0] sm:$0xff]
        %v3443 = vld [vmem:[#allocation3 + $0x1c8] sm:$0xff]
        %v3444 = vld [vmem:[#allocation3 + $0x1d0] sm:$0xff]
        %v3445 = vld [vmem:[#allocation3 + $0x1d8] sm:$0xff]
        %v3446 = vld [vmem:[#allocation3 + $0x1e0] sm:$0xff]
        %v3447 = vld [vmem:[#allocation3 + $0x1e8] sm:$0xff]
        %v3448 = vld [vmem:[#allocation3 + $0x1f0] sm:$0xff]
        %v3449 = vld [vmem:[#allocation3 + $0x1f8] sm:$0xff]
        %v3450 = vld [vmem:[#allocation3 + $0x200] sm:$0xff]
        %v3451 = vld [vmem:[#allocation3 + $0x208] sm:$0xff]
        %v3452 = vld [vmem:[#allocation3 + $0x210] sm:$0xff]
        %v3453 = vld [vmem:[#allocation3 + $0x218] sm:$0xff]
        %v3454 = vld [vmem:[#allocation3 + $0x220] sm:$0xff]
        %v3455 = vld [vmem:[#allocation3 + $0x228] sm:$0xff]
        %v3456 = vld [vmem:[#allocation3 + $0x230] sm:$0xff]
        %v3457 = vld [vmem:[#allocation3 + $0x238] sm:$0xff]
        %v3458 = vld [vmem:[#allocation3 + $0x240] sm:$0xff]
        %v3459 = vld [vmem:[#allocation3 + $0x248] sm:$0xff]
        %v3460 = vld [vmem:[#allocation3 + $0x250] sm:$0xff]
        %v3461 = vld [vmem:[#allocation3 + $0x258] sm:$0xff]
        %v3462 = vld [vmem:[#allocation3 + $0x260] sm:$0xff]
        %v3463 = vld [vmem:[#allocation3 + $0x268] sm:$0xff]
        %v3464 = vld [vmem:[#allocation3 + $0x270] sm:$0xff]
        %v3465 = vld [vmem:[#allocation3 + $0x278] sm:$0xff]
        %v3466 = vld [vmem:[#allocation3 + $0x280] sm:$0xff]
        %v3467 = vld [vmem:[#allocation3 + $0x288] sm:$0xff]
        %v3468 = vld [vmem:[#allocation3 + $0x290] sm:$0xff]
        %v3469 = vld [vmem:[#allocation3 + $0x298] sm:$0xff]
        %v3470 = vld [vmem:[#allocation3 + $0x2a0] sm:$0xff]
        %v3471 = vld [vmem:[#allocation3 + $0x2a8] sm:$0xff]
        %v3472 = vld [vmem:[#allocation3 + $0x2b0] sm:$0xff]
        %v3473 = vld [vmem:[#allocation3 + $0x2b8] sm:$0xff]
        %v3474 = vld [vmem:[#allocation3 + $0x2c0] sm:$0xff]
        %v3475 = vld [vmem:[#allocation3 + $0x2c8] sm:$0xff]
        %v3476 = vld [vmem:[#allocation3 + $0x2d0] sm:$0xff]
        %v3477 = vld [vmem:[#allocation3 + $0x2d8] sm:$0xff]
        %v3478 = vld [vmem:[#allocation3 + $0x2e0] sm:$0xff]
        %v3479 = vld [vmem:[#allocation3 + $0x2e8] sm:$0xff]
        %v3480 = vld [vmem:[#allocation3 + $0x2f0] sm:$0xff]
        %v3481 = vld [vmem:[#allocation3 + $0x2f8] sm:$0xff]
        %v3482 = vld [vmem:[#allocation3 + $0x300] sm:$0xff]
        %v3483 = vld [vmem:[#allocation3 + $0x308] sm:$0xff]
        %v3484 = vld [vmem:[#allocation3 + $0x310] sm:$0xff]
        %v3485 = vld [vmem:[#allocation3 + $0x318] sm:$0xff]
        %v3486 = vld [vmem:[#allocation3 + $0x320] sm:$0xff]
        %v3487 = vld [vmem:[#allocation3 + $0x328] sm:$0xff]
        %v3488 = vld [vmem:[#allocation3 + $0x330] sm:$0xff]
        %v3489 = vld [vmem:[#allocation3 + $0x338] sm:$0xff]
        %v3490 = vld [vmem:[#allocation3 + $0x340] sm:$0xff]
        %v3491 = vld [vmem:[#allocation3 + $0x348] sm:$0xff]
        %v3492 = vld [vmem:[#allocation3 + $0x350] sm:$0xff]
        %v3493 = vld [vmem:[#allocation3 + $0x358] sm:$0xff]
        %v3494 = vld [vmem:[#allocation3 + $0x360] sm:$0xff]
        %v3495 = vld [vmem:[#allocation3 + $0x368] sm:$0xff]
        %v3496 = vld [vmem:[#allocation3 + $0x370] sm:$0xff]
        %v3497 = vld [vmem:[#allocation3 + $0x378] sm:$0xff]
        %v3498 = vld [vmem:[#allocation3 + $0x380] sm:$0xff]
        %v3499 = vld [vmem:[#allocation3 + $0x388] sm:$0xff]
        %v3500 = vld [vmem:[#allocation3 + $0x390] sm:$0xff]
        %v3501 = vld [vmem:[#allocation3 + $0x398] sm:$0xff]
        %v3502 = vld [vmem:[#allocation3 + $0x3a0] sm:$0xff]
        %v3503 = vld [vmem:[#allocation3 + $0x3a8] sm:$0xff]
        %v3504 = vld [vmem:[#allocation3 + $0x3b0] sm:$0xff]
        %v3505 = vld [vmem:[#allocation3 + $0x3b8] sm:$0xff]
        %v3506 = vld [vmem:[#allocation3 + $0x3c0] sm:$0xff]
        %v3507 = vld [vmem:[#allocation3 + $0x3c8] sm:$0xff]
        %v3508 = vld [vmem:[#allocation3 + $0x3d0] sm:$0xff]
        %v3509 = vld [vmem:[#allocation3 + $0x3d8] sm:$0xff]
        %v3510 = vld [vmem:[#allocation3 + $0x3e0] sm:$0xff]
        %v3511 = vld [vmem:[#allocation3 + $0x3e8] sm:$0xff]
        %v3512 = vld [vmem:[#allocation3 + $0x3f0] sm:$0xff]
        %v3513 = vld [vmem:[#allocation3 + $0x3f8] sm:$0xff]
        %v3514 = vld [vmem:[%s487 + $0x10] sm:$0xff]
        %v3515 = vld [vmem:[%s487 + $0x30] sm:$0xff]
        %v3516 = vld [vmem:[%s487 + $0x50] sm:$0xff]
        %v3517 = vld [vmem:[%s487 + $0x70] sm:$0xff]
        %v3518 = vld [vmem:[%s487 + $0x90] sm:$0xff]
        %v3519 = vld [vmem:[%s487 + $0xb0] sm:$0xff]
        %v3520 = vld [vmem:[%s487 + $0xd0] sm:$0xff]
        %v3521 = vld [vmem:[%s487 + $0xf0] sm:$0xff]
        %v3522 = vld [vmem:[%s487 + $0x110] sm:$0xff]
        %v3523 = vld [vmem:[%s487 + $0x130] sm:$0xff]
        %v3524 = vld [vmem:[%s487 + $0x150] sm:$0xff]
        %v3525 = vld [vmem:[%s487 + $0x170] sm:$0xff]
        %v3526 = vld [vmem:[%s487 + $0x190] sm:$0xff]
        %v3527 = vld [vmem:[%s487 + $0x1b0] sm:$0xff]
        %v3528 = vld [vmem:[%s487 + $0x1d0] sm:$0xff]
        %v3529 = vld [vmem:[%s487 + $0x1f0] sm:$0xff]
        %v3530 = vld [vmem:[%s487 + $0x210] sm:$0xff]
        %v3531 = vld [vmem:[%s487 + $0x230] sm:$0xff]
        %v3532 = vld [vmem:[%s487 + $0x250] sm:$0xff]
        %v3533 = vld [vmem:[%s487 + $0x270] sm:$0xff]
        %v3534 = vld [vmem:[%s487 + $0x290] sm:$0xff]
        %v3535 = vld [vmem:[%s487 + $0x2b0] sm:$0xff]
        %v3536 = vld [vmem:[%s487 + $0x2d0] sm:$0xff]
        %v3537 = vld [vmem:[%s487 + $0x2f0] sm:$0xff]
        %v3538 = vld [vmem:[%s487 + $0x310] sm:$0xff]
        %v3539 = vld [vmem:[%s487 + $0x330] sm:$0xff]
        %v3540 = vld [vmem:[%s487 + $0x350] sm:$0xff]
        %v3541 = vld [vmem:[%s487 + $0x370] sm:$0xff]
        %v3542 = vld [vmem:[%s487 + $0x390] sm:$0xff]
        %v3543 = vld [vmem:[%s487 + $0x3b0] sm:$0xff]
        %v3544 = vld [vmem:[%s487 + $0x3d0] sm:$0xff]
        %v3545 = vld [vmem:[%s487 + $0x3f0] sm:$0xff]
        %v3546 = vld [vmem:[%s487 + $0x410] sm:$0xff]
        %v3547 = vld [vmem:[%s487 + $0x430] sm:$0xff]
        %v3548 = vld [vmem:[%s487 + $0x450] sm:$0xff]
        %v3549 = vld [vmem:[%s487 + $0x470] sm:$0xff]
        %v3550 = vld [vmem:[%s487 + $0x490] sm:$0xff]
        %v3551 = vld [vmem:[%s487 + $0x4b0] sm:$0xff]
        %v3552 = vld [vmem:[%s487 + $0x4d0] sm:$0xff]
        %v3553 = vld [vmem:[%s487 + $0x4f0] sm:$0xff]
        %v3554 = vld [vmem:[%s487 + $0x510] sm:$0xff]
        %v3555 = vld [vmem:[%s487 + $0x530] sm:$0xff]
        %v3556 = vld [vmem:[%s487 + $0x550] sm:$0xff]
        %v3557 = vld [vmem:[%s487 + $0x570] sm:$0xff]
        %v3558 = vld [vmem:[%s487 + $0x590] sm:$0xff]
        %v3559 = vld [vmem:[%s487 + $0x5b0] sm:$0xff]
        %v3560 = vld [vmem:[%s487 + $0x5d0] sm:$0xff]
        %v3561 = vld [vmem:[%s487 + $0x5f0] sm:$0xff]
        %v3562 = vld [vmem:[%s487 + $0x610] sm:$0xff]
        %v3563 = vld [vmem:[%s487 + $0x630] sm:$0xff]
        %v3564 = vld [vmem:[%s487 + $0x650] sm:$0xff]
        %v3565 = vld [vmem:[%s487 + $0x670] sm:$0xff]
        %v3566 = vld [vmem:[%s487 + $0x690] sm:$0xff]
        %v3567 = vld [vmem:[%s487 + $0x6b0] sm:$0xff]
        %v3568 = vld [vmem:[%s487 + $0x6d0] sm:$0xff]
        %v3569 = vld [vmem:[%s487 + $0x6f0] sm:$0xff]
        %v3570 = vld [vmem:[%s487 + $0x710] sm:$0xff]
        %v3571 = vld [vmem:[%s487 + $0x730] sm:$0xff]
        %v3572 = vld [vmem:[%s487 + $0x750] sm:$0xff]
        %v3573 = vld [vmem:[%s487 + $0x770] sm:$0xff]
        %v3574 = vld [vmem:[%s487 + $0x790] sm:$0xff]
        %v3575 = vld [vmem:[%s487 + $0x7b0] sm:$0xff]
        %v3576 = vld [vmem:[%s487 + $0x7d0] sm:$0xff]
        %v3577 = vld [vmem:[%s487 + $0x7f0] sm:$0xff]
        %v3578 = vld [vmem:[%s487 + $0x810] sm:$0xff]
        %v3579 = vld [vmem:[%s487 + $0x830] sm:$0xff]
        %v3580 = vld [vmem:[%s487 + $0x850] sm:$0xff]
        %v3581 = vld [vmem:[%s487 + $0x870] sm:$0xff]
        %v3582 = vld [vmem:[%s487 + $0x890] sm:$0xff]
        %v3583 = vld [vmem:[%s487 + $0x8b0] sm:$0xff]
        %v3584 = vld [vmem:[%s487 + $0x8d0] sm:$0xff]
        %v3585 = vld [vmem:[%s487 + $0x8f0] sm:$0xff]
        %v3586 = vld [vmem:[%s487 + $0x910] sm:$0xff]
        %v3587 = vld [vmem:[%s487 + $0x930] sm:$0xff]
        %v3588 = vld [vmem:[%s487 + $0x950] sm:$0xff]
        %v3589 = vld [vmem:[%s487 + $0x970] sm:$0xff]
        %v3590 = vld [vmem:[%s487 + $0x990] sm:$0xff]
        %v3591 = vld [vmem:[%s487 + $0x9b0] sm:$0xff]
        %v3592 = vld [vmem:[%s487 + $0x9d0] sm:$0xff]
        %v3593 = vld [vmem:[%s487 + $0x9f0] sm:$0xff]
        %v3594 = vld [vmem:[%s487 + $0xa10] sm:$0xff]
        %v3595 = vld [vmem:[%s487 + $0xa30] sm:$0xff]
        %v3596 = vld [vmem:[%s487 + $0xa50] sm:$0xff]
        %v3597 = vld [vmem:[%s487 + $0xa70] sm:$0xff]
        %v3598 = vld [vmem:[%s487 + $0xa90] sm:$0xff]
        %v3599 = vld [vmem:[%s487 + $0xab0] sm:$0xff]
        %v3600 = vld [vmem:[%s487 + $0xad0] sm:$0xff]
        %v3601 = vld [vmem:[%s487 + $0xaf0] sm:$0xff]
        %v3602 = vld [vmem:[%s487 + $0xb10] sm:$0xff]
        %v3603 = vld [vmem:[%s487 + $0xb30] sm:$0xff]
        %v3604 = vld [vmem:[%s487 + $0xb50] sm:$0xff]
        %v3605 = vld [vmem:[%s487 + $0xb70] sm:$0xff]
        %v3606 = vld [vmem:[%s487 + $0xb90] sm:$0xff]
        %v3607 = vld [vmem:[%s487 + $0xbb0] sm:$0xff]
        %v3608 = vld [vmem:[%s487 + $0xbd0] sm:$0xff]
        %v3609 = vld [vmem:[%s487 + $0xbf0] sm:$0xff]
        %v3610 = vld [vmem:[%s487 + $0xc10] sm:$0xff]
        %v3611 = vld [vmem:[%s487 + $0xc30] sm:$0xff]
        %v3612 = vld [vmem:[%s487 + $0xc50] sm:$0xff]
        %v3613 = vld [vmem:[%s487 + $0xc70] sm:$0xff]
        %v3614 = vld [vmem:[%s487 + $0xc90] sm:$0xff]
        %v3615 = vld [vmem:[%s487 + $0xcb0] sm:$0xff]
        %v3616 = vld [vmem:[%s487 + $0xcd0] sm:$0xff]
        %v3617 = vld [vmem:[%s487 + $0xcf0] sm:$0xff]
        %v3618 = vld [vmem:[%s487 + $0xd10] sm:$0xff]
        %v3619 = vld [vmem:[%s487 + $0xd30] sm:$0xff]
        %v3620 = vld [vmem:[%s487 + $0xd50] sm:$0xff]
        %v3621 = vld [vmem:[%s487 + $0xd70] sm:$0xff]
        %v3622 = vld [vmem:[%s487 + $0xd90] sm:$0xff]
        %v3623 = vld [vmem:[%s487 + $0xdb0] sm:$0xff]
        %v3624 = vld [vmem:[%s487 + $0xdd0] sm:$0xff]
        %v3625 = vld [vmem:[%s487 + $0xdf0] sm:$0xff]
        %v3626 = vld [vmem:[%s487 + $0xe10] sm:$0xff]
        %v3627 = vld [vmem:[%s487 + $0xe30] sm:$0xff]
        %v3628 = vld [vmem:[%s487 + $0xe50] sm:$0xff]
        %v3629 = vld [vmem:[%s487 + $0xe70] sm:$0xff]
        %v3630 = vld [vmem:[%s487 + $0xe90] sm:$0xff]
        %v3631 = vld [vmem:[%s487 + $0xeb0] sm:$0xff]
        %v3632 = vld [vmem:[%s487 + $0xed0] sm:$0xff]
        %v3633 = vld [vmem:[%s487 + $0xef0] sm:$0xff]
        %v3634 = vld [vmem:[%s487 + $0xf10] sm:$0xff]
        %v3635 = vld [vmem:[%s487 + $0xf30] sm:$0xff]
        %v3636 = vld [vmem:[%s487 + $0xf50] sm:$0xff]
        %v3637 = vld [vmem:[%s487 + $0xf70] sm:$0xff]
        %v3638 = vld [vmem:[%s487 + $0xf90] sm:$0xff]
        %v3639 = vld [vmem:[%s487 + $0xfb0] sm:$0xff]
        %v3640 = vld [vmem:[%s487 + $0xfd0] sm:$0xff]
        %v3641 = vld [vmem:[%s487 + $0xff0] sm:$0xff]
        %v3642 = vmax.f32 %v3386, %v3514
        %v3643 = vmax.f32 %v3387, %v3515
        %v3644 = vmax.f32 %v3388, %v3516
        %v3645 = vmax.f32 %v3389, %v3517
        %v3646 = vmax.f32 %v3390, %v3518
        %v3647 = vmax.f32 %v3391, %v3519
        %v3648 = vmax.f32 %v3392, %v3520
        %v3649 = vmax.f32 %v3393, %v3521
        %v3650 = vmax.f32 %v3394, %v3522
        %v3651 = vmax.f32 %v3395, %v3523
        %v3652 = vmax.f32 %v3396, %v3524
        %v3653 = vmax.f32 %v3397, %v3525
        %v3654 = vmax.f32 %v3398, %v3526
        %v3655 = vmax.f32 %v3399, %v3527
        %v3656 = vmax.f32 %v3400, %v3528
        %v3657 = vmax.f32 %v3401, %v3529
        %v3658 = vmax.f32 %v3402, %v3530
        %v3659 = vmax.f32 %v3403, %v3531
        %v3660 = vmax.f32 %v3404, %v3532
        %v3661 = vmax.f32 %v3405, %v3533
        %v3662 = vmax.f32 %v3406, %v3534
        %v3663 = vmax.f32 %v3407, %v3535
        %v3664 = vmax.f32 %v3408, %v3536
        %v3665 = vmax.f32 %v3409, %v3537
        %v3666 = vmax.f32 %v3410, %v3538
        %v3667 = vmax.f32 %v3411, %v3539
        %v3668 = vmax.f32 %v3412, %v3540
        %v3669 = vmax.f32 %v3413, %v3541
        %v3670 = vmax.f32 %v3414, %v3542
        %v3671 = vmax.f32 %v3415, %v3543
        %v3672 = vmax.f32 %v3416, %v3544
        %v3673 = vmax.f32 %v3417, %v3545
        %v3674 = vmax.f32 %v3418, %v3546
        %v3675 = vmax.f32 %v3419, %v3547
        %v3676 = vmax.f32 %v3420, %v3548
        %v3677 = vmax.f32 %v3421, %v3549
        %v3678 = vmax.f32 %v3422, %v3550
        %v3679 = vmax.f32 %v3423, %v3551
        %v3680 = vmax.f32 %v3424, %v3552
        %v3681 = vmax.f32 %v3425, %v3553
        %v3682 = vmax.f32 %v3426, %v3554
        %v3683 = vmax.f32 %v3427, %v3555
        %v3684 = vmax.f32 %v3428, %v3556
        %v3685 = vmax.f32 %v3429, %v3557
        %v3686 = vmax.f32 %v3430, %v3558
        %v3687 = vmax.f32 %v3431, %v3559
        %v3688 = vmax.f32 %v3432, %v3560
        %v3689 = vmax.f32 %v3433, %v3561
        %v3690 = vmax.f32 %v3434, %v3562
        %v3691 = vmax.f32 %v3435, %v3563
        %v3692 = vmax.f32 %v3436, %v3564
        %v3693 = vmax.f32 %v3437, %v3565
        %v3694 = vmax.f32 %v3438, %v3566
        %v3695 = vmax.f32 %v3439, %v3567
        %v3696 = vmax.f32 %v3440, %v3568
        %v3697 = vmax.f32 %v3441, %v3569
        %v3698 = vmax.f32 %v3442, %v3570
        %v3699 = vmax.f32 %v3443, %v3571
        %v3700 = vmax.f32 %v3444, %v3572
        %v3701 = vmax.f32 %v3445, %v3573
        %v3702 = vmax.f32 %v3446, %v3574
        %v3703 = vmax.f32 %v3447, %v3575
        %v3704 = vmax.f32 %v3448, %v3576
        %v3705 = vmax.f32 %v3449, %v3577
        %v3706 = vmax.f32 %v3450, %v3578
        %v3707 = vmax.f32 %v3451, %v3579
        %v3708 = vmax.f32 %v3452, %v3580
        %v3709 = vmax.f32 %v3453, %v3581
        %v3710 = vmax.f32 %v3454, %v3582
        %v3711 = vmax.f32 %v3455, %v3583
        %v3712 = vmax.f32 %v3456, %v3584
        %v3713 = vmax.f32 %v3457, %v3585
        %v3714 = vmax.f32 %v3458, %v3586
        %v3715 = vmax.f32 %v3459, %v3587
        %v3716 = vmax.f32 %v3460, %v3588
        %v3717 = vmax.f32 %v3461, %v3589
        %v3718 = vmax.f32 %v3462, %v3590
        %v3719 = vmax.f32 %v3463, %v3591
        %v3720 = vmax.f32 %v3464, %v3592
        %v3721 = vmax.f32 %v3465, %v3593
        %v3722 = vmax.f32 %v3466, %v3594
        %v3723 = vmax.f32 %v3467, %v3595
        %v3724 = vmax.f32 %v3468, %v3596
        %v3725 = vmax.f32 %v3469, %v3597
        %v3726 = vmax.f32 %v3470, %v3598
        %v3727 = vmax.f32 %v3471, %v3599
        %v3728 = vmax.f32 %v3472, %v3600
        %v3729 = vmax.f32 %v3473, %v3601
        %v3730 = vmax.f32 %v3474, %v3602
        %v3731 = vmax.f32 %v3475, %v3603
        %v3732 = vmax.f32 %v3476, %v3604
        %v3733 = vmax.f32 %v3477, %v3605
        %v3734 = vmax.f32 %v3478, %v3606
        %v3735 = vmax.f32 %v3479, %v3607
        %v3736 = vmax.f32 %v3480, %v3608
        %v3737 = vmax.f32 %v3481, %v3609
        %v3738 = vmax.f32 %v3482, %v3610
        %v3739 = vmax.f32 %v3483, %v3611
        %v3740 = vmax.f32 %v3484, %v3612
        %v3741 = vmax.f32 %v3485, %v3613
        %v3742 = vmax.f32 %v3486, %v3614
        %v3743 = vmax.f32 %v3487, %v3615
        %v3744 = vmax.f32 %v3488, %v3616
        %v3745 = vmax.f32 %v3489, %v3617
        %v3746 = vmax.f32 %v3490, %v3618
        %v3747 = vmax.f32 %v3491, %v3619
        %v3748 = vmax.f32 %v3492, %v3620
        %v3749 = vmax.f32 %v3493, %v3621
        %v3750 = vmax.f32 %v3494, %v3622
        %v3751 = vmax.f32 %v3495, %v3623
        %v3752 = vmax.f32 %v3496, %v3624
        %v3753 = vmax.f32 %v3497, %v3625
        %v3754 = vmax.f32 %v3498, %v3626
        %v3755 = vmax.f32 %v3499, %v3627
        %v3756 = vmax.f32 %v3500, %v3628
        %v3757 = vmax.f32 %v3501, %v3629
        %v3758 = vmax.f32 %v3502, %v3630
        %v3759 = vmax.f32 %v3503, %v3631
        %v3760 = vmax.f32 %v3504, %v3632
        %v3761 = vmax.f32 %v3505, %v3633
        %v3762 = vmax.f32 %v3506, %v3634
        %v3763 = vmax.f32 %v3507, %v3635
        %v3764 = vmax.f32 %v3508, %v3636
        %v3765 = vmax.f32 %v3509, %v3637
        %v3766 = vmax.f32 %v3510, %v3638
        %v3767 = vmax.f32 %v3511, %v3639
        %v3768 = vmax.f32 %v3512, %v3640
        %v3769 = vmax.f32 %v3513, %v3641
        %3770 = vst [vmem:[#allocation3] sm:$0xff] %v3642
        %3771 = vst [vmem:[#allocation3 + $0x8] sm:$0xff] %v3643
        %3772 = vst [vmem:[#allocation3 + $0x10] sm:$0xff] %v3644
        %3773 = vst [vmem:[#allocation3 + $0x18] sm:$0xff] %v3645
        %3774 = vst [vmem:[#allocation3 + $0x20] sm:$0xff] %v3646
        %3775 = vst [vmem:[#allocation3 + $0x28] sm:$0xff] %v3647
        %3776 = vst [vmem:[#allocation3 + $0x30] sm:$0xff] %v3648
        %3777 = vst [vmem:[#allocation3 + $0x38] sm:$0xff] %v3649
        %3778 = vst [vmem:[#allocation3 + $0x40] sm:$0xff] %v3650
        %3779 = vst [vmem:[#allocation3 + $0x48] sm:$0xff] %v3651
        %3780 = vst [vmem:[#allocation3 + $0x50] sm:$0xff] %v3652
        %3781 = vst [vmem:[#allocation3 + $0x58] sm:$0xff] %v3653
        %3782 = vst [vmem:[#allocation3 + $0x60] sm:$0xff] %v3654
        %3783 = vst [vmem:[#allocation3 + $0x68] sm:$0xff] %v3655
        %3784 = vst [vmem:[#allocation3 + $0x70] sm:$0xff] %v3656
        %3785 = vst [vmem:[#allocation3 + $0x78] sm:$0xff] %v3657
        %3786 = vst [vmem:[#allocation3 + $0x80] sm:$0xff] %v3658
        %3787 = vst [vmem:[#allocation3 + $0x88] sm:$0xff] %v3659
        %3788 = vst [vmem:[#allocation3 + $0x90] sm:$0xff] %v3660
        %3789 = vst [vmem:[#allocation3 + $0x98] sm:$0xff] %v3661
        %3790 = vst [vmem:[#allocation3 + $0xa0] sm:$0xff] %v3662
        %3791 = vst [vmem:[#allocation3 + $0xa8] sm:$0xff] %v3663
        %3792 = vst [vmem:[#allocation3 + $0xb0] sm:$0xff] %v3664
        %3793 = vst [vmem:[#allocation3 + $0xb8] sm:$0xff] %v3665
        %3794 = vst [vmem:[#allocation3 + $0xc0] sm:$0xff] %v3666
        %3795 = vst [vmem:[#allocation3 + $0xc8] sm:$0xff] %v3667
        %3796 = vst [vmem:[#allocation3 + $0xd0] sm:$0xff] %v3668
        %3797 = vst [vmem:[#allocation3 + $0xd8] sm:$0xff] %v3669
        %3798 = vst [vmem:[#allocation3 + $0xe0] sm:$0xff] %v3670
        %3799 = vst [vmem:[#allocation3 + $0xe8] sm:$0xff] %v3671
        %3800 = vst [vmem:[#allocation3 + $0xf0] sm:$0xff] %v3672
        %3801 = vst [vmem:[#allocation3 + $0xf8] sm:$0xff] %v3673
        %3802 = vst [vmem:[#allocation3 + $0x100] sm:$0xff] %v3674
        %3803 = vst [vmem:[#allocation3 + $0x108] sm:$0xff] %v3675
        %3804 = vst [vmem:[#allocation3 + $0x110] sm:$0xff] %v3676
        %3805 = vst [vmem:[#allocation3 + $0x118] sm:$0xff] %v3677
        %3806 = vst [vmem:[#allocation3 + $0x120] sm:$0xff] %v3678
        %3807 = vst [vmem:[#allocation3 + $0x128] sm:$0xff] %v3679
        %3808 = vst [vmem:[#allocation3 + $0x130] sm:$0xff] %v3680
        %3809 = vst [vmem:[#allocation3 + $0x138] sm:$0xff] %v3681
        %3810 = vst [vmem:[#allocation3 + $0x140] sm:$0xff] %v3682
        %3811 = vst [vmem:[#allocation3 + $0x148] sm:$0xff] %v3683
        %3812 = vst [vmem:[#allocation3 + $0x150] sm:$0xff] %v3684
        %3813 = vst [vmem:[#allocation3 + $0x158] sm:$0xff] %v3685
        %3814 = vst [vmem:[#allocation3 + $0x160] sm:$0xff] %v3686
        %3815 = vst [vmem:[#allocation3 + $0x168] sm:$0xff] %v3687
        %3816 = vst [vmem:[#allocation3 + $0x170] sm:$0xff] %v3688
        %3817 = vst [vmem:[#allocation3 + $0x178] sm:$0xff] %v3689
        %3818 = vst [vmem:[#allocation3 + $0x180] sm:$0xff] %v3690
        %3819 = vst [vmem:[#allocation3 + $0x188] sm:$0xff] %v3691
        %3820 = vst [vmem:[#allocation3 + $0x190] sm:$0xff] %v3692
        %3821 = vst [vmem:[#allocation3 + $0x198] sm:$0xff] %v3693
        %3822 = vst [vmem:[#allocation3 + $0x1a0] sm:$0xff] %v3694
        %3823 = vst [vmem:[#allocation3 + $0x1a8] sm:$0xff] %v3695
        %3824 = vst [vmem:[#allocation3 + $0x1b0] sm:$0xff] %v3696
        %3825 = vst [vmem:[#allocation3 + $0x1b8] sm:$0xff] %v3697
        %3826 = vst [vmem:[#allocation3 + $0x1c0] sm:$0xff] %v3698
        %3827 = vst [vmem:[#allocation3 + $0x1c8] sm:$0xff] %v3699
        %3828 = vst [vmem:[#allocation3 + $0x1d0] sm:$0xff] %v3700
        %3829 = vst [vmem:[#allocation3 + $0x1d8] sm:$0xff] %v3701
        %3830 = vst [vmem:[#allocation3 + $0x1e0] sm:$0xff] %v3702
        %3831 = vst [vmem:[#allocation3 + $0x1e8] sm:$0xff] %v3703
        %3832 = vst [vmem:[#allocation3 + $0x1f0] sm:$0xff] %v3704
        %3833 = vst [vmem:[#allocation3 + $0x1f8] sm:$0xff] %v3705
        %3834 = vst [vmem:[#allocation3 + $0x200] sm:$0xff] %v3706
        %3835 = vst [vmem:[#allocation3 + $0x208] sm:$0xff] %v3707
        %3836 = vst [vmem:[#allocation3 + $0x210] sm:$0xff] %v3708
        %3837 = vst [vmem:[#allocation3 + $0x218] sm:$0xff] %v3709
        %3838 = vst [vmem:[#allocation3 + $0x220] sm:$0xff] %v3710
        %3839 = vst [vmem:[#allocation3 + $0x228] sm:$0xff] %v3711
        %3840 = vst [vmem:[#allocation3 + $0x230] sm:$0xff] %v3712
        %3841 = vst [vmem:[#allocation3 + $0x238] sm:$0xff] %v3713
        %3842 = vst [vmem:[#allocation3 + $0x240] sm:$0xff] %v3714
        %3843 = vst [vmem:[#allocation3 + $0x248] sm:$0xff] %v3715
        %3844 = vst [vmem:[#allocation3 + $0x250] sm:$0xff] %v3716
        %3845 = vst [vmem:[#allocation3 + $0x258] sm:$0xff] %v3717
        %3846 = vst [vmem:[#allocation3 + $0x260] sm:$0xff] %v3718
        %3847 = vst [vmem:[#allocation3 + $0x268] sm:$0xff] %v3719
        %3848 = vst [vmem:[#allocation3 + $0x270] sm:$0xff] %v3720
        %3849 = vst [vmem:[#allocation3 + $0x278] sm:$0xff] %v3721
        %3850 = vst [vmem:[#allocation3 + $0x280] sm:$0xff] %v3722
        %3851 = vst [vmem:[#allocation3 + $0x288] sm:$0xff] %v3723
        %3852 = vst [vmem:[#allocation3 + $0x290] sm:$0xff] %v3724
        %3853 = vst [vmem:[#allocation3 + $0x298] sm:$0xff] %v3725
        %3854 = vst [vmem:[#allocation3 + $0x2a0] sm:$0xff] %v3726
        %3855 = vst [vmem:[#allocation3 + $0x2a8] sm:$0xff] %v3727
        %3856 = vst [vmem:[#allocation3 + $0x2b0] sm:$0xff] %v3728
        %3857 = vst [vmem:[#allocation3 + $0x2b8] sm:$0xff] %v3729
        %3858 = vst [vmem:[#allocation3 + $0x2c0] sm:$0xff] %v3730
        %3859 = vst [vmem:[#allocation3 + $0x2c8] sm:$0xff] %v3731
        %3860 = vst [vmem:[#allocation3 + $0x2d0] sm:$0xff] %v3732
        %3861 = vst [vmem:[#allocation3 + $0x2d8] sm:$0xff] %v3733
        %3862 = vst [vmem:[#allocation3 + $0x2e0] sm:$0xff] %v3734
        %3863 = vst [vmem:[#allocation3 + $0x2e8] sm:$0xff] %v3735
        %3864 = vst [vmem:[#allocation3 + $0x2f0] sm:$0xff] %v3736
        %3865 = vst [vmem:[#allocation3 + $0x2f8] sm:$0xff] %v3737
        %3866 = vst [vmem:[#allocation3 + $0x300] sm:$0xff] %v3738
        %3867 = vst [vmem:[#allocation3 + $0x308] sm:$0xff] %v3739
        %3868 = vst [vmem:[#allocation3 + $0x310] sm:$0xff] %v3740
        %3869 = vst [vmem:[#allocation3 + $0x318] sm:$0xff] %v3741
        %3870 = vst [vmem:[#allocation3 + $0x320] sm:$0xff] %v3742
        %3871 = vst [vmem:[#allocation3 + $0x328] sm:$0xff] %v3743
        %3872 = vst [vmem:[#allocation3 + $0x330] sm:$0xff] %v3744
        %3873 = vst [vmem:[#allocation3 + $0x338] sm:$0xff] %v3745
        %3874 = vst [vmem:[#allocation3 + $0x340] sm:$0xff] %v3746
        %3875 = vst [vmem:[#allocation3 + $0x348] sm:$0xff] %v3747
        %3876 = vst [vmem:[#allocation3 + $0x350] sm:$0xff] %v3748
        %3877 = vst [vmem:[#allocation3 + $0x358] sm:$0xff] %v3749
        %3878 = vst [vmem:[#allocation3 + $0x360] sm:$0xff] %v3750
        %3879 = vst [vmem:[#allocation3 + $0x368] sm:$0xff] %v3751
        %3880 = vst [vmem:[#allocation3 + $0x370] sm:$0xff] %v3752
        %3881 = vst [vmem:[#allocation3 + $0x378] sm:$0xff] %v3753
        %3882 = vst [vmem:[#allocation3 + $0x380] sm:$0xff] %v3754
        %3883 = vst [vmem:[#allocation3 + $0x388] sm:$0xff] %v3755
        %3884 = vst [vmem:[#allocation3 + $0x390] sm:$0xff] %v3756
        %3885 = vst [vmem:[#allocation3 + $0x398] sm:$0xff] %v3757
        %3886 = vst [vmem:[#allocation3 + $0x3a0] sm:$0xff] %v3758
        %3887 = vst [vmem:[#allocation3 + $0x3a8] sm:$0xff] %v3759
        %3888 = vst [vmem:[#allocation3 + $0x3b0] sm:$0xff] %v3760
        %3889 = vst [vmem:[#allocation3 + $0x3b8] sm:$0xff] %v3761
        %3890 = vst [vmem:[#allocation3 + $0x3c0] sm:$0xff] %v3762
        %3891 = vst [vmem:[#allocation3 + $0x3c8] sm:$0xff] %v3763
        %3892 = vst [vmem:[#allocation3 + $0x3d0] sm:$0xff] %v3764
        %3893 = vst [vmem:[#allocation3 + $0x3d8] sm:$0xff] %v3765
        %3894 = vst [vmem:[#allocation3 + $0x3e0] sm:$0xff] %v3766
        %3895 = vst [vmem:[#allocation3 + $0x3e8] sm:$0xff] %v3767
        %3896 = vst [vmem:[#allocation3 + $0x3f0] sm:$0xff] %v3768
        %3897 = vst [vmem:[#allocation3 + $0x3f8] sm:$0xff] %v3769
        %v3898 = vld [vmem:[#allocation2] sm:$0xff]
        %v3899 = vld [vmem:[#allocation2 + $0x8] sm:$0xff]
        %v3900 = vld [vmem:[#allocation2 + $0x10] sm:$0xff]
        %v3901 = vld [vmem:[#allocation2 + $0x18] sm:$0xff]
        %v3902 = vld [vmem:[#allocation2 + $0x20] sm:$0xff]
        %v3903 = vld [vmem:[#allocation2 + $0x28] sm:$0xff]
        %v3904 = vld [vmem:[#allocation2 + $0x30] sm:$0xff]
        %v3905 = vld [vmem:[#allocation2 + $0x38] sm:$0xff]
        %v3906 = vld [vmem:[#allocation2 + $0x40] sm:$0xff]
        %v3907 = vld [vmem:[#allocation2 + $0x48] sm:$0xff]
        %v3908 = vld [vmem:[#allocation2 + $0x50] sm:$0xff]
        %v3909 = vld [vmem:[#allocation2 + $0x58] sm:$0xff]
        %v3910 = vld [vmem:[#allocation2 + $0x60] sm:$0xff]
        %v3911 = vld [vmem:[#allocation2 + $0x68] sm:$0xff]
        %v3912 = vld [vmem:[#allocation2 + $0x70] sm:$0xff]
        %v3913 = vld [vmem:[#allocation2 + $0x78] sm:$0xff]
        %v3914 = vld [vmem:[#allocation2 + $0x80] sm:$0xff]
        %v3915 = vld [vmem:[#allocation2 + $0x88] sm:$0xff]
        %v3916 = vld [vmem:[#allocation2 + $0x90] sm:$0xff]
        %v3917 = vld [vmem:[#allocation2 + $0x98] sm:$0xff]
        %v3918 = vld [vmem:[#allocation2 + $0xa0] sm:$0xff]
        %v3919 = vld [vmem:[#allocation2 + $0xa8] sm:$0xff]
        %v3920 = vld [vmem:[#allocation2 + $0xb0] sm:$0xff]
        %v3921 = vld [vmem:[#allocation2 + $0xb8] sm:$0xff]
        %v3922 = vld [vmem:[#allocation2 + $0xc0] sm:$0xff]
        %v3923 = vld [vmem:[#allocation2 + $0xc8] sm:$0xff]
        %v3924 = vld [vmem:[#allocation2 + $0xd0] sm:$0xff]
        %v3925 = vld [vmem:[#allocation2 + $0xd8] sm:$0xff]
        %v3926 = vld [vmem:[#allocation2 + $0xe0] sm:$0xff]
        %v3927 = vld [vmem:[#allocation2 + $0xe8] sm:$0xff]
        %v3928 = vld [vmem:[#allocation2 + $0xf0] sm:$0xff]
        %v3929 = vld [vmem:[#allocation2 + $0xf8] sm:$0xff]
        %v3930 = vld [vmem:[#allocation2 + $0x100] sm:$0xff]
        %v3931 = vld [vmem:[#allocation2 + $0x108] sm:$0xff]
        %v3932 = vld [vmem:[#allocation2 + $0x110] sm:$0xff]
        %v3933 = vld [vmem:[#allocation2 + $0x118] sm:$0xff]
        %v3934 = vld [vmem:[#allocation2 + $0x120] sm:$0xff]
        %v3935 = vld [vmem:[#allocation2 + $0x128] sm:$0xff]
        %v3936 = vld [vmem:[#allocation2 + $0x130] sm:$0xff]
        %v3937 = vld [vmem:[#allocation2 + $0x138] sm:$0xff]
        %v3938 = vld [vmem:[#allocation2 + $0x140] sm:$0xff]
        %v3939 = vld [vmem:[#allocation2 + $0x148] sm:$0xff]
        %v3940 = vld [vmem:[#allocation2 + $0x150] sm:$0xff]
        %v3941 = vld [vmem:[#allocation2 + $0x158] sm:$0xff]
        %v3942 = vld [vmem:[#allocation2 + $0x160] sm:$0xff]
        %v3943 = vld [vmem:[#allocation2 + $0x168] sm:$0xff]
        %v3944 = vld [vmem:[#allocation2 + $0x170] sm:$0xff]
        %v3945 = vld [vmem:[#allocation2 + $0x178] sm:$0xff]
        %v3946 = vld [vmem:[#allocation2 + $0x180] sm:$0xff]
        %v3947 = vld [vmem:[#allocation2 + $0x188] sm:$0xff]
        %v3948 = vld [vmem:[#allocation2 + $0x190] sm:$0xff]
        %v3949 = vld [vmem:[#allocation2 + $0x198] sm:$0xff]
        %v3950 = vld [vmem:[#allocation2 + $0x1a0] sm:$0xff]
        %v3951 = vld [vmem:[#allocation2 + $0x1a8] sm:$0xff]
        %v3952 = vld [vmem:[#allocation2 + $0x1b0] sm:$0xff]
        %v3953 = vld [vmem:[#allocation2 + $0x1b8] sm:$0xff]
        %v3954 = vld [vmem:[#allocation2 + $0x1c0] sm:$0xff]
        %v3955 = vld [vmem:[#allocation2 + $0x1c8] sm:$0xff]
        %v3956 = vld [vmem:[#allocation2 + $0x1d0] sm:$0xff]
        %v3957 = vld [vmem:[#allocation2 + $0x1d8] sm:$0xff]
        %v3958 = vld [vmem:[#allocation2 + $0x1e0] sm:$0xff]
        %v3959 = vld [vmem:[#allocation2 + $0x1e8] sm:$0xff]
        %v3960 = vld [vmem:[#allocation2 + $0x1f0] sm:$0xff]
        %v3961 = vld [vmem:[#allocation2 + $0x1f8] sm:$0xff]
        %v3962 = vld [vmem:[#allocation2 + $0x200] sm:$0xff]
        %v3963 = vld [vmem:[#allocation2 + $0x208] sm:$0xff]
        %v3964 = vld [vmem:[#allocation2 + $0x210] sm:$0xff]
        %v3965 = vld [vmem:[#allocation2 + $0x218] sm:$0xff]
        %v3966 = vld [vmem:[#allocation2 + $0x220] sm:$0xff]
        %v3967 = vld [vmem:[#allocation2 + $0x228] sm:$0xff]
        %v3968 = vld [vmem:[#allocation2 + $0x230] sm:$0xff]
        %v3969 = vld [vmem:[#allocation2 + $0x238] sm:$0xff]
        %v3970 = vld [vmem:[#allocation2 + $0x240] sm:$0xff]
        %v3971 = vld [vmem:[#allocation2 + $0x248] sm:$0xff]
        %v3972 = vld [vmem:[#allocation2 + $0x250] sm:$0xff]
        %v3973 = vld [vmem:[#allocation2 + $0x258] sm:$0xff]
        %v3974 = vld [vmem:[#allocation2 + $0x260] sm:$0xff]
        %v3975 = vld [vmem:[#allocation2 + $0x268] sm:$0xff]
        %v3976 = vld [vmem:[#allocation2 + $0x270] sm:$0xff]
        %v3977 = vld [vmem:[#allocation2 + $0x278] sm:$0xff]
        %v3978 = vld [vmem:[#allocation2 + $0x280] sm:$0xff]
        %v3979 = vld [vmem:[#allocation2 + $0x288] sm:$0xff]
        %v3980 = vld [vmem:[#allocation2 + $0x290] sm:$0xff]
        %v3981 = vld [vmem:[#allocation2 + $0x298] sm:$0xff]
        %v3982 = vld [vmem:[#allocation2 + $0x2a0] sm:$0xff]
        %v3983 = vld [vmem:[#allocation2 + $0x2a8] sm:$0xff]
        %v3984 = vld [vmem:[#allocation2 + $0x2b0] sm:$0xff]
        %v3985 = vld [vmem:[#allocation2 + $0x2b8] sm:$0xff]
        %v3986 = vld [vmem:[#allocation2 + $0x2c0] sm:$0xff]
        %v3987 = vld [vmem:[#allocation2 + $0x2c8] sm:$0xff]
        %v3988 = vld [vmem:[#allocation2 + $0x2d0] sm:$0xff]
        %v3989 = vld [vmem:[#allocation2 + $0x2d8] sm:$0xff]
        %v3990 = vld [vmem:[#allocation2 + $0x2e0] sm:$0xff]
        %v3991 = vld [vmem:[#allocation2 + $0x2e8] sm:$0xff]
        %v3992 = vld [vmem:[#allocation2 + $0x2f0] sm:$0xff]
        %v3993 = vld [vmem:[#allocation2 + $0x2f8] sm:$0xff]
        %v3994 = vld [vmem:[#allocation2 + $0x300] sm:$0xff]
        %v3995 = vld [vmem:[#allocation2 + $0x308] sm:$0xff]
        %v3996 = vld [vmem:[#allocation2 + $0x310] sm:$0xff]
        %v3997 = vld [vmem:[#allocation2 + $0x318] sm:$0xff]
        %v3998 = vld [vmem:[#allocation2 + $0x320] sm:$0xff]
        %v3999 = vld [vmem:[#allocation2 + $0x328] sm:$0xff]
        %v4000 = vld [vmem:[#allocation2 + $0x330] sm:$0xff]
        %v4001 = vld [vmem:[#allocation2 + $0x338] sm:$0xff]
        %v4002 = vld [vmem:[#allocation2 + $0x340] sm:$0xff]
        %v4003 = vld [vmem:[#allocation2 + $0x348] sm:$0xff]
        %v4004 = vld [vmem:[#allocation2 + $0x350] sm:$0xff]
        %v4005 = vld [vmem:[#allocation2 + $0x358] sm:$0xff]
        %v4006 = vld [vmem:[#allocation2 + $0x360] sm:$0xff]
        %v4007 = vld [vmem:[#allocation2 + $0x368] sm:$0xff]
        %v4008 = vld [vmem:[#allocation2 + $0x370] sm:$0xff]
        %v4009 = vld [vmem:[#allocation2 + $0x378] sm:$0xff]
        %v4010 = vld [vmem:[#allocation2 + $0x380] sm:$0xff]
        %v4011 = vld [vmem:[#allocation2 + $0x388] sm:$0xff]
        %v4012 = vld [vmem:[#allocation2 + $0x390] sm:$0xff]
        %v4013 = vld [vmem:[#allocation2 + $0x398] sm:$0xff]
        %v4014 = vld [vmem:[#allocation2 + $0x3a0] sm:$0xff]
        %v4015 = vld [vmem:[#allocation2 + $0x3a8] sm:$0xff]
        %v4016 = vld [vmem:[#allocation2 + $0x3b0] sm:$0xff]
        %v4017 = vld [vmem:[#allocation2 + $0x3b8] sm:$0xff]
        %v4018 = vld [vmem:[#allocation2 + $0x3c0] sm:$0xff]
        %v4019 = vld [vmem:[#allocation2 + $0x3c8] sm:$0xff]
        %v4020 = vld [vmem:[#allocation2 + $0x3d0] sm:$0xff]
        %v4021 = vld [vmem:[#allocation2 + $0x3d8] sm:$0xff]
        %v4022 = vld [vmem:[#allocation2 + $0x3e0] sm:$0xff]
        %v4023 = vld [vmem:[#allocation2 + $0x3e8] sm:$0xff]
        %v4024 = vld [vmem:[#allocation2 + $0x3f0] sm:$0xff]
        %v4025 = vld [vmem:[#allocation2 + $0x3f8] sm:$0xff]
        %v4026 = vld [vmem:[%s478 + $0x18] sm:$0xff]
        %v4027 = vld [vmem:[%s478 + $0x38] sm:$0xff]
        %v4028 = vld [vmem:[%s478 + $0x58] sm:$0xff]
        %v4029 = vld [vmem:[%s478 + $0x78] sm:$0xff]
        %v4030 = vld [vmem:[%s478 + $0x98] sm:$0xff]
        %v4031 = vld [vmem:[%s478 + $0xb8] sm:$0xff]
        %v4032 = vld [vmem:[%s478 + $0xd8] sm:$0xff]
        %v4033 = vld [vmem:[%s478 + $0xf8] sm:$0xff]
        %v4034 = vld [vmem:[%s478 + $0x118] sm:$0xff]
        %v4035 = vld [vmem:[%s478 + $0x138] sm:$0xff]
        %v4036 = vld [vmem:[%s478 + $0x158] sm:$0xff]
        %v4037 = vld [vmem:[%s478 + $0x178] sm:$0xff]
        %v4038 = vld [vmem:[%s478 + $0x198] sm:$0xff]
        %v4039 = vld [vmem:[%s478 + $0x1b8] sm:$0xff]
        %v4040 = vld [vmem:[%s478 + $0x1d8] sm:$0xff]
        %v4041 = vld [vmem:[%s478 + $0x1f8] sm:$0xff]
        %v4042 = vld [vmem:[%s478 + $0x218] sm:$0xff]
        %v4043 = vld [vmem:[%s478 + $0x238] sm:$0xff]
        %v4044 = vld [vmem:[%s478 + $0x258] sm:$0xff]
        %v4045 = vld [vmem:[%s478 + $0x278] sm:$0xff]
        %v4046 = vld [vmem:[%s478 + $0x298] sm:$0xff]
        %v4047 = vld [vmem:[%s478 + $0x2b8] sm:$0xff]
        %v4048 = vld [vmem:[%s478 + $0x2d8] sm:$0xff]
        %v4049 = vld [vmem:[%s478 + $0x2f8] sm:$0xff]
        %v4050 = vld [vmem:[%s478 + $0x318] sm:$0xff]
        %v4051 = vld [vmem:[%s478 + $0x338] sm:$0xff]
        %v4052 = vld [vmem:[%s478 + $0x358] sm:$0xff]
        %v4053 = vld [vmem:[%s478 + $0x378] sm:$0xff]
        %v4054 = vld [vmem:[%s478 + $0x398] sm:$0xff]
        %v4055 = vld [vmem:[%s478 + $0x3b8] sm:$0xff]
        %v4056 = vld [vmem:[%s478 + $0x3d8] sm:$0xff]
        %v4057 = vld [vmem:[%s478 + $0x3f8] sm:$0xff]
        %v4058 = vld [vmem:[%s478 + $0x418] sm:$0xff]
        %v4059 = vld [vmem:[%s478 + $0x438] sm:$0xff]
        %v4060 = vld [vmem:[%s478 + $0x458] sm:$0xff]
        %v4061 = vld [vmem:[%s478 + $0x478] sm:$0xff]
        %v4062 = vld [vmem:[%s478 + $0x498] sm:$0xff]
        %v4063 = vld [vmem:[%s478 + $0x4b8] sm:$0xff]
        %v4064 = vld [vmem:[%s478 + $0x4d8] sm:$0xff]
        %v4065 = vld [vmem:[%s478 + $0x4f8] sm:$0xff]
        %v4066 = vld [vmem:[%s478 + $0x518] sm:$0xff]
        %v4067 = vld [vmem:[%s478 + $0x538] sm:$0xff]
        %v4068 = vld [vmem:[%s478 + $0x558] sm:$0xff]
        %v4069 = vld [vmem:[%s478 + $0x578] sm:$0xff]
        %v4070 = vld [vmem:[%s478 + $0x598] sm:$0xff]
        %v4071 = vld [vmem:[%s478 + $0x5b8] sm:$0xff]
        %v4072 = vld [vmem:[%s478 + $0x5d8] sm:$0xff]
        %v4073 = vld [vmem:[%s478 + $0x5f8] sm:$0xff]
        %v4074 = vld [vmem:[%s478 + $0x618] sm:$0xff]
        %v4075 = vld [vmem:[%s478 + $0x638] sm:$0xff]
        %v4076 = vld [vmem:[%s478 + $0x658] sm:$0xff]
        %v4077 = vld [vmem:[%s478 + $0x678] sm:$0xff]
        %v4078 = vld [vmem:[%s478 + $0x698] sm:$0xff]
        %v4079 = vld [vmem:[%s478 + $0x6b8] sm:$0xff]
        %v4080 = vld [vmem:[%s478 + $0x6d8] sm:$0xff]
        %v4081 = vld [vmem:[%s478 + $0x6f8] sm:$0xff]
        %v4082 = vld [vmem:[%s478 + $0x718] sm:$0xff]
        %v4083 = vld [vmem:[%s478 + $0x738] sm:$0xff]
        %v4084 = vld [vmem:[%s478 + $0x758] sm:$0xff]
        %v4085 = vld [vmem:[%s478 + $0x778] sm:$0xff]
        %v4086 = vld [vmem:[%s478 + $0x798] sm:$0xff]
        %v4087 = vld [vmem:[%s478 + $0x7b8] sm:$0xff]
        %v4088 = vld [vmem:[%s478 + $0x7d8] sm:$0xff]
        %v4089 = vld [vmem:[%s478 + $0x7f8] sm:$0xff]
        %v4090 = vld [vmem:[%s478 + $0x818] sm:$0xff]
        %v4091 = vld [vmem:[%s478 + $0x838] sm:$0xff]
        %v4092 = vld [vmem:[%s478 + $0x858] sm:$0xff]
        %v4093 = vld [vmem:[%s478 + $0x878] sm:$0xff]
        %v4094 = vld [vmem:[%s478 + $0x898] sm:$0xff]
        %v4095 = vld [vmem:[%s478 + $0x8b8] sm:$0xff]
        %v4096 = vld [vmem:[%s478 + $0x8d8] sm:$0xff]
        %v4097 = vld [vmem:[%s478 + $0x8f8] sm:$0xff]
        %v4098 = vld [vmem:[%s478 + $0x918] sm:$0xff]
        %v4099 = vld [vmem:[%s478 + $0x938] sm:$0xff]
        %v4100 = vld [vmem:[%s478 + $0x958] sm:$0xff]
        %v4101 = vld [vmem:[%s478 + $0x978] sm:$0xff]
        %v4102 = vld [vmem:[%s478 + $0x998] sm:$0xff]
        %v4103 = vld [vmem:[%s478 + $0x9b8] sm:$0xff]
        %v4104 = vld [vmem:[%s478 + $0x9d8] sm:$0xff]
        %v4105 = vld [vmem:[%s478 + $0x9f8] sm:$0xff]
        %v4106 = vld [vmem:[%s478 + $0xa18] sm:$0xff]
        %v4107 = vld [vmem:[%s478 + $0xa38] sm:$0xff]
        %v4108 = vld [vmem:[%s478 + $0xa58] sm:$0xff]
        %v4109 = vld [vmem:[%s478 + $0xa78] sm:$0xff]
        %v4110 = vld [vmem:[%s478 + $0xa98] sm:$0xff]
        %v4111 = vld [vmem:[%s478 + $0xab8] sm:$0xff]
        %v4112 = vld [vmem:[%s478 + $0xad8] sm:$0xff]
        %v4113 = vld [vmem:[%s478 + $0xaf8] sm:$0xff]
        %v4114 = vld [vmem:[%s478 + $0xb18] sm:$0xff]
        %v4115 = vld [vmem:[%s478 + $0xb38] sm:$0xff]
        %v4116 = vld [vmem:[%s478 + $0xb58] sm:$0xff]
        %v4117 = vld [vmem:[%s478 + $0xb78] sm:$0xff]
        %v4118 = vld [vmem:[%s478 + $0xb98] sm:$0xff]
        %v4119 = vld [vmem:[%s478 + $0xbb8] sm:$0xff]
        %v4120 = vld [vmem:[%s478 + $0xbd8] sm:$0xff]
        %v4121 = vld [vmem:[%s478 + $0xbf8] sm:$0xff]
        %v4122 = vld [vmem:[%s478 + $0xc18] sm:$0xff]
        %v4123 = vld [vmem:[%s478 + $0xc38] sm:$0xff]
        %v4124 = vld [vmem:[%s478 + $0xc58] sm:$0xff]
        %v4125 = vld [vmem:[%s478 + $0xc78] sm:$0xff]
        %v4126 = vld [vmem:[%s478 + $0xc98] sm:$0xff]
        %v4127 = vld [vmem:[%s478 + $0xcb8] sm:$0xff]
        %v4128 = vld [vmem:[%s478 + $0xcd8] sm:$0xff]
        %v4129 = vld [vmem:[%s478 + $0xcf8] sm:$0xff]
        %v4130 = vld [vmem:[%s478 + $0xd18] sm:$0xff]
        %v4131 = vld [vmem:[%s478 + $0xd38] sm:$0xff]
        %v4132 = vld [vmem:[%s478 + $0xd58] sm:$0xff]
        %v4133 = vld [vmem:[%s478 + $0xd78] sm:$0xff]
        %v4134 = vld [vmem:[%s478 + $0xd98] sm:$0xff]
        %v4135 = vld [vmem:[%s478 + $0xdb8] sm:$0xff]
        %v4136 = vld [vmem:[%s478 + $0xdd8] sm:$0xff]
        %v4137 = vld [vmem:[%s478 + $0xdf8] sm:$0xff]
        %v4138 = vld [vmem:[%s478 + $0xe18] sm:$0xff]
        %v4139 = vld [vmem:[%s478 + $0xe38] sm:$0xff]
        %v4140 = vld [vmem:[%s478 + $0xe58] sm:$0xff]
        %v4141 = vld [vmem:[%s478 + $0xe78] sm:$0xff]
        %v4142 = vld [vmem:[%s478 + $0xe98] sm:$0xff]
        %v4143 = vld [vmem:[%s478 + $0xeb8] sm:$0xff]
        %v4144 = vld [vmem:[%s478 + $0xed8] sm:$0xff]
        %v4145 = vld [vmem:[%s478 + $0xef8] sm:$0xff]
        %v4146 = vld [vmem:[%s478 + $0xf18] sm:$0xff]
        %v4147 = vld [vmem:[%s478 + $0xf38] sm:$0xff]
        %v4148 = vld [vmem:[%s478 + $0xf58] sm:$0xff]
        %v4149 = vld [vmem:[%s478 + $0xf78] sm:$0xff]
        %v4150 = vld [vmem:[%s478 + $0xf98] sm:$0xff]
        %v4151 = vld [vmem:[%s478 + $0xfb8] sm:$0xff]
        %v4152 = vld [vmem:[%s478 + $0xfd8] sm:$0xff]
        %v4153 = vld [vmem:[%s478 + $0xff8] sm:$0xff]
        %v4154 = vmax.f32 %v3898, %v4026
        %v4155 = vmax.f32 %v3899, %v4027
        %v4156 = vmax.f32 %v3900, %v4028
        %v4157 = vmax.f32 %v3901, %v4029
        %v4158 = vmax.f32 %v3902, %v4030
        %v4159 = vmax.f32 %v3903, %v4031
        %v4160 = vmax.f32 %v3904, %v4032
        %v4161 = vmax.f32 %v3905, %v4033
        %v4162 = vmax.f32 %v3906, %v4034
        %v4163 = vmax.f32 %v3907, %v4035
        %v4164 = vmax.f32 %v3908, %v4036
        %v4165 = vmax.f32 %v3909, %v4037
        %v4166 = vmax.f32 %v3910, %v4038
        %v4167 = vmax.f32 %v3911, %v4039
        %v4168 = vmax.f32 %v3912, %v4040
        %v4169 = vmax.f32 %v3913, %v4041
        %v4170 = vmax.f32 %v3914, %v4042
        %v4171 = vmax.f32 %v3915, %v4043
        %v4172 = vmax.f32 %v3916, %v4044
        %v4173 = vmax.f32 %v3917, %v4045
        %v4174 = vmax.f32 %v3918, %v4046
        %v4175 = vmax.f32 %v3919, %v4047
        %v4176 = vmax.f32 %v3920, %v4048
        %v4177 = vmax.f32 %v3921, %v4049
        %v4178 = vmax.f32 %v3922, %v4050
        %v4179 = vmax.f32 %v3923, %v4051
        %v4180 = vmax.f32 %v3924, %v4052
        %v4181 = vmax.f32 %v3925, %v4053
        %v4182 = vmax.f32 %v3926, %v4054
        %v4183 = vmax.f32 %v3927, %v4055
        %v4184 = vmax.f32 %v3928, %v4056
        %v4185 = vmax.f32 %v3929, %v4057
        %v4186 = vmax.f32 %v3930, %v4058
        %v4187 = vmax.f32 %v3931, %v4059
        %v4188 = vmax.f32 %v3932, %v4060
        %v4189 = vmax.f32 %v3933, %v4061
        %v4190 = vmax.f32 %v3934, %v4062
        %v4191 = vmax.f32 %v3935, %v4063
        %v4192 = vmax.f32 %v3936, %v4064
        %v4193 = vmax.f32 %v3937, %v4065
        %v4194 = vmax.f32 %v3938, %v4066
        %v4195 = vmax.f32 %v3939, %v4067
        %v4196 = vmax.f32 %v3940, %v4068
        %v4197 = vmax.f32 %v3941, %v4069
        %v4198 = vmax.f32 %v3942, %v4070
        %v4199 = vmax.f32 %v3943, %v4071
        %v4200 = vmax.f32 %v3944, %v4072
        %v4201 = vmax.f32 %v3945, %v4073
        %v4202 = vmax.f32 %v3946, %v4074
        %v4203 = vmax.f32 %v3947, %v4075
        %v4204 = vmax.f32 %v3948, %v4076
        %v4205 = vmax.f32 %v3949, %v4077
        %v4206 = vmax.f32 %v3950, %v4078
        %v4207 = vmax.f32 %v3951, %v4079
        %v4208 = vmax.f32 %v3952, %v4080
        %v4209 = vmax.f32 %v3953, %v4081
        %v4210 = vmax.f32 %v3954, %v4082
        %v4211 = vmax.f32 %v3955, %v4083
        %v4212 = vmax.f32 %v3956, %v4084
        %v4213 = vmax.f32 %v3957, %v4085
        %v4214 = vmax.f32 %v3958, %v4086
        %v4215 = vmax.f32 %v3959, %v4087
        %v4216 = vmax.f32 %v3960, %v4088
        %v4217 = vmax.f32 %v3961, %v4089
        %v4218 = vmax.f32 %v3962, %v4090
        %v4219 = vmax.f32 %v3963, %v4091
        %v4220 = vmax.f32 %v3964, %v4092
        %v4221 = vmax.f32 %v3965, %v4093
        %v4222 = vmax.f32 %v3966, %v4094
        %v4223 = vmax.f32 %v3967, %v4095
        %v4224 = vmax.f32 %v3968, %v4096
        %v4225 = vmax.f32 %v3969, %v4097
        %v4226 = vmax.f32 %v3970, %v4098
        %v4227 = vmax.f32 %v3971, %v4099
        %v4228 = vmax.f32 %v3972, %v4100
        %v4229 = vmax.f32 %v3973, %v4101
        %v4230 = vmax.f32 %v3974, %v4102
        %v4231 = vmax.f32 %v3975, %v4103
        %v4232 = vmax.f32 %v3976, %v4104
        %v4233 = vmax.f32 %v3977, %v4105
        %v4234 = vmax.f32 %v3978, %v4106
        %v4235 = vmax.f32 %v3979, %v4107
        %v4236 = vmax.f32 %v3980, %v4108
        %v4237 = vmax.f32 %v3981, %v4109
        %v4238 = vmax.f32 %v3982, %v4110
        %v4239 = vmax.f32 %v3983, %v4111
        %v4240 = vmax.f32 %v3984, %v4112
        %v4241 = vmax.f32 %v3985, %v4113
        %v4242 = vmax.f32 %v3986, %v4114
        %v4243 = vmax.f32 %v3987, %v4115
        %v4244 = vmax.f32 %v3988, %v4116
        %v4245 = vmax.f32 %v3989, %v4117
        %v4246 = vmax.f32 %v3990, %v4118
        %v4247 = vmax.f32 %v3991, %v4119
        %v4248 = vmax.f32 %v3992, %v4120
        %v4249 = vmax.f32 %v3993, %v4121
        %v4250 = vmax.f32 %v3994, %v4122
        %v4251 = vmax.f32 %v3995, %v4123
        %v4252 = vmax.f32 %v3996, %v4124
        %v4253 = vmax.f32 %v3997, %v4125
        %v4254 = vmax.f32 %v3998, %v4126
        %v4255 = vmax.f32 %v3999, %v4127
        %v4256 = vmax.f32 %v4000, %v4128
        %v4257 = vmax.f32 %v4001, %v4129
        %v4258 = vmax.f32 %v4002, %v4130
        %v4259 = vmax.f32 %v4003, %v4131
        %v4260 = vmax.f32 %v4004, %v4132
        %v4261 = vmax.f32 %v4005, %v4133
        %v4262 = vmax.f32 %v4006, %v4134
        %v4263 = vmax.f32 %v4007, %v4135
        %v4264 = vmax.f32 %v4008, %v4136
        %v4265 = vmax.f32 %v4009, %v4137
        %v4266 = vmax.f32 %v4010, %v4138
        %v4267 = vmax.f32 %v4011, %v4139
        %v4268 = vmax.f32 %v4012, %v4140
        %v4269 = vmax.f32 %v4013, %v4141
        %v4270 = vmax.f32 %v4014, %v4142
        %v4271 = vmax.f32 %v4015, %v4143
        %v4272 = vmax.f32 %v4016, %v4144
        %v4273 = vmax.f32 %v4017, %v4145
        %v4274 = vmax.f32 %v4018, %v4146
        %v4275 = vmax.f32 %v4019, %v4147
        %v4276 = vmax.f32 %v4020, %v4148
        %v4277 = vmax.f32 %v4021, %v4149
        %v4278 = vmax.f32 %v4022, %v4150
        %v4279 = vmax.f32 %v4023, %v4151
        %v4280 = vmax.f32 %v4024, %v4152
        %v4281 = vmax.f32 %v4025, %v4153
        %4282 = vst [vmem:[#allocation2] sm:$0xff] %v4154
        %4283 = vst [vmem:[#allocation2 + $0x8] sm:$0xff] %v4155
        %4284 = vst [vmem:[#allocation2 + $0x10] sm:$0xff] %v4156
        %4285 = vst [vmem:[#allocation2 + $0x18] sm:$0xff] %v4157
        %4286 = vst [vmem:[#allocation2 + $0x20] sm:$0xff] %v4158
        %4287 = vst [vmem:[#allocation2 + $0x28] sm:$0xff] %v4159
        %4288 = vst [vmem:[#allocation2 + $0x30] sm:$0xff] %v4160
        %4289 = vst [vmem:[#allocation2 + $0x38] sm:$0xff] %v4161
        %4290 = vst [vmem:[#allocation2 + $0x40] sm:$0xff] %v4162
        %4291 = vst [vmem:[#allocation2 + $0x48] sm:$0xff] %v4163
        %4292 = vst [vmem:[#allocation2 + $0x50] sm:$0xff] %v4164
        %4293 = vst [vmem:[#allocation2 + $0x58] sm:$0xff] %v4165
        %4294 = vst [vmem:[#allocation2 + $0x60] sm:$0xff] %v4166
        %4295 = vst [vmem:[#allocation2 + $0x68] sm:$0xff] %v4167
        %4296 = vst [vmem:[#allocation2 + $0x70] sm:$0xff] %v4168
        %4297 = vst [vmem:[#allocation2 + $0x78] sm:$0xff] %v4169
        %4298 = vst [vmem:[#allocation2 + $0x80] sm:$0xff] %v4170
        %4299 = vst [vmem:[#allocation2 + $0x88] sm:$0xff] %v4171
        %4300 = vst [vmem:[#allocation2 + $0x90] sm:$0xff] %v4172
        %4301 = vst [vmem:[#allocation2 + $0x98] sm:$0xff] %v4173
        %4302 = vst [vmem:[#allocation2 + $0xa0] sm:$0xff] %v4174
        %4303 = vst [vmem:[#allocation2 + $0xa8] sm:$0xff] %v4175
        %4304 = vst [vmem:[#allocation2 + $0xb0] sm:$0xff] %v4176
        %4305 = vst [vmem:[#allocation2 + $0xb8] sm:$0xff] %v4177
        %4306 = vst [vmem:[#allocation2 + $0xc0] sm:$0xff] %v4178
        %4307 = vst [vmem:[#allocation2 + $0xc8] sm:$0xff] %v4179
        %4308 = vst [vmem:[#allocation2 + $0xd0] sm:$0xff] %v4180
        %4309 = vst [vmem:[#allocation2 + $0xd8] sm:$0xff] %v4181
        %4310 = vst [vmem:[#allocation2 + $0xe0] sm:$0xff] %v4182
        %4311 = vst [vmem:[#allocation2 + $0xe8] sm:$0xff] %v4183
        %4312 = vst [vmem:[#allocation2 + $0xf0] sm:$0xff] %v4184
        %4313 = vst [vmem:[#allocation2 + $0xf8] sm:$0xff] %v4185
        %4314 = vst [vmem:[#allocation2 + $0x100] sm:$0xff] %v4186
        %4315 = vst [vmem:[#allocation2 + $0x108] sm:$0xff] %v4187
        %4316 = vst [vmem:[#allocation2 + $0x110] sm:$0xff] %v4188
        %4317 = vst [vmem:[#allocation2 + $0x118] sm:$0xff] %v4189
        %4318 = vst [vmem:[#allocation2 + $0x120] sm:$0xff] %v4190
        %4319 = vst [vmem:[#allocation2 + $0x128] sm:$0xff] %v4191
        %4320 = vst [vmem:[#allocation2 + $0x130] sm:$0xff] %v4192
        %4321 = vst [vmem:[#allocation2 + $0x138] sm:$0xff] %v4193
        %4322 = vst [vmem:[#allocation2 + $0x140] sm:$0xff] %v4194
        %4323 = vst [vmem:[#allocation2 + $0x148] sm:$0xff] %v4195
        %4324 = vst [vmem:[#allocation2 + $0x150] sm:$0xff] %v4196
        %4325 = vst [vmem:[#allocation2 + $0x158] sm:$0xff] %v4197
        %4326 = vst [vmem:[#allocation2 + $0x160] sm:$0xff] %v4198
        %4327 = vst [vmem:[#allocation2 + $0x168] sm:$0xff] %v4199
        %4328 = vst [vmem:[#allocation2 + $0x170] sm:$0xff] %v4200
        %4329 = vst [vmem:[#allocation2 + $0x178] sm:$0xff] %v4201
        %4330 = vst [vmem:[#allocation2 + $0x180] sm:$0xff] %v4202
        %4331 = vst [vmem:[#allocation2 + $0x188] sm:$0xff] %v4203
        %4332 = vst [vmem:[#allocation2 + $0x190] sm:$0xff] %v4204
        %4333 = vst [vmem:[#allocation2 + $0x198] sm:$0xff] %v4205
        %4334 = vst [vmem:[#allocation2 + $0x1a0] sm:$0xff] %v4206
        %4335 = vst [vmem:[#allocation2 + $0x1a8] sm:$0xff] %v4207
        %4336 = vst [vmem:[#allocation2 + $0x1b0] sm:$0xff] %v4208
        %4337 = vst [vmem:[#allocation2 + $0x1b8] sm:$0xff] %v4209
        %4338 = vst [vmem:[#allocation2 + $0x1c0] sm:$0xff] %v4210
        %4339 = vst [vmem:[#allocation2 + $0x1c8] sm:$0xff] %v4211
        %4340 = vst [vmem:[#allocation2 + $0x1d0] sm:$0xff] %v4212
        %4341 = vst [vmem:[#allocation2 + $0x1d8] sm:$0xff] %v4213
        %4342 = vst [vmem:[#allocation2 + $0x1e0] sm:$0xff] %v4214
        %4343 = vst [vmem:[#allocation2 + $0x1e8] sm:$0xff] %v4215
        %4344 = vst [vmem:[#allocation2 + $0x1f0] sm:$0xff] %v4216
        %4345 = vst [vmem:[#allocation2 + $0x1f8] sm:$0xff] %v4217
        %4346 = vst [vmem:[#allocation2 + $0x200] sm:$0xff] %v4218
        %4347 = vst [vmem:[#allocation2 + $0x208] sm:$0xff] %v4219
        %4348 = vst [vmem:[#allocation2 + $0x210] sm:$0xff] %v4220
        %4349 = vst [vmem:[#allocation2 + $0x218] sm:$0xff] %v4221
        %4350 = vst [vmem:[#allocation2 + $0x220] sm:$0xff] %v4222
        %4351 = vst [vmem:[#allocation2 + $0x228] sm:$0xff] %v4223
        %4352 = vst [vmem:[#allocation2 + $0x230] sm:$0xff] %v4224
        %4353 = vst [vmem:[#allocation2 + $0x238] sm:$0xff] %v4225
        %4354 = vst [vmem:[#allocation2 + $0x240] sm:$0xff] %v4226
        %4355 = vst [vmem:[#allocation2 + $0x248] sm:$0xff] %v4227
        %4356 = vst [vmem:[#allocation2 + $0x250] sm:$0xff] %v4228
        %4357 = vst [vmem:[#allocation2 + $0x258] sm:$0xff] %v4229
        %4358 = vst [vmem:[#allocation2 + $0x260] sm:$0xff] %v4230
        %4359 = vst [vmem:[#allocation2 + $0x268] sm:$0xff] %v4231
        %4360 = vst [vmem:[#allocation2 + $0x270] sm:$0xff] %v4232
        %4361 = vst [vmem:[#allocation2 + $0x278] sm:$0xff] %v4233
        %4362 = vst [vmem:[#allocation2 + $0x280] sm:$0xff] %v4234
        %4363 = vst [vmem:[#allocation2 + $0x288] sm:$0xff] %v4235
        %4364 = vst [vmem:[#allocation2 + $0x290] sm:$0xff] %v4236
        %4365 = vst [vmem:[#allocation2 + $0x298] sm:$0xff] %v4237
        %4366 = vst [vmem:[#allocation2 + $0x2a0] sm:$0xff] %v4238
        %4367 = vst [vmem:[#allocation2 + $0x2a8] sm:$0xff] %v4239
        %4368 = vst [vmem:[#allocation2 + $0x2b0] sm:$0xff] %v4240
        %4369 = vst [vmem:[#allocation2 + $0x2b8] sm:$0xff] %v4241
        %4370 = vst [vmem:[#allocation2 + $0x2c0] sm:$0xff] %v4242
        %4371 = vst [vmem:[#allocation2 + $0x2c8] sm:$0xff] %v4243
        %4372 = vst [vmem:[#allocation2 + $0x2d0] sm:$0xff] %v4244
        %4373 = vst [vmem:[#allocation2 + $0x2d8] sm:$0xff] %v4245
        %4374 = vst [vmem:[#allocation2 + $0x2e0] sm:$0xff] %v4246
        %4375 = vst [vmem:[#allocation2 + $0x2e8] sm:$0xff] %v4247
        %4376 = vst [vmem:[#allocation2 + $0x2f0] sm:$0xff] %v4248
        %4377 = vst [vmem:[#allocation2 + $0x2f8] sm:$0xff] %v4249
        %4378 = vst [vmem:[#allocation2 + $0x300] sm:$0xff] %v4250
        %4379 = vst [vmem:[#allocation2 + $0x308] sm:$0xff] %v4251
        %4380 = vst [vmem:[#allocation2 + $0x310] sm:$0xff] %v4252
        %4381 = vst [vmem:[#allocation2 + $0x318] sm:$0xff] %v4253
        %4382 = vst [vmem:[#allocation2 + $0x320] sm:$0xff] %v4254
        %4383 = vst [vmem:[#allocation2 + $0x328] sm:$0xff] %v4255
        %4384 = vst [vmem:[#allocation2 + $0x330] sm:$0xff] %v4256
        %4385 = vst [vmem:[#allocation2 + $0x338] sm:$0xff] %v4257
        %4386 = vst [vmem:[#allocation2 + $0x340] sm:$0xff] %v4258
        %4387 = vst [vmem:[#allocation2 + $0x348] sm:$0xff] %v4259
        %4388 = vst [vmem:[#allocation2 + $0x350] sm:$0xff] %v4260
        %4389 = vst [vmem:[#allocation2 + $0x358] sm:$0xff] %v4261
        %4390 = vst [vmem:[#allocation2 + $0x360] sm:$0xff] %v4262
        %4391 = vst [vmem:[#allocation2 + $0x368] sm:$0xff] %v4263
        %4392 = vst [vmem:[#allocation2 + $0x370] sm:$0xff] %v4264
        %4393 = vst [vmem:[#allocation2 + $0x378] sm:$0xff] %v4265
        %4394 = vst [vmem:[#allocation2 + $0x380] sm:$0xff] %v4266
        %4395 = vst [vmem:[#allocation2 + $0x388] sm:$0xff] %v4267
        %4396 = vst [vmem:[#allocation2 + $0x390] sm:$0xff] %v4268
        %4397 = vst [vmem:[#allocation2 + $0x398] sm:$0xff] %v4269
        %4398 = vst [vmem:[#allocation2 + $0x3a0] sm:$0xff] %v4270
        %4399 = vst [vmem:[#allocation2 + $0x3a8] sm:$0xff] %v4271
        %4400 = vst [vmem:[#allocation2 + $0x3b0] sm:$0xff] %v4272
        %4401 = vst [vmem:[#allocation2 + $0x3b8] sm:$0xff] %v4273
        %4402 = vst [vmem:[#allocation2 + $0x3c0] sm:$0xff] %v4274
        %4403 = vst [vmem:[#allocation2 + $0x3c8] sm:$0xff] %v4275
        %4404 = vst [vmem:[#allocation2 + $0x3d0] sm:$0xff] %v4276
        %4405 = vst [vmem:[#allocation2 + $0x3d8] sm:$0xff] %v4277
        %4406 = vst [vmem:[#allocation2 + $0x3e0] sm:$0xff] %v4278
        %4407 = vst [vmem:[#allocation2 + $0x3e8] sm:$0xff] %v4279
        %4408 = vst [vmem:[#allocation2 + $0x3f0] sm:$0xff] %v4280
        %4409 = vst [vmem:[#allocation2 + $0x3f8] sm:$0xff] %v4281
        %v4410 = vld [vmem:[#allocation3] sm:$0xff]
        %v4411 = vld [vmem:[#allocation3 + $0x8] sm:$0xff]
        %v4412 = vld [vmem:[#allocation3 + $0x10] sm:$0xff]
        %v4413 = vld [vmem:[#allocation3 + $0x18] sm:$0xff]
        %v4414 = vld [vmem:[#allocation3 + $0x20] sm:$0xff]
        %v4415 = vld [vmem:[#allocation3 + $0x28] sm:$0xff]
        %v4416 = vld [vmem:[#allocation3 + $0x30] sm:$0xff]
        %v4417 = vld [vmem:[#allocation3 + $0x38] sm:$0xff]
        %v4418 = vld [vmem:[#allocation3 + $0x40] sm:$0xff]
        %v4419 = vld [vmem:[#allocation3 + $0x48] sm:$0xff]
        %v4420 = vld [vmem:[#allocation3 + $0x50] sm:$0xff]
        %v4421 = vld [vmem:[#allocation3 + $0x58] sm:$0xff]
        %v4422 = vld [vmem:[#allocation3 + $0x60] sm:$0xff]
        %v4423 = vld [vmem:[#allocation3 + $0x68] sm:$0xff]
        %v4424 = vld [vmem:[#allocation3 + $0x70] sm:$0xff]
        %v4425 = vld [vmem:[#allocation3 + $0x78] sm:$0xff]
        %v4426 = vld [vmem:[#allocation3 + $0x80] sm:$0xff]
        %v4427 = vld [vmem:[#allocation3 + $0x88] sm:$0xff]
        %v4428 = vld [vmem:[#allocation3 + $0x90] sm:$0xff]
        %v4429 = vld [vmem:[#allocation3 + $0x98] sm:$0xff]
        %v4430 = vld [vmem:[#allocation3 + $0xa0] sm:$0xff]
        %v4431 = vld [vmem:[#allocation3 + $0xa8] sm:$0xff]
        %v4432 = vld [vmem:[#allocation3 + $0xb0] sm:$0xff]
        %v4433 = vld [vmem:[#allocation3 + $0xb8] sm:$0xff]
        %v4434 = vld [vmem:[#allocation3 + $0xc0] sm:$0xff]
        %v4435 = vld [vmem:[#allocation3 + $0xc8] sm:$0xff]
        %v4436 = vld [vmem:[#allocation3 + $0xd0] sm:$0xff]
        %v4437 = vld [vmem:[#allocation3 + $0xd8] sm:$0xff]
        %v4438 = vld [vmem:[#allocation3 + $0xe0] sm:$0xff]
        %v4439 = vld [vmem:[#allocation3 + $0xe8] sm:$0xff]
        %v4440 = vld [vmem:[#allocation3 + $0xf0] sm:$0xff]
        %v4441 = vld [vmem:[#allocation3 + $0xf8] sm:$0xff]
        %v4442 = vld [vmem:[#allocation3 + $0x100] sm:$0xff]
        %v4443 = vld [vmem:[#allocation3 + $0x108] sm:$0xff]
        %v4444 = vld [vmem:[#allocation3 + $0x110] sm:$0xff]
        %v4445 = vld [vmem:[#allocation3 + $0x118] sm:$0xff]
        %v4446 = vld [vmem:[#allocation3 + $0x120] sm:$0xff]
        %v4447 = vld [vmem:[#allocation3 + $0x128] sm:$0xff]
        %v4448 = vld [vmem:[#allocation3 + $0x130] sm:$0xff]
        %v4449 = vld [vmem:[#allocation3 + $0x138] sm:$0xff]
        %v4450 = vld [vmem:[#allocation3 + $0x140] sm:$0xff]
        %v4451 = vld [vmem:[#allocation3 + $0x148] sm:$0xff]
        %v4452 = vld [vmem:[#allocation3 + $0x150] sm:$0xff]
        %v4453 = vld [vmem:[#allocation3 + $0x158] sm:$0xff]
        %v4454 = vld [vmem:[#allocation3 + $0x160] sm:$0xff]
        %v4455 = vld [vmem:[#allocation3 + $0x168] sm:$0xff]
        %v4456 = vld [vmem:[#allocation3 + $0x170] sm:$0xff]
        %v4457 = vld [vmem:[#allocation3 + $0x178] sm:$0xff]
        %v4458 = vld [vmem:[#allocation3 + $0x180] sm:$0xff]
        %v4459 = vld [vmem:[#allocation3 + $0x188] sm:$0xff]
        %v4460 = vld [vmem:[#allocation3 + $0x190] sm:$0xff]
        %v4461 = vld [vmem:[#allocation3 + $0x198] sm:$0xff]
        %v4462 = vld [vmem:[#allocation3 + $0x1a0] sm:$0xff]
        %v4463 = vld [vmem:[#allocation3 + $0x1a8] sm:$0xff]
        %v4464 = vld [vmem:[#allocation3 + $0x1b0] sm:$0xff]
        %v4465 = vld [vmem:[#allocation3 + $0x1b8] sm:$0xff]
        %v4466 = vld [vmem:[#allocation3 + $0x1c0] sm:$0xff]
        %v4467 = vld [vmem:[#allocation3 + $0x1c8] sm:$0xff]
        %v4468 = vld [vmem:[#allocation3 + $0x1d0] sm:$0xff]
        %v4469 = vld [vmem:[#allocation3 + $0x1d8] sm:$0xff]
        %v4470 = vld [vmem:[#allocation3 + $0x1e0] sm:$0xff]
        %v4471 = vld [vmem:[#allocation3 + $0x1e8] sm:$0xff]
        %v4472 = vld [vmem:[#allocation3 + $0x1f0] sm:$0xff]
        %v4473 = vld [vmem:[#allocation3 + $0x1f8] sm:$0xff]
        %v4474 = vld [vmem:[#allocation3 + $0x200] sm:$0xff]
        %v4475 = vld [vmem:[#allocation3 + $0x208] sm:$0xff]
        %v4476 = vld [vmem:[#allocation3 + $0x210] sm:$0xff]
        %v4477 = vld [vmem:[#allocation3 + $0x218] sm:$0xff]
        %v4478 = vld [vmem:[#allocation3 + $0x220] sm:$0xff]
        %v4479 = vld [vmem:[#allocation3 + $0x228] sm:$0xff]
        %v4480 = vld [vmem:[#allocation3 + $0x230] sm:$0xff]
        %v4481 = vld [vmem:[#allocation3 + $0x238] sm:$0xff]
        %v4482 = vld [vmem:[#allocation3 + $0x240] sm:$0xff]
        %v4483 = vld [vmem:[#allocation3 + $0x248] sm:$0xff]
        %v4484 = vld [vmem:[#allocation3 + $0x250] sm:$0xff]
        %v4485 = vld [vmem:[#allocation3 + $0x258] sm:$0xff]
        %v4486 = vld [vmem:[#allocation3 + $0x260] sm:$0xff]
        %v4487 = vld [vmem:[#allocation3 + $0x268] sm:$0xff]
        %v4488 = vld [vmem:[#allocation3 + $0x270] sm:$0xff]
        %v4489 = vld [vmem:[#allocation3 + $0x278] sm:$0xff]
        %v4490 = vld [vmem:[#allocation3 + $0x280] sm:$0xff]
        %v4491 = vld [vmem:[#allocation3 + $0x288] sm:$0xff]
        %v4492 = vld [vmem:[#allocation3 + $0x290] sm:$0xff]
        %v4493 = vld [vmem:[#allocation3 + $0x298] sm:$0xff]
        %v4494 = vld [vmem:[#allocation3 + $0x2a0] sm:$0xff]
        %v4495 = vld [vmem:[#allocation3 + $0x2a8] sm:$0xff]
        %v4496 = vld [vmem:[#allocation3 + $0x2b0] sm:$0xff]
        %v4497 = vld [vmem:[#allocation3 + $0x2b8] sm:$0xff]
        %v4498 = vld [vmem:[#allocation3 + $0x2c0] sm:$0xff]
        %v4499 = vld [vmem:[#allocation3 + $0x2c8] sm:$0xff]
        %v4500 = vld [vmem:[#allocation3 + $0x2d0] sm:$0xff]
        %v4501 = vld [vmem:[#allocation3 + $0x2d8] sm:$0xff]
        %v4502 = vld [vmem:[#allocation3 + $0x2e0] sm:$0xff]
        %v4503 = vld [vmem:[#allocation3 + $0x2e8] sm:$0xff]
        %v4504 = vld [vmem:[#allocation3 + $0x2f0] sm:$0xff]
        %v4505 = vld [vmem:[#allocation3 + $0x2f8] sm:$0xff]
        %v4506 = vld [vmem:[#allocation3 + $0x300] sm:$0xff]
        %v4507 = vld [vmem:[#allocation3 + $0x308] sm:$0xff]
        %v4508 = vld [vmem:[#allocation3 + $0x310] sm:$0xff]
        %v4509 = vld [vmem:[#allocation3 + $0x318] sm:$0xff]
        %v4510 = vld [vmem:[#allocation3 + $0x320] sm:$0xff]
        %v4511 = vld [vmem:[#allocation3 + $0x328] sm:$0xff]
        %v4512 = vld [vmem:[#allocation3 + $0x330] sm:$0xff]
        %v4513 = vld [vmem:[#allocation3 + $0x338] sm:$0xff]
        %v4514 = vld [vmem:[#allocation3 + $0x340] sm:$0xff]
        %v4515 = vld [vmem:[#allocation3 + $0x348] sm:$0xff]
        %v4516 = vld [vmem:[#allocation3 + $0x350] sm:$0xff]
        %v4517 = vld [vmem:[#allocation3 + $0x358] sm:$0xff]
        %v4518 = vld [vmem:[#allocation3 + $0x360] sm:$0xff]
        %v4519 = vld [vmem:[#allocation3 + $0x368] sm:$0xff]
        %v4520 = vld [vmem:[#allocation3 + $0x370] sm:$0xff]
        %v4521 = vld [vmem:[#allocation3 + $0x378] sm:$0xff]
        %v4522 = vld [vmem:[#allocation3 + $0x380] sm:$0xff]
        %v4523 = vld [vmem:[#allocation3 + $0x388] sm:$0xff]
        %v4524 = vld [vmem:[#allocation3 + $0x390] sm:$0xff]
        %v4525 = vld [vmem:[#allocation3 + $0x398] sm:$0xff]
        %v4526 = vld [vmem:[#allocation3 + $0x3a0] sm:$0xff]
        %v4527 = vld [vmem:[#allocation3 + $0x3a8] sm:$0xff]
        %v4528 = vld [vmem:[#allocation3 + $0x3b0] sm:$0xff]
        %v4529 = vld [vmem:[#allocation3 + $0x3b8] sm:$0xff]
        %v4530 = vld [vmem:[#allocation3 + $0x3c0] sm:$0xff]
        %v4531 = vld [vmem:[#allocation3 + $0x3c8] sm:$0xff]
        %v4532 = vld [vmem:[#allocation3 + $0x3d0] sm:$0xff]
        %v4533 = vld [vmem:[#allocation3 + $0x3d8] sm:$0xff]
        %v4534 = vld [vmem:[#allocation3 + $0x3e0] sm:$0xff]
        %v4535 = vld [vmem:[#allocation3 + $0x3e8] sm:$0xff]
        %v4536 = vld [vmem:[#allocation3 + $0x3f0] sm:$0xff]
        %v4537 = vld [vmem:[#allocation3 + $0x3f8] sm:$0xff]
        %v4538 = vld [vmem:[%s487 + $0x18] sm:$0xff]
        %v4539 = vld [vmem:[%s487 + $0x38] sm:$0xff]
        %v4540 = vld [vmem:[%s487 + $0x58] sm:$0xff]
        %v4541 = vld [vmem:[%s487 + $0x78] sm:$0xff]
        %v4542 = vld [vmem:[%s487 + $0x98] sm:$0xff]
        %v4543 = vld [vmem:[%s487 + $0xb8] sm:$0xff]
        %v4544 = vld [vmem:[%s487 + $0xd8] sm:$0xff]
        %v4545 = vld [vmem:[%s487 + $0xf8] sm:$0xff]
        %v4546 = vld [vmem:[%s487 + $0x118] sm:$0xff]
        %v4547 = vld [vmem:[%s487 + $0x138] sm:$0xff]
        %v4548 = vld [vmem:[%s487 + $0x158] sm:$0xff]
        %v4549 = vld [vmem:[%s487 + $0x178] sm:$0xff]
        %v4550 = vld [vmem:[%s487 + $0x198] sm:$0xff]
        %v4551 = vld [vmem:[%s487 + $0x1b8] sm:$0xff]
        %v4552 = vld [vmem:[%s487 + $0x1d8] sm:$0xff]
        %v4553 = vld [vmem:[%s487 + $0x1f8] sm:$0xff]
        %v4554 = vld [vmem:[%s487 + $0x218] sm:$0xff]
        %v4555 = vld [vmem:[%s487 + $0x238] sm:$0xff]
        %v4556 = vld [vmem:[%s487 + $0x258] sm:$0xff]
        %v4557 = vld [vmem:[%s487 + $0x278] sm:$0xff]
        %v4558 = vld [vmem:[%s487 + $0x298] sm:$0xff]
        %v4559 = vld [vmem:[%s487 + $0x2b8] sm:$0xff]
        %v4560 = vld [vmem:[%s487 + $0x2d8] sm:$0xff]
        %v4561 = vld [vmem:[%s487 + $0x2f8] sm:$0xff]
        %v4562 = vld [vmem:[%s487 + $0x318] sm:$0xff]
        %v4563 = vld [vmem:[%s487 + $0x338] sm:$0xff]
        %v4564 = vld [vmem:[%s487 + $0x358] sm:$0xff]
        %v4565 = vld [vmem:[%s487 + $0x378] sm:$0xff]
        %v4566 = vld [vmem:[%s487 + $0x398] sm:$0xff]
        %v4567 = vld [vmem:[%s487 + $0x3b8] sm:$0xff]
        %v4568 = vld [vmem:[%s487 + $0x3d8] sm:$0xff]
        %v4569 = vld [vmem:[%s487 + $0x3f8] sm:$0xff]
        %v4570 = vld [vmem:[%s487 + $0x418] sm:$0xff]
        %v4571 = vld [vmem:[%s487 + $0x438] sm:$0xff]
        %v4572 = vld [vmem:[%s487 + $0x458] sm:$0xff]
        %v4573 = vld [vmem:[%s487 + $0x478] sm:$0xff]
        %v4574 = vld [vmem:[%s487 + $0x498] sm:$0xff]
        %v4575 = vld [vmem:[%s487 + $0x4b8] sm:$0xff]
        %v4576 = vld [vmem:[%s487 + $0x4d8] sm:$0xff]
        %v4577 = vld [vmem:[%s487 + $0x4f8] sm:$0xff]
        %v4578 = vld [vmem:[%s487 + $0x518] sm:$0xff]
        %v4579 = vld [vmem:[%s487 + $0x538] sm:$0xff]
        %v4580 = vld [vmem:[%s487 + $0x558] sm:$0xff]
        %v4581 = vld [vmem:[%s487 + $0x578] sm:$0xff]
        %v4582 = vld [vmem:[%s487 + $0x598] sm:$0xff]
        %v4583 = vld [vmem:[%s487 + $0x5b8] sm:$0xff]
        %v4584 = vld [vmem:[%s487 + $0x5d8] sm:$0xff]
        %v4585 = vld [vmem:[%s487 + $0x5f8] sm:$0xff]
        %v4586 = vld [vmem:[%s487 + $0x618] sm:$0xff]
        %v4587 = vld [vmem:[%s487 + $0x638] sm:$0xff]
        %v4588 = vld [vmem:[%s487 + $0x658] sm:$0xff]
        %v4589 = vld [vmem:[%s487 + $0x678] sm:$0xff]
        %v4590 = vld [vmem:[%s487 + $0x698] sm:$0xff]
        %v4591 = vld [vmem:[%s487 + $0x6b8] sm:$0xff]
        %v4592 = vld [vmem:[%s487 + $0x6d8] sm:$0xff]
        %v4593 = vld [vmem:[%s487 + $0x6f8] sm:$0xff]
        %v4594 = vld [vmem:[%s487 + $0x718] sm:$0xff]
        %v4595 = vld [vmem:[%s487 + $0x738] sm:$0xff]
        %v4596 = vld [vmem:[%s487 + $0x758] sm:$0xff]
        %v4597 = vld [vmem:[%s487 + $0x778] sm:$0xff]
        %v4598 = vld [vmem:[%s487 + $0x798] sm:$0xff]
        %v4599 = vld [vmem:[%s487 + $0x7b8] sm:$0xff]
        %v4600 = vld [vmem:[%s487 + $0x7d8] sm:$0xff]
        %v4601 = vld [vmem:[%s487 + $0x7f8] sm:$0xff]
        %v4602 = vld [vmem:[%s487 + $0x818] sm:$0xff]
        %v4603 = vld [vmem:[%s487 + $0x838] sm:$0xff]
        %v4604 = vld [vmem:[%s487 + $0x858] sm:$0xff]
        %v4605 = vld [vmem:[%s487 + $0x878] sm:$0xff]
        %v4606 = vld [vmem:[%s487 + $0x898] sm:$0xff]
        %v4607 = vld [vmem:[%s487 + $0x8b8] sm:$0xff]
        %v4608 = vld [vmem:[%s487 + $0x8d8] sm:$0xff]
        %v4609 = vld [vmem:[%s487 + $0x8f8] sm:$0xff]
        %v4610 = vld [vmem:[%s487 + $0x918] sm:$0xff]
        %v4611 = vld [vmem:[%s487 + $0x938] sm:$0xff]
        %v4612 = vld [vmem:[%s487 + $0x958] sm:$0xff]
        %v4613 = vld [vmem:[%s487 + $0x978] sm:$0xff]
        %v4614 = vld [vmem:[%s487 + $0x998] sm:$0xff]
        %v4615 = vld [vmem:[%s487 + $0x9b8] sm:$0xff]
        %v4616 = vld [vmem:[%s487 + $0x9d8] sm:$0xff]
        %v4617 = vld [vmem:[%s487 + $0x9f8] sm:$0xff]
        %v4618 = vld [vmem:[%s487 + $0xa18] sm:$0xff]
        %v4619 = vld [vmem:[%s487 + $0xa38] sm:$0xff]
        %v4620 = vld [vmem:[%s487 + $0xa58] sm:$0xff]
        %v4621 = vld [vmem:[%s487 + $0xa78] sm:$0xff]
        %v4622 = vld [vmem:[%s487 + $0xa98] sm:$0xff]
        %v4623 = vld [vmem:[%s487 + $0xab8] sm:$0xff]
        %v4624 = vld [vmem:[%s487 + $0xad8] sm:$0xff]
        %v4625 = vld [vmem:[%s487 + $0xaf8] sm:$0xff]
        %v4626 = vld [vmem:[%s487 + $0xb18] sm:$0xff]
        %v4627 = vld [vmem:[%s487 + $0xb38] sm:$0xff]
        %v4628 = vld [vmem:[%s487 + $0xb58] sm:$0xff]
        %v4629 = vld [vmem:[%s487 + $0xb78] sm:$0xff]
        %v4630 = vld [vmem:[%s487 + $0xb98] sm:$0xff]
        %v4631 = vld [vmem:[%s487 + $0xbb8] sm:$0xff]
        %v4632 = vld [vmem:[%s487 + $0xbd8] sm:$0xff]
        %v4633 = vld [vmem:[%s487 + $0xbf8] sm:$0xff]
        %v4634 = vld [vmem:[%s487 + $0xc18] sm:$0xff]
        %v4635 = vld [vmem:[%s487 + $0xc38] sm:$0xff]
        %v4636 = vld [vmem:[%s487 + $0xc58] sm:$0xff]
        %v4637 = vld [vmem:[%s487 + $0xc78] sm:$0xff]
        %v4638 = vld [vmem:[%s487 + $0xc98] sm:$0xff]
        %v4639 = vld [vmem:[%s487 + $0xcb8] sm:$0xff]
        %v4640 = vld [vmem:[%s487 + $0xcd8] sm:$0xff]
        %v4641 = vld [vmem:[%s487 + $0xcf8] sm:$0xff]
        %v4642 = vld [vmem:[%s487 + $0xd18] sm:$0xff]
        %v4643 = vld [vmem:[%s487 + $0xd38] sm:$0xff]
        %v4644 = vld [vmem:[%s487 + $0xd58] sm:$0xff]
        %v4645 = vld [vmem:[%s487 + $0xd78] sm:$0xff]
        %v4646 = vld [vmem:[%s487 + $0xd98] sm:$0xff]
        %v4647 = vld [vmem:[%s487 + $0xdb8] sm:$0xff]
        %v4648 = vld [vmem:[%s487 + $0xdd8] sm:$0xff]
        %v4649 = vld [vmem:[%s487 + $0xdf8] sm:$0xff]
        %v4650 = vld [vmem:[%s487 + $0xe18] sm:$0xff]
        %v4651 = vld [vmem:[%s487 + $0xe38] sm:$0xff]
        %v4652 = vld [vmem:[%s487 + $0xe58] sm:$0xff]
        %v4653 = vld [vmem:[%s487 + $0xe78] sm:$0xff]
        %v4654 = vld [vmem:[%s487 + $0xe98] sm:$0xff]
        %v4655 = vld [vmem:[%s487 + $0xeb8] sm:$0xff]
        %v4656 = vld [vmem:[%s487 + $0xed8] sm:$0xff]
        %v4657 = vld [vmem:[%s487 + $0xef8] sm:$0xff]
        %v4658 = vld [vmem:[%s487 + $0xf18] sm:$0xff]
        %v4659 = vld [vmem:[%s487 + $0xf38] sm:$0xff]
        %v4660 = vld [vmem:[%s487 + $0xf58] sm:$0xff]
        %v4661 = vld [vmem:[%s487 + $0xf78] sm:$0xff]
        %v4662 = vld [vmem:[%s487 + $0xf98] sm:$0xff]
        %v4663 = vld [vmem:[%s487 + $0xfb8] sm:$0xff]
        %v4664 = vld [vmem:[%s487 + $0xfd8] sm:$0xff]
        %v4665 = vld [vmem:[%s487 + $0xff8] sm:$0xff]
        %v4666 = vmax.f32 %v4410, %v4538
        %v4667 = vmax.f32 %v4411, %v4539
        %v4668 = vmax.f32 %v4412, %v4540
        %v4669 = vmax.f32 %v4413, %v4541
        %v4670 = vmax.f32 %v4414, %v4542
        %v4671 = vmax.f32 %v4415, %v4543
        %v4672 = vmax.f32 %v4416, %v4544
        %v4673 = vmax.f32 %v4417, %v4545
        %v4674 = vmax.f32 %v4418, %v4546
        %v4675 = vmax.f32 %v4419, %v4547
        %v4676 = vmax.f32 %v4420, %v4548
        %v4677 = vmax.f32 %v4421, %v4549
        %v4678 = vmax.f32 %v4422, %v4550
        %v4679 = vmax.f32 %v4423, %v4551
        %v4680 = vmax.f32 %v4424, %v4552
        %v4681 = vmax.f32 %v4425, %v4553
        %v4682 = vmax.f32 %v4426, %v4554
        %v4683 = vmax.f32 %v4427, %v4555
        %v4684 = vmax.f32 %v4428, %v4556
        %v4685 = vmax.f32 %v4429, %v4557
        %v4686 = vmax.f32 %v4430, %v4558
        %v4687 = vmax.f32 %v4431, %v4559
        %v4688 = vmax.f32 %v4432, %v4560
        %v4689 = vmax.f32 %v4433, %v4561
        %v4690 = vmax.f32 %v4434, %v4562
        %v4691 = vmax.f32 %v4435, %v4563
        %v4692 = vmax.f32 %v4436, %v4564
        %v4693 = vmax.f32 %v4437, %v4565
        %v4694 = vmax.f32 %v4438, %v4566
        %v4695 = vmax.f32 %v4439, %v4567
        %v4696 = vmax.f32 %v4440, %v4568
        %v4697 = vmax.f32 %v4441, %v4569
        %v4698 = vmax.f32 %v4442, %v4570
        %v4699 = vmax.f32 %v4443, %v4571
        %v4700 = vmax.f32 %v4444, %v4572
        %v4701 = vmax.f32 %v4445, %v4573
        %v4702 = vmax.f32 %v4446, %v4574
        %v4703 = vmax.f32 %v4447, %v4575
        %v4704 = vmax.f32 %v4448, %v4576
        %v4705 = vmax.f32 %v4449, %v4577
        %v4706 = vmax.f32 %v4450, %v4578
        %v4707 = vmax.f32 %v4451, %v4579
        %v4708 = vmax.f32 %v4452, %v4580
        %v4709 = vmax.f32 %v4453, %v4581
        %v4710 = vmax.f32 %v4454, %v4582
        %v4711 = vmax.f32 %v4455, %v4583
        %v4712 = vmax.f32 %v4456, %v4584
        %v4713 = vmax.f32 %v4457, %v4585
        %v4714 = vmax.f32 %v4458, %v4586
        %v4715 = vmax.f32 %v4459, %v4587
        %v4716 = vmax.f32 %v4460, %v4588
        %v4717 = vmax.f32 %v4461, %v4589
        %v4718 = vmax.f32 %v4462, %v4590
        %v4719 = vmax.f32 %v4463, %v4591
        %v4720 = vmax.f32 %v4464, %v4592
        %v4721 = vmax.f32 %v4465, %v4593
        %v4722 = vmax.f32 %v4466, %v4594
        %v4723 = vmax.f32 %v4467, %v4595
        %v4724 = vmax.f32 %v4468, %v4596
        %v4725 = vmax.f32 %v4469, %v4597
        %v4726 = vmax.f32 %v4470, %v4598
        %v4727 = vmax.f32 %v4471, %v4599
        %v4728 = vmax.f32 %v4472, %v4600
        %v4729 = vmax.f32 %v4473, %v4601
        %v4730 = vmax.f32 %v4474, %v4602
        %v4731 = vmax.f32 %v4475, %v4603
        %v4732 = vmax.f32 %v4476, %v4604
        %v4733 = vmax.f32 %v4477, %v4605
        %v4734 = vmax.f32 %v4478, %v4606
        %v4735 = vmax.f32 %v4479, %v4607
        %v4736 = vmax.f32 %v4480, %v4608
        %v4737 = vmax.f32 %v4481, %v4609
        %v4738 = vmax.f32 %v4482, %v4610
        %v4739 = vmax.f32 %v4483, %v4611
        %v4740 = vmax.f32 %v4484, %v4612
        %v4741 = vmax.f32 %v4485, %v4613
        %v4742 = vmax.f32 %v4486, %v4614
        %v4743 = vmax.f32 %v4487, %v4615
        %v4744 = vmax.f32 %v4488, %v4616
        %v4745 = vmax.f32 %v4489, %v4617
        %v4746 = vmax.f32 %v4490, %v4618
        %v4747 = vmax.f32 %v4491, %v4619
        %v4748 = vmax.f32 %v4492, %v4620
        %v4749 = vmax.f32 %v4493, %v4621
        %v4750 = vmax.f32 %v4494, %v4622
        %v4751 = vmax.f32 %v4495, %v4623
        %v4752 = vmax.f32 %v4496, %v4624
        %v4753 = vmax.f32 %v4497, %v4625
        %v4754 = vmax.f32 %v4498, %v4626
        %v4755 = vmax.f32 %v4499, %v4627
        %v4756 = vmax.f32 %v4500, %v4628
        %v4757 = vmax.f32 %v4501, %v4629
        %v4758 = vmax.f32 %v4502, %v4630
        %v4759 = vmax.f32 %v4503, %v4631
        %v4760 = vmax.f32 %v4504, %v4632
        %v4761 = vmax.f32 %v4505, %v4633
        %v4762 = vmax.f32 %v4506, %v4634
        %v4763 = vmax.f32 %v4507, %v4635
        %v4764 = vmax.f32 %v4508, %v4636
        %v4765 = vmax.f32 %v4509, %v4637
        %v4766 = vmax.f32 %v4510, %v4638
        %v4767 = vmax.f32 %v4511, %v4639
        %v4768 = vmax.f32 %v4512, %v4640
        %v4769 = vmax.f32 %v4513, %v4641
        %v4770 = vmax.f32 %v4514, %v4642
        %v4771 = vmax.f32 %v4515, %v4643
        %v4772 = vmax.f32 %v4516, %v4644
        %v4773 = vmax.f32 %v4517, %v4645
        %v4774 = vmax.f32 %v4518, %v4646
        %v4775 = vmax.f32 %v4519, %v4647
        %v4776 = vmax.f32 %v4520, %v4648
        %v4777 = vmax.f32 %v4521, %v4649
        %v4778 = vmax.f32 %v4522, %v4650
        %v4779 = vmax.f32 %v4523, %v4651
        %v4780 = vmax.f32 %v4524, %v4652
        %v4781 = vmax.f32 %v4525, %v4653
        %v4782 = vmax.f32 %v4526, %v4654
        %v4783 = vmax.f32 %v4527, %v4655
        %v4784 = vmax.f32 %v4528, %v4656
        %v4785 = vmax.f32 %v4529, %v4657
        %v4786 = vmax.f32 %v4530, %v4658
        %v4787 = vmax.f32 %v4531, %v4659
        %v4788 = vmax.f32 %v4532, %v4660
        %v4789 = vmax.f32 %v4533, %v4661
        %v4790 = vmax.f32 %v4534, %v4662
        %v4791 = vmax.f32 %v4535, %v4663
        %v4792 = vmax.f32 %v4536, %v4664
        %v4793 = vmax.f32 %v4537, %v4665
        %4794 = vst [vmem:[#allocation3] sm:$0xff] %v4666
        %4795 = vst [vmem:[#allocation3 + $0x8] sm:$0xff] %v4667
        %4796 = vst [vmem:[#allocation3 + $0x10] sm:$0xff] %v4668
        %4797 = vst [vmem:[#allocation3 + $0x18] sm:$0xff] %v4669
        %4798 = vst [vmem:[#allocation3 + $0x20] sm:$0xff] %v4670
        %4799 = vst [vmem:[#allocation3 + $0x28] sm:$0xff] %v4671
        %4800 = vst [vmem:[#allocation3 + $0x30] sm:$0xff] %v4672
        %4801 = vst [vmem:[#allocation3 + $0x38] sm:$0xff] %v4673
        %4802 = vst [vmem:[#allocation3 + $0x40] sm:$0xff] %v4674
        %4803 = vst [vmem:[#allocation3 + $0x48] sm:$0xff] %v4675
        %4804 = vst [vmem:[#allocation3 + $0x50] sm:$0xff] %v4676
        %4805 = vst [vmem:[#allocation3 + $0x58] sm:$0xff] %v4677
        %4806 = vst [vmem:[#allocation3 + $0x60] sm:$0xff] %v4678
        %4807 = vst [vmem:[#allocation3 + $0x68] sm:$0xff] %v4679
        %4808 = vst [vmem:[#allocation3 + $0x70] sm:$0xff] %v4680
        %4809 = vst [vmem:[#allocation3 + $0x78] sm:$0xff] %v4681
        %4810 = vst [vmem:[#allocation3 + $0x80] sm:$0xff] %v4682
        %4811 = vst [vmem:[#allocation3 + $0x88] sm:$0xff] %v4683
        %4812 = vst [vmem:[#allocation3 + $0x90] sm:$0xff] %v4684
        %4813 = vst [vmem:[#allocation3 + $0x98] sm:$0xff] %v4685
        %4814 = vst [vmem:[#allocation3 + $0xa0] sm:$0xff] %v4686
        %4815 = vst [vmem:[#allocation3 + $0xa8] sm:$0xff] %v4687
        %4816 = vst [vmem:[#allocation3 + $0xb0] sm:$0xff] %v4688
        %4817 = vst [vmem:[#allocation3 + $0xb8] sm:$0xff] %v4689
        %4818 = vst [vmem:[#allocation3 + $0xc0] sm:$0xff] %v4690
        %4819 = vst [vmem:[#allocation3 + $0xc8] sm:$0xff] %v4691
        %4820 = vst [vmem:[#allocation3 + $0xd0] sm:$0xff] %v4692
        %4821 = vst [vmem:[#allocation3 + $0xd8] sm:$0xff] %v4693
        %4822 = vst [vmem:[#allocation3 + $0xe0] sm:$0xff] %v4694
        %4823 = vst [vmem:[#allocation3 + $0xe8] sm:$0xff] %v4695
        %4824 = vst [vmem:[#allocation3 + $0xf0] sm:$0xff] %v4696
        %4825 = vst [vmem:[#allocation3 + $0xf8] sm:$0xff] %v4697
        %4826 = vst [vmem:[#allocation3 + $0x100] sm:$0xff] %v4698
        %4827 = vst [vmem:[#allocation3 + $0x108] sm:$0xff] %v4699
        %4828 = vst [vmem:[#allocation3 + $0x110] sm:$0xff] %v4700
        %4829 = vst [vmem:[#allocation3 + $0x118] sm:$0xff] %v4701
        %4830 = vst [vmem:[#allocation3 + $0x120] sm:$0xff] %v4702
        %4831 = vst [vmem:[#allocation3 + $0x128] sm:$0xff] %v4703
        %4832 = vst [vmem:[#allocation3 + $0x130] sm:$0xff] %v4704
        %4833 = vst [vmem:[#allocation3 + $0x138] sm:$0xff] %v4705
        %4834 = vst [vmem:[#allocation3 + $0x140] sm:$0xff] %v4706
        %4835 = vst [vmem:[#allocation3 + $0x148] sm:$0xff] %v4707
        %4836 = vst [vmem:[#allocation3 + $0x150] sm:$0xff] %v4708
        %4837 = vst [vmem:[#allocation3 + $0x158] sm:$0xff] %v4709
        %4838 = vst [vmem:[#allocation3 + $0x160] sm:$0xff] %v4710
        %4839 = vst [vmem:[#allocation3 + $0x168] sm:$0xff] %v4711
        %4840 = vst [vmem:[#allocation3 + $0x170] sm:$0xff] %v4712
        %4841 = vst [vmem:[#allocation3 + $0x178] sm:$0xff] %v4713
        %4842 = vst [vmem:[#allocation3 + $0x180] sm:$0xff] %v4714
        %4843 = vst [vmem:[#allocation3 + $0x188] sm:$0xff] %v4715
        %4844 = vst [vmem:[#allocation3 + $0x190] sm:$0xff] %v4716
        %4845 = vst [vmem:[#allocation3 + $0x198] sm:$0xff] %v4717
        %4846 = vst [vmem:[#allocation3 + $0x1a0] sm:$0xff] %v4718
        %4847 = vst [vmem:[#allocation3 + $0x1a8] sm:$0xff] %v4719
        %4848 = vst [vmem:[#allocation3 + $0x1b0] sm:$0xff] %v4720
        %4849 = vst [vmem:[#allocation3 + $0x1b8] sm:$0xff] %v4721
        %4850 = vst [vmem:[#allocation3 + $0x1c0] sm:$0xff] %v4722
        %4851 = vst [vmem:[#allocation3 + $0x1c8] sm:$0xff] %v4723
        %4852 = vst [vmem:[#allocation3 + $0x1d0] sm:$0xff] %v4724
        %4853 = vst [vmem:[#allocation3 + $0x1d8] sm:$0xff] %v4725
        %4854 = vst [vmem:[#allocation3 + $0x1e0] sm:$0xff] %v4726
        %4855 = vst [vmem:[#allocation3 + $0x1e8] sm:$0xff] %v4727
        %4856 = vst [vmem:[#allocation3 + $0x1f0] sm:$0xff] %v4728
        %4857 = vst [vmem:[#allocation3 + $0x1f8] sm:$0xff] %v4729
        %4858 = vst [vmem:[#allocation3 + $0x200] sm:$0xff] %v4730
        %4859 = vst [vmem:[#allocation3 + $0x208] sm:$0xff] %v4731
        %4860 = vst [vmem:[#allocation3 + $0x210] sm:$0xff] %v4732
        %4861 = vst [vmem:[#allocation3 + $0x218] sm:$0xff] %v4733
        %4862 = vst [vmem:[#allocation3 + $0x220] sm:$0xff] %v4734
        %4863 = vst [vmem:[#allocation3 + $0x228] sm:$0xff] %v4735
        %4864 = vst [vmem:[#allocation3 + $0x230] sm:$0xff] %v4736
        %4865 = vst [vmem:[#allocation3 + $0x238] sm:$0xff] %v4737
        %4866 = vst [vmem:[#allocation3 + $0x240] sm:$0xff] %v4738
        %4867 = vst [vmem:[#allocation3 + $0x248] sm:$0xff] %v4739
        %4868 = vst [vmem:[#allocation3 + $0x250] sm:$0xff] %v4740
        %4869 = vst [vmem:[#allocation3 + $0x258] sm:$0xff] %v4741
        %4870 = vst [vmem:[#allocation3 + $0x260] sm:$0xff] %v4742
        %4871 = vst [vmem:[#allocation3 + $0x268] sm:$0xff] %v4743
        %4872 = vst [vmem:[#allocation3 + $0x270] sm:$0xff] %v4744
        %4873 = vst [vmem:[#allocation3 + $0x278] sm:$0xff] %v4745
        %4874 = vst [vmem:[#allocation3 + $0x280] sm:$0xff] %v4746
        %4875 = vst [vmem:[#allocation3 + $0x288] sm:$0xff] %v4747
        %4876 = vst [vmem:[#allocation3 + $0x290] sm:$0xff] %v4748
        %4877 = vst [vmem:[#allocation3 + $0x298] sm:$0xff] %v4749
        %4878 = vst [vmem:[#allocation3 + $0x2a0] sm:$0xff] %v4750
        %4879 = vst [vmem:[#allocation3 + $0x2a8] sm:$0xff] %v4751
        %4880 = vst [vmem:[#allocation3 + $0x2b0] sm:$0xff] %v4752
        %4881 = vst [vmem:[#allocation3 + $0x2b8] sm:$0xff] %v4753
        %4882 = vst [vmem:[#allocation3 + $0x2c0] sm:$0xff] %v4754
        %4883 = vst [vmem:[#allocation3 + $0x2c8] sm:$0xff] %v4755
        %4884 = vst [vmem:[#allocation3 + $0x2d0] sm:$0xff] %v4756
        %4885 = vst [vmem:[#allocation3 + $0x2d8] sm:$0xff] %v4757
        %4886 = vst [vmem:[#allocation3 + $0x2e0] sm:$0xff] %v4758
        %4887 = vst [vmem:[#allocation3 + $0x2e8] sm:$0xff] %v4759
        %4888 = vst [vmem:[#allocation3 + $0x2f0] sm:$0xff] %v4760
        %4889 = vst [vmem:[#allocation3 + $0x2f8] sm:$0xff] %v4761
        %4890 = vst [vmem:[#allocation3 + $0x300] sm:$0xff] %v4762
        %4891 = vst [vmem:[#allocation3 + $0x308] sm:$0xff] %v4763
        %4892 = vst [vmem:[#allocation3 + $0x310] sm:$0xff] %v4764
        %4893 = vst [vmem:[#allocation3 + $0x318] sm:$0xff] %v4765
        %4894 = vst [vmem:[#allocation3 + $0x320] sm:$0xff] %v4766
        %4895 = vst [vmem:[#allocation3 + $0x328] sm:$0xff] %v4767
        %4896 = vst [vmem:[#allocation3 + $0x330] sm:$0xff] %v4768
        %4897 = vst [vmem:[#allocation3 + $0x338] sm:$0xff] %v4769
        %4898 = vst [vmem:[#allocation3 + $0x340] sm:$0xff] %v4770
        %4899 = vst [vmem:[#allocation3 + $0x348] sm:$0xff] %v4771
        %4900 = vst [vmem:[#allocation3 + $0x350] sm:$0xff] %v4772
        %4901 = vst [vmem:[#allocation3 + $0x358] sm:$0xff] %v4773
        %4902 = vst [vmem:[#allocation3 + $0x360] sm:$0xff] %v4774
        %4903 = vst [vmem:[#allocation3 + $0x368] sm:$0xff] %v4775
        %4904 = vst [vmem:[#allocation3 + $0x370] sm:$0xff] %v4776
        %4905 = vst [vmem:[#allocation3 + $0x378] sm:$0xff] %v4777
        %4906 = vst [vmem:[#allocation3 + $0x380] sm:$0xff] %v4778
        %4907 = vst [vmem:[#allocation3 + $0x388] sm:$0xff] %v4779
        %4908 = vst [vmem:[#allocation3 + $0x390] sm:$0xff] %v4780
        %4909 = vst [vmem:[#allocation3 + $0x398] sm:$0xff] %v4781
        %4910 = vst [vmem:[#allocation3 + $0x3a0] sm:$0xff] %v4782
        %4911 = vst [vmem:[#allocation3 + $0x3a8] sm:$0xff] %v4783
        %4912 = vst [vmem:[#allocation3 + $0x3b0] sm:$0xff] %v4784
        %4913 = vst [vmem:[#allocation3 + $0x3b8] sm:$0xff] %v4785
        %4914 = vst [vmem:[#allocation3 + $0x3c0] sm:$0xff] %v4786
        %4915 = vst [vmem:[#allocation3 + $0x3c8] sm:$0xff] %v4787
        %4916 = vst [vmem:[#allocation3 + $0x3d0] sm:$0xff] %v4788
        %4917 = vst [vmem:[#allocation3 + $0x3d8] sm:$0xff] %v4789
        %4918 = vst [vmem:[#allocation3 + $0x3e0] sm:$0xff] %v4790
        %4919 = vst [vmem:[#allocation3 + $0x3e8] sm:$0xff] %v4791
        %4920 = vst [vmem:[#allocation3 + $0x3f0] sm:$0xff] %v4792
        %4921 = vst [vmem:[#allocation3 + $0x3f8] sm:$0xff] %v4793
        // Predicated region
        $region105: #{_lambda_.1} parent=63 // pred_check
          %p4922 = pneg %p566
        $region106: #{_lambda_.1} parent=63 // pred_check_branch
          %4924 = sbr.rel (%p4922) target = $region108
        $region107: #{_lambda_.1} parent=63 // pred_region
          %v4925 = vld [vmem:[#allocation2] sm:$0xff]
          %v4926 = vld [vmem:[#allocation2 + $0x8] sm:$0xff]
          %v4927 = vld [vmem:[#allocation2 + $0x10] sm:$0xff]
          %v4928 = vld [vmem:[#allocation2 + $0x18] sm:$0xff]
          %v4929 = vld [vmem:[#allocation2 + $0x20] sm:$0xff]
          %v4930 = vld [vmem:[#allocation2 + $0x28] sm:$0xff]
          %v4931 = vld [vmem:[#allocation2 + $0x30] sm:$0xff]
          %v4932 = vld [vmem:[#allocation2 + $0x38] sm:$0xff]
          %v4933 = vld [vmem:[#allocation2 + $0x40] sm:$0xff]
          %v4934 = vld [vmem:[#allocation2 + $0x48] sm:$0xff]
          %v4935 = vld [vmem:[#allocation2 + $0x50] sm:$0xff]
          %v4936 = vld [vmem:[#allocation2 + $0x58] sm:$0xff]
          %v4937 = vld [vmem:[#allocation2 + $0x60] sm:$0xff]
          %v4938 = vld [vmem:[#allocation2 + $0x68] sm:$0xff]
          %v4939 = vld [vmem:[#allocation2 + $0x70] sm:$0xff]
          %v4940 = vld [vmem:[#allocation2 + $0x78] sm:$0xff]
          %v4941 = vld [vmem:[#allocation2 + $0x80] sm:$0xff]
          %v4942 = vld [vmem:[#allocation2 + $0x88] sm:$0xff]
          %v4943 = vld [vmem:[#allocation2 + $0x90] sm:$0xff]
          %v4944 = vld [vmem:[#allocation2 + $0x98] sm:$0xff]
          %v4945 = vld [vmem:[#allocation2 + $0xa0] sm:$0xff]
          %v4946 = vld [vmem:[#allocation2 + $0xa8] sm:$0xff]
          %v4947 = vld [vmem:[#allocation2 + $0xb0] sm:$0xff]
          %v4948 = vld [vmem:[#allocation2 + $0xb8] sm:$0xff]
          %v4949 = vld [vmem:[#allocation2 + $0xc0] sm:$0xff]
          %v4950 = vld [vmem:[#allocation2 + $0xc8] sm:$0xff]
          %v4951 = vld [vmem:[#allocation2 + $0xd0] sm:$0xff]
          %v4952 = vld [vmem:[#allocation2 + $0xd8] sm:$0xff]
          %v4953 = vld [vmem:[#allocation2 + $0xe0] sm:$0xff]
          %v4954 = vld [vmem:[#allocation2 + $0xe8] sm:$0xff]
          %v4955 = vld [vmem:[#allocation2 + $0xf0] sm:$0xff]
          %v4956 = vld [vmem:[#allocation2 + $0xf8] sm:$0xff]
          %v4957 = vld [vmem:[#allocation2 + $0x100] sm:$0xff]
          %v4958 = vld [vmem:[#allocation2 + $0x108] sm:$0xff]
          %v4959 = vld [vmem:[#allocation2 + $0x110] sm:$0xff]
          %v4960 = vld [vmem:[#allocation2 + $0x118] sm:$0xff]
          %v4961 = vld [vmem:[#allocation2 + $0x120] sm:$0xff]
          %v4962 = vld [vmem:[#allocation2 + $0x128] sm:$0xff]
          %v4963 = vld [vmem:[#allocation2 + $0x130] sm:$0xff]
          %v4964 = vld [vmem:[#allocation2 + $0x138] sm:$0xff]
          %v4965 = vld [vmem:[#allocation2 + $0x140] sm:$0xff]
          %v4966 = vld [vmem:[#allocation2 + $0x148] sm:$0xff]
          %v4967 = vld [vmem:[#allocation2 + $0x150] sm:$0xff]
          %v4968 = vld [vmem:[#allocation2 + $0x158] sm:$0xff]
          %v4969 = vld [vmem:[#allocation2 + $0x160] sm:$0xff]
          %v4970 = vld [vmem:[#allocation2 + $0x168] sm:$0xff]
          %v4971 = vld [vmem:[#allocation2 + $0x170] sm:$0xff]
          %v4972 = vld [vmem:[#allocation2 + $0x178] sm:$0xff]
          %v4973 = vld [vmem:[#allocation2 + $0x180] sm:$0xff]
          %v4974 = vld [vmem:[#allocation2 + $0x188] sm:$0xff]
          %v4975 = vld [vmem:[#allocation2 + $0x190] sm:$0xff]
          %v4976 = vld [vmem:[#allocation2 + $0x198] sm:$0xff]
          %v4977 = vld [vmem:[#allocation2 + $0x1a0] sm:$0xff]
          %v4978 = vld [vmem:[#allocation2 + $0x1a8] sm:$0xff]
          %v4979 = vld [vmem:[#allocation2 + $0x1b0] sm:$0xff]
          %v4980 = vld [vmem:[#allocation2 + $0x1b8] sm:$0xff]
          %v4981 = vld [vmem:[#allocation2 + $0x1c0] sm:$0xff]
          %v4982 = vld [vmem:[#allocation2 + $0x1c8] sm:$0xff]
          %v4983 = vld [vmem:[#allocation2 + $0x1d0] sm:$0xff]
          %v4984 = vld [vmem:[#allocation2 + $0x1d8] sm:$0xff]
          %v4985 = vld [vmem:[#allocation2 + $0x1e0] sm:$0xff]
          %v4986 = vld [vmem:[#allocation2 + $0x1e8] sm:$0xff]
          %v4987 = vld [vmem:[#allocation2 + $0x1f0] sm:$0xff]
          %v4988 = vld [vmem:[#allocation2 + $0x1f8] sm:$0xff]
          %v4989 = vld [vmem:[#allocation2 + $0x200] sm:$0xff]
          %v4990 = vld [vmem:[#allocation2 + $0x208] sm:$0xff]
          %v4991 = vld [vmem:[#allocation2 + $0x210] sm:$0xff]
          %v4992 = vld [vmem:[#allocation2 + $0x218] sm:$0xff]
          %v4993 = vld [vmem:[#allocation2 + $0x220] sm:$0xff]
          %v4994 = vld [vmem:[#allocation2 + $0x228] sm:$0xff]
          %v4995 = vld [vmem:[#allocation2 + $0x230] sm:$0xff]
          %v4996 = vld [vmem:[#allocation2 + $0x238] sm:$0xff]
          %v4997 = vld [vmem:[#allocation2 + $0x240] sm:$0xff]
          %v4998 = vld [vmem:[#allocation2 + $0x248] sm:$0xff]
          %v4999 = vld [vmem:[#allocation2 + $0x250] sm:$0xff]
          %v5000 = vld [vmem:[#allocation2 + $0x258] sm:$0xff]
          %v5001 = vld [vmem:[#allocation2 + $0x260] sm:$0xff]
          %v5002 = vld [vmem:[#allocation2 + $0x268] sm:$0xff]
          %v5003 = vld [vmem:[#allocation2 + $0x270] sm:$0xff]
          %v5004 = vld [vmem:[#allocation2 + $0x278] sm:$0xff]
          %v5005 = vld [vmem:[#allocation2 + $0x280] sm:$0xff]
          %v5006 = vld [vmem:[#allocation2 + $0x288] sm:$0xff]
          %v5007 = vld [vmem:[#allocation2 + $0x290] sm:$0xff]
          %v5008 = vld [vmem:[#allocation2 + $0x298] sm:$0xff]
          %v5009 = vld [vmem:[#allocation2 + $0x2a0] sm:$0xff]
          %v5010 = vld [vmem:[#allocation2 + $0x2a8] sm:$0xff]
          %v5011 = vld [vmem:[#allocation2 + $0x2b0] sm:$0xff]
          %v5012 = vld [vmem:[#allocation2 + $0x2b8] sm:$0xff]
          %v5013 = vld [vmem:[#allocation2 + $0x2c0] sm:$0xff]
          %v5014 = vld [vmem:[#allocation2 + $0x2c8] sm:$0xff]
          %v5015 = vld [vmem:[#allocation2 + $0x2d0] sm:$0xff]
          %v5016 = vld [vmem:[#allocation2 + $0x2d8] sm:$0xff]
          %v5017 = vld [vmem:[#allocation2 + $0x2e0] sm:$0xff]
          %v5018 = vld [vmem:[#allocation2 + $0x2e8] sm:$0xff]
          %v5019 = vld [vmem:[#allocation2 + $0x2f0] sm:$0xff]
          %v5020 = vld [vmem:[#allocation2 + $0x2f8] sm:$0xff]
          %v5021 = vld [vmem:[#allocation2 + $0x300] sm:$0xff]
          %v5022 = vld [vmem:[#allocation2 + $0x308] sm:$0xff]
          %v5023 = vld [vmem:[#allocation2 + $0x310] sm:$0xff]
          %v5024 = vld [vmem:[#allocation2 + $0x318] sm:$0xff]
          %v5025 = vld [vmem:[#allocation2 + $0x320] sm:$0xff]
          %v5026 = vld [vmem:[#allocation2 + $0x328] sm:$0xff]
          %v5027 = vld [vmem:[#allocation2 + $0x330] sm:$0xff]
          %v5028 = vld [vmem:[#allocation2 + $0x338] sm:$0xff]
          %v5029 = vld [vmem:[#allocation2 + $0x340] sm:$0xff]
          %v5030 = vld [vmem:[#allocation2 + $0x348] sm:$0xff]
          %v5031 = vld [vmem:[#allocation2 + $0x350] sm:$0xff]
          %v5032 = vld [vmem:[#allocation2 + $0x358] sm:$0xff]
          %v5033 = vld [vmem:[#allocation2 + $0x360] sm:$0xff]
          %v5034 = vld [vmem:[#allocation2 + $0x368] sm:$0xff]
          %v5035 = vld [vmem:[#allocation2 + $0x370] sm:$0xff]
          %v5036 = vld [vmem:[#allocation2 + $0x378] sm:$0xff]
          %v5037 = vld [vmem:[#allocation2 + $0x380] sm:$0xff]
          %v5038 = vld [vmem:[#allocation2 + $0x388] sm:$0xff]
          %v5039 = vld [vmem:[#allocation2 + $0x390] sm:$0xff]
          %v5040 = vld [vmem:[#allocation2 + $0x398] sm:$0xff]
          %v5041 = vld [vmem:[#allocation2 + $0x3a0] sm:$0xff]
          %v5042 = vld [vmem:[#allocation2 + $0x3a8] sm:$0xff]
          %v5043 = vld [vmem:[#allocation2 + $0x3b0] sm:$0xff]
          %v5044 = vld [vmem:[#allocation2 + $0x3b8] sm:$0xff]
          %v5045 = vld [vmem:[#allocation2 + $0x3c0] sm:$0xff]
          %v5046 = vld [vmem:[#allocation2 + $0x3c8] sm:$0xff]
          %v5047 = vld [vmem:[#allocation2 + $0x3d0] sm:$0xff]
          %v5048 = vld [vmem:[#allocation2 + $0x3d8] sm:$0xff]
          %v5049 = vld [vmem:[#allocation2 + $0x3e0] sm:$0xff]
          %v5050 = vld [vmem:[#allocation2 + $0x3e8] sm:$0xff]
          %v5051 = vld [vmem:[#allocation2 + $0x3f0] sm:$0xff]
          %v5052 = vld [vmem:[#allocation2 + $0x3f8] sm:$0xff]
          %5053 = vmax.xlane.f32.xlu0 %v4925
          %v5054 = vpop.xlane.xlu0 %5053
          %5055 = vmax.xlane.f32.xlu0 %v4926
          %v5056 = vpop.xlane.xlu0 %5055
          %5057 = vmax.xlane.f32.xlu0 %v4927
          %v5058 = vpop.xlane.xlu0 %5057
          %5059 = vmax.xlane.f32.xlu0 %v4928
          %v5060 = vpop.xlane.xlu0 %5059
          %5061 = vmax.xlane.f32.xlu0 %v4929
          %v5062 = vpop.xlane.xlu0 %5061
          %5063 = vmax.xlane.f32.xlu0 %v4930
          %v5064 = vpop.xlane.xlu0 %5063
          %5065 = vmax.xlane.f32.xlu0 %v4931
          %v5066 = vpop.xlane.xlu0 %5065
          %5067 = vmax.xlane.f32.xlu0 %v4932
          %v5068 = vpop.xlane.xlu0 %5067
          %5069 = vmax.xlane.f32.xlu0 %v4933
          %v5070 = vpop.xlane.xlu0 %5069
          %5071 = vmax.xlane.f32.xlu0 %v4934
          %v5072 = vpop.xlane.xlu0 %5071
          %5073 = vmax.xlane.f32.xlu0 %v4935
          %v5074 = vpop.xlane.xlu0 %5073
          %5075 = vmax.xlane.f32.xlu0 %v4936
          %v5076 = vpop.xlane.xlu0 %5075
          %5077 = vmax.xlane.f32.xlu0 %v4937
          %v5078 = vpop.xlane.xlu0 %5077
          %5079 = vmax.xlane.f32.xlu0 %v4938
          %v5080 = vpop.xlane.xlu0 %5079
          %5081 = vmax.xlane.f32.xlu0 %v4939
          %v5082 = vpop.xlane.xlu0 %5081
          %5083 = vmax.xlane.f32.xlu0 %v4940
          %v5084 = vpop.xlane.xlu0 %5083
          %5085 = vmax.xlane.f32.xlu0 %v4941
          %v5086 = vpop.xlane.xlu0 %5085
          %5087 = vmax.xlane.f32.xlu0 %v4942
          %v5088 = vpop.xlane.xlu0 %5087
          %5089 = vmax.xlane.f32.xlu0 %v4943
          %v5090 = vpop.xlane.xlu0 %5089
          %5091 = vmax.xlane.f32.xlu0 %v4944
          %v5092 = vpop.xlane.xlu0 %5091
          %5093 = vmax.xlane.f32.xlu0 %v4945
          %v5094 = vpop.xlane.xlu0 %5093
          %5095 = vmax.xlane.f32.xlu0 %v4946
          %v5096 = vpop.xlane.xlu0 %5095
          %5097 = vmax.xlane.f32.xlu0 %v4947
          %v5098 = vpop.xlane.xlu0 %5097
          %5099 = vmax.xlane.f32.xlu0 %v4948
          %v5100 = vpop.xlane.xlu0 %5099
          %5101 = vmax.xlane.f32.xlu0 %v4949
          %v5102 = vpop.xlane.xlu0 %5101
          %5103 = vmax.xlane.f32.xlu0 %v4950
          %v5104 = vpop.xlane.xlu0 %5103
          %5105 = vmax.xlane.f32.xlu0 %v4951
          %v5106 = vpop.xlane.xlu0 %5105
          %5107 = vmax.xlane.f32.xlu0 %v4952
          %v5108 = vpop.xlane.xlu0 %5107
          %5109 = vmax.xlane.f32.xlu0 %v4953
          %v5110 = vpop.xlane.xlu0 %5109
          %5111 = vmax.xlane.f32.xlu0 %v4954
          %v5112 = vpop.xlane.xlu0 %5111
          %5113 = vmax.xlane.f32.xlu0 %v4955
          %v5114 = vpop.xlane.xlu0 %5113
          %5115 = vmax.xlane.f32.xlu0 %v4956
          %v5116 = vpop.xlane.xlu0 %5115
          %5117 = vmax.xlane.f32.xlu0 %v4957
          %v5118 = vpop.xlane.xlu0 %5117
          %5119 = vmax.xlane.f32.xlu0 %v4958
          %v5120 = vpop.xlane.xlu0 %5119
          %5121 = vmax.xlane.f32.xlu0 %v4959
          %v5122 = vpop.xlane.xlu0 %5121
          %5123 = vmax.xlane.f32.xlu0 %v4960
          %v5124 = vpop.xlane.xlu0 %5123
          %5125 = vmax.xlane.f32.xlu0 %v4961
          %v5126 = vpop.xlane.xlu0 %5125
          %5127 = vmax.xlane.f32.xlu0 %v4962
          %v5128 = vpop.xlane.xlu0 %5127
          %5129 = vmax.xlane.f32.xlu0 %v4963
          %v5130 = vpop.xlane.xlu0 %5129
          %5131 = vmax.xlane.f32.xlu0 %v4964
          %v5132 = vpop.xlane.xlu0 %5131
          %5133 = vmax.xlane.f32.xlu0 %v4965
          %v5134 = vpop.xlane.xlu0 %5133
          %5135 = vmax.xlane.f32.xlu0 %v4966
          %v5136 = vpop.xlane.xlu0 %5135
          %5137 = vmax.xlane.f32.xlu0 %v4967
          %v5138 = vpop.xlane.xlu0 %5137
          %5139 = vmax.xlane.f32.xlu0 %v4968
          %v5140 = vpop.xlane.xlu0 %5139
          %5141 = vmax.xlane.f32.xlu0 %v4969
          %v5142 = vpop.xlane.xlu0 %5141
          %5143 = vmax.xlane.f32.xlu0 %v4970
          %v5144 = vpop.xlane.xlu0 %5143
          %5145 = vmax.xlane.f32.xlu0 %v4971
          %v5146 = vpop.xlane.xlu0 %5145
          %5147 = vmax.xlane.f32.xlu0 %v4972
          %v5148 = vpop.xlane.xlu0 %5147
          %5149 = vmax.xlane.f32.xlu0 %v4973
          %v5150 = vpop.xlane.xlu0 %5149
          %5151 = vmax.xlane.f32.xlu0 %v4974
          %v5152 = vpop.xlane.xlu0 %5151
          %5153 = vmax.xlane.f32.xlu0 %v4975
          %v5154 = vpop.xlane.xlu0 %5153
          %5155 = vmax.xlane.f32.xlu0 %v4976
          %v5156 = vpop.xlane.xlu0 %5155
          %5157 = vmax.xlane.f32.xlu0 %v4977
          %v5158 = vpop.xlane.xlu0 %5157
          %5159 = vmax.xlane.f32.xlu0 %v4978
          %v5160 = vpop.xlane.xlu0 %5159
          %5161 = vmax.xlane.f32.xlu0 %v4979
          %v5162 = vpop.xlane.xlu0 %5161
          %5163 = vmax.xlane.f32.xlu0 %v4980
          %v5164 = vpop.xlane.xlu0 %5163
          %5165 = vmax.xlane.f32.xlu0 %v4981
          %v5166 = vpop.xlane.xlu0 %5165
          %5167 = vmax.xlane.f32.xlu0 %v4982
          %v5168 = vpop.xlane.xlu0 %5167
          %5169 = vmax.xlane.f32.xlu0 %v4983
          %v5170 = vpop.xlane.xlu0 %5169
          %5171 = vmax.xlane.f32.xlu0 %v4984
          %v5172 = vpop.xlane.xlu0 %5171
          %5173 = vmax.xlane.f32.xlu0 %v4985
          %v5174 = vpop.xlane.xlu0 %5173
          %5175 = vmax.xlane.f32.xlu0 %v4986
          %v5176 = vpop.xlane.xlu0 %5175
          %5177 = vmax.xlane.f32.xlu0 %v4987
          %v5178 = vpop.xlane.xlu0 %5177
          %5179 = vmax.xlane.f32.xlu0 %v4988
          %v5180 = vpop.xlane.xlu0 %5179
          %5181 = vmax.xlane.f32.xlu0 %v4989
          %v5182 = vpop.xlane.xlu0 %5181
          %5183 = vmax.xlane.f32.xlu0 %v4990
          %v5184 = vpop.xlane.xlu0 %5183
          %5185 = vmax.xlane.f32.xlu0 %v4991
          %v5186 = vpop.xlane.xlu0 %5185
          %5187 = vmax.xlane.f32.xlu0 %v4992
          %v5188 = vpop.xlane.xlu0 %5187
          %5189 = vmax.xlane.f32.xlu0 %v4993
          %v5190 = vpop.xlane.xlu0 %5189
          %5191 = vmax.xlane.f32.xlu0 %v4994
          %v5192 = vpop.xlane.xlu0 %5191
          %5193 = vmax.xlane.f32.xlu0 %v4995
          %v5194 = vpop.xlane.xlu0 %5193
          %5195 = vmax.xlane.f32.xlu0 %v4996
          %v5196 = vpop.xlane.xlu0 %5195
          %5197 = vmax.xlane.f32.xlu0 %v4997
          %v5198 = vpop.xlane.xlu0 %5197
          %5199 = vmax.xlane.f32.xlu0 %v4998
          %v5200 = vpop.xlane.xlu0 %5199
          %5201 = vmax.xlane.f32.xlu0 %v4999
          %v5202 = vpop.xlane.xlu0 %5201
          %5203 = vmax.xlane.f32.xlu0 %v5000
          %v5204 = vpop.xlane.xlu0 %5203
          %5205 = vmax.xlane.f32.xlu0 %v5001
          %v5206 = vpop.xlane.xlu0 %5205
          %5207 = vmax.xlane.f32.xlu0 %v5002
          %v5208 = vpop.xlane.xlu0 %5207
          %5209 = vmax.xlane.f32.xlu0 %v5003
          %v5210 = vpop.xlane.xlu0 %5209
          %5211 = vmax.xlane.f32.xlu0 %v5004
          %v5212 = vpop.xlane.xlu0 %5211
          %5213 = vmax.xlane.f32.xlu0 %v5005
          %v5214 = vpop.xlane.xlu0 %5213
          %5215 = vmax.xlane.f32.xlu0 %v5006
          %v5216 = vpop.xlane.xlu0 %5215
          %5217 = vmax.xlane.f32.xlu0 %v5007
          %v5218 = vpop.xlane.xlu0 %5217
          %5219 = vmax.xlane.f32.xlu0 %v5008
          %v5220 = vpop.xlane.xlu0 %5219
          %5221 = vmax.xlane.f32.xlu0 %v5009
          %v5222 = vpop.xlane.xlu0 %5221
          %5223 = vmax.xlane.f32.xlu0 %v5010
          %v5224 = vpop.xlane.xlu0 %5223
          %5225 = vmax.xlane.f32.xlu0 %v5011
          %v5226 = vpop.xlane.xlu0 %5225
          %5227 = vmax.xlane.f32.xlu0 %v5012
          %v5228 = vpop.xlane.xlu0 %5227
          %5229 = vmax.xlane.f32.xlu0 %v5013
          %v5230 = vpop.xlane.xlu0 %5229
          %5231 = vmax.xlane.f32.xlu0 %v5014
          %v5232 = vpop.xlane.xlu0 %5231
          %5233 = vmax.xlane.f32.xlu0 %v5015
          %v5234 = vpop.xlane.xlu0 %5233
          %5235 = vmax.xlane.f32.xlu0 %v5016
          %v5236 = vpop.xlane.xlu0 %5235
          %5237 = vmax.xlane.f32.xlu0 %v5017
          %v5238 = vpop.xlane.xlu0 %5237
          %5239 = vmax.xlane.f32.xlu0 %v5018
          %v5240 = vpop.xlane.xlu0 %5239
          %5241 = vmax.xlane.f32.xlu0 %v5019
          %v5242 = vpop.xlane.xlu0 %5241
          %5243 = vmax.xlane.f32.xlu0 %v5020
          %v5244 = vpop.xlane.xlu0 %5243
          %5245 = vmax.xlane.f32.xlu0 %v5021
          %v5246 = vpop.xlane.xlu0 %5245
          %5247 = vmax.xlane.f32.xlu0 %v5022
          %v5248 = vpop.xlane.xlu0 %5247
          %5249 = vmax.xlane.f32.xlu0 %v5023
          %v5250 = vpop.xlane.xlu0 %5249
          %5251 = vmax.xlane.f32.xlu0 %v5024
          %v5252 = vpop.xlane.xlu0 %5251
          %5253 = vmax.xlane.f32.xlu0 %v5025
          %v5254 = vpop.xlane.xlu0 %5253
          %5255 = vmax.xlane.f32.xlu0 %v5026
          %v5256 = vpop.xlane.xlu0 %5255
          %5257 = vmax.xlane.f32.xlu0 %v5027
          %v5258 = vpop.xlane.xlu0 %5257
          %5259 = vmax.xlane.f32.xlu0 %v5028
          %v5260 = vpop.xlane.xlu0 %5259
          %5261 = vmax.xlane.f32.xlu0 %v5029
          %v5262 = vpop.xlane.xlu0 %5261
          %5263 = vmax.xlane.f32.xlu0 %v5030
          %v5264 = vpop.xlane.xlu0 %5263
          %5265 = vmax.xlane.f32.xlu0 %v5031
          %v5266 = vpop.xlane.xlu0 %5265
          %5267 = vmax.xlane.f32.xlu0 %v5032
          %v5268 = vpop.xlane.xlu0 %5267
          %5269 = vmax.xlane.f32.xlu0 %v5033
          %v5270 = vpop.xlane.xlu0 %5269
          %5271 = vmax.xlane.f32.xlu0 %v5034
          %v5272 = vpop.xlane.xlu0 %5271
          %5273 = vmax.xlane.f32.xlu0 %v5035
          %v5274 = vpop.xlane.xlu0 %5273
          %5275 = vmax.xlane.f32.xlu0 %v5036
          %v5276 = vpop.xlane.xlu0 %5275
          %5277 = vmax.xlane.f32.xlu0 %v5037
          %v5278 = vpop.xlane.xlu0 %5277
          %5279 = vmax.xlane.f32.xlu0 %v5038
          %v5280 = vpop.xlane.xlu0 %5279
          %5281 = vmax.xlane.f32.xlu0 %v5039
          %v5282 = vpop.xlane.xlu0 %5281
          %5283 = vmax.xlane.f32.xlu0 %v5040
          %v5284 = vpop.xlane.xlu0 %5283
          %5285 = vmax.xlane.f32.xlu0 %v5041
          %v5286 = vpop.xlane.xlu0 %5285
          %5287 = vmax.xlane.f32.xlu0 %v5042
          %v5288 = vpop.xlane.xlu0 %5287
          %5289 = vmax.xlane.f32.xlu0 %v5043
          %v5290 = vpop.xlane.xlu0 %5289
          %5291 = vmax.xlane.f32.xlu0 %v5044
          %v5292 = vpop.xlane.xlu0 %5291
          %5293 = vmax.xlane.f32.xlu0 %v5045
          %v5294 = vpop.xlane.xlu0 %5293
          %5295 = vmax.xlane.f32.xlu0 %v5046
          %v5296 = vpop.xlane.xlu0 %5295
          %5297 = vmax.xlane.f32.xlu0 %v5047
          %v5298 = vpop.xlane.xlu0 %5297
          %5299 = vmax.xlane.f32.xlu0 %v5048
          %v5300 = vpop.xlane.xlu0 %5299
          %5301 = vmax.xlane.f32.xlu0 %v5049
          %v5302 = vpop.xlane.xlu0 %5301
          %5303 = vmax.xlane.f32.xlu0 %v5050
          %v5304 = vpop.xlane.xlu0 %5303
          %5305 = vmax.xlane.f32.xlu0 %v5051
          %v5306 = vpop.xlane.xlu0 %5305
          %5307 = vmax.xlane.f32.xlu0 %v5052
          %v5308 = vpop.xlane.xlu0 %5307
          %v5309 = vld [vmem:[#allocation3] sm:$0xff]
          %v5310 = vld [vmem:[#allocation3 + $0x8] sm:$0xff]
          %v5311 = vld [vmem:[#allocation3 + $0x10] sm:$0xff]
          %v5312 = vld [vmem:[#allocation3 + $0x18] sm:$0xff]
          %v5313 = vld [vmem:[#allocation3 + $0x20] sm:$0xff]
          %v5314 = vld [vmem:[#allocation3 + $0x28] sm:$0xff]
          %v5315 = vld [vmem:[#allocation3 + $0x30] sm:$0xff]
          %v5316 = vld [vmem:[#allocation3 + $0x38] sm:$0xff]
          %v5317 = vld [vmem:[#allocation3 + $0x40] sm:$0xff]
          %v5318 = vld [vmem:[#allocation3 + $0x48] sm:$0xff]
          %v5319 = vld [vmem:[#allocation3 + $0x50] sm:$0xff]
          %v5320 = vld [vmem:[#allocation3 + $0x58] sm:$0xff]
          %v5321 = vld [vmem:[#allocation3 + $0x60] sm:$0xff]
          %v5322 = vld [vmem:[#allocation3 + $0x68] sm:$0xff]
          %v5323 = vld [vmem:[#allocation3 + $0x70] sm:$0xff]
          %v5324 = vld [vmem:[#allocation3 + $0x78] sm:$0xff]
          %v5325 = vld [vmem:[#allocation3 + $0x80] sm:$0xff]
          %v5326 = vld [vmem:[#allocation3 + $0x88] sm:$0xff]
          %v5327 = vld [vmem:[#allocation3 + $0x90] sm:$0xff]
          %v5328 = vld [vmem:[#allocation3 + $0x98] sm:$0xff]
          %v5329 = vld [vmem:[#allocation3 + $0xa0] sm:$0xff]
          %v5330 = vld [vmem:[#allocation3 + $0xa8] sm:$0xff]
          %v5331 = vld [vmem:[#allocation3 + $0xb0] sm:$0xff]
          %v5332 = vld [vmem:[#allocation3 + $0xb8] sm:$0xff]
          %v5333 = vld [vmem:[#allocation3 + $0xc0] sm:$0xff]
          %v5334 = vld [vmem:[#allocation3 + $0xc8] sm:$0xff]
          %v5335 = vld [vmem:[#allocation3 + $0xd0] sm:$0xff]
          %v5336 = vld [vmem:[#allocation3 + $0xd8] sm:$0xff]
          %v5337 = vld [vmem:[#allocation3 + $0xe0] sm:$0xff]
          %v5338 = vld [vmem:[#allocation3 + $0xe8] sm:$0xff]
          %v5339 = vld [vmem:[#allocation3 + $0xf0] sm:$0xff]
          %v5340 = vld [vmem:[#allocation3 + $0xf8] sm:$0xff]
          %v5341 = vld [vmem:[#allocation3 + $0x100] sm:$0xff]
          %v5342 = vld [vmem:[#allocation3 + $0x108] sm:$0xff]
          %v5343 = vld [vmem:[#allocation3 + $0x110] sm:$0xff]
          %v5344 = vld [vmem:[#allocation3 + $0x118] sm:$0xff]
          %v5345 = vld [vmem:[#allocation3 + $0x120] sm:$0xff]
          %v5346 = vld [vmem:[#allocation3 + $0x128] sm:$0xff]
          %v5347 = vld [vmem:[#allocation3 + $0x130] sm:$0xff]
          %v5348 = vld [vmem:[#allocation3 + $0x138] sm:$0xff]
          %v5349 = vld [vmem:[#allocation3 + $0x140] sm:$0xff]
          %v5350 = vld [vmem:[#allocation3 + $0x148] sm:$0xff]
          %v5351 = vld [vmem:[#allocation3 + $0x150] sm:$0xff]
          %v5352 = vld [vmem:[#allocation3 + $0x158] sm:$0xff]
          %v5353 = vld [vmem:[#allocation3 + $0x160] sm:$0xff]
          %v5354 = vld [vmem:[#allocation3 + $0x168] sm:$0xff]
          %v5355 = vld [vmem:[#allocation3 + $0x170] sm:$0xff]
          %v5356 = vld [vmem:[#allocation3 + $0x178] sm:$0xff]
          %v5357 = vld [vmem:[#allocation3 + $0x180] sm:$0xff]
          %v5358 = vld [vmem:[#allocation3 + $0x188] sm:$0xff]
          %v5359 = vld [vmem:[#allocation3 + $0x190] sm:$0xff]
          %v5360 = vld [vmem:[#allocation3 + $0x198] sm:$0xff]
          %v5361 = vld [vmem:[#allocation3 + $0x1a0] sm:$0xff]
          %v5362 = vld [vmem:[#allocation3 + $0x1a8] sm:$0xff]
          %v5363 = vld [vmem:[#allocation3 + $0x1b0] sm:$0xff]
          %v5364 = vld [vmem:[#allocation3 + $0x1b8] sm:$0xff]
          %v5365 = vld [vmem:[#allocation3 + $0x1c0] sm:$0xff]
          %v5366 = vld [vmem:[#allocation3 + $0x1c8] sm:$0xff]
          %v5367 = vld [vmem:[#allocation3 + $0x1d0] sm:$0xff]
          %v5368 = vld [vmem:[#allocation3 + $0x1d8] sm:$0xff]
          %v5369 = vld [vmem:[#allocation3 + $0x1e0] sm:$0xff]
          %v5370 = vld [vmem:[#allocation3 + $0x1e8] sm:$0xff]
          %v5371 = vld [vmem:[#allocation3 + $0x1f0] sm:$0xff]
          %v5372 = vld [vmem:[#allocation3 + $0x1f8] sm:$0xff]
          %v5373 = vld [vmem:[#allocation3 + $0x200] sm:$0xff]
          %v5374 = vld [vmem:[#allocation3 + $0x208] sm:$0xff]
          %v5375 = vld [vmem:[#allocation3 + $0x210] sm:$0xff]
          %v5376 = vld [vmem:[#allocation3 + $0x218] sm:$0xff]
          %v5377 = vld [vmem:[#allocation3 + $0x220] sm:$0xff]
          %v5378 = vld [vmem:[#allocation3 + $0x228] sm:$0xff]
          %v5379 = vld [vmem:[#allocation3 + $0x230] sm:$0xff]
          %v5380 = vld [vmem:[#allocation3 + $0x238] sm:$0xff]
          %v5381 = vld [vmem:[#allocation3 + $0x240] sm:$0xff]
          %v5382 = vld [vmem:[#allocation3 + $0x248] sm:$0xff]
          %v5383 = vld [vmem:[#allocation3 + $0x250] sm:$0xff]
          %v5384 = vld [vmem:[#allocation3 + $0x258] sm:$0xff]
          %v5385 = vld [vmem:[#allocation3 + $0x260] sm:$0xff]
          %v5386 = vld [vmem:[#allocation3 + $0x268] sm:$0xff]
          %v5387 = vld [vmem:[#allocation3 + $0x270] sm:$0xff]
          %v5388 = vld [vmem:[#allocation3 + $0x278] sm:$0xff]
          %v5389 = vld [vmem:[#allocation3 + $0x280] sm:$0xff]
          %v5390 = vld [vmem:[#allocation3 + $0x288] sm:$0xff]
          %v5391 = vld [vmem:[#allocation3 + $0x290] sm:$0xff]
          %v5392 = vld [vmem:[#allocation3 + $0x298] sm:$0xff]
          %v5393 = vld [vmem:[#allocation3 + $0x2a0] sm:$0xff]
          %v5394 = vld [vmem:[#allocation3 + $0x2a8] sm:$0xff]
          %v5395 = vld [vmem:[#allocation3 + $0x2b0] sm:$0xff]
          %v5396 = vld [vmem:[#allocation3 + $0x2b8] sm:$0xff]
          %v5397 = vld [vmem:[#allocation3 + $0x2c0] sm:$0xff]
          %v5398 = vld [vmem:[#allocation3 + $0x2c8] sm:$0xff]
          %v5399 = vld [vmem:[#allocation3 + $0x2d0] sm:$0xff]
          %v5400 = vld [vmem:[#allocation3 + $0x2d8] sm:$0xff]
          %v5401 = vld [vmem:[#allocation3 + $0x2e0] sm:$0xff]
          %v5402 = vld [vmem:[#allocation3 + $0x2e8] sm:$0xff]
          %v5403 = vld [vmem:[#allocation3 + $0x2f0] sm:$0xff]
          %v5404 = vld [vmem:[#allocation3 + $0x2f8] sm:$0xff]
          %v5405 = vld [vmem:[#allocation3 + $0x300] sm:$0xff]
          %v5406 = vld [vmem:[#allocation3 + $0x308] sm:$0xff]
          %v5407 = vld [vmem:[#allocation3 + $0x310] sm:$0xff]
          %v5408 = vld [vmem:[#allocation3 + $0x318] sm:$0xff]
          %v5409 = vld [vmem:[#allocation3 + $0x320] sm:$0xff]
          %v5410 = vld [vmem:[#allocation3 + $0x328] sm:$0xff]
          %v5411 = vld [vmem:[#allocation3 + $0x330] sm:$0xff]
          %v5412 = vld [vmem:[#allocation3 + $0x338] sm:$0xff]
          %v5413 = vld [vmem:[#allocation3 + $0x340] sm:$0xff]
          %v5414 = vld [vmem:[#allocation3 + $0x348] sm:$0xff]
          %v5415 = vld [vmem:[#allocation3 + $0x350] sm:$0xff]
          %v5416 = vld [vmem:[#allocation3 + $0x358] sm:$0xff]
          %v5417 = vld [vmem:[#allocation3 + $0x360] sm:$0xff]
          %v5418 = vld [vmem:[#allocation3 + $0x368] sm:$0xff]
          %v5419 = vld [vmem:[#allocation3 + $0x370] sm:$0xff]
          %v5420 = vld [vmem:[#allocation3 + $0x378] sm:$0xff]
          %v5421 = vld [vmem:[#allocation3 + $0x380] sm:$0xff]
          %v5422 = vld [vmem:[#allocation3 + $0x388] sm:$0xff]
          %v5423 = vld [vmem:[#allocation3 + $0x390] sm:$0xff]
          %v5424 = vld [vmem:[#allocation3 + $0x398] sm:$0xff]
          %v5425 = vld [vmem:[#allocation3 + $0x3a0] sm:$0xff]
          %v5426 = vld [vmem:[#allocation3 + $0x3a8] sm:$0xff]
          %v5427 = vld [vmem:[#allocation3 + $0x3b0] sm:$0xff]
          %v5428 = vld [vmem:[#allocation3 + $0x3b8] sm:$0xff]
          %v5429 = vld [vmem:[#allocation3 + $0x3c0] sm:$0xff]
          %v5430 = vld [vmem:[#allocation3 + $0x3c8] sm:$0xff]
          %v5431 = vld [vmem:[#allocation3 + $0x3d0] sm:$0xff]
          %v5432 = vld [vmem:[#allocation3 + $0x3d8] sm:$0xff]
          %v5433 = vld [vmem:[#allocation3 + $0x3e0] sm:$0xff]
          %v5434 = vld [vmem:[#allocation3 + $0x3e8] sm:$0xff]
          %v5435 = vld [vmem:[#allocation3 + $0x3f0] sm:$0xff]
          %v5436 = vld [vmem:[#allocation3 + $0x3f8] sm:$0xff]
          %5437 = vmax.xlane.f32.xlu0 %v5309
          %v5438 = vpop.xlane.xlu0 %5437
          %5439 = vmax.xlane.f32.xlu0 %v5310
          %v5440 = vpop.xlane.xlu0 %5439
          %5441 = vmax.xlane.f32.xlu0 %v5311
          %v5442 = vpop.xlane.xlu0 %5441
          %5443 = vmax.xlane.f32.xlu0 %v5312
          %v5444 = vpop.xlane.xlu0 %5443
          %5445 = vmax.xlane.f32.xlu0 %v5313
          %v5446 = vpop.xlane.xlu0 %5445
          %5447 = vmax.xlane.f32.xlu0 %v5314
          %v5448 = vpop.xlane.xlu0 %5447
          %5449 = vmax.xlane.f32.xlu0 %v5315
          %v5450 = vpop.xlane.xlu0 %5449
          %5451 = vmax.xlane.f32.xlu0 %v5316
          %v5452 = vpop.xlane.xlu0 %5451
          %5453 = vmax.xlane.f32.xlu0 %v5317
          %v5454 = vpop.xlane.xlu0 %5453
          %5455 = vmax.xlane.f32.xlu0 %v5318
          %v5456 = vpop.xlane.xlu0 %5455
          %5457 = vmax.xlane.f32.xlu0 %v5319
          %v5458 = vpop.xlane.xlu0 %5457
          %5459 = vmax.xlane.f32.xlu0 %v5320
          %v5460 = vpop.xlane.xlu0 %5459
          %5461 = vmax.xlane.f32.xlu0 %v5321
          %v5462 = vpop.xlane.xlu0 %5461
          %5463 = vmax.xlane.f32.xlu0 %v5322
          %v5464 = vpop.xlane.xlu0 %5463
          %5465 = vmax.xlane.f32.xlu0 %v5323
          %v5466 = vpop.xlane.xlu0 %5465
          %5467 = vmax.xlane.f32.xlu0 %v5324
          %v5468 = vpop.xlane.xlu0 %5467
          %5469 = vmax.xlane.f32.xlu0 %v5325
          %v5470 = vpop.xlane.xlu0 %5469
          %5471 = vmax.xlane.f32.xlu0 %v5326
          %v5472 = vpop.xlane.xlu0 %5471
          %5473 = vmax.xlane.f32.xlu0 %v5327
          %v5474 = vpop.xlane.xlu0 %5473
          %5475 = vmax.xlane.f32.xlu0 %v5328
          %v5476 = vpop.xlane.xlu0 %5475
          %5477 = vmax.xlane.f32.xlu0 %v5329
          %v5478 = vpop.xlane.xlu0 %5477
          %5479 = vmax.xlane.f32.xlu0 %v5330
          %v5480 = vpop.xlane.xlu0 %5479
          %5481 = vmax.xlane.f32.xlu0 %v5331
          %v5482 = vpop.xlane.xlu0 %5481
          %5483 = vmax.xlane.f32.xlu0 %v5332
          %v5484 = vpop.xlane.xlu0 %5483
          %5485 = vmax.xlane.f32.xlu0 %v5333
          %v5486 = vpop.xlane.xlu0 %5485
          %5487 = vmax.xlane.f32.xlu0 %v5334
          %v5488 = vpop.xlane.xlu0 %5487
          %5489 = vmax.xlane.f32.xlu0 %v5335
          %v5490 = vpop.xlane.xlu0 %5489
          %5491 = vmax.xlane.f32.xlu0 %v5336
          %v5492 = vpop.xlane.xlu0 %5491
          %5493 = vmax.xlane.f32.xlu0 %v5337
          %v5494 = vpop.xlane.xlu0 %5493
          %5495 = vmax.xlane.f32.xlu0 %v5338
          %v5496 = vpop.xlane.xlu0 %5495
          %5497 = vmax.xlane.f32.xlu0 %v5339
          %v5498 = vpop.xlane.xlu0 %5497
          %5499 = vmax.xlane.f32.xlu0 %v5340
          %v5500 = vpop.xlane.xlu0 %5499
          %5501 = vmax.xlane.f32.xlu0 %v5341
          %v5502 = vpop.xlane.xlu0 %5501
          %5503 = vmax.xlane.f32.xlu0 %v5342
          %v5504 = vpop.xlane.xlu0 %5503
          %5505 = vmax.xlane.f32.xlu0 %v5343
          %v5506 = vpop.xlane.xlu0 %5505
          %5507 = vmax.xlane.f32.xlu0 %v5344
          %v5508 = vpop.xlane.xlu0 %5507
          %5509 = vmax.xlane.f32.xlu0 %v5345
          %v5510 = vpop.xlane.xlu0 %5509
          %5511 = vmax.xlane.f32.xlu0 %v5346
          %v5512 = vpop.xlane.xlu0 %5511
          %5513 = vmax.xlane.f32.xlu0 %v5347
          %v5514 = vpop.xlane.xlu0 %5513
          %5515 = vmax.xlane.f32.xlu0 %v5348
          %v5516 = vpop.xlane.xlu0 %5515
          %5517 = vmax.xlane.f32.xlu0 %v5349
          %v5518 = vpop.xlane.xlu0 %5517
          %5519 = vmax.xlane.f32.xlu0 %v5350
          %v5520 = vpop.xlane.xlu0 %5519
          %5521 = vmax.xlane.f32.xlu0 %v5351
          %v5522 = vpop.xlane.xlu0 %5521
          %5523 = vmax.xlane.f32.xlu0 %v5352
          %v5524 = vpop.xlane.xlu0 %5523
          %5525 = vmax.xlane.f32.xlu0 %v5353
          %v5526 = vpop.xlane.xlu0 %5525
          %5527 = vmax.xlane.f32.xlu0 %v5354
          %v5528 = vpop.xlane.xlu0 %5527
          %5529 = vmax.xlane.f32.xlu0 %v5355
          %v5530 = vpop.xlane.xlu0 %5529
          %5531 = vmax.xlane.f32.xlu0 %v5356
          %v5532 = vpop.xlane.xlu0 %5531
          %5533 = vmax.xlane.f32.xlu0 %v5357
          %v5534 = vpop.xlane.xlu0 %5533
          %5535 = vmax.xlane.f32.xlu0 %v5358
          %v5536 = vpop.xlane.xlu0 %5535
          %5537 = vmax.xlane.f32.xlu0 %v5359
          %v5538 = vpop.xlane.xlu0 %5537
          %5539 = vmax.xlane.f32.xlu0 %v5360
          %v5540 = vpop.xlane.xlu0 %5539
          %5541 = vmax.xlane.f32.xlu0 %v5361
          %v5542 = vpop.xlane.xlu0 %5541
          %5543 = vmax.xlane.f32.xlu0 %v5362
          %v5544 = vpop.xlane.xlu0 %5543
          %5545 = vmax.xlane.f32.xlu0 %v5363
          %v5546 = vpop.xlane.xlu0 %5545
          %5547 = vmax.xlane.f32.xlu0 %v5364
          %v5548 = vpop.xlane.xlu0 %5547
          %5549 = vmax.xlane.f32.xlu0 %v5365
          %v5550 = vpop.xlane.xlu0 %5549
          %5551 = vmax.xlane.f32.xlu0 %v5366
          %v5552 = vpop.xlane.xlu0 %5551
          %5553 = vmax.xlane.f32.xlu0 %v5367
          %v5554 = vpop.xlane.xlu0 %5553
          %5555 = vmax.xlane.f32.xlu0 %v5368
          %v5556 = vpop.xlane.xlu0 %5555
          %5557 = vmax.xlane.f32.xlu0 %v5369
          %v5558 = vpop.xlane.xlu0 %5557
          %5559 = vmax.xlane.f32.xlu0 %v5370
          %v5560 = vpop.xlane.xlu0 %5559
          %5561 = vmax.xlane.f32.xlu0 %v5371
          %v5562 = vpop.xlane.xlu0 %5561
          %5563 = vmax.xlane.f32.xlu0 %v5372
          %v5564 = vpop.xlane.xlu0 %5563
          %5565 = vmax.xlane.f32.xlu0 %v5373
          %v5566 = vpop.xlane.xlu0 %5565
          %5567 = vmax.xlane.f32.xlu0 %v5374
          %v5568 = vpop.xlane.xlu0 %5567
          %5569 = vmax.xlane.f32.xlu0 %v5375
          %v5570 = vpop.xlane.xlu0 %5569
          %5571 = vmax.xlane.f32.xlu0 %v5376
          %v5572 = vpop.xlane.xlu0 %5571
          %5573 = vmax.xlane.f32.xlu0 %v5377
          %v5574 = vpop.xlane.xlu0 %5573
          %5575 = vmax.xlane.f32.xlu0 %v5378
          %v5576 = vpop.xlane.xlu0 %5575
          %5577 = vmax.xlane.f32.xlu0 %v5379
          %v5578 = vpop.xlane.xlu0 %5577
          %5579 = vmax.xlane.f32.xlu0 %v5380
          %v5580 = vpop.xlane.xlu0 %5579
          %5581 = vmax.xlane.f32.xlu0 %v5381
          %v5582 = vpop.xlane.xlu0 %5581
          %5583 = vmax.xlane.f32.xlu0 %v5382
          %v5584 = vpop.xlane.xlu0 %5583
          %5585 = vmax.xlane.f32.xlu0 %v5383
          %v5586 = vpop.xlane.xlu0 %5585
          %5587 = vmax.xlane.f32.xlu0 %v5384
          %v5588 = vpop.xlane.xlu0 %5587
          %5589 = vmax.xlane.f32.xlu0 %v5385
          %v5590 = vpop.xlane.xlu0 %5589
          %5591 = vmax.xlane.f32.xlu0 %v5386
          %v5592 = vpop.xlane.xlu0 %5591
          %5593 = vmax.xlane.f32.xlu0 %v5387
          %v5594 = vpop.xlane.xlu0 %5593
          %5595 = vmax.xlane.f32.xlu0 %v5388
          %v5596 = vpop.xlane.xlu0 %5595
          %5597 = vmax.xlane.f32.xlu0 %v5389
          %v5598 = vpop.xlane.xlu0 %5597
          %5599 = vmax.xlane.f32.xlu0 %v5390
          %v5600 = vpop.xlane.xlu0 %5599
          %5601 = vmax.xlane.f32.xlu0 %v5391
          %v5602 = vpop.xlane.xlu0 %5601
          %5603 = vmax.xlane.f32.xlu0 %v5392
          %v5604 = vpop.xlane.xlu0 %5603
          %5605 = vmax.xlane.f32.xlu0 %v5393
          %v5606 = vpop.xlane.xlu0 %5605
          %5607 = vmax.xlane.f32.xlu0 %v5394
          %v5608 = vpop.xlane.xlu0 %5607
          %5609 = vmax.xlane.f32.xlu0 %v5395
          %v5610 = vpop.xlane.xlu0 %5609
          %5611 = vmax.xlane.f32.xlu0 %v5396
          %v5612 = vpop.xlane.xlu0 %5611
          %5613 = vmax.xlane.f32.xlu0 %v5397
          %v5614 = vpop.xlane.xlu0 %5613
          %5615 = vmax.xlane.f32.xlu0 %v5398
          %v5616 = vpop.xlane.xlu0 %5615
          %5617 = vmax.xlane.f32.xlu0 %v5399
          %v5618 = vpop.xlane.xlu0 %5617
          %5619 = vmax.xlane.f32.xlu0 %v5400
          %v5620 = vpop.xlane.xlu0 %5619
          %5621 = vmax.xlane.f32.xlu0 %v5401
          %v5622 = vpop.xlane.xlu0 %5621
          %5623 = vmax.xlane.f32.xlu0 %v5402
          %v5624 = vpop.xlane.xlu0 %5623
          %5625 = vmax.xlane.f32.xlu0 %v5403
          %v5626 = vpop.xlane.xlu0 %5625
          %5627 = vmax.xlane.f32.xlu0 %v5404
          %v5628 = vpop.xlane.xlu0 %5627
          %5629 = vmax.xlane.f32.xlu0 %v5405
          %v5630 = vpop.xlane.xlu0 %5629
          %5631 = vmax.xlane.f32.xlu0 %v5406
          %v5632 = vpop.xlane.xlu0 %5631
          %5633 = vmax.xlane.f32.xlu0 %v5407
          %v5634 = vpop.xlane.xlu0 %5633
          %5635 = vmax.xlane.f32.xlu0 %v5408
          %v5636 = vpop.xlane.xlu0 %5635
          %5637 = vmax.xlane.f32.xlu0 %v5409
          %v5638 = vpop.xlane.xlu0 %5637
          %5639 = vmax.xlane.f32.xlu0 %v5410
          %v5640 = vpop.xlane.xlu0 %5639
          %5641 = vmax.xlane.f32.xlu0 %v5411
          %v5642 = vpop.xlane.xlu0 %5641
          %5643 = vmax.xlane.f32.xlu0 %v5412
          %v5644 = vpop.xlane.xlu0 %5643
          %5645 = vmax.xlane.f32.xlu0 %v5413
          %v5646 = vpop.xlane.xlu0 %5645
          %5647 = vmax.xlane.f32.xlu0 %v5414
          %v5648 = vpop.xlane.xlu0 %5647
          %5649 = vmax.xlane.f32.xlu0 %v5415
          %v5650 = vpop.xlane.xlu0 %5649
          %5651 = vmax.xlane.f32.xlu0 %v5416
          %v5652 = vpop.xlane.xlu0 %5651
          %5653 = vmax.xlane.f32.xlu0 %v5417
          %v5654 = vpop.xlane.xlu0 %5653
          %5655 = vmax.xlane.f32.xlu0 %v5418
          %v5656 = vpop.xlane.xlu0 %5655
          %5657 = vmax.xlane.f32.xlu0 %v5419
          %v5658 = vpop.xlane.xlu0 %5657
          %5659 = vmax.xlane.f32.xlu0 %v5420
          %v5660 = vpop.xlane.xlu0 %5659
          %5661 = vmax.xlane.f32.xlu0 %v5421
          %v5662 = vpop.xlane.xlu0 %5661
          %5663 = vmax.xlane.f32.xlu0 %v5422
          %v5664 = vpop.xlane.xlu0 %5663
          %5665 = vmax.xlane.f32.xlu0 %v5423
          %v5666 = vpop.xlane.xlu0 %5665
          %5667 = vmax.xlane.f32.xlu0 %v5424
          %v5668 = vpop.xlane.xlu0 %5667
          %5669 = vmax.xlane.f32.xlu0 %v5425
          %v5670 = vpop.xlane.xlu0 %5669
          %5671 = vmax.xlane.f32.xlu0 %v5426
          %v5672 = vpop.xlane.xlu0 %5671
          %5673 = vmax.xlane.f32.xlu0 %v5427
          %v5674 = vpop.xlane.xlu0 %5673
          %5675 = vmax.xlane.f32.xlu0 %v5428
          %v5676 = vpop.xlane.xlu0 %5675
          %5677 = vmax.xlane.f32.xlu0 %v5429
          %v5678 = vpop.xlane.xlu0 %5677
          %5679 = vmax.xlane.f32.xlu0 %v5430
          %v5680 = vpop.xlane.xlu0 %5679
          %5681 = vmax.xlane.f32.xlu0 %v5431
          %v5682 = vpop.xlane.xlu0 %5681
          %5683 = vmax.xlane.f32.xlu0 %v5432
          %v5684 = vpop.xlane.xlu0 %5683
          %5685 = vmax.xlane.f32.xlu0 %v5433
          %v5686 = vpop.xlane.xlu0 %5685
          %5687 = vmax.xlane.f32.xlu0 %v5434
          %v5688 = vpop.xlane.xlu0 %5687
          %5689 = vmax.xlane.f32.xlu0 %v5435
          %v5690 = vpop.xlane.xlu0 %5689
          %5691 = vmax.xlane.f32.xlu0 %v5436
          %v5692 = vpop.xlane.xlu0 %5691
          %v5693 = vld [vmem:[#allocation8] sm:$0xff]
          %v5694 = vld [vmem:[#allocation8 + $0x8] sm:$0xff]
          %v5695 = vld [vmem:[#allocation8 + $0x10] sm:$0xff]
          %v5696 = vld [vmem:[#allocation8 + $0x18] sm:$0xff]
          %v5697 = vld [vmem:[#allocation8 + $0x20] sm:$0xff]
          %v5698 = vld [vmem:[#allocation8 + $0x28] sm:$0xff]
          %v5699 = vld [vmem:[#allocation8 + $0x30] sm:$0xff]
          %v5700 = vld [vmem:[#allocation8 + $0x38] sm:$0xff]
          %v5701 = vld [vmem:[#allocation8 + $0x40] sm:$0xff]
          %v5702 = vld [vmem:[#allocation8 + $0x48] sm:$0xff]
          %v5703 = vld [vmem:[#allocation8 + $0x50] sm:$0xff]
          %v5704 = vld [vmem:[#allocation8 + $0x58] sm:$0xff]
          %v5705 = vld [vmem:[#allocation8 + $0x60] sm:$0xff]
          %v5706 = vld [vmem:[#allocation8 + $0x68] sm:$0xff]
          %v5707 = vld [vmem:[#allocation8 + $0x70] sm:$0xff]
          %v5708 = vld [vmem:[#allocation8 + $0x78] sm:$0xff]
          %v5709 = vld [vmem:[#allocation8 + $0x80] sm:$0xff]
          %v5710 = vld [vmem:[#allocation8 + $0x88] sm:$0xff]
          %v5711 = vld [vmem:[#allocation8 + $0x90] sm:$0xff]
          %v5712 = vld [vmem:[#allocation8 + $0x98] sm:$0xff]
          %v5713 = vld [vmem:[#allocation8 + $0xa0] sm:$0xff]
          %v5714 = vld [vmem:[#allocation8 + $0xa8] sm:$0xff]
          %v5715 = vld [vmem:[#allocation8 + $0xb0] sm:$0xff]
          %v5716 = vld [vmem:[#allocation8 + $0xb8] sm:$0xff]
          %v5717 = vld [vmem:[#allocation8 + $0xc0] sm:$0xff]
          %v5718 = vld [vmem:[#allocation8 + $0xc8] sm:$0xff]
          %v5719 = vld [vmem:[#allocation8 + $0xd0] sm:$0xff]
          %v5720 = vld [vmem:[#allocation8 + $0xd8] sm:$0xff]
          %v5721 = vld [vmem:[#allocation8 + $0xe0] sm:$0xff]
          %v5722 = vld [vmem:[#allocation8 + $0xe8] sm:$0xff]
          %v5723 = vld [vmem:[#allocation8 + $0xf0] sm:$0xff]
          %v5724 = vld [vmem:[#allocation8 + $0xf8] sm:$0xff]
          %v5725 = vld [vmem:[#allocation9] sm:$0xff]
          %v5726 = vld [vmem:[#allocation9 + $0x8] sm:$0xff]
          %v5727 = vld [vmem:[#allocation9 + $0x10] sm:$0xff]
          %v5728 = vld [vmem:[#allocation9 + $0x18] sm:$0xff]
          %v5729 = vld [vmem:[#allocation9 + $0x20] sm:$0xff]
          %v5730 = vld [vmem:[#allocation9 + $0x28] sm:$0xff]
          %v5731 = vld [vmem:[#allocation9 + $0x30] sm:$0xff]
          %v5732 = vld [vmem:[#allocation9 + $0x38] sm:$0xff]
          %v5733 = vld [vmem:[#allocation9 + $0x40] sm:$0xff]
          %v5734 = vld [vmem:[#allocation9 + $0x48] sm:$0xff]
          %v5735 = vld [vmem:[#allocation9 + $0x50] sm:$0xff]
          %v5736 = vld [vmem:[#allocation9 + $0x58] sm:$0xff]
          %v5737 = vld [vmem:[#allocation9 + $0x60] sm:$0xff]
          %v5738 = vld [vmem:[#allocation9 + $0x68] sm:$0xff]
          %v5739 = vld [vmem:[#allocation9 + $0x70] sm:$0xff]
          %v5740 = vld [vmem:[#allocation9 + $0x78] sm:$0xff]
          %v5741 = vld [vmem:[#allocation9 + $0x80] sm:$0xff]
          %v5742 = vld [vmem:[#allocation9 + $0x88] sm:$0xff]
          %v5743 = vld [vmem:[#allocation9 + $0x90] sm:$0xff]
          %v5744 = vld [vmem:[#allocation9 + $0x98] sm:$0xff]
          %v5745 = vld [vmem:[#allocation9 + $0xa0] sm:$0xff]
          %v5746 = vld [vmem:[#allocation9 + $0xa8] sm:$0xff]
          %v5747 = vld [vmem:[#allocation9 + $0xb0] sm:$0xff]
          %v5748 = vld [vmem:[#allocation9 + $0xb8] sm:$0xff]
          %v5749 = vld [vmem:[#allocation9 + $0xc0] sm:$0xff]
          %v5750 = vld [vmem:[#allocation9 + $0xc8] sm:$0xff]
          %v5751 = vld [vmem:[#allocation9 + $0xd0] sm:$0xff]
          %v5752 = vld [vmem:[#allocation9 + $0xd8] sm:$0xff]
          %v5753 = vld [vmem:[#allocation9 + $0xe0] sm:$0xff]
          %v5754 = vld [vmem:[#allocation9 + $0xe8] sm:$0xff]
          %v5755 = vld [vmem:[#allocation9 + $0xf0] sm:$0xff]
          %v5756 = vld [vmem:[#allocation9 + $0xf8] sm:$0xff]
          %v5885 = vlaneseq
          %v5886 = vand.u32 %v5885, 127
          %v5887 = vlaneseq
          %v5888 = vshrl.u32 %v5887, 7
          %v5889 = vsub.s32 %v5886, %v5888
          %v5890 = vrot.slane %v5438, %v5889
          %v5891 = vadd.s32 %v5886, 4294967288
          %v5892 = vlaneseq
          %v5893 = vshrl.u32 %v5892, 7
          %v5894 = vsub.s32 %v5891, %v5893
          %v5895 = vrot.slane %v5440, %v5894
          %vm5896 = vcmask 130112
          %v5897 = vsel %vm5896, %v5895, %v5890
          %v5898 = vadd.s32 %v5886, 4294967280
          %v5899 = vlaneseq
          %v5900 = vshrl.u32 %v5899, 7
          %v5901 = vsub.s32 %v5898, %v5900
          %v5902 = vrot.slane %v5442, %v5901
          %vm5903 = vcmask 195712
          %v5904 = vsel %vm5903, %v5902, %v5897
          %v5905 = vadd.s32 %v5886, 4294967272
          %v5906 = vlaneseq
          %v5907 = vshrl.u32 %v5906, 7
          %v5908 = vsub.s32 %v5905, %v5907
          %v5909 = vrot.slane %v5444, %v5908
          %vm5910 = vcmask 261312
          %v5911 = vsel %vm5910, %v5909, %v5904
          %v5912 = vadd.s32 %v5886, 4294967264
          %v5913 = vlaneseq
          %v5914 = vshrl.u32 %v5913, 7
          %v5915 = vsub.s32 %v5912, %v5914
          %v5916 = vrot.slane %v5446, %v5915
          %vm5917 = vcmask 326912
          %v5918 = vsel %vm5917, %v5916, %v5911
          %v5919 = vadd.s32 %v5886, 4294967256
          %v5920 = vlaneseq
          %v5921 = vshrl.u32 %v5920, 7
          %v5922 = vsub.s32 %v5919, %v5921
          %v5923 = vrot.slane %v5448, %v5922
          %vm5924 = vcmask 392512
          %v5925 = vsel %vm5924, %v5923, %v5918
          %v5926 = vadd.s32 %v5886, 4294967248
          %v5927 = vlaneseq
          %v5928 = vshrl.u32 %v5927, 7
          %v5929 = vsub.s32 %v5926, %v5928
          %v5930 = vrot.slane %v5450, %v5929
          %vm5931 = vcmask 458112
          %v5932 = vsel %vm5931, %v5930, %v5925
          %v5933 = vadd.s32 %v5886, 4294967240
          %v5934 = vlaneseq
          %v5935 = vshrl.u32 %v5934, 7
          %v5936 = vsub.s32 %v5933, %v5935
          %v5937 = vrot.slane %v5452, %v5936
          %vm5938 = vcmask 523712
          %v5939 = vsel %vm5938, %v5937, %v5932
          %v5940 = vadd.s32 %v5886, 4294967232
          %v5941 = vlaneseq
          %v5942 = vshrl.u32 %v5941, 7
          %v5943 = vsub.s32 %v5940, %v5942
          %v5944 = vrot.slane %v5454, %v5943
          %vm5945 = vcmask 589312
          %v5946 = vsel %vm5945, %v5944, %v5939
          %v5947 = vadd.s32 %v5886, 4294967224
          %v5948 = vlaneseq
          %v5949 = vshrl.u32 %v5948, 7
          %v5950 = vsub.s32 %v5947, %v5949
          %v5951 = vrot.slane %v5456, %v5950
          %vm5952 = vcmask 654912
          %v5953 = vsel %vm5952, %v5951, %v5946
          %v5954 = vadd.s32 %v5886, 4294967216
          %v5955 = vlaneseq
          %v5956 = vshrl.u32 %v5955, 7
          %v5957 = vsub.s32 %v5954, %v5956
          %v5958 = vrot.slane %v5458, %v5957
          %vm5959 = vcmask 720512
          %v5960 = vsel %vm5959, %v5958, %v5953
          %v5961 = vadd.s32 %v5886, 4294967208
          %v5962 = vlaneseq
          %v5963 = vshrl.u32 %v5962, 7
          %v5964 = vsub.s32 %v5961, %v5963
          %v5965 = vrot.slane %v5460, %v5964
          %vm5966 = vcmask 786112
          %v5967 = vsel %vm5966, %v5965, %v5960
          %v5968 = vadd.s32 %v5886, 4294967200
          %v5969 = vlaneseq
          %v5970 = vshrl.u32 %v5969, 7
          %v5971 = vsub.s32 %v5968, %v5970
          %v5972 = vrot.slane %v5462, %v5971
          %vm5973 = vcmask 851712
          %v5974 = vsel %vm5973, %v5972, %v5967
          %v5975 = vadd.s32 %v5886, 4294967192
          %v5976 = vlaneseq
          %v5977 = vshrl.u32 %v5976, 7
          %v5978 = vsub.s32 %v5975, %v5977
          %v5979 = vrot.slane %v5464, %v5978
          %vm5980 = vcmask 917312
          %v5981 = vsel %vm5980, %v5979, %v5974
          %v5982 = vadd.s32 %v5886, 4294967184
          %v5983 = vlaneseq
          %v5984 = vshrl.u32 %v5983, 7
          %v5985 = vsub.s32 %v5982, %v5984
          %v5986 = vrot.slane %v5466, %v5985
          %vm5987 = vcmask 982912
          %v5988 = vsel %vm5987, %v5986, %v5981
          %v5989 = vadd.s32 %v5886, 4294967176
          %v5990 = vlaneseq
          %v5991 = vshrl.u32 %v5990, 7
          %v5992 = vsub.s32 %v5989, %v5991
          %v5993 = vrot.slane %v5468, %v5992
          %vm5994 = vcmask 1048512
          %v5995 = vsel %vm5994, %v5993, %v5988
          %v5996 = vlaneseq
          %v5997 = vshrl.u32 %v5996, 7
          %v5998 = vsub.s32 %v5886, %v5997
          %v5999 = vrot.slane %v5470, %v5998
          %v6000 = vlaneseq
          %v6001 = vshrl.u32 %v6000, 7
          %v6002 = vsub.s32 %v5891, %v6001
          %v6003 = vrot.slane %v5472, %v6002
          %v6004 = vsel %vm5896, %v6003, %v5999
          %v6005 = vlaneseq
          %v6006 = vshrl.u32 %v6005, 7
          %v6007 = vsub.s32 %v5898, %v6006
          %v6008 = vrot.slane %v5474, %v6007
          %v6009 = vsel %vm5903, %v6008, %v6004
          %v6010 = vlaneseq
          %v6011 = vshrl.u32 %v6010, 7
          %v6012 = vsub.s32 %v5905, %v6011
          %v6013 = vrot.slane %v5476, %v6012
          %v6014 = vsel %vm5910, %v6013, %v6009
          %v6015 = vlaneseq
          %v6016 = vshrl.u32 %v6015, 7
          %v6017 = vsub.s32 %v5912, %v6016
          %v6018 = vrot.slane %v5478, %v6017
          %v6019 = vsel %vm5917, %v6018, %v6014
          %v6020 = vlaneseq
          %v6021 = vshrl.u32 %v6020, 7
          %v6022 = vsub.s32 %v5919, %v6021
          %v6023 = vrot.slane %v5480, %v6022
          %v6024 = vsel %vm5924, %v6023, %v6019
          %v6025 = vlaneseq
          %v6026 = vshrl.u32 %v6025, 7
          %v6027 = vsub.s32 %v5926, %v6026
          %v6028 = vrot.slane %v5482, %v6027
          %v6029 = vsel %vm5931, %v6028, %v6024
          %v6030 = vlaneseq
          %v6031 = vshrl.u32 %v6030, 7
          %v6032 = vsub.s32 %v5933, %v6031
          %v6033 = vrot.slane %v5484, %v6032
          %v6034 = vsel %vm5938, %v6033, %v6029
          %v6035 = vlaneseq
          %v6036 = vshrl.u32 %v6035, 7
          %v6037 = vsub.s32 %v5940, %v6036
          %v6038 = vrot.slane %v5486, %v6037
          %v6039 = vsel %vm5945, %v6038, %v6034
          %v6040 = vlaneseq
          %v6041 = vshrl.u32 %v6040, 7
          %v6042 = vsub.s32 %v5947, %v6041
          %v6043 = vrot.slane %v5488, %v6042
          %v6044 = vsel %vm5952, %v6043, %v6039
          %v6045 = vlaneseq
          %v6046 = vshrl.u32 %v6045, 7
          %v6047 = vsub.s32 %v5954, %v6046
          %v6048 = vrot.slane %v5490, %v6047
          %v6049 = vsel %vm5959, %v6048, %v6044
          %v6050 = vlaneseq
          %v6051 = vshrl.u32 %v6050, 7
          %v6052 = vsub.s32 %v5961, %v6051
          %v6053 = vrot.slane %v5492, %v6052
          %v6054 = vsel %vm5966, %v6053, %v6049
          %v6055 = vlaneseq
          %v6056 = vshrl.u32 %v6055, 7
          %v6057 = vsub.s32 %v5968, %v6056
          %v6058 = vrot.slane %v5494, %v6057
          %v6059 = vsel %vm5973, %v6058, %v6054
          %v6060 = vlaneseq
          %v6061 = vshrl.u32 %v6060, 7
          %v6062 = vsub.s32 %v5975, %v6061
          %v6063 = vrot.slane %v5496, %v6062
          %v6064 = vsel %vm5980, %v6063, %v6059
          %v6065 = vlaneseq
          %v6066 = vshrl.u32 %v6065, 7
          %v6067 = vsub.s32 %v5982, %v6066
          %v6068 = vrot.slane %v5498, %v6067
          %v6069 = vsel %vm5987, %v6068, %v6064
          %v6070 = vlaneseq
          %v6071 = vshrl.u32 %v6070, 7
          %v6072 = vsub.s32 %v5989, %v6071
          %v6073 = vrot.slane %v5500, %v6072
          %v6074 = vsel %vm5994, %v6073, %v6069
          %v6075 = vlaneseq
          %v6076 = vshrl.u32 %v6075, 7
          %v6077 = vsub.s32 %v5886, %v6076
          %v6078 = vrot.slane %v5502, %v6077
          %v6079 = vlaneseq
          %v6080 = vshrl.u32 %v6079, 7
          %v6081 = vsub.s32 %v5891, %v6080
          %v6082 = vrot.slane %v5504, %v6081
          %v6083 = vsel %vm5896, %v6082, %v6078
          %v6084 = vlaneseq
          %v6085 = vshrl.u32 %v6084, 7
          %v6086 = vsub.s32 %v5898, %v6085
          %v6087 = vrot.slane %v5506, %v6086
          %v6088 = vsel %vm5903, %v6087, %v6083
          %v6089 = vlaneseq
          %v6090 = vshrl.u32 %v6089, 7
          %v6091 = vsub.s32 %v5905, %v6090
          %v6092 = vrot.slane %v5508, %v6091
          %v6093 = vsel %vm5910, %v6092, %v6088
          %v6094 = vlaneseq
          %v6095 = vshrl.u32 %v6094, 7
          %v6096 = vsub.s32 %v5912, %v6095
          %v6097 = vrot.slane %v5510, %v6096
          %v6098 = vsel %vm5917, %v6097, %v6093
          %v6099 = vlaneseq
          %v6100 = vshrl.u32 %v6099, 7
          %v6101 = vsub.s32 %v5919, %v6100
          %v6102 = vrot.slane %v5512, %v6101
          %v6103 = vsel %vm5924, %v6102, %v6098
          %v6104 = vlaneseq
          %v6105 = vshrl.u32 %v6104, 7
          %v6106 = vsub.s32 %v5926, %v6105
          %v6107 = vrot.slane %v5514, %v6106
          %v6108 = vsel %vm5931, %v6107, %v6103
          %v6109 = vlaneseq
          %v6110 = vshrl.u32 %v6109, 7
          %v6111 = vsub.s32 %v5933, %v6110
          %v6112 = vrot.slane %v5516, %v6111
          %v6113 = vsel %vm5938, %v6112, %v6108
          %v6114 = vlaneseq
          %v6115 = vshrl.u32 %v6114, 7
          %v6116 = vsub.s32 %v5940, %v6115
          %v6117 = vrot.slane %v5518, %v6116
          %v6118 = vsel %vm5945, %v6117, %v6113
          %v6119 = vlaneseq
          %v6120 = vshrl.u32 %v6119, 7
          %v6121 = vsub.s32 %v5947, %v6120
          %v6122 = vrot.slane %v5520, %v6121
          %v6123 = vsel %vm5952, %v6122, %v6118
          %v6124 = vlaneseq
          %v6125 = vshrl.u32 %v6124, 7
          %v6126 = vsub.s32 %v5954, %v6125
          %v6127 = vrot.slane %v5522, %v6126
          %v6128 = vsel %vm5959, %v6127, %v6123
          %v6129 = vlaneseq
          %v6130 = vshrl.u32 %v6129, 7
          %v6131 = vsub.s32 %v5961, %v6130
          %v6132 = vrot.slane %v5524, %v6131
          %v6133 = vsel %vm5966, %v6132, %v6128
          %v6134 = vlaneseq
          %v6135 = vshrl.u32 %v6134, 7
          %v6136 = vsub.s32 %v5968, %v6135
          %v6137 = vrot.slane %v5526, %v6136
          %v6138 = vsel %vm5973, %v6137, %v6133
          %v6139 = vlaneseq
          %v6140 = vshrl.u32 %v6139, 7
          %v6141 = vsub.s32 %v5975, %v6140
          %v6142 = vrot.slane %v5528, %v6141
          %v6143 = vsel %vm5980, %v6142, %v6138
          %v6144 = vlaneseq
          %v6145 = vshrl.u32 %v6144, 7
          %v6146 = vsub.s32 %v5982, %v6145
          %v6147 = vrot.slane %v5530, %v6146
          %v6148 = vsel %vm5987, %v6147, %v6143
          %v6149 = vlaneseq
          %v6150 = vshrl.u32 %v6149, 7
          %v6151 = vsub.s32 %v5989, %v6150
          %v6152 = vrot.slane %v5532, %v6151
          %v6153 = vsel %vm5994, %v6152, %v6148
          %v6154 = vlaneseq
          %v6155 = vshrl.u32 %v6154, 7
          %v6156 = vsub.s32 %v5886, %v6155
          %v6157 = vrot.slane %v5534, %v6156
          %v6158 = vlaneseq
          %v6159 = vshrl.u32 %v6158, 7
          %v6160 = vsub.s32 %v5891, %v6159
          %v6161 = vrot.slane %v5536, %v6160
          %v6162 = vsel %vm5896, %v6161, %v6157
          %v6163 = vlaneseq
          %v6164 = vshrl.u32 %v6163, 7
          %v6165 = vsub.s32 %v5898, %v6164
          %v6166 = vrot.slane %v5538, %v6165
          %v6167 = vsel %vm5903, %v6166, %v6162
          %v6168 = vlaneseq
          %v6169 = vshrl.u32 %v6168, 7
          %v6170 = vsub.s32 %v5905, %v6169
          %v6171 = vrot.slane %v5540, %v6170
          %v6172 = vsel %vm5910, %v6171, %v6167
          %v6173 = vlaneseq
          %v6174 = vshrl.u32 %v6173, 7
          %v6175 = vsub.s32 %v5912, %v6174
          %v6176 = vrot.slane %v5542, %v6175
          %v6177 = vsel %vm5917, %v6176, %v6172
          %v6178 = vlaneseq
          %v6179 = vshrl.u32 %v6178, 7
          %v6180 = vsub.s32 %v5919, %v6179
          %v6181 = vrot.slane %v5544, %v6180
          %v6182 = vsel %vm5924, %v6181, %v6177
          %v6183 = vlaneseq
          %v6184 = vshrl.u32 %v6183, 7
          %v6185 = vsub.s32 %v5926, %v6184
          %v6186 = vrot.slane %v5546, %v6185
          %v6187 = vsel %vm5931, %v6186, %v6182
          %v6188 = vlaneseq
          %v6189 = vshrl.u32 %v6188, 7
          %v6190 = vsub.s32 %v5933, %v6189
          %v6191 = vrot.slane %v5548, %v6190
          %v6192 = vsel %vm5938, %v6191, %v6187
          %v6193 = vlaneseq
          %v6194 = vshrl.u32 %v6193, 7
          %v6195 = vsub.s32 %v5940, %v6194
          %v6196 = vrot.slane %v5550, %v6195
          %v6197 = vsel %vm5945, %v6196, %v6192
          %v6198 = vlaneseq
          %v6199 = vshrl.u32 %v6198, 7
          %v6200 = vsub.s32 %v5947, %v6199
          %v6201 = vrot.slane %v5552, %v6200
          %v6202 = vsel %vm5952, %v6201, %v6197
          %v6203 = vlaneseq
          %v6204 = vshrl.u32 %v6203, 7
          %v6205 = vsub.s32 %v5954, %v6204
          %v6206 = vrot.slane %v5554, %v6205
          %v6207 = vsel %vm5959, %v6206, %v6202
          %v6208 = vlaneseq
          %v6209 = vshrl.u32 %v6208, 7
          %v6210 = vsub.s32 %v5961, %v6209
          %v6211 = vrot.slane %v5556, %v6210
          %v6212 = vsel %vm5966, %v6211, %v6207
          %v6213 = vlaneseq
          %v6214 = vshrl.u32 %v6213, 7
          %v6215 = vsub.s32 %v5968, %v6214
          %v6216 = vrot.slane %v5558, %v6215
          %v6217 = vsel %vm5973, %v6216, %v6212
          %v6218 = vlaneseq
          %v6219 = vshrl.u32 %v6218, 7
          %v6220 = vsub.s32 %v5975, %v6219
          %v6221 = vrot.slane %v5560, %v6220
          %v6222 = vsel %vm5980, %v6221, %v6217
          %v6223 = vlaneseq
          %v6224 = vshrl.u32 %v6223, 7
          %v6225 = vsub.s32 %v5982, %v6224
          %v6226 = vrot.slane %v5562, %v6225
          %v6227 = vsel %vm5987, %v6226, %v6222
          %v6228 = vlaneseq
          %v6229 = vshrl.u32 %v6228, 7
          %v6230 = vsub.s32 %v5989, %v6229
          %v6231 = vrot.slane %v5564, %v6230
          %v6232 = vsel %vm5994, %v6231, %v6227
          %v6233 = vlaneseq
          %v6234 = vshrl.u32 %v6233, 7
          %v6235 = vsub.s32 %v5886, %v6234
          %v6236 = vrot.slane %v5566, %v6235
          %v6237 = vlaneseq
          %v6238 = vshrl.u32 %v6237, 7
          %v6239 = vsub.s32 %v5891, %v6238
          %v6240 = vrot.slane %v5568, %v6239
          %v6241 = vsel %vm5896, %v6240, %v6236
          %v6242 = vlaneseq
          %v6243 = vshrl.u32 %v6242, 7
          %v6244 = vsub.s32 %v5898, %v6243
          %v6245 = vrot.slane %v5570, %v6244
          %v6246 = vsel %vm5903, %v6245, %v6241
          %v6247 = vlaneseq
          %v6248 = vshrl.u32 %v6247, 7
          %v6249 = vsub.s32 %v5905, %v6248
          %v6250 = vrot.slane %v5572, %v6249
          %v6251 = vsel %vm5910, %v6250, %v6246
          %v6252 = vlaneseq
          %v6253 = vshrl.u32 %v6252, 7
          %v6254 = vsub.s32 %v5912, %v6253
          %v6255 = vrot.slane %v5574, %v6254
          %v6256 = vsel %vm5917, %v6255, %v6251
          %v6257 = vlaneseq
          %v6258 = vshrl.u32 %v6257, 7
          %v6259 = vsub.s32 %v5919, %v6258
          %v6260 = vrot.slane %v5576, %v6259
          %v6261 = vsel %vm5924, %v6260, %v6256
          %v6262 = vlaneseq
          %v6263 = vshrl.u32 %v6262, 7
          %v6264 = vsub.s32 %v5926, %v6263
          %v6265 = vrot.slane %v5578, %v6264
          %v6266 = vsel %vm5931, %v6265, %v6261
          %v6267 = vlaneseq
          %v6268 = vshrl.u32 %v6267, 7
          %v6269 = vsub.s32 %v5933, %v6268
          %v6270 = vrot.slane %v5580, %v6269
          %v6271 = vsel %vm5938, %v6270, %v6266
          %v6272 = vlaneseq
          %v6273 = vshrl.u32 %v6272, 7
          %v6274 = vsub.s32 %v5940, %v6273
          %v6275 = vrot.slane %v5582, %v6274
          %v6276 = vsel %vm5945, %v6275, %v6271
          %v6277 = vlaneseq
          %v6278 = vshrl.u32 %v6277, 7
          %v6279 = vsub.s32 %v5947, %v6278
          %v6280 = vrot.slane %v5584, %v6279
          %v6281 = vsel %vm5952, %v6280, %v6276
          %v6282 = vlaneseq
          %v6283 = vshrl.u32 %v6282, 7
          %v6284 = vsub.s32 %v5954, %v6283
          %v6285 = vrot.slane %v5586, %v6284
          %v6286 = vsel %vm5959, %v6285, %v6281
          %v6287 = vlaneseq
          %v6288 = vshrl.u32 %v6287, 7
          %v6289 = vsub.s32 %v5961, %v6288
          %v6290 = vrot.slane %v5588, %v6289
          %v6291 = vsel %vm5966, %v6290, %v6286
          %v6292 = vlaneseq
          %v6293 = vshrl.u32 %v6292, 7
          %v6294 = vsub.s32 %v5968, %v6293
          %v6295 = vrot.slane %v5590, %v6294
          %v6296 = vsel %vm5973, %v6295, %v6291
          %v6297 = vlaneseq
          %v6298 = vshrl.u32 %v6297, 7
          %v6299 = vsub.s32 %v5975, %v6298
          %v6300 = vrot.slane %v5592, %v6299
          %v6301 = vsel %vm5980, %v6300, %v6296
          %v6302 = vlaneseq
          %v6303 = vshrl.u32 %v6302, 7
          %v6304 = vsub.s32 %v5982, %v6303
          %v6305 = vrot.slane %v5594, %v6304
          %v6306 = vsel %vm5987, %v6305, %v6301
          %v6307 = vlaneseq
          %v6308 = vshrl.u32 %v6307, 7
          %v6309 = vsub.s32 %v5989, %v6308
          %v6310 = vrot.slane %v5596, %v6309
          %v6311 = vsel %vm5994, %v6310, %v6306
          %v6312 = vlaneseq
          %v6313 = vshrl.u32 %v6312, 7
          %v6314 = vsub.s32 %v5886, %v6313
          %v6315 = vrot.slane %v5598, %v6314
          %v6316 = vlaneseq
          %v6317 = vshrl.u32 %v6316, 7
          %v6318 = vsub.s32 %v5891, %v6317
          %v6319 = vrot.slane %v5600, %v6318
          %v6320 = vsel %vm5896, %v6319, %v6315
          %v6321 = vlaneseq
          %v6322 = vshrl.u32 %v6321, 7
          %v6323 = vsub.s32 %v5898, %v6322
          %v6324 = vrot.slane %v5602, %v6323
          %v6325 = vsel %vm5903, %v6324, %v6320
          %v6326 = vlaneseq
          %v6327 = vshrl.u32 %v6326, 7
          %v6328 = vsub.s32 %v5905, %v6327
          %v6329 = vrot.slane %v5604, %v6328
          %v6330 = vsel %vm5910, %v6329, %v6325
          %v6331 = vlaneseq
          %v6332 = vshrl.u32 %v6331, 7
          %v6333 = vsub.s32 %v5912, %v6332
          %v6334 = vrot.slane %v5606, %v6333
          %v6335 = vsel %vm5917, %v6334, %v6330
          %v6336 = vlaneseq
          %v6337 = vshrl.u32 %v6336, 7
          %v6338 = vsub.s32 %v5919, %v6337
          %v6339 = vrot.slane %v5608, %v6338
          %v6340 = vsel %vm5924, %v6339, %v6335
          %v6341 = vlaneseq
          %v6342 = vshrl.u32 %v6341, 7
          %v6343 = vsub.s32 %v5926, %v6342
          %v6344 = vrot.slane %v5610, %v6343
          %v6345 = vsel %vm5931, %v6344, %v6340
          %v6346 = vlaneseq
          %v6347 = vshrl.u32 %v6346, 7
          %v6348 = vsub.s32 %v5933, %v6347
          %v6349 = vrot.slane %v5612, %v6348
          %v6350 = vsel %vm5938, %v6349, %v6345
          %v6351 = vlaneseq
          %v6352 = vshrl.u32 %v6351, 7
          %v6353 = vsub.s32 %v5940, %v6352
          %v6354 = vrot.slane %v5614, %v6353
          %v6355 = vsel %vm5945, %v6354, %v6350
          %v6356 = vlaneseq
          %v6357 = vshrl.u32 %v6356, 7
          %v6358 = vsub.s32 %v5947, %v6357
          %v6359 = vrot.slane %v5616, %v6358
          %v6360 = vsel %vm5952, %v6359, %v6355
          %v6361 = vlaneseq
          %v6362 = vshrl.u32 %v6361, 7
          %v6363 = vsub.s32 %v5954, %v6362
          %v6364 = vrot.slane %v5618, %v6363
          %v6365 = vsel %vm5959, %v6364, %v6360
          %v6366 = vlaneseq
          %v6367 = vshrl.u32 %v6366, 7
          %v6368 = vsub.s32 %v5961, %v6367
          %v6369 = vrot.slane %v5620, %v6368
          %v6370 = vsel %vm5966, %v6369, %v6365
          %v6371 = vlaneseq
          %v6372 = vshrl.u32 %v6371, 7
          %v6373 = vsub.s32 %v5968, %v6372
          %v6374 = vrot.slane %v5622, %v6373
          %v6375 = vsel %vm5973, %v6374, %v6370
          %v6376 = vlaneseq
          %v6377 = vshrl.u32 %v6376, 7
          %v6378 = vsub.s32 %v5975, %v6377
          %v6379 = vrot.slane %v5624, %v6378
          %v6380 = vsel %vm5980, %v6379, %v6375
          %v6381 = vlaneseq
          %v6382 = vshrl.u32 %v6381, 7
          %v6383 = vsub.s32 %v5982, %v6382
          %v6384 = vrot.slane %v5626, %v6383
          %v6385 = vsel %vm5987, %v6384, %v6380
          %v6386 = vlaneseq
          %v6387 = vshrl.u32 %v6386, 7
          %v6388 = vsub.s32 %v5989, %v6387
          %v6389 = vrot.slane %v5628, %v6388
          %v6390 = vsel %vm5994, %v6389, %v6385
          %v6391 = vlaneseq
          %v6392 = vshrl.u32 %v6391, 7
          %v6393 = vsub.s32 %v5886, %v6392
          %v6394 = vrot.slane %v5630, %v6393
          %v6395 = vlaneseq
          %v6396 = vshrl.u32 %v6395, 7
          %v6397 = vsub.s32 %v5891, %v6396
          %v6398 = vrot.slane %v5632, %v6397
          %v6399 = vsel %vm5896, %v6398, %v6394
          %v6400 = vlaneseq
          %v6401 = vshrl.u32 %v6400, 7
          %v6402 = vsub.s32 %v5898, %v6401
          %v6403 = vrot.slane %v5634, %v6402
          %v6404 = vsel %vm5903, %v6403, %v6399
          %v6405 = vlaneseq
          %v6406 = vshrl.u32 %v6405, 7
          %v6407 = vsub.s32 %v5905, %v6406
          %v6408 = vrot.slane %v5636, %v6407
          %v6409 = vsel %vm5910, %v6408, %v6404
          %v6410 = vlaneseq
          %v6411 = vshrl.u32 %v6410, 7
          %v6412 = vsub.s32 %v5912, %v6411
          %v6413 = vrot.slane %v5638, %v6412
          %v6414 = vsel %vm5917, %v6413, %v6409
          %v6415 = vlaneseq
          %v6416 = vshrl.u32 %v6415, 7
          %v6417 = vsub.s32 %v5919, %v6416
          %v6418 = vrot.slane %v5640, %v6417
          %v6419 = vsel %vm5924, %v6418, %v6414
          %v6420 = vlaneseq
          %v6421 = vshrl.u32 %v6420, 7
          %v6422 = vsub.s32 %v5926, %v6421
          %v6423 = vrot.slane %v5642, %v6422
          %v6424 = vsel %vm5931, %v6423, %v6419
          %v6425 = vlaneseq
          %v6426 = vshrl.u32 %v6425, 7
          %v6427 = vsub.s32 %v5933, %v6426
          %v6428 = vrot.slane %v5644, %v6427
          %v6429 = vsel %vm5938, %v6428, %v6424
          %v6430 = vlaneseq
          %v6431 = vshrl.u32 %v6430, 7
          %v6432 = vsub.s32 %v5940, %v6431
          %v6433 = vrot.slane %v5646, %v6432
          %v6434 = vsel %vm5945, %v6433, %v6429
          %v6435 = vlaneseq
          %v6436 = vshrl.u32 %v6435, 7
          %v6437 = vsub.s32 %v5947, %v6436
          %v6438 = vrot.slane %v5648, %v6437
          %v6439 = vsel %vm5952, %v6438, %v6434
          %v6440 = vlaneseq
          %v6441 = vshrl.u32 %v6440, 7
          %v6442 = vsub.s32 %v5954, %v6441
          %v6443 = vrot.slane %v5650, %v6442
          %v6444 = vsel %vm5959, %v6443, %v6439
          %v6445 = vlaneseq
          %v6446 = vshrl.u32 %v6445, 7
          %v6447 = vsub.s32 %v5961, %v6446
          %v6448 = vrot.slane %v5652, %v6447
          %v6449 = vsel %vm5966, %v6448, %v6444
          %v6450 = vlaneseq
          %v6451 = vshrl.u32 %v6450, 7
          %v6452 = vsub.s32 %v5968, %v6451
          %v6453 = vrot.slane %v5654, %v6452
          %v6454 = vsel %vm5973, %v6453, %v6449
          %v6455 = vlaneseq
          %v6456 = vshrl.u32 %v6455, 7
          %v6457 = vsub.s32 %v5975, %v6456
          %v6458 = vrot.slane %v5656, %v6457
          %v6459 = vsel %vm5980, %v6458, %v6454
          %v6460 = vlaneseq
          %v6461 = vshrl.u32 %v6460, 7
          %v6462 = vsub.s32 %v5982, %v6461
          %v6463 = vrot.slane %v5658, %v6462
          %v6464 = vsel %vm5987, %v6463, %v6459
          %v6465 = vlaneseq
          %v6466 = vshrl.u32 %v6465, 7
          %v6467 = vsub.s32 %v5989, %v6466
          %v6468 = vrot.slane %v5660, %v6467
          %v6469 = vsel %vm5994, %v6468, %v6464
          %v6470 = vlaneseq
          %v6471 = vshrl.u32 %v6470, 7
          %v6472 = vsub.s32 %v5886, %v6471
          %v6473 = vrot.slane %v5662, %v6472
          %v6474 = vlaneseq
          %v6475 = vshrl.u32 %v6474, 7
          %v6476 = vsub.s32 %v5891, %v6475
          %v6477 = vrot.slane %v5664, %v6476
          %v6478 = vsel %vm5896, %v6477, %v6473
          %v6479 = vlaneseq
          %v6480 = vshrl.u32 %v6479, 7
          %v6481 = vsub.s32 %v5898, %v6480
          %v6482 = vrot.slane %v5666, %v6481
          %v6483 = vsel %vm5903, %v6482, %v6478
          %v6484 = vlaneseq
          %v6485 = vshrl.u32 %v6484, 7
          %v6486 = vsub.s32 %v5905, %v6485
          %v6487 = vrot.slane %v5668, %v6486
          %v6488 = vsel %vm5910, %v6487, %v6483
          %v6489 = vlaneseq
          %v6490 = vshrl.u32 %v6489, 7
          %v6491 = vsub.s32 %v5912, %v6490
          %v6492 = vrot.slane %v5670, %v6491
          %v6493 = vsel %vm5917, %v6492, %v6488
          %v6494 = vlaneseq
          %v6495 = vshrl.u32 %v6494, 7
          %v6496 = vsub.s32 %v5919, %v6495
          %v6497 = vrot.slane %v5672, %v6496
          %v6498 = vsel %vm5924, %v6497, %v6493
          %v6499 = vlaneseq
          %v6500 = vshrl.u32 %v6499, 7
          %v6501 = vsub.s32 %v5926, %v6500
          %v6502 = vrot.slane %v5674, %v6501
          %v6503 = vsel %vm5931, %v6502, %v6498
          %v6504 = vlaneseq
          %v6505 = vshrl.u32 %v6504, 7
          %v6506 = vsub.s32 %v5933, %v6505
          %v6507 = vrot.slane %v5676, %v6506
          %v6508 = vsel %vm5938, %v6507, %v6503
          %v6509 = vlaneseq
          %v6510 = vshrl.u32 %v6509, 7
          %v6511 = vsub.s32 %v5940, %v6510
          %v6512 = vrot.slane %v5678, %v6511
          %v6513 = vsel %vm5945, %v6512, %v6508
          %v6514 = vlaneseq
          %v6515 = vshrl.u32 %v6514, 7
          %v6516 = vsub.s32 %v5947, %v6515
          %v6517 = vrot.slane %v5680, %v6516
          %v6518 = vsel %vm5952, %v6517, %v6513
          %v6519 = vlaneseq
          %v6520 = vshrl.u32 %v6519, 7
          %v6521 = vsub.s32 %v5954, %v6520
          %v6522 = vrot.slane %v5682, %v6521
          %v6523 = vsel %vm5959, %v6522, %v6518
          %v6524 = vlaneseq
          %v6525 = vshrl.u32 %v6524, 7
          %v6526 = vsub.s32 %v5961, %v6525
          %v6527 = vrot.slane %v5684, %v6526
          %v6528 = vsel %vm5966, %v6527, %v6523
          %v6529 = vlaneseq
          %v6530 = vshrl.u32 %v6529, 7
          %v6531 = vsub.s32 %v5968, %v6530
          %v6532 = vrot.slane %v5686, %v6531
          %v6533 = vsel %vm5973, %v6532, %v6528
          %v6534 = vlaneseq
          %v6535 = vshrl.u32 %v6534, 7
          %v6536 = vsub.s32 %v5975, %v6535
          %v6537 = vrot.slane %v5688, %v6536
          %v6538 = vsel %vm5980, %v6537, %v6533
          %v6539 = vlaneseq
          %v6540 = vshrl.u32 %v6539, 7
          %v6541 = vsub.s32 %v5982, %v6540
          %v6542 = vrot.slane %v5690, %v6541
          %v6543 = vsel %vm5987, %v6542, %v6538
          %v6544 = vlaneseq
          %v6545 = vshrl.u32 %v6544, 7
          %v6546 = vsub.s32 %v5989, %v6545
          %v6547 = vrot.slane %v5692, %v6546
          %v6548 = vsel %vm5994, %v6547, %v6543
          %vm6549 = vcmask 1041409
          %v6550 = vsel %vm6549, %v6153, %v5995
          %vm6551 = vcmask 1042434
          %v6552 = vsel %vm6551, %v6311, %v6550
          %vm6553 = vcmask 1043459
          %v6554 = vsel %vm6553, %v6469, %v6552
          %v6555 = vsel %vm6549, %v6232, %v6074
          %v6556 = vsel %vm6551, %v6390, %v6555
          %v6557 = vsel %vm6553, %v6548, %v6556
          %6560 = vmatprep.subr.mxu0 0.0
          %6561 = vmatpush1.msra.mxu0 %v5740
          %6562 = vmatprep.subr.mxu0 0.0
          %6563 = vmatpush1.msra.mxu0 %v5739
          %6564 = vmatprep.subr.mxu0 0.0
          %6565 = vmatpush1.msra.mxu0 %v5738
          %6566 = vmatprep.subr.mxu0 0.0
          %6567 = vmatpush1.msra.mxu0 %v5737
          %6568 = vmatprep.subr.mxu0 0.0
          %6569 = vmatpush1.msra.mxu0 %v5736
          %6570 = vmatprep.subr.mxu0 0.0
          %6571 = vmatpush1.msra.mxu0 %v5735
          %6572 = vmatprep.subr.mxu0 0.0
          %6573 = vmatpush1.msra.mxu0 %v5734
          %6574 = vmatprep.subr.mxu0 0.0
          %6575 = vmatpush1.msra.mxu0 %v5733
          %6576 = vmatprep.subr.mxu0 0.0
          %6577 = vmatpush1.msra.mxu0 %v5732
          %6578 = vmatprep.subr.mxu0 0.0
          %6579 = vmatpush1.msra.mxu0 %v5731
          %6580 = vmatprep.subr.mxu0 0.0
          %6581 = vmatpush1.msra.mxu0 %v5730
          %6582 = vmatprep.subr.mxu0 0.0
          %6583 = vmatpush1.msra.mxu0 %v5729
          %6584 = vmatprep.subr.mxu0 0.0
          %6585 = vmatpush1.msra.mxu0 %v5728
          %6586 = vmatprep.subr.mxu0 0.0
          %6587 = vmatpush1.msra.mxu0 %v5727
          %6588 = vmatprep.subr.mxu0 0.0
          %6589 = vmatpush1.msra.mxu0 %v5726
          %6590 = vmatprep.subr.mxu0 0.0
          %6591 = vmatpush1.msra.mxu0 %v5725
          %6592 = vmatprep.subr.mxu0 0.0
          %6593 = vmatpush2.msra.mxu0 %v5756
          %6594 = vmatprep.subr.mxu0 0.0
          %6595 = vmatpush2.msra.mxu0 %v5755
          %6596 = vmatprep.subr.mxu0 0.0
          %6597 = vmatpush2.msra.mxu0 %v5754
          %6598 = vmatprep.subr.mxu0 0.0
          %6599 = vmatpush2.msra.mxu0 %v5753
          %6600 = vmatprep.subr.mxu0 0.0
          %6601 = vmatpush2.msra.mxu0 %v5752
          %6602 = vmatprep.subr.mxu0 0.0
          %6603 = vmatpush2.msra.mxu0 %v5751
          %6604 = vmatprep.subr.mxu0 0.0
          %6605 = vmatpush2.msra.mxu0 %v5750
          %6606 = vmatprep.subr.mxu0 0.0
          %6607 = vmatpush2.msra.mxu0 %v5749
          %6608 = vmatprep.subr.mxu0 0.0
          %6609 = vmatpush2.msra.mxu0 %v5748
          %6610 = vmatprep.subr.mxu0 0.0
          %6611 = vmatpush2.msra.mxu0 %v5747
          %6612 = vmatprep.subr.mxu0 0.0
          %6613 = vmatpush2.msra.mxu0 %v5746
          %6614 = vmatprep.subr.mxu0 0.0
          %6615 = vmatpush2.msra.mxu0 %v5745
          %6616 = vmatprep.subr.mxu0 0.0
          %6617 = vmatpush2.msra.mxu0 %v5744
          %6618 = vmatprep.subr.mxu0 0.0
          %6619 = vmatpush2.msra.mxu0 %v5743
          %6620 = vmatprep.subr.mxu0 0.0
          %6621 = vmatpush2.msra.mxu0 %v5742
          %6622 = vmatprep.subr.mxu0 0.0
          %6623 = vmatpush2.msra.mxu0 %v5741
          %6624 = vmatprep.mubr.f32.mxu0 %v6557
          %6625 = vmatmul.mubr.f32.gmra.mxu0 %v6554
          %v6626 = vpop.f32.mrf.mxu0
          %v6627 = vadd.f32 0.0, %v6626
          %v6628 = vpop.f32.mrf.mxu0
          %6629 = vdwg.mxu0
          %v6758 = vlaneseq
          %v6759 = vshrl.u32 %v6758, 7
          %v6760 = vsub.s32 %v5886, %v6759
          %v6761 = vrot.slane %v5054, %v6760
          %v6762 = vlaneseq
          %v6763 = vshrl.u32 %v6762, 7
          %v6764 = vsub.s32 %v5891, %v6763
          %v6765 = vrot.slane %v5056, %v6764
          %v6766 = vsel %vm5896, %v6765, %v6761
          %v6767 = vlaneseq
          %v6768 = vshrl.u32 %v6767, 7
          %v6769 = vsub.s32 %v5898, %v6768
          %v6770 = vrot.slane %v5058, %v6769
          %v6771 = vsel %vm5903, %v6770, %v6766
          %v6772 = vlaneseq
          %v6773 = vshrl.u32 %v6772, 7
          %v6774 = vsub.s32 %v5905, %v6773
          %v6775 = vrot.slane %v5060, %v6774
          %v6776 = vsel %vm5910, %v6775, %v6771
          %v6777 = vlaneseq
          %v6778 = vshrl.u32 %v6777, 7
          %v6779 = vsub.s32 %v5912, %v6778
          %v6780 = vrot.slane %v5062, %v6779
          %v6781 = vsel %vm5917, %v6780, %v6776
          %v6782 = vlaneseq
          %v6783 = vshrl.u32 %v6782, 7
          %v6784 = vsub.s32 %v5919, %v6783
          %v6785 = vrot.slane %v5064, %v6784
          %v6786 = vsel %vm5924, %v6785, %v6781
          %v6787 = vlaneseq
          %v6788 = vshrl.u32 %v6787, 7
          %v6789 = vsub.s32 %v5926, %v6788
          %v6790 = vrot.slane %v5066, %v6789
          %v6791 = vsel %vm5931, %v6790, %v6786
          %v6792 = vlaneseq
          %v6793 = vshrl.u32 %v6792, 7
          %v6794 = vsub.s32 %v5933, %v6793
          %v6795 = vrot.slane %v5068, %v6794
          %v6796 = vsel %vm5938, %v6795, %v6791
          %v6797 = vlaneseq
          %v6798 = vshrl.u32 %v6797, 7
          %v6799 = vsub.s32 %v5940, %v6798
          %v6800 = vrot.slane %v5070, %v6799
          %v6801 = vsel %vm5945, %v6800, %v6796
          %v6802 = vlaneseq
          %v6803 = vshrl.u32 %v6802, 7
          %v6804 = vsub.s32 %v5947, %v6803
          %v6805 = vrot.slane %v5072, %v6804
          %v6806 = vsel %vm5952, %v6805, %v6801
          %v6807 = vlaneseq
          %v6808 = vshrl.u32 %v6807, 7
          %v6809 = vsub.s32 %v5954, %v6808
          %v6810 = vrot.slane %v5074, %v6809
          %v6811 = vsel %vm5959, %v6810, %v6806
          %v6812 = vlaneseq
          %v6813 = vshrl.u32 %v6812, 7
          %v6814 = vsub.s32 %v5961, %v6813
          %v6815 = vrot.slane %v5076, %v6814
          %v6816 = vsel %vm5966, %v6815, %v6811
          %v6817 = vlaneseq
          %v6818 = vshrl.u32 %v6817, 7
          %v6819 = vsub.s32 %v5968, %v6818
          %v6820 = vrot.slane %v5078, %v6819
          %v6821 = vsel %vm5973, %v6820, %v6816
          %v6822 = vlaneseq
          %v6823 = vshrl.u32 %v6822, 7
          %v6824 = vsub.s32 %v5975, %v6823
          %v6825 = vrot.slane %v5080, %v6824
          %v6826 = vsel %vm5980, %v6825, %v6821
          %v6827 = vlaneseq
          %v6828 = vshrl.u32 %v6827, 7
          %v6829 = vsub.s32 %v5982, %v6828
          %v6830 = vrot.slane %v5082, %v6829
          %v6831 = vsel %vm5987, %v6830, %v6826
          %v6832 = vlaneseq
          %v6833 = vshrl.u32 %v6832, 7
          %v6834 = vsub.s32 %v5989, %v6833
          %v6835 = vrot.slane %v5084, %v6834
          %v6836 = vsel %vm5994, %v6835, %v6831
          %v6837 = vlaneseq
          %v6838 = vshrl.u32 %v6837, 7
          %v6839 = vsub.s32 %v5886, %v6838
          %v6840 = vrot.slane %v5086, %v6839
          %v6841 = vlaneseq
          %v6842 = vshrl.u32 %v6841, 7
          %v6843 = vsub.s32 %v5891, %v6842
          %v6844 = vrot.slane %v5088, %v6843
          %v6845 = vsel %vm5896, %v6844, %v6840
          %v6846 = vlaneseq
          %v6847 = vshrl.u32 %v6846, 7
          %v6848 = vsub.s32 %v5898, %v6847
          %v6849 = vrot.slane %v5090, %v6848
          %v6850 = vsel %vm5903, %v6849, %v6845
          %v6851 = vlaneseq
          %v6852 = vshrl.u32 %v6851, 7
          %v6853 = vsub.s32 %v5905, %v6852
          %v6854 = vrot.slane %v5092, %v6853
          %v6855 = vsel %vm5910, %v6854, %v6850
          %v6856 = vlaneseq
          %v6857 = vshrl.u32 %v6856, 7
          %v6858 = vsub.s32 %v5912, %v6857
          %v6859 = vrot.slane %v5094, %v6858
          %v6860 = vsel %vm5917, %v6859, %v6855
          %v6861 = vlaneseq
          %v6862 = vshrl.u32 %v6861, 7
          %v6863 = vsub.s32 %v5919, %v6862
          %v6864 = vrot.slane %v5096, %v6863
          %v6865 = vsel %vm5924, %v6864, %v6860
          %v6866 = vlaneseq
          %v6867 = vshrl.u32 %v6866, 7
          %v6868 = vsub.s32 %v5926, %v6867
          %v6869 = vrot.slane %v5098, %v6868
          %v6870 = vsel %vm5931, %v6869, %v6865
          %v6871 = vlaneseq
          %v6872 = vshrl.u32 %v6871, 7
          %v6873 = vsub.s32 %v5933, %v6872
          %v6874 = vrot.slane %v5100, %v6873
          %v6875 = vsel %vm5938, %v6874, %v6870
          %v6876 = vlaneseq
          %v6877 = vshrl.u32 %v6876, 7
          %v6878 = vsub.s32 %v5940, %v6877
          %v6879 = vrot.slane %v5102, %v6878
          %v6880 = vsel %vm5945, %v6879, %v6875
          %v6881 = vlaneseq
          %v6882 = vshrl.u32 %v6881, 7
          %v6883 = vsub.s32 %v5947, %v6882
          %v6884 = vrot.slane %v5104, %v6883
          %v6885 = vsel %vm5952, %v6884, %v6880
          %v6886 = vlaneseq
          %v6887 = vshrl.u32 %v6886, 7
          %v6888 = vsub.s32 %v5954, %v6887
          %v6889 = vrot.slane %v5106, %v6888
          %v6890 = vsel %vm5959, %v6889, %v6885
          %v6891 = vlaneseq
          %v6892 = vshrl.u32 %v6891, 7
          %v6893 = vsub.s32 %v5961, %v6892
          %v6894 = vrot.slane %v5108, %v6893
          %v6895 = vsel %vm5966, %v6894, %v6890
          %v6896 = vlaneseq
          %v6897 = vshrl.u32 %v6896, 7
          %v6898 = vsub.s32 %v5968, %v6897
          %v6899 = vrot.slane %v5110, %v6898
          %v6900 = vsel %vm5973, %v6899, %v6895
          %v6901 = vlaneseq
          %v6902 = vshrl.u32 %v6901, 7
          %v6903 = vsub.s32 %v5975, %v6902
          %v6904 = vrot.slane %v5112, %v6903
          %v6905 = vsel %vm5980, %v6904, %v6900
          %v6906 = vlaneseq
          %v6907 = vshrl.u32 %v6906, 7
          %v6908 = vsub.s32 %v5982, %v6907
          %v6909 = vrot.slane %v5114, %v6908
          %v6910 = vsel %vm5987, %v6909, %v6905
          %v6911 = vlaneseq
          %v6912 = vshrl.u32 %v6911, 7
          %v6913 = vsub.s32 %v5989, %v6912
          %v6914 = vrot.slane %v5116, %v6913
          %v6915 = vsel %vm5994, %v6914, %v6910
          %v6916 = vlaneseq
          %v6917 = vshrl.u32 %v6916, 7
          %v6918 = vsub.s32 %v5886, %v6917
          %v6919 = vrot.slane %v5118, %v6918
          %v6920 = vlaneseq
          %v6921 = vshrl.u32 %v6920, 7
          %v6922 = vsub.s32 %v5891, %v6921
          %v6923 = vrot.slane %v5120, %v6922
          %v6924 = vsel %vm5896, %v6923, %v6919
          %v6925 = vlaneseq
          %v6926 = vshrl.u32 %v6925, 7
          %v6927 = vsub.s32 %v5898, %v6926
          %v6928 = vrot.slane %v5122, %v6927
          %v6929 = vsel %vm5903, %v6928, %v6924
          %v6930 = vlaneseq
          %v6931 = vshrl.u32 %v6930, 7
          %v6932 = vsub.s32 %v5905, %v6931
          %v6933 = vrot.slane %v5124, %v6932
          %v6934 = vsel %vm5910, %v6933, %v6929
          %v6935 = vlaneseq
          %v6936 = vshrl.u32 %v6935, 7
          %v6937 = vsub.s32 %v5912, %v6936
          %v6938 = vrot.slane %v5126, %v6937
          %v6939 = vsel %vm5917, %v6938, %v6934
          %v6940 = vlaneseq
          %v6941 = vshrl.u32 %v6940, 7
          %v6942 = vsub.s32 %v5919, %v6941
          %v6943 = vrot.slane %v5128, %v6942
          %v6944 = vsel %vm5924, %v6943, %v6939
          %v6945 = vlaneseq
          %v6946 = vshrl.u32 %v6945, 7
          %v6947 = vsub.s32 %v5926, %v6946
          %v6948 = vrot.slane %v5130, %v6947
          %v6949 = vsel %vm5931, %v6948, %v6944
          %v6950 = vlaneseq
          %v6951 = vshrl.u32 %v6950, 7
          %v6952 = vsub.s32 %v5933, %v6951
          %v6953 = vrot.slane %v5132, %v6952
          %v6954 = vsel %vm5938, %v6953, %v6949
          %v6955 = vlaneseq
          %v6956 = vshrl.u32 %v6955, 7
          %v6957 = vsub.s32 %v5940, %v6956
          %v6958 = vrot.slane %v5134, %v6957
          %v6959 = vsel %vm5945, %v6958, %v6954
          %v6960 = vlaneseq
          %v6961 = vshrl.u32 %v6960, 7
          %v6962 = vsub.s32 %v5947, %v6961
          %v6963 = vrot.slane %v5136, %v6962
          %v6964 = vsel %vm5952, %v6963, %v6959
          %v6965 = vlaneseq
          %v6966 = vshrl.u32 %v6965, 7
          %v6967 = vsub.s32 %v5954, %v6966
          %v6968 = vrot.slane %v5138, %v6967
          %v6969 = vsel %vm5959, %v6968, %v6964
          %v6970 = vlaneseq
          %v6971 = vshrl.u32 %v6970, 7
          %v6972 = vsub.s32 %v5961, %v6971
          %v6973 = vrot.slane %v5140, %v6972
          %v6974 = vsel %vm5966, %v6973, %v6969
          %v6975 = vlaneseq
          %v6976 = vshrl.u32 %v6975, 7
          %v6977 = vsub.s32 %v5968, %v6976
          %v6978 = vrot.slane %v5142, %v6977
          %v6979 = vsel %vm5973, %v6978, %v6974
          %v6980 = vlaneseq
          %v6981 = vshrl.u32 %v6980, 7
          %v6982 = vsub.s32 %v5975, %v6981
          %v6983 = vrot.slane %v5144, %v6982
          %v6984 = vsel %vm5980, %v6983, %v6979
          %v6985 = vlaneseq
          %v6986 = vshrl.u32 %v6985, 7
          %v6987 = vsub.s32 %v5982, %v6986
          %v6988 = vrot.slane %v5146, %v6987
          %v6989 = vsel %vm5987, %v6988, %v6984
          %v6990 = vlaneseq
          %v6991 = vshrl.u32 %v6990, 7
          %v6992 = vsub.s32 %v5989, %v6991
          %v6993 = vrot.slane %v5148, %v6992
          %v6994 = vsel %vm5994, %v6993, %v6989
          %v6995 = vlaneseq
          %v6996 = vshrl.u32 %v6995, 7
          %v6997 = vsub.s32 %v5886, %v6996
          %v6998 = vrot.slane %v5150, %v6997
          %v6999 = vlaneseq
          %v7000 = vshrl.u32 %v6999, 7
          %v7001 = vsub.s32 %v5891, %v7000
          %v7002 = vrot.slane %v5152, %v7001
          %v7003 = vsel %vm5896, %v7002, %v6998
          %v7004 = vlaneseq
          %v7005 = vshrl.u32 %v7004, 7
          %v7006 = vsub.s32 %v5898, %v7005
          %v7007 = vrot.slane %v5154, %v7006
          %v7008 = vsel %vm5903, %v7007, %v7003
          %v7009 = vlaneseq
          %v7010 = vshrl.u32 %v7009, 7
          %v7011 = vsub.s32 %v5905, %v7010
          %v7012 = vrot.slane %v5156, %v7011
          %v7013 = vsel %vm5910, %v7012, %v7008
          %v7014 = vlaneseq
          %v7015 = vshrl.u32 %v7014, 7
          %v7016 = vsub.s32 %v5912, %v7015
          %v7017 = vrot.slane %v5158, %v7016
          %v7018 = vsel %vm5917, %v7017, %v7013
          %v7019 = vlaneseq
          %v7020 = vshrl.u32 %v7019, 7
          %v7021 = vsub.s32 %v5919, %v7020
          %v7022 = vrot.slane %v5160, %v7021
          %v7023 = vsel %vm5924, %v7022, %v7018
          %v7024 = vlaneseq
          %v7025 = vshrl.u32 %v7024, 7
          %v7026 = vsub.s32 %v5926, %v7025
          %v7027 = vrot.slane %v5162, %v7026
          %v7028 = vsel %vm5931, %v7027, %v7023
          %v7029 = vlaneseq
          %v7030 = vshrl.u32 %v7029, 7
          %v7031 = vsub.s32 %v5933, %v7030
          %v7032 = vrot.slane %v5164, %v7031
          %v7033 = vsel %vm5938, %v7032, %v7028
          %v7034 = vlaneseq
          %v7035 = vshrl.u32 %v7034, 7
          %v7036 = vsub.s32 %v5940, %v7035
          %v7037 = vrot.slane %v5166, %v7036
          %v7038 = vsel %vm5945, %v7037, %v7033
          %v7039 = vlaneseq
          %v7040 = vshrl.u32 %v7039, 7
          %v7041 = vsub.s32 %v5947, %v7040
          %v7042 = vrot.slane %v5168, %v7041
          %v7043 = vsel %vm5952, %v7042, %v7038
          %v7044 = vlaneseq
          %v7045 = vshrl.u32 %v7044, 7
          %v7046 = vsub.s32 %v5954, %v7045
          %v7047 = vrot.slane %v5170, %v7046
          %v7048 = vsel %vm5959, %v7047, %v7043
          %v7049 = vlaneseq
          %v7050 = vshrl.u32 %v7049, 7
          %v7051 = vsub.s32 %v5961, %v7050
          %v7052 = vrot.slane %v5172, %v7051
          %v7053 = vsel %vm5966, %v7052, %v7048
          %v7054 = vlaneseq
          %v7055 = vshrl.u32 %v7054, 7
          %v7056 = vsub.s32 %v5968, %v7055
          %v7057 = vrot.slane %v5174, %v7056
          %v7058 = vsel %vm5973, %v7057, %v7053
          %v7059 = vlaneseq
          %v7060 = vshrl.u32 %v7059, 7
          %v7061 = vsub.s32 %v5975, %v7060
          %v7062 = vrot.slane %v5176, %v7061
          %v7063 = vsel %vm5980, %v7062, %v7058
          %v7064 = vlaneseq
          %v7065 = vshrl.u32 %v7064, 7
          %v7066 = vsub.s32 %v5982, %v7065
          %v7067 = vrot.slane %v5178, %v7066
          %v7068 = vsel %vm5987, %v7067, %v7063
          %v7069 = vlaneseq
          %v7070 = vshrl.u32 %v7069, 7
          %v7071 = vsub.s32 %v5989, %v7070
          %v7072 = vrot.slane %v5180, %v7071
          %v7073 = vsel %vm5994, %v7072, %v7068
          %v7074 = vlaneseq
          %v7075 = vshrl.u32 %v7074, 7
          %v7076 = vsub.s32 %v5886, %v7075
          %v7077 = vrot.slane %v5182, %v7076
          %v7078 = vlaneseq
          %v7079 = vshrl.u32 %v7078, 7
          %v7080 = vsub.s32 %v5891, %v7079
          %v7081 = vrot.slane %v5184, %v7080
          %v7082 = vsel %vm5896, %v7081, %v7077
          %v7083 = vlaneseq
          %v7084 = vshrl.u32 %v7083, 7
          %v7085 = vsub.s32 %v5898, %v7084
          %v7086 = vrot.slane %v5186, %v7085
          %v7087 = vsel %vm5903, %v7086, %v7082
          %v7088 = vlaneseq
          %v7089 = vshrl.u32 %v7088, 7
          %v7090 = vsub.s32 %v5905, %v7089
          %v7091 = vrot.slane %v5188, %v7090
          %v7092 = vsel %vm5910, %v7091, %v7087
          %v7093 = vlaneseq
          %v7094 = vshrl.u32 %v7093, 7
          %v7095 = vsub.s32 %v5912, %v7094
          %v7096 = vrot.slane %v5190, %v7095
          %v7097 = vsel %vm5917, %v7096, %v7092
          %v7098 = vlaneseq
          %v7099 = vshrl.u32 %v7098, 7
          %v7100 = vsub.s32 %v5919, %v7099
          %v7101 = vrot.slane %v5192, %v7100
          %v7102 = vsel %vm5924, %v7101, %v7097
          %v7103 = vlaneseq
          %v7104 = vshrl.u32 %v7103, 7
          %v7105 = vsub.s32 %v5926, %v7104
          %v7106 = vrot.slane %v5194, %v7105
          %v7107 = vsel %vm5931, %v7106, %v7102
          %v7108 = vlaneseq
          %v7109 = vshrl.u32 %v7108, 7
          %v7110 = vsub.s32 %v5933, %v7109
          %v7111 = vrot.slane %v5196, %v7110
          %v7112 = vsel %vm5938, %v7111, %v7107
          %v7113 = vlaneseq
          %v7114 = vshrl.u32 %v7113, 7
          %v7115 = vsub.s32 %v5940, %v7114
          %v7116 = vrot.slane %v5198, %v7115
          %v7117 = vsel %vm5945, %v7116, %v7112
          %v7118 = vlaneseq
          %v7119 = vshrl.u32 %v7118, 7
          %v7120 = vsub.s32 %v5947, %v7119
          %v7121 = vrot.slane %v5200, %v7120
          %v7122 = vsel %vm5952, %v7121, %v7117
          %v7123 = vlaneseq
          %v7124 = vshrl.u32 %v7123, 7
          %v7125 = vsub.s32 %v5954, %v7124
          %v7126 = vrot.slane %v5202, %v7125
          %v7127 = vsel %vm5959, %v7126, %v7122
          %v7128 = vlaneseq
          %v7129 = vshrl.u32 %v7128, 7
          %v7130 = vsub.s32 %v5961, %v7129
          %v7131 = vrot.slane %v5204, %v7130
          %v7132 = vsel %vm5966, %v7131, %v7127
          %v7133 = vlaneseq
          %v7134 = vshrl.u32 %v7133, 7
          %v7135 = vsub.s32 %v5968, %v7134
          %v7136 = vrot.slane %v5206, %v7135
          %v7137 = vsel %vm5973, %v7136, %v7132
          %v7138 = vlaneseq
          %v7139 = vshrl.u32 %v7138, 7
          %v7140 = vsub.s32 %v5975, %v7139
          %v7141 = vrot.slane %v5208, %v7140
          %v7142 = vsel %vm5980, %v7141, %v7137
          %v7143 = vlaneseq
          %v7144 = vshrl.u32 %v7143, 7
          %v7145 = vsub.s32 %v5982, %v7144
          %v7146 = vrot.slane %v5210, %v7145
          %v7147 = vsel %vm5987, %v7146, %v7142
          %v7148 = vlaneseq
          %v7149 = vshrl.u32 %v7148, 7
          %v7150 = vsub.s32 %v5989, %v7149
          %v7151 = vrot.slane %v5212, %v7150
          %v7152 = vsel %vm5994, %v7151, %v7147
          %v7153 = vlaneseq
          %v7154 = vshrl.u32 %v7153, 7
          %v7155 = vsub.s32 %v5886, %v7154
          %v7156 = vrot.slane %v5214, %v7155
          %v7157 = vlaneseq
          %v7158 = vshrl.u32 %v7157, 7
          %v7159 = vsub.s32 %v5891, %v7158
          %v7160 = vrot.slane %v5216, %v7159
          %v7161 = vsel %vm5896, %v7160, %v7156
          %v7162 = vlaneseq
          %v7163 = vshrl.u32 %v7162, 7
          %v7164 = vsub.s32 %v5898, %v7163
          %v7165 = vrot.slane %v5218, %v7164
          %v7166 = vsel %vm5903, %v7165, %v7161
          %v7167 = vlaneseq
          %v7168 = vshrl.u32 %v7167, 7
          %v7169 = vsub.s32 %v5905, %v7168
          %v7170 = vrot.slane %v5220, %v7169
          %v7171 = vsel %vm5910, %v7170, %v7166
          %v7172 = vlaneseq
          %v7173 = vshrl.u32 %v7172, 7
          %v7174 = vsub.s32 %v5912, %v7173
          %v7175 = vrot.slane %v5222, %v7174
          %v7176 = vsel %vm5917, %v7175, %v7171
          %v7177 = vlaneseq
          %v7178 = vshrl.u32 %v7177, 7
          %v7179 = vsub.s32 %v5919, %v7178
          %v7180 = vrot.slane %v5224, %v7179
          %v7181 = vsel %vm5924, %v7180, %v7176
          %v7182 = vlaneseq
          %v7183 = vshrl.u32 %v7182, 7
          %v7184 = vsub.s32 %v5926, %v7183
          %v7185 = vrot.slane %v5226, %v7184
          %v7186 = vsel %vm5931, %v7185, %v7181
          %v7187 = vlaneseq
          %v7188 = vshrl.u32 %v7187, 7
          %v7189 = vsub.s32 %v5933, %v7188
          %v7190 = vrot.slane %v5228, %v7189
          %v7191 = vsel %vm5938, %v7190, %v7186
          %v7192 = vlaneseq
          %v7193 = vshrl.u32 %v7192, 7
          %v7194 = vsub.s32 %v5940, %v7193
          %v7195 = vrot.slane %v5230, %v7194
          %v7196 = vsel %vm5945, %v7195, %v7191
          %v7197 = vlaneseq
          %v7198 = vshrl.u32 %v7197, 7
          %v7199 = vsub.s32 %v5947, %v7198
          %v7200 = vrot.slane %v5232, %v7199
          %v7201 = vsel %vm5952, %v7200, %v7196
          %v7202 = vlaneseq
          %v7203 = vshrl.u32 %v7202, 7
          %v7204 = vsub.s32 %v5954, %v7203
          %v7205 = vrot.slane %v5234, %v7204
          %v7206 = vsel %vm5959, %v7205, %v7201
          %v7207 = vlaneseq
          %v7208 = vshrl.u32 %v7207, 7
          %v7209 = vsub.s32 %v5961, %v7208
          %v7210 = vrot.slane %v5236, %v7209
          %v7211 = vsel %vm5966, %v7210, %v7206
          %v7212 = vlaneseq
          %v7213 = vshrl.u32 %v7212, 7
          %v7214 = vsub.s32 %v5968, %v7213
          %v7215 = vrot.slane %v5238, %v7214
          %v7216 = vsel %vm5973, %v7215, %v7211
          %v7217 = vlaneseq
          %v7218 = vshrl.u32 %v7217, 7
          %v7219 = vsub.s32 %v5975, %v7218
          %v7220 = vrot.slane %v5240, %v7219
          %v7221 = vsel %vm5980, %v7220, %v7216
          %v7222 = vlaneseq
          %v7223 = vshrl.u32 %v7222, 7
          %v7224 = vsub.s32 %v5982, %v7223
          %v7225 = vrot.slane %v5242, %v7224
          %v7226 = vsel %vm5987, %v7225, %v7221
          %v7227 = vlaneseq
          %v7228 = vshrl.u32 %v7227, 7
          %v7229 = vsub.s32 %v5989, %v7228
          %v7230 = vrot.slane %v5244, %v7229
          %v7231 = vsel %vm5994, %v7230, %v7226
          %v7232 = vlaneseq
          %v7233 = vshrl.u32 %v7232, 7
          %v7234 = vsub.s32 %v5886, %v7233
          %v7235 = vrot.slane %v5246, %v7234
          %v7236 = vlaneseq
          %v7237 = vshrl.u32 %v7236, 7
          %v7238 = vsub.s32 %v5891, %v7237
          %v7239 = vrot.slane %v5248, %v7238
          %v7240 = vsel %vm5896, %v7239, %v7235
          %v7241 = vlaneseq
          %v7242 = vshrl.u32 %v7241, 7
          %v7243 = vsub.s32 %v5898, %v7242
          %v7244 = vrot.slane %v5250, %v7243
          %v7245 = vsel %vm5903, %v7244, %v7240
          %v7246 = vlaneseq
          %v7247 = vshrl.u32 %v7246, 7
          %v7248 = vsub.s32 %v5905, %v7247
          %v7249 = vrot.slane %v5252, %v7248
          %v7250 = vsel %vm5910, %v7249, %v7245
          %v7251 = vlaneseq
          %v7252 = vshrl.u32 %v7251, 7
          %v7253 = vsub.s32 %v5912, %v7252
          %v7254 = vrot.slane %v5254, %v7253
          %v7255 = vsel %vm5917, %v7254, %v7250
          %v7256 = vlaneseq
          %v7257 = vshrl.u32 %v7256, 7
          %v7258 = vsub.s32 %v5919, %v7257
          %v7259 = vrot.slane %v5256, %v7258
          %v7260 = vsel %vm5924, %v7259, %v7255
          %v7261 = vlaneseq
          %v7262 = vshrl.u32 %v7261, 7
          %v7263 = vsub.s32 %v5926, %v7262
          %v7264 = vrot.slane %v5258, %v7263
          %v7265 = vsel %vm5931, %v7264, %v7260
          %v7266 = vlaneseq
          %v7267 = vshrl.u32 %v7266, 7
          %v7268 = vsub.s32 %v5933, %v7267
          %v7269 = vrot.slane %v5260, %v7268
          %v7270 = vsel %vm5938, %v7269, %v7265
          %v7271 = vlaneseq
          %v7272 = vshrl.u32 %v7271, 7
          %v7273 = vsub.s32 %v5940, %v7272
          %v7274 = vrot.slane %v5262, %v7273
          %v7275 = vsel %vm5945, %v7274, %v7270
          %v7276 = vlaneseq
          %v7277 = vshrl.u32 %v7276, 7
          %v7278 = vsub.s32 %v5947, %v7277
          %v7279 = vrot.slane %v5264, %v7278
          %v7280 = vsel %vm5952, %v7279, %v7275
          %v7281 = vlaneseq
          %v7282 = vshrl.u32 %v7281, 7
          %v7283 = vsub.s32 %v5954, %v7282
          %v7284 = vrot.slane %v5266, %v7283
          %v7285 = vsel %vm5959, %v7284, %v7280
          %v7286 = vlaneseq
          %v7287 = vshrl.u32 %v7286, 7
          %v7288 = vsub.s32 %v5961, %v7287
          %v7289 = vrot.slane %v5268, %v7288
          %v7290 = vsel %vm5966, %v7289, %v7285
          %v7291 = vlaneseq
          %v7292 = vshrl.u32 %v7291, 7
          %v7293 = vsub.s32 %v5968, %v7292
          %v7294 = vrot.slane %v5270, %v7293
          %v7295 = vsel %vm5973, %v7294, %v7290
          %v7296 = vlaneseq
          %v7297 = vshrl.u32 %v7296, 7
          %v7298 = vsub.s32 %v5975, %v7297
          %v7299 = vrot.slane %v5272, %v7298
          %v7300 = vsel %vm5980, %v7299, %v7295
          %v7301 = vlaneseq
          %v7302 = vshrl.u32 %v7301, 7
          %v7303 = vsub.s32 %v5982, %v7302
          %v7304 = vrot.slane %v5274, %v7303
          %v7305 = vsel %vm5987, %v7304, %v7300
          %v7306 = vlaneseq
          %v7307 = vshrl.u32 %v7306, 7
          %v7308 = vsub.s32 %v5989, %v7307
          %v7309 = vrot.slane %v5276, %v7308
          %v7310 = vsel %vm5994, %v7309, %v7305
          %v7311 = vlaneseq
          %v7312 = vshrl.u32 %v7311, 7
          %v7313 = vsub.s32 %v5886, %v7312
          %v7314 = vrot.slane %v5278, %v7313
          %v7315 = vlaneseq
          %v7316 = vshrl.u32 %v7315, 7
          %v7317 = vsub.s32 %v5891, %v7316
          %v7318 = vrot.slane %v5280, %v7317
          %v7319 = vsel %vm5896, %v7318, %v7314
          %v7320 = vlaneseq
          %v7321 = vshrl.u32 %v7320, 7
          %v7322 = vsub.s32 %v5898, %v7321
          %v7323 = vrot.slane %v5282, %v7322
          %v7324 = vsel %vm5903, %v7323, %v7319
          %v7325 = vlaneseq
          %v7326 = vshrl.u32 %v7325, 7
          %v7327 = vsub.s32 %v5905, %v7326
          %v7328 = vrot.slane %v5284, %v7327
          %v7329 = vsel %vm5910, %v7328, %v7324
          %v7330 = vlaneseq
          %v7331 = vshrl.u32 %v7330, 7
          %v7332 = vsub.s32 %v5912, %v7331
          %v7333 = vrot.slane %v5286, %v7332
          %v7334 = vsel %vm5917, %v7333, %v7329
          %v7335 = vlaneseq
          %v7336 = vshrl.u32 %v7335, 7
          %v7337 = vsub.s32 %v5919, %v7336
          %v7338 = vrot.slane %v5288, %v7337
          %v7339 = vsel %vm5924, %v7338, %v7334
          %v7340 = vlaneseq
          %v7341 = vshrl.u32 %v7340, 7
          %v7342 = vsub.s32 %v5926, %v7341
          %v7343 = vrot.slane %v5290, %v7342
          %v7344 = vsel %vm5931, %v7343, %v7339
          %v7345 = vlaneseq
          %v7346 = vshrl.u32 %v7345, 7
          %v7347 = vsub.s32 %v5933, %v7346
          %v7348 = vrot.slane %v5292, %v7347
          %v7349 = vsel %vm5938, %v7348, %v7344
          %v7350 = vlaneseq
          %v7351 = vshrl.u32 %v7350, 7
          %v7352 = vsub.s32 %v5940, %v7351
          %v7353 = vrot.slane %v5294, %v7352
          %v7354 = vsel %vm5945, %v7353, %v7349
          %v7355 = vlaneseq
          %v7356 = vshrl.u32 %v7355, 7
          %v7357 = vsub.s32 %v5947, %v7356
          %v7358 = vrot.slane %v5296, %v7357
          %v7359 = vsel %vm5952, %v7358, %v7354
          %v7360 = vlaneseq
          %v7361 = vshrl.u32 %v7360, 7
          %v7362 = vsub.s32 %v5954, %v7361
          %v7363 = vrot.slane %v5298, %v7362
          %v7364 = vsel %vm5959, %v7363, %v7359
          %v7365 = vlaneseq
          %v7366 = vshrl.u32 %v7365, 7
          %v7367 = vsub.s32 %v5961, %v7366
          %v7368 = vrot.slane %v5300, %v7367
          %v7369 = vsel %vm5966, %v7368, %v7364
          %v7370 = vlaneseq
          %v7371 = vshrl.u32 %v7370, 7
          %v7372 = vsub.s32 %v5968, %v7371
          %v7373 = vrot.slane %v5302, %v7372
          %v7374 = vsel %vm5973, %v7373, %v7369
          %v7375 = vlaneseq
          %v7376 = vshrl.u32 %v7375, 7
          %v7377 = vsub.s32 %v5975, %v7376
          %v7378 = vrot.slane %v5304, %v7377
          %v7379 = vsel %vm5980, %v7378, %v7374
          %v7380 = vlaneseq
          %v7381 = vshrl.u32 %v7380, 7
          %v7382 = vsub.s32 %v5982, %v7381
          %v7383 = vrot.slane %v5306, %v7382
          %v7384 = vsel %vm5987, %v7383, %v7379
          %v7385 = vlaneseq
          %v7386 = vshrl.u32 %v7385, 7
          %v7387 = vsub.s32 %v5989, %v7386
          %v7388 = vrot.slane %v5308, %v7387
          %v7389 = vsel %vm5994, %v7388, %v7384
          %v7390 = vsel %vm6549, %v6994, %v6836
          %v7391 = vsel %vm6551, %v7152, %v7390
          %v7392 = vsel %vm6553, %v7310, %v7391
          %v7393 = vsel %vm6549, %v7073, %v6915
          %v7394 = vsel %vm6551, %v7231, %v7393
          %v7395 = vsel %vm6553, %v7389, %v7394
          %7398 = vmatprep.subr.mxu0 0.0
          %7399 = vmatpush1.msra.mxu0 %v5708
          %7400 = vmatprep.subr.mxu0 0.0
          %7401 = vmatpush1.msra.mxu0 %v5707
          %7402 = vmatprep.subr.mxu0 0.0
          %7403 = vmatpush1.msra.mxu0 %v5706
          %7404 = vmatprep.subr.mxu0 0.0
          %7405 = vmatpush1.msra.mxu0 %v5705
          %7406 = vmatprep.subr.mxu0 0.0
          %7407 = vmatpush1.msra.mxu0 %v5704
          %7408 = vmatprep.subr.mxu0 0.0
          %7409 = vmatpush1.msra.mxu0 %v5703
          %7410 = vmatprep.subr.mxu0 0.0
          %7411 = vmatpush1.msra.mxu0 %v5702
          %7412 = vmatprep.subr.mxu0 0.0
          %7413 = vmatpush1.msra.mxu0 %v5701
          %7414 = vmatprep.subr.mxu0 0.0
          %7415 = vmatpush1.msra.mxu0 %v5700
          %7416 = vmatprep.subr.mxu0 0.0
          %7417 = vmatpush1.msra.mxu0 %v5699
          %7418 = vmatprep.subr.mxu0 0.0
          %7419 = vmatpush1.msra.mxu0 %v5698
          %7420 = vmatprep.subr.mxu0 0.0
          %7421 = vmatpush1.msra.mxu0 %v5697
          %7422 = vmatprep.subr.mxu0 0.0
          %7423 = vmatpush1.msra.mxu0 %v5696
          %7424 = vmatprep.subr.mxu0 0.0
          %7425 = vmatpush1.msra.mxu0 %v5695
          %7426 = vmatprep.subr.mxu0 0.0
          %7427 = vmatpush1.msra.mxu0 %v5694
          %7428 = vmatprep.subr.mxu0 0.0
          %7429 = vmatpush1.msra.mxu0 %v5693
          %7430 = vmatprep.subr.mxu0 0.0
          %7431 = vmatpush2.msra.mxu0 %v5724
          %7432 = vmatprep.subr.mxu0 0.0
          %7433 = vmatpush2.msra.mxu0 %v5723
          %7434 = vmatprep.subr.mxu0 0.0
          %7435 = vmatpush2.msra.mxu0 %v5722
          %7436 = vmatprep.subr.mxu0 0.0
          %7437 = vmatpush2.msra.mxu0 %v5721
          %7438 = vmatprep.subr.mxu0 0.0
          %7439 = vmatpush2.msra.mxu0 %v5720
          %7440 = vmatprep.subr.mxu0 0.0
          %7441 = vmatpush2.msra.mxu0 %v5719
          %7442 = vmatprep.subr.mxu0 0.0
          %7443 = vmatpush2.msra.mxu0 %v5718
          %7444 = vmatprep.subr.mxu0 0.0
          %7445 = vmatpush2.msra.mxu0 %v5717
          %7446 = vmatprep.subr.mxu0 0.0
          %7447 = vmatpush2.msra.mxu0 %v5716
          %7448 = vmatprep.subr.mxu0 0.0
          %7449 = vmatpush2.msra.mxu0 %v5715
          %7450 = vmatprep.subr.mxu0 0.0
          %7451 = vmatpush2.msra.mxu0 %v5714
          %7452 = vmatprep.subr.mxu0 0.0
          %7453 = vmatpush2.msra.mxu0 %v5713
          %7454 = vmatprep.subr.mxu0 0.0
          %7455 = vmatpush2.msra.mxu0 %v5712
          %7456 = vmatprep.subr.mxu0 0.0
          %7457 = vmatpush2.msra.mxu0 %v5711
          %7458 = vmatprep.subr.mxu0 0.0
          %7459 = vmatpush2.msra.mxu0 %v5710
          %7460 = vmatprep.subr.mxu0 0.0
          %7461 = vmatpush2.msra.mxu0 %v5709
          %7462 = vmatprep.mubr.f32.mxu0 %v7395
          %7463 = vmatmul.mubr.f32.gmra.mxu0 %v7392
          %v7464 = vpop.f32.mrf.mxu0
          %v7465 = vadd.f32 %v6627, %v7464
          %v7466 = vpop.f32.mrf.mxu0
          %7467 = vdwg.mxu0
          %v7468 = vld [vmem:[#allocation11] sm:$0x1]
          %v7470 = vlaneseq
          %v7471 = vshrl.u32 %v7470, 7
          %v7472 = vsub.s32 0, %v7471
          %v7473 = vrot.slane %v7468, %v7472
          %v7475 = vadd.f32 %v7465, %v7473
          %v7476 = vmax.f32 %v7475, 0.0
          %v7477 = vld [vmem:[#allocation12] sm:$0xff]
          %v7478 = vld [vmem:[#allocation12 + $0x8] sm:$0xff]
          %v7479 = vld [vmem:[#allocation12 + $0x10] sm:$0xff]
          %v7480 = vld [vmem:[#allocation12 + $0x18] sm:$0xff]
          %v7481 = vld [vmem:[#allocation12 + $0x20] sm:$0xff]
          %v7482 = vld [vmem:[#allocation12 + $0x28] sm:$0xff]
          %v7483 = vld [vmem:[#allocation12 + $0x30] sm:$0xff]
          %v7484 = vld [vmem:[#allocation12 + $0x38] sm:$0xff]
          %v7485 = vld [vmem:[#allocation12 + $0x40] sm:$0xff]
          %v7486 = vld [vmem:[#allocation12 + $0x48] sm:$0xff]
          %v7487 = vld [vmem:[#allocation12 + $0x50] sm:$0xff]
          %v7488 = vld [vmem:[#allocation12 + $0x58] sm:$0xff]
          %v7489 = vld [vmem:[#allocation12 + $0x60] sm:$0xff]
          %v7490 = vld [vmem:[#allocation12 + $0x68] sm:$0xff]
          %v7491 = vld [vmem:[#allocation12 + $0x70] sm:$0xff]
          %v7492 = vld [vmem:[#allocation12 + $0x78] sm:$0xff]
          %v7493 = vld [vmem:[#allocation14] sm:$0x1]
          %v7495 = vlaneseq
          %v7496 = vshrl.u32 %v7495, 7
          %v7497 = vsub.s32 0, %v7496
          %v7498 = vrot.slane %v7493, %v7497
          %7500 = vmatprep.subr.mxu0 0.0
          %7501 = vmatpush1.msra.mxu0 %v7492
          %7502 = vmatprep.subr.mxu0 0.0
          %7503 = vmatpush1.msra.mxu0 %v7491
          %7504 = vmatprep.subr.mxu0 0.0
          %7505 = vmatpush1.msra.mxu0 %v7490
          %7506 = vmatprep.subr.mxu0 0.0
          %7507 = vmatpush1.msra.mxu0 %v7489
          %7508 = vmatprep.subr.mxu0 0.0
          %7509 = vmatpush1.msra.mxu0 %v7488
          %7510 = vmatprep.subr.mxu0 0.0
          %7511 = vmatpush1.msra.mxu0 %v7487
          %7512 = vmatprep.subr.mxu0 0.0
          %7513 = vmatpush1.msra.mxu0 %v7486
          %7514 = vmatprep.subr.mxu0 0.0
          %7515 = vmatpush1.msra.mxu0 %v7485
          %7516 = vmatprep.subr.mxu0 0.0
          %7517 = vmatpush1.msra.mxu0 %v7484
          %7518 = vmatprep.subr.mxu0 0.0
          %7519 = vmatpush1.msra.mxu0 %v7483
          %7520 = vmatprep.subr.mxu0 0.0
          %7521 = vmatpush1.msra.mxu0 %v7482
          %7522 = vmatprep.subr.mxu0 0.0
          %7523 = vmatpush1.msra.mxu0 %v7481
          %7524 = vmatprep.subr.mxu0 0.0
          %7525 = vmatpush1.msra.mxu0 %v7480
          %7526 = vmatprep.subr.mxu0 0.0
          %7527 = vmatpush1.msra.mxu0 %v7479
          %7528 = vmatprep.subr.mxu0 0.0
          %7529 = vmatpush1.msra.mxu0 %v7478
          %7530 = vmatprep.subr.mxu0 0.0
          %7531 = vmatpush1.msra.mxu0 %v7477
          %7532 = vmatprep.subr.mxu0 0.0
          %7533 = vmatpush2.msra.mxu0 0.0
          %7534 = vmatprep.subr.mxu0 0.0
          %7535 = vmatpush2.msra.mxu0 0.0
          %7536 = vmatprep.subr.mxu0 0.0
          %7537 = vmatpush2.msra.mxu0 0.0
          %7538 = vmatprep.subr.mxu0 0.0
          %7539 = vmatpush2.msra.mxu0 0.0
          %7540 = vmatprep.subr.mxu0 0.0
          %7541 = vmatpush2.msra.mxu0 0.0
          %7542 = vmatprep.subr.mxu0 0.0
          %7543 = vmatpush2.msra.mxu0 0.0
          %7544 = vmatprep.subr.mxu0 0.0
          %7545 = vmatpush2.msra.mxu0 0.0
          %7546 = vmatprep.subr.mxu0 0.0
          %7547 = vmatpush2.msra.mxu0 0.0
          %7548 = vmatprep.subr.mxu0 0.0
          %7549 = vmatpush2.msra.mxu0 0.0
          %7550 = vmatprep.subr.mxu0 0.0
          %7551 = vmatpush2.msra.mxu0 0.0
          %7552 = vmatprep.subr.mxu0 0.0
          %7553 = vmatpush2.msra.mxu0 0.0
          %7554 = vmatprep.subr.mxu0 0.0
          %7555 = vmatpush2.msra.mxu0 0.0
          %7556 = vmatprep.subr.mxu0 0.0
          %7557 = vmatpush2.msra.mxu0 0.0
          %7558 = vmatprep.subr.mxu0 0.0
          %7559 = vmatpush2.msra.mxu0 0.0
          %7560 = vmatprep.subr.mxu0 0.0
          %7561 = vmatpush2.msra.mxu0 0.0
          %7562 = vmatprep.subr.mxu0 0.0
          %7563 = vmatpush2.msra.mxu0 0.0
          %7564 = vmatprep.mubr.f32.mxu0 0.0
          %7565 = vmatmul.mubr.f32.gmra.mxu0 %v7476
          %v7566 = vpop.f32.mrf.mxu0
          %v7567 = vadd.f32 %v7498, %v7566
          %v7568 = vpop.f32.mrf.mxu0
          %7569 = vdwg.mxu0
          %v7570 = vmax.f32 %v7567, 0.0
          %v7571 = vld [vmem:[#allocation15] sm:$0xff]
          %v7572 = vld [vmem:[#allocation15 + $0x8] sm:$0xff]
          %v7573 = vld [vmem:[#allocation15 + $0x10] sm:$0xff]
          %v7574 = vld [vmem:[#allocation15 + $0x18] sm:$0xff]
          %v7575 = vld [vmem:[#allocation15 + $0x20] sm:$0xff]
          %v7576 = vld [vmem:[#allocation15 + $0x28] sm:$0xff]
          %v7577 = vld [vmem:[#allocation15 + $0x30] sm:$0xff]
          %v7578 = vld [vmem:[#allocation15 + $0x38] sm:$0xff]
          %v7579 = vld [vmem:[#allocation17] sm:$0x1]
          %v7581 = vlaneseq
          %v7582 = vshrl.u32 %v7581, 7
          %v7583 = vsub.s32 0, %v7582
          %v7584 = vrot.slane %v7579, %v7583
          %vm7586 = vcmask 523264
          %v7588 = vsel %vm7586, %v7570, 0
          %7590 = vmatprep.subr.mxu0 0.0
          %7591 = vmatpush1.msra.mxu0 0.0
          %7592 = vmatprep.subr.mxu0 0.0
          %7593 = vmatpush1.msra.mxu0 0.0
          %7594 = vmatprep.subr.mxu0 0.0
          %7595 = vmatpush1.msra.mxu0 0.0
          %7596 = vmatprep.subr.mxu0 0.0
          %7597 = vmatpush1.msra.mxu0 0.0
          %7598 = vmatprep.subr.mxu0 0.0
          %7599 = vmatpush1.msra.mxu0 0.0
          %7600 = vmatprep.subr.mxu0 0.0
          %7601 = vmatpush1.msra.mxu0 0.0
          %7602 = vmatprep.subr.mxu0 0.0
          %7603 = vmatpush1.msra.mxu0 0.0
          %7604 = vmatprep.subr.mxu0 0.0
          %7605 = vmatpush1.msra.mxu0 0.0
          %7606 = vmatprep.subr.mxu0 0.0
          %7607 = vmatpush1.msra.mxu0 %v7578
          %7608 = vmatprep.subr.mxu0 0.0
          %7609 = vmatpush1.msra.mxu0 %v7577
          %7610 = vmatprep.subr.mxu0 0.0
          %7611 = vmatpush1.msra.mxu0 %v7576
          %7612 = vmatprep.subr.mxu0 0.0
          %7613 = vmatpush1.msra.mxu0 %v7575
          %7614 = vmatprep.subr.mxu0 0.0
          %7615 = vmatpush1.msra.mxu0 %v7574
          %7616 = vmatprep.subr.mxu0 0.0
          %7617 = vmatpush1.msra.mxu0 %v7573
          %7618 = vmatprep.subr.mxu0 0.0
          %7619 = vmatpush1.msra.mxu0 %v7572
          %7620 = vmatprep.subr.mxu0 0.0
          %7621 = vmatpush1.msra.mxu0 %v7571
          %7622 = vmatprep.subr.mxu0 0.0
          %7623 = vmatpush2.msra.mxu0 0.0
          %7624 = vmatprep.subr.mxu0 0.0
          %7625 = vmatpush2.msra.mxu0 0.0
          %7626 = vmatprep.subr.mxu0 0.0
          %7627 = vmatpush2.msra.mxu0 0.0
          %7628 = vmatprep.subr.mxu0 0.0
          %7629 = vmatpush2.msra.mxu0 0.0
          %7630 = vmatprep.subr.mxu0 0.0
          %7631 = vmatpush2.msra.mxu0 0.0
          %7632 = vmatprep.subr.mxu0 0.0
          %7633 = vmatpush2.msra.mxu0 0.0
          %7634 = vmatprep.subr.mxu0 0.0
          %7635 = vmatpush2.msra.mxu0 0.0
          %7636 = vmatprep.subr.mxu0 0.0
          %7637 = vmatpush2.msra.mxu0 0.0
          %7638 = vmatprep.subr.mxu0 0.0
          %7639 = vmatpush2.msra.mxu0 0.0
          %7640 = vmatprep.subr.mxu0 0.0
          %7641 = vmatpush2.msra.mxu0 0.0
          %7642 = vmatprep.subr.mxu0 0.0
          %7643 = vmatpush2.msra.mxu0 0.0
          %7644 = vmatprep.subr.mxu0 0.0
          %7645 = vmatpush2.msra.mxu0 0.0
          %7646 = vmatprep.subr.mxu0 0.0
          %7647 = vmatpush2.msra.mxu0 0.0
          %7648 = vmatprep.subr.mxu0 0.0
          %7649 = vmatpush2.msra.mxu0 0.0
          %7650 = vmatprep.subr.mxu0 0.0
          %7651 = vmatpush2.msra.mxu0 0.0
          %7652 = vmatprep.subr.mxu0 0.0
          %7653 = vmatpush2.msra.mxu0 0.0
          %7654 = vmatprep.mubr.f32.mxu0 0.0
          %7655 = vmatmul.mubr.f32.gmra.mxu0 %v7588
          %v7656 = vpop.f32.mrf.mxu0
          %v7657 = vadd.f32 %v7584, %v7656
          %v7658 = vpop.f32.mrf.mxu0
          %7659 = vdwg.mxu0
          %v7660 = vmax.f32 %v7657, 0.0
          %v7661 = vld [vmem:[%s9] sm:$0xff]
          %v7662 = vld [vmem:[%s9 + $0x8] sm:$0xff]
          %v7663 = vld [vmem:[%s9 + $0x10] sm:$0xff]
          %v7664 = vld [vmem:[%s9 + $0x18] sm:$0xff]
          %v7665 = vld [vmem:[%s10] sm:$0x1]
          %v7667 = vlaneseq
          %v7668 = vshrl.u32 %v7667, 7
          %v7669 = vsub.s32 0, %v7668
          %v7670 = vrot.slane %v7665, %v7669
          %vm7672 = vcmask 261120
          %v7674 = vsel %vm7672, %v7660, 0
          %7676 = vmatprep.subr.mxu0 0.0
          %7677 = vmatpush1.msra.mxu0 0.0
          %7678 = vmatprep.subr.mxu0 0.0
          %7679 = vmatpush1.msra.mxu0 0.0
          %7680 = vmatprep.subr.mxu0 0.0
          %7681 = vmatpush1.msra.mxu0 0.0
          %7682 = vmatprep.subr.mxu0 0.0
          %7683 = vmatpush1.msra.mxu0 0.0
          %7684 = vmatprep.subr.mxu0 0.0
          %7685 = vmatpush1.msra.mxu0 0.0
          %7686 = vmatprep.subr.mxu0 0.0
          %7687 = vmatpush1.msra.mxu0 0.0
          %7688 = vmatprep.subr.mxu0 0.0
          %7689 = vmatpush1.msra.mxu0 0.0
          %7690 = vmatprep.subr.mxu0 0.0
          %7691 = vmatpush1.msra.mxu0 0.0
          %7692 = vmatprep.subr.mxu0 0.0
          %7693 = vmatpush1.msra.mxu0 0.0
          %7694 = vmatprep.subr.mxu0 0.0
          %7695 = vmatpush1.msra.mxu0 0.0
          %7696 = vmatprep.subr.mxu0 0.0
          %7697 = vmatpush1.msra.mxu0 0.0
          %7698 = vmatprep.subr.mxu0 0.0
          %7699 = vmatpush1.msra.mxu0 0.0
          %7700 = vmatprep.subr.mxu0 0.0
          %7701 = vmatpush1.msra.mxu0 %v7664
          %7702 = vmatprep.subr.mxu0 0.0
          %7703 = vmatpush1.msra.mxu0 %v7663
          %7704 = vmatprep.subr.mxu0 0.0
          %7705 = vmatpush1.msra.mxu0 %v7662
          %7706 = vmatprep.subr.mxu0 0.0
          %7707 = vmatpush1.msra.mxu0 %v7661
          %7708 = vmatprep.subr.mxu0 0.0
          %7709 = vmatpush2.msra.mxu0 0.0
          %7710 = vmatprep.subr.mxu0 0.0
          %7711 = vmatpush2.msra.mxu0 0.0
          %7712 = vmatprep.subr.mxu0 0.0
          %7713 = vmatpush2.msra.mxu0 0.0
          %7714 = vmatprep.subr.mxu0 0.0
          %7715 = vmatpush2.msra.mxu0 0.0
          %7716 = vmatprep.subr.mxu0 0.0
          %7717 = vmatpush2.msra.mxu0 0.0
          %7718 = vmatprep.subr.mxu0 0.0
          %7719 = vmatpush2.msra.mxu0 0.0
          %7720 = vmatprep.subr.mxu0 0.0
          %7721 = vmatpush2.msra.mxu0 0.0
          %7722 = vmatprep.subr.mxu0 0.0
          %7723 = vmatpush2.msra.mxu0 0.0
          %7724 = vmatprep.subr.mxu0 0.0
          %7725 = vmatpush2.msra.mxu0 0.0
          %7726 = vmatprep.subr.mxu0 0.0
          %7727 = vmatpush2.msra.mxu0 0.0
          %7728 = vmatprep.subr.mxu0 0.0
          %7729 = vmatpush2.msra.mxu0 0.0
          %7730 = vmatprep.subr.mxu0 0.0
          %7731 = vmatpush2.msra.mxu0 0.0
          %7732 = vmatprep.subr.mxu0 0.0
          %7733 = vmatpush2.msra.mxu0 0.0
          %7734 = vmatprep.subr.mxu0 0.0
          %7735 = vmatpush2.msra.mxu0 0.0
          %7736 = vmatprep.subr.mxu0 0.0
          %7737 = vmatpush2.msra.mxu0 0.0
          %7738 = vmatprep.subr.mxu0 0.0
          %7739 = vmatpush2.msra.mxu0 0.0
          %7740 = vmatprep.mubr.f32.mxu0 0.0
          %7741 = vmatmul.mubr.f32.gmra.mxu0 %v7674
          %v7742 = vpop.f32.mrf.mxu0
          %v7743 = vadd.f32 %v7670, %v7742
          %v7744 = vpop.f32.mrf.mxu0
          %7745 = vdwg.mxu0
          %7746 = vst [vmem:[%s565] sm:$0xf] %v7743
        $region108: #{_lambda_.1} parent=63 // pred_fallthru
          _
        %p7747 = scmp.lt.s32.totalorder %s35, 1
        %s7748 = scalar_select %p7747, %s35, 1
        %s7749 = smul.addr %s7748, 4
        %s7750 = scalar_lea.vmem %s11, %s7749
        // Predicated region
        $region109: #{_lambda_.1} parent=63 // pred_check
          %p7751 = pneg %p306
        $region110: #{_lambda_.1} parent=63 // pred_check_branch
          %7753 = sbr.rel (%p7751) target = $region112
        $region111: #{_lambda_.1} parent=63 // pred_region
          _
        $region112: #{_lambda_.1} parent=63 // pred_fallthru
          _
      $region64: #{_lambda_.1} parent=5 // pred_fallthru
        _
      %p7754 = scmp.le.s32.totalorder 2, %s26
      // Predicated region
      $region113: #{_lambda_.1} parent=5 // pred_check
        %p7755 = pneg %p7754
      $region114: #{_lambda_.1} parent=5 // pred_check_branch
        %7757 = sbr.rel (%p7755) target = $region116
      $region115: #{_lambda_.1} parent=5 // pred_region
        %s7758 = ssub.s32 %s26, 2
        // Predicated region
        $region117: #{_lambda_.1} parent=115 // pred_check
          %p7759 = pneg %p312
        $region118: #{_lambda_.1} parent=115 // pred_check_branch
          %7761 = sbr.rel (%p7759) target = $region120
        $region119: #{_lambda_.1} parent=115 // pred_region
          %p7762 = scmp.lt.s32.totalorder %s37, 1
          %s7763 = scalar_select %p7762, %s37, 1
          %s7764 = smul.addr %s7763, 4
          %s7765 = scalar_lea.vmem %s11, %s7764
        $region120: #{_lambda_.1} parent=115 // pred_fallthru
          _
      $region116: #{_lambda_.1} parent=5 // pred_fallthru
        _
    $region6: #{_lambda_.1} parent=1 // loop_footer
      %s30 = sadd.s32 1, %s26
    $region7: #{_lambda_.1} parent=1 // loop_footer_branch
      %25 = sbr.rel target = $region3
    $region8: #{_lambda_.1} parent=1 // loop_exit
      _
    %7766 = vsyncpa [#allocation5], 1
    %s7767 = scalar_lea.sflag [#allocation5], 1
    %7768 = vsyncpa %s7767, 1
    %7769 = vsyncpa [#allocation7], 1
    %s7770 = scalar_lea.sflag [#allocation7], 1
    %7771 = vsyncpa %s7770, 1
    %7772 = vsyncpa [#allocation10], 1
    %7773 = vsyncpa [#allocation13], 1
    %7774 = vsyncpa [#allocation16], 1

</llo_original>
